<compile_context>
chip_gen: v7x
topology: tpu7x:2x2x1
jax: 0.10.0
libtpu: 0.0.40
codegen_flags: <defaults>
</compile_context>

<pallas_src>
import functools

import numpy as np
import jax
import jax.numpy as jnp
from jax.experimental import pallas as pl
from jax.experimental.pallas import tpu as pltpu

ALPHA = 0.1     # PLU alpha
C = 1.0         # PLU c
PPAD = 128      # lane-padded pose width (pose_dim columns are real, rest zero)


def _plu(x):
    o1 = ALPHA * (x + C) - C
    o2 = ALPHA * (x - C) + C
    o3 = x - jnp.maximum(x - o2, 0.0)
    return jnp.maximum(o1 - o3, 0.0) + o3


def _lin(x, w_ref, b_ref):
    # bf16 weights resident in VMEM; f32 activations; f32 accumulation on the MXU.
    return jnp.dot(x.astype(jnp.bfloat16), w_ref[...],
                   preferred_element_type=jnp.float32) + b_ref[...]


def rnn_fused_kernel(
    # scalar prefetch (SMEM)
    tta_ref,
    # runtime / resident data
    seed_state_ref, seed_offset_ref, target_ref, target_p_ref,
    noise_ref, init_pose_ref, gmat_ref, ztta_ref,
    # encoder weights
    w_s0, b_s0, w_s1, b_s1,
    w_o0, b_o0, w_o1, b_o1,
    w_t0, b_t0, w_t1, b_t1,
    # LSTM weights ([W_ih; W_hh] pre-stacked, biases pre-summed)
    w_lstm, b_lstm,
    # decoder weights (last layer lane-padded to PPAD)
    w_d0, b_d0, w_d1, b_d1, w_d2, b_d2,
    # outputs
    pose_out_ref, h_ref, c_ref,
    # scratch (persists across grid steps)
    st_scr, off_scr, prev_scr, x_scr,
    *, seed_frames, latent_dim, quat_dim,
):
    t = pl.program_id(0)
    n_t = pl.num_programs(0)
    S = seed_frames
    L = latent_dim
    QD = quat_dim
    H = 3 * L

    # Pose rows for t < seed_frames are dummies and get sliced off on the host.
    pose_out_ref[...] = jnp.zeros_like(pose_out_ref)

    @pl.when(t == 0)
    def _init():
        h_ref[...] = jnp.zeros_like(h_ref)
        c_ref[...] = jnp.zeros_like(c_ref)
        prev_scr[...] = init_pose_ref[...]          # [seed_p[:,-1] | seed_q[:,-1]]

    @pl.when(t < S)
    def _seed_inputs():
        st_scr[...] = seed_state_ref[t]
        off_scr[...] = seed_offset_ref[t]

    @pl.when(t >= S)
    def _auto_inputs():
        xprev = x_scr[...]                          # decoded pose from previous frame
        prev = prev_scr[...]                        # [last_p(3) | last_q(QD)]
        root_v = xprev[:, 0:3]
        root_p = prev[:, 0:3] + root_v
        q = xprev[:, 3:3 + QD] + prev[:, 3:3 + QD]
        # per-joint (groups of 4 lanes) sum of squares via a tiny masked matmul
        ssq = jnp.dot(q * q, gmat_ref[...], preferred_element_type=jnp.float32)
        q_n = q / jnp.maximum(jnp.sqrt(ssq), 1e-6)
        # emit integrated pose + update carried "last pose"
        pose_out_ref[:, 0:3] = root_p
        pose_out_ref[:, 3:3 + QD] = q_n
        prev_scr[:, 0:3] = root_p
        prev_scr[:, 3:3 + QD] = q_n
        # encoder inputs for this frame
        st_scr[:, 0:3] = root_v
        st_scr[:, 3:3 + QD] = q_n
        off_scr[:, 0:3] = target_p_ref[...] - root_p
        off_scr[:, 3:3 + QD] = target_ref[...] - q_n

    @pl.when(t < n_t - 1)                           # last frame only integrates the pose
    def _enc_lstm_dec():
        ztta_row = ztta_ref[...]                    # (1, L), row picked via scalar prefetch
        tta_f = tta_ref[t].astype(jnp.float32)
        zt = jnp.clip((tta_f - 5.0) / 25.0, 0.0, 1.0)   # ztarget schedule

        # ---- RNNEncoder ----
        s_enc = _lin(_plu(_lin(st_scr[...], w_s0, b_s0)), w_s1, b_s1) + ztta_row
        o_enc = _lin(_plu(_lin(off_scr[...], w_o0, b_o0)), w_o1, b_o1) + ztta_row
        t_enc = _lin(_plu(_lin(target_ref[...], w_t0, b_t0)), w_t1, b_t1) + ztta_row
        noise = noise_ref[...] * zt
        o_in = o_enc + noise[:, 0:L]
        t_in = t_enc + noise[:, L:2 * L]

        # ---- single-layer LSTM cell (gate order i, f, g, o) ----
        # One merged (B, 3L+H) @ (3L+H, 4H) matmul (lane-aligned concat is cheap and
        # saves MXU weight-tile pushes vs 4 small-K matmuls).
        lstm_in = jnp.concatenate([s_enc, o_in, t_in, h_ref[...]], axis=-1)
        gates = jnp.dot(lstm_in.astype(jnp.bfloat16), w_lstm[...],
                        preferred_element_type=jnp.float32) + b_lstm[...]
        i_g = jax.nn.sigmoid(gates[:, 0:H])
        f_g = jax.nn.sigmoid(gates[:, H:2 * H])
        g_g = jnp.tanh(gates[:, 2 * H:3 * H])
        o_g = jax.nn.sigmoid(gates[:, 3 * H:4 * H])
        c_new = f_g * c_ref[...] + i_g * g_g
        h_new = o_g * jnp.tanh(c_new)
        h_ref[...] = h_new
        c_ref[...] = c_new

        # ---- RNNDecoder (lane-padded last layer -> (B, PPAD)) ----
        d = _lin(_plu(_lin(_plu(_lin(h_new, w_d0, b_d0)), w_d1, b_d1)), w_d2, b_d2)
        x_scr[...] = d


def build_rnn_call(*, T, S, B, latent_dim, hidden_dim, state_dim, target_dim,
                   quat_dim, max_tta):
    L = latent_dim
    H = 3 * L
    prev_dim = 3 + quat_dim

    def resident(shape):
        nd = len(shape)
        return pl.BlockSpec(shape, lambda *_, nd=nd: (0,) * nd)

    in_specs = [
        resident((S, B, state_dim)),           # seed_state
        resident((S, B, state_dim)),           # seed_offset
        resident((B, target_dim)),             # target (flattened target_q)
        resident((B, 3)),                      # target_p
        resident((B, 2 * L)),                  # target noise
        resident((B, prev_dim)),               # init last pose
        resident((quat_dim, quat_dim)),        # per-joint group-sum matrix
        pl.BlockSpec((None, 1, L), lambda t, tta: (tta[t], 0, 0)),   # ztta row
        # encoder
        resident((state_dim, hidden_dim)), resident((1, hidden_dim)),
        resident((hidden_dim, L)), resident((1, L)),
        resident((state_dim, hidden_dim)), resident((1, hidden_dim)),
        resident((hidden_dim, L)), resident((1, L)),
        resident((target_dim, hidden_dim)), resident((1, hidden_dim)),
        resident((hidden_dim, L)), resident((1, L)),
        # LSTM (stacked [W_ih; W_hh])
        resident((3 * L + H, 4 * H)), resident((1, 4 * H)),
        # decoder
        resident((H, hidden_dim)), resident((1, hidden_dim)),
        resident((hidden_dim, hidden_dim // 2)), resident((1, hidden_dim // 2)),
        resident((hidden_dim // 2, PPAD)), resident((1, PPAD)),
    ]

    out_specs = (
        pl.BlockSpec((None, B, PPAD), lambda t, tta: (t, 0, 0)),   # pose slab
        pl.BlockSpec((B, H), lambda t, tta: (0, 0)),               # h (resident carry)
        pl.BlockSpec((B, H), lambda t, tta: (0, 0)),               # c (resident carry)
    )
    out_shape = (
        jax.ShapeDtypeStruct((T, B, PPAD), jnp.float32),
        jax.ShapeDtypeStruct((B, H), jnp.float32),
        jax.ShapeDtypeStruct((B, H), jnp.float32),
    )
    scratch_shapes = [
        pltpu.VMEM((B, state_dim), jnp.float32),    # state
        pltpu.VMEM((B, state_dim), jnp.float32),    # offset
        pltpu.VMEM((B, prev_dim), jnp.float32),     # last pose [p | q]
        pltpu.VMEM((B, PPAD), jnp.float32),         # decoded pose
    ]
    kernel = functools.partial(rnn_fused_kernel, seed_frames=S,
                               latent_dim=L, quat_dim=quat_dim)
    return pl.pallas_call(
        kernel,
        out_shape=out_shape,
        grid_spec=pltpu.PrefetchScalarGridSpec(
            num_scalar_prefetch=1,
            grid=(T,),
            in_specs=in_specs,
            out_specs=out_specs,
            scratch_shapes=scratch_shapes,
        ),
        compiler_params=pltpu.CompilerParams(
            dimension_semantics=("arbitrary",)),
    )


def make_ztta(max_tta, out_dim):
    j = jnp.arange(out_dim, dtype=jnp.float32)
    basis = jnp.power(10000.0, j / (-float(out_dim)))
    t = jnp.arange(max_tta, dtype=jnp.float32)[:, None]
    ang = t * basis[None, :]
    even = (jnp.arange(out_dim) % 2) == 0
    return jnp.where(even[None, :], jnp.sin(ang), jnp.cos(ang)).astype(jnp.float32)


def init_params(key, state_dim, offset_dim, target_dim, pose_dim,
                hidden_dim, latent_dim, max_tta):
    H = 3 * latent_dim
    ks = jax.random.split(key, 10)

    def linear(k, fi, fo):
        kw, kb = jax.random.split(k)
        bound = 1.0 / np.sqrt(fi)
        w = jax.random.uniform(kw, (fi, fo), jnp.float32, -bound, bound)
        b = jax.random.uniform(kb, (1, fo), jnp.float32, -bound, bound)
        return w, b

    p = {}
    p["s0"] = linear(ks[0], state_dim, hidden_dim)
    p["s1"] = linear(ks[1], hidden_dim, latent_dim)
    p["o0"] = linear(ks[2], offset_dim, hidden_dim)
    p["o1"] = linear(ks[3], hidden_dim, latent_dim)
    p["t0"] = linear(ks[4], target_dim, hidden_dim)
    p["t1"] = linear(ks[5], hidden_dim, latent_dim)
    kih, khh, kbi, kbh = jax.random.split(ks[6], 4)
    bound = 1.0 / np.sqrt(H)
    p["w_ih"] = jax.random.uniform(kih, (H, 4 * H), jnp.float32, -bound, bound)
    p["w_hh"] = jax.random.uniform(khh, (H, 4 * H), jnp.float32, -bound, bound)
    p["b_ih"] = jax.random.uniform(kbi, (1, 4 * H), jnp.float32, -bound, bound)
    p["b_hh"] = jax.random.uniform(kbh, (1, 4 * H), jnp.float32, -bound, bound)
    p["d0"] = linear(ks[7], H, hidden_dim)
    p["d1"] = linear(ks[8], hidden_dim, hidden_dim // 2)
    p["d2"] = linear(ks[9], hidden_dim // 2, pose_dim)
    p["ztta"] = make_ztta(max_tta, latent_dim)
    return p


def pack_weights(p, latent_dim, pose_dim):
    """bf16 weights, stacked LSTM weight, pre-summed LSTM bias, lane-padded decoder."""
    bf = lambda w: w.astype(jnp.bfloat16)
    w_lstm = jnp.concatenate([p["w_ih"], p["w_hh"]], axis=0)   # (3L + H, 4H)
    b_lstm = p["b_ih"] + p["b_hh"]
    w_d2, b_d2 = p["d2"]
    hd2 = w_d2.shape[0]
    w_d2p = jnp.zeros((hd2, PPAD), jnp.float32).at[:, :pose_dim].set(w_d2)
    b_d2p = jnp.zeros((1, PPAD), jnp.float32).at[:, :pose_dim].set(b_d2)
    return (
        bf(p["s0"][0]), p["s0"][1], bf(p["s1"][0]), p["s1"][1],
        bf(p["o0"][0]), p["o0"][1], bf(p["o1"][0]), p["o1"][1],
        bf(p["t0"][0]), p["t0"][1], bf(p["t1"][0]), p["t1"][1],
        bf(w_lstm), b_lstm,
        bf(p["d0"][0]), p["d0"][1], bf(p["d1"][0]), p["d1"][1],
        bf(w_d2p), b_d2p,
    )


def rnn_inpainter_forward(params, seed_p, seed_q, target_p, target_q, frames,
                          latent_dim, hidden_dim, max_tta, noise=False):
    B, S, _ = seed_p.shape
    J = seed_q.shape[2]
    quat_dim = 4 * J
    state_dim = 3 + quat_dim
    target_dim = quat_dim
    pose_dim = 3 + quat_dim
    L = latent_dim
    T = frames - 1
    assert S >= 1 and S < frames - 1 and frames <= max_tta

    target_p_ = target_p.reshape(B, 1, 3)
    target_q_ = target_q.reshape(B, 1, J, 4)
    seed_root_v = jnp.zeros_like(seed_p).at[:, 1:].set(seed_p[:, 1:] - seed_p[:, :-1])
    seed_offset_p = target_p_ - seed_p
    seed_offset_q = target_q_ - seed_q
    seed_state = jnp.concatenate([seed_root_v, seed_q.reshape(B, S, -1)], axis=-1)
    seed_offset = jnp.concatenate(
        [seed_offset_p, seed_offset_q.reshape(B, S, -1)], axis=-1)
    seed_state = jnp.transpose(seed_state, (1, 0, 2))      # (S, B, state_dim)
    seed_offset = jnp.transpose(seed_offset, (1, 0, 2))
    target = target_q.reshape(B, -1)                       # (B, 4J)
    init_pose = jnp.concatenate(
        [seed_p[:, -1], seed_q[:, -1].reshape(B, -1)], axis=-1)   # (B, 3+4J)

    if noise:
        # TODO(synk): torch.normal is sampled host-side with jax.random (equivalent),
        # not with the in-kernel TPU PRNG.
        target_noise = 0.5 * jax.random.normal(jax.random.PRNGKey(2),
                                               (B, 2 * L), jnp.float32)
    else:
        target_noise = jnp.zeros((B, 2 * L), jnp.float32)

    # per-joint group-sum matrix for the quaternion norm (avoids in-kernel reshape)
    gidx = np.arange(quat_dim) // 4
    gmat = jnp.asarray((gidx[:, None] == gidx[None, :]).astype(np.float32))

    # tta per grid step (time-to-arrival), used for ztta row select + noise schedule
    tta = jnp.asarray(frames - 1 - np.arange(T), dtype=jnp.int32)

    step = build_rnn_call(T=T, S=S, B=B, latent_dim=L, hidden_dim=hidden_dim,
                          state_dim=state_dim, target_dim=target_dim,
                          quat_dim=quat_dim, max_tta=max_tta)
    ztta3 = params["ztta"].reshape(max_tta, 1, L)
    wargs = pack_weights(params, L, pose_dim)

    pose_slab, h, c = step(
        tta,
        seed_state, seed_offset, target, target_p,
        target_noise, init_pose, gmat, ztta3, *wargs)

    out_pose = jnp.transpose(pose_slab[S:, :, :pose_dim], (1, 0, 2))
    return out_pose, (h[None], c[None])   # lstm_hc as (1, B, H) each, like nn.LSTM


# ---------------------------------------------------------------------------
# Pure-JAX reference that mirrors the kernel's bf16-weight / f32-accumulate math.
# ---------------------------------------------------------------------------
def reference_forward(params, seed_p, seed_q, target_p, target_q, frames,
                      latent_dim, hidden_dim, max_tta, noise_arr):
    bf = jnp.bfloat16
    L = latent_dim
    H = 3 * L
    B, S, _ = seed_p.shape
    J = seed_q.shape[2]

    def lin(x, wb):
        w, b = wb
        return jnp.dot(x.astype(bf), w.astype(bf),
                       preferred_element_type=jnp.float32) + b

    def plu(x):
        o1 = ALPHA * (x + C) - C
        o2 = ALPHA * (x - C) + C
        o3 = jnp.minimum(x, o2)
        return jnp.maximum(o1, o3)

    ztta = params["ztta"]
    target_qf = target_q.reshape(B, -1)
    seed_root_v = jnp.zeros_like(seed_p).at[:, 1:].set(seed_p[:, 1:] - seed_p[:, :-1])
    seed_state = jnp.concatenate([seed_root_v, seed_q.reshape(B, S, -1)], axis=-1)
    seed_offset = jnp.concatenate(
        [target_p[:, None] - seed_p,
         target_qf[:, None] - seed_q.reshape(B, S, -1)], axis=-1)

    def enc(state, offset, tta):
        zr = ztta[tta][None, :]
        s = lin(plu(lin(state, params["s0"])), params["s1"]) + zr
        o = lin(plu(lin(offset, params["o0"])), params["o1"]) + zr
        tg = lin(plu(lin(target_qf, params["t0"])), params["t1"]) + zr
        zt = min(max((tta - 5) / 25.0, 0.0), 1.0)
        o = o + noise_arr[:, :L] * zt
        tg = tg + noise_arr[:, L:] * zt
        return jnp.concatenate([s, o, tg], axis=-1)

    w_ih, w_hh = params["w_ih"], params["w_hh"]
    b_lstm = params["b_ih"] + params["b_hh"]

    def lstm(x, h, c):
        gates = (jnp.dot(x.astype(bf), w_ih.astype(bf), preferred_element_type=jnp.float32)
                 + jnp.dot(h.astype(bf), w_hh.astype(bf), preferred_element_type=jnp.float32)
                 + b_lstm)
        i = jax.nn.sigmoid(gates[:, :H])
        f = jax.nn.sigmoid(gates[:, H:2 * H])
        g = jnp.tanh(gates[:, 2 * H:3 * H])
        o = jax.nn.sigmoid(gates[:, 3 * H:])
        c = f * c + i * g
        h = o * jnp.tanh(c)
        return h, c

    def dec(h):
        return lin(plu(lin(plu(lin(h, params["d0"])), params["d1"])), params["d2"])

    h = jnp.zeros((B, H), jnp.float32)
    c = jnp.zeros((B, H), jnp.float32)
    xd = None
    for f in range(S):
        x = enc(seed_state[:, f], seed_offset[:, f], frames - 1 - f)
        h, c = lstm(x, h, c)
        xd = dec(h)

    last_p = seed_p[:, -1]
    last_q = seed_q[:, -1].reshape(B, -1)
    out = []
    for f in range(S, frames - 1):
        root_v = xd[:, :3]
        root_p = last_p + root_v
        q = (xd[:, 3:] + last_q).reshape(B, J, 4)
        qn = q / jnp.maximum(jnp.linalg.norm(q, axis=-1, keepdims=True), 1e-6)
        last_p = root_p
        last_q = qn.reshape(B, -1)
        out.append(jnp.concatenate([last_p, last_q], axis=-1))
        if f == frames - 2:
            break
        state = jnp.concatenate([root_v, last_q], axis=-1)
        offset = jnp.concatenate([target_p - root_p, target_qf - last_q], axis=-1)
        x = enc(state, offset, frames - 1 - f)
        h, c = lstm(x, h, c)
        xd = dec(h)
    return jnp.stack(out, axis=1), h, c


if __name__ == "__main__":
    # small shapes consistent with the module's forward
    B, S, J = 8, 4, 4          # batch (>=8 so sublanes are not wasted), seed frames, joints
    frames = 16
    latent_dim = 128           # LSTM hidden = 3*latent = 384 (lane aligned)
    hidden_dim = 256           # hidden//2 = 128 keeps all matmul dims lane aligned
    max_tta = 64
    state_dim = 3 + 4 * J
    offset_dim = 3 + 4 * J
    target_dim = 4 * J
    pose_dim = 3 + 4 * J

    key = jax.random.PRNGKey(0)
    k1, k2, k3, k4, k5 = jax.random.split(key, 5)
    seed_p = jax.random.normal(k1, (B, S, 3), jnp.float32)
    seed_q = jax.random.normal(k2, (B, S, J, 4), jnp.float32)
    target_p = jax.random.normal(k3, (B, 3), jnp.float32)
    target_q = jax.random.normal(k4, (B, J, 4), jnp.float32)

    params = init_params(k5, state_dim, offset_dim, target_dim, pose_dim,
                         hidden_dim, latent_dim, max_tta)

    out_pose, (h_n, c_n) = rnn_inpainter_forward(
        params, seed_p, seed_q, target_p, target_q, frames,
        latent_dim, hidden_dim, max_tta, noise=False)
    jax.block_until_ready((out_pose, h_n, c_n))

    assert out_pose.shape == (B, frames - 1 - S, pose_dim), out_pose.shape
    assert h_n.shape == (1, B, 3 * latent_dim) and c_n.shape == (1, B, 3 * latent_dim)
    assert bool(jnp.all(jnp.isfinite(out_pose)))

    # correctness check against a precision-matched pure-JAX reference
    zero_noise = jnp.zeros((B, 2 * latent_dim), jnp.float32)
    ref_pose, ref_h, ref_c = reference_forward(
        params, seed_p, seed_q, target_p, target_q, frames,
        latent_dim, hidden_dim, max_tta, zero_noise)
    jax.block_until_ready((ref_pose, ref_h, ref_c))
    pose_err = float(jnp.max(jnp.abs(out_pose - ref_pose)))
    h_err = float(jnp.max(jnp.abs(h_n[0] - ref_h)))
    c_err = float(jnp.max(jnp.abs(c_n[0] - ref_c)))
    assert pose_err < 5e-2 and h_err < 5e-2 and c_err < 5e-2, (pose_err, h_err, c_err)

    print("KERNEL_OK")
</pallas_src>

<mosaic_0001>
module attributes {stable_mosaic.version = 11 : i64} {
  func.func @rnn_fused_kernel(%arg0: i32, %arg1: memref<15xi32, #tpu.memory_space<smem>>, %arg2: memref<4x8x19xf32, #tpu.memory_space<vmem>>, %arg3: memref<4x8x19xf32, #tpu.memory_space<vmem>>, %arg4: memref<8x16xf32, #tpu.memory_space<vmem>>, %arg5: memref<8x3xf32, #tpu.memory_space<vmem>>, %arg6: memref<8x256xf32, #tpu.memory_space<vmem>>, %arg7: memref<8x19xf32, #tpu.memory_space<vmem>>, %arg8: memref<16x16xf32, #tpu.memory_space<vmem>>, %arg9: memref<1x1x128xf32, #tpu.memory_space<vmem>>, %arg10: memref<19x256xbf16, #tpu.memory_space<vmem>>, %arg11: memref<1x256xf32, #tpu.memory_space<vmem>>, %arg12: memref<256x128xbf16, #tpu.memory_space<vmem>>, %arg13: memref<1x128xf32, #tpu.memory_space<vmem>>, %arg14: memref<19x256xbf16, #tpu.memory_space<vmem>>, %arg15: memref<1x256xf32, #tpu.memory_space<vmem>>, %arg16: memref<256x128xbf16, #tpu.memory_space<vmem>>, %arg17: memref<1x128xf32, #tpu.memory_space<vmem>>, %arg18: memref<16x256xbf16, #tpu.memory_space<vmem>>, %arg19: memref<1x256xf32, #tpu.memory_space<vmem>>, %arg20: memref<256x128xbf16, #tpu.memory_space<vmem>>, %arg21: memref<1x128xf32, #tpu.memory_space<vmem>>, %arg22: memref<768x1536xbf16, #tpu.memory_space<vmem>>, %arg23: memref<1x1536xf32, #tpu.memory_space<vmem>>, %arg24: memref<384x256xbf16, #tpu.memory_space<vmem>>, %arg25: memref<1x256xf32, #tpu.memory_space<vmem>>, %arg26: memref<256x128xbf16, #tpu.memory_space<vmem>>, %arg27: memref<1x128xf32, #tpu.memory_space<vmem>>, %arg28: memref<128x128xbf16, #tpu.memory_space<vmem>>, %arg29: memref<1x128xf32, #tpu.memory_space<vmem>>, %arg30: memref<1x8x128xf32, #tpu.memory_space<vmem>>, %arg31: memref<8x384xf32, #tpu.memory_space<vmem>>, %arg32: memref<8x384xf32, #tpu.memory_space<vmem>>, %arg33: memref<8x19xf32, #tpu.memory_space<vmem>>, %arg34: memref<8x19xf32, #tpu.memory_space<vmem>>, %arg35: memref<8x19xf32, #tpu.memory_space<vmem>>, %arg36: memref<8x128xf32, #tpu.memory_space<vmem>>) attributes {dimension_semantics = [#tpu.dimension_semantics<arbitrary>], iteration_bounds = array<i64: 15>, scalar_prefetch = 1 : i64, scratch_operands = 4 : i64, tpu.core_type = #tpu.core_type<tc>, window_params = [{pipeline_mode = #tpu.pipeline_mode<synchronous>, transform_indices = @transform_0, window_bounds = array<i64: 4, 8, 19>}, {pipeline_mode = #tpu.pipeline_mode<synchronous>, transform_indices = @transform_1, window_bounds = array<i64: 4, 8, 19>}, {pipeline_mode = #tpu.pipeline_mode<synchronous>, transform_indices = @transform_2, window_bounds = array<i64: 8, 16>}, {pipeline_mode = #tpu.pipeline_mode<synchronous>, transform_indices = @transform_3, window_bounds = array<i64: 8, 3>}, {pipeline_mode = #tpu.pipeline_mode<synchronous>, transform_indices = @transform_4, window_bounds = array<i64: 8, 256>}, {pipeline_mode = #tpu.pipeline_mode<synchronous>, transform_indices = @transform_5, window_bounds = array<i64: 8, 19>}, {pipeline_mode = #tpu.pipeline_mode<synchronous>, transform_indices = @transform_6, window_bounds = array<i64: 16, 16>}, {transform_indices = @transform_7, window_bounds = array<i64: 1, 1, 128>}, {pipeline_mode = #tpu.pipeline_mode<synchronous>, transform_indices = @transform_8, window_bounds = array<i64: 19, 256>}, {pipeline_mode = #tpu.pipeline_mode<synchronous>, transform_indices = @transform_9, window_bounds = array<i64: 1, 256>}, {pipeline_mode = #tpu.pipeline_mode<synchronous>, transform_indices = @transform_10, window_bounds = array<i64: 256, 128>}, {pipeline_mode = #tpu.pipeline_mode<synchronous>, transform_indices = @transform_11, window_bounds = array<i64: 1, 128>}, {pipeline_mode = #tpu.pipeline_mode<synchronous>, transform_indices = @transform_12, window_bounds = array<i64: 19, 256>}, {pipeline_mode = #tpu.pipeline_mode<synchronous>, transform_indices = @transform_13, window_bounds = array<i64: 1, 256>}, {pipeline_mode = #tpu.pipeline_mode<synchronous>, transform_indices = @transform_14, window_bounds = array<i64: 256, 128>}, {pipeline_mode = #tpu.pipeline_mode<synchronous>, transform_indices = @transform_15, window_bounds = array<i64: 1, 128>}, {pipeline_mode = #tpu.pipeline_mode<synchronous>, transform_indices = @transform_16, window_bounds = array<i64: 16, 256>}, {pipeline_mode = #tpu.pipeline_mode<synchronous>, transform_indices = @transform_17, window_bounds = array<i64: 1, 256>}, {pipeline_mode = #tpu.pipeline_mode<synchronous>, transform_indices = @transform_18, window_bounds = array<i64: 256, 128>}, {pipeline_mode = #tpu.pipeline_mode<synchronous>, transform_indices = @transform_19, window_bounds = array<i64: 1, 128>}, {pipeline_mode = #tpu.pipeline_mode<synchronous>, transform_indices = @transform_20, window_bounds = array<i64: 768, 1536>}, {pipeline_mode = #tpu.pipeline_mode<synchronous>, transform_indices = @transform_21, window_bounds = array<i64: 1, 1536>}, {pipeline_mode = #tpu.pipeline_mode<synchronous>, transform_indices = @transform_22, window_bounds = array<i64: 384, 256>}, {pipeline_mode = #tpu.pipeline_mode<synchronous>, transform_indices = @transform_23, window_bounds = array<i64: 1, 256>}, {pipeline_mode = #tpu.pipeline_mode<synchronous>, transform_indices = @transform_24, window_bounds = array<i64: 256, 128>}, {pipeline_mode = #tpu.pipeline_mode<synchronous>, transform_indices = @transform_25, window_bounds = array<i64: 1, 128>}, {pipeline_mode = #tpu.pipeline_mode<synchronous>, transform_indices = @transform_26, window_bounds = array<i64: 128, 128>}, {pipeline_mode = #tpu.pipeline_mode<synchronous>, transform_indices = @transform_27, window_bounds = array<i64: 1, 128>}, {transform_indices = @transform_28, window_bounds = array<i64: 1, 8, 128>}, {pipeline_mode = #tpu.pipeline_mode<synchronous>, transform_indices = @transform_29, window_bounds = array<i64: 8, 384>}, {pipeline_mode = #tpu.pipeline_mode<synchronous>, transform_indices = @transform_30, window_bounds = array<i64: 8, 384>}]} {
    %cst = arith.constant 0.000000e+00 : f32
    %0 = vector.broadcast %cst : f32 to vector<8x128xf32>
    %c0 = arith.constant 0 : index
    %c0_0 = arith.constant 0 : index
    %c0_1 = arith.constant 0 : index
    %1 = vector.load %arg30[%c0, %c0_0, %c0_1] : memref<1x8x128xf32, #tpu.memory_space<vmem>>, vector<1x8x128xf32>
    %2 = vector.shape_cast %1 : vector<1x8x128xf32> to vector<8x128xf32>
    %3 = vector.shape_cast %0 : vector<8x128xf32> to vector<1x8x128xf32>
    tpu.vector_store %arg30[%c0, %c0_0, %c0_1], %3 {strides = array<i32>} : memref<1x8x128xf32, #tpu.memory_space<vmem>>, vector<1x8x128xf32>,
    %c0_i32 = arith.constant 0 : i32
    %4 = arith.cmpi eq, %arg0, %c0_i32 : i32
    %5 = arith.extui %4 : i1 to i32
    %c0_i32_2 = arith.constant 0 : i32
    %6 = arith.cmpi ne, %5, %c0_i32_2 : i32
    scf.if %6 {
      %cst_7 = arith.constant 0.000000e+00 : f32
      %16 = vector.broadcast %cst_7 : f32 to vector<8x384xf32>
      %c0_8 = arith.constant 0 : index
      %c0_9 = arith.constant 0 : index
      %17 = vector.load %arg31[%c0_8, %c0_9] : memref<8x384xf32, #tpu.memory_space<vmem>>, vector<8x384xf32>
      tpu.vector_store %arg31[%c0_8, %c0_9], %16 {strides = array<i32>} : memref<8x384xf32, #tpu.memory_space<vmem>>, vector<8x384xf32>,
      %cst_10 = arith.constant 0.000000e+00 : f32
      %18 = vector.broadcast %cst_10 : f32 to vector<8x384xf32>
      %c0_11 = arith.constant 0 : index
      %c0_12 = arith.constant 0 : index
      %19 = vector.load %arg32[%c0_11, %c0_12] : memref<8x384xf32, #tpu.memory_space<vmem>>, vector<8x384xf32>
      tpu.vector_store %arg32[%c0_11, %c0_12], %18 {strides = array<i32>} : memref<8x384xf32, #tpu.memory_space<vmem>>, vector<8x384xf32>,
      %c0_13 = arith.constant 0 : index
      %c0_14 = arith.constant 0 : index
      %20 = vector.load %arg7[%c0_13, %c0_14] : memref<8x19xf32, #tpu.memory_space<vmem>>, vector<8x19xf32>
      %c0_15 = arith.constant 0 : index
      %c0_16 = arith.constant 0 : index
      %21 = vector.load %arg35[%c0_15, %c0_16] : memref<8x19xf32, #tpu.memory_space<vmem>>, vector<8x19xf32>
      tpu.vector_store %arg35[%c0_15, %c0_16], %20 {strides = array<i32>} : memref<8x19xf32, #tpu.memory_space<vmem>>, vector<8x19xf32>,
    } else {
    }
    %c4_i32 = arith.constant 4 : i32
    %7 = arith.cmpi slt, %arg0, %c4_i32 : i32
    %8 = arith.extui %7 : i1 to i32
    %c0_i32_3 = arith.constant 0 : i32
    %9 = arith.cmpi ne, %8, %c0_i32_3 : i32
    scf.if %9 {
      %16 = arith.index_cast %arg0 : i32 to index
      %c0_7 = arith.constant 0 : index
      %c0_8 = arith.constant 0 : index
      %17 = vector.load %arg2[%16, %c0_7, %c0_8] : memref<4x8x19xf32, #tpu.memory_space<vmem>>, vector<1x8x19xf32>
      %18 = vector.shape_cast %17 : vector<1x8x19xf32> to vector<8x19xf32>
      %c0_9 = arith.constant 0 : index
      %c0_10 = arith.constant 0 : index
      %19 = vector.load %arg33[%c0_9, %c0_10] : memref<8x19xf32, #tpu.memory_space<vmem>>, vector<8x19xf32>
      tpu.vector_store %arg33[%c0_9, %c0_10], %18 {strides = array<i32>} : memref<8x19xf32, #tpu.memory_space<vmem>>, vector<8x19xf32>,
      %20 = arith.index_cast %arg0 : i32 to index
      %c0_11 = arith.constant 0 : index
      %c0_12 = arith.constant 0 : index
      %21 = vector.load %arg3[%20, %c0_11, %c0_12] : memref<4x8x19xf32, #tpu.memory_space<vmem>>, vector<1x8x19xf32>
      %22 = vector.shape_cast %21 : vector<1x8x19xf32> to vector<8x19xf32>
      %c0_13 = arith.constant 0 : index
      %c0_14 = arith.constant 0 : index
      %23 = vector.load %arg34[%c0_13, %c0_14] : memref<8x19xf32, #tpu.memory_space<vmem>>, vector<8x19xf32>
      tpu.vector_store %arg34[%c0_13, %c0_14], %22 {strides = array<i32>} : memref<8x19xf32, #tpu.memory_space<vmem>>, vector<8x19xf32>,
    } else {
    }
    %c4_i32_4 = arith.constant 4 : i32
    %10 = arith.cmpi sge, %arg0, %c4_i32_4 : i32
    %11 = arith.extui %10 : i1 to i32
    %c0_i32_5 = arith.constant 0 : i32
    %12 = arith.cmpi ne, %11, %c0_i32_5 : i32
    scf.if %12 {
      %c0_7 = arith.constant 0 : index
      %c0_8 = arith.constant 0 : index
      %16 = vector.load %arg36[%c0_7, %c0_8] : memref<8x128xf32, #tpu.memory_space<vmem>>, vector<8x128xf32>
      %c0_9 = arith.constant 0 : index
      %c0_10 = arith.constant 0 : index
      %17 = vector.load %arg35[%c0_9, %c0_10] : memref<8x19xf32, #tpu.memory_space<vmem>>, vector<8x19xf32>
      %18 = vector.extract_strided_slice %16 {offsets = [0, 0], sizes = [8, 3], strides = [1, 1]} : vector<8x128xf32> to vector<8x3xf32>
      %19 = vector.extract_strided_slice %17 {offsets = [0, 0], sizes = [8, 3], strides = [1, 1]} : vector<8x19xf32> to vector<8x3xf32>
      %20 = arith.addf %19, %18 : vector<8x3xf32>
      %21 = vector.extract_strided_slice %16 {offsets = [0, 3], sizes = [8, 16], strides = [1, 1]} : vector<8x128xf32> to vector<8x16xf32>
      %22 = vector.extract_strided_slice %17 {offsets = [0, 3], sizes = [8, 16], strides = [1, 1]} : vector<8x19xf32> to vector<8x16xf32>
      %23 = arith.addf %21, %22 : vector<8x16xf32>
      %24 = arith.mulf %23, %23 : vector<8x16xf32>
      %c0_11 = arith.constant 0 : index
      %c0_12 = arith.constant 0 : index
      %25 = vector.load %arg8[%c0_11, %c0_12] : memref<16x16xf32, #tpu.memory_space<vmem>>, vector<16x16xf32>
      %cst_13 = arith.constant dense<0.000000e+00> : vector<8x16xf32>
      %26 = tpu.matmul %24, %25, %cst_13 {dimension_numbers = #tpu.dot_dimension_numbers<[1], [0], [0], [1], [0, 0, 1, 1], [], []>} : vector<8x16xf32>, vector<16x16xf32>, vector<8x16xf32> -> vector<8x16xf32>
      %27 = math.sqrt %26 : vector<8x16xf32>
      %cst_14 = arith.constant 9.99999997E-7 : f32
      %28 = vector.broadcast %cst_14 : f32 to vector<8x16xf32>
      %29 = arith.maximumf %27, %28 : vector<8x16xf32>
      %30 = arith.divf %23, %29 : vector<8x16xf32>
      %c0_15 = arith.constant 0 : index
      %c0_16 = arith.constant 0 : index
      %c0_17 = arith.constant 0 : index
      %31 = vector.load %arg30[%c0_15, %c0_16, %c0_17] : memref<1x8x128xf32, #tpu.memory_space<vmem>>, vector<1x8x3xf32>
      %32 = vector.shape_cast %31 : vector<1x8x3xf32> to vector<8x3xf32>
      %33 = vector.shape_cast %20 : vector<8x3xf32> to vector<1x8x3xf32>
      tpu.vector_store %arg30[%c0_15, %c0_16, %c0_17], %33 {strides = array<i32>} : memref<1x8x128xf32, #tpu.memory_space<vmem>>, vector<1x8x3xf32>,
      %c0_18 = arith.constant 0 : index
      %c0_19 = arith.constant 0 : index
      %c3 = arith.constant 3 : index
      %34 = vector.load %arg30[%c0_18, %c0_19, %c3] : memref<1x8x128xf32, #tpu.memory_space<vmem>>, vector<1x8x16xf32>
      %35 = vector.shape_cast %34 : vector<1x8x16xf32> to vector<8x16xf32>
      %36 = vector.shape_cast %30 : vector<8x16xf32> to vector<1x8x16xf32>
      tpu.vector_store %arg30[%c0_18, %c0_19, %c3], %36 {strides = array<i32>} : memref<1x8x128xf32, #tpu.memory_space<vmem>>, vector<1x8x16xf32>,
      %c0_20 = arith.constant 0 : index
      %c0_21 = arith.constant 0 : index
      %37 = vector.load %arg35[%c0_20, %c0_21] : memref<8x19xf32, #tpu.memory_space<vmem>>, vector<8x3xf32>
      tpu.vector_store %arg35[%c0_20, %c0_21], %20 {strides = array<i32>} : memref<8x19xf32, #tpu.memory_space<vmem>>, vector<8x3xf32>,
      %c0_22 = arith.constant 0 : index
      %c3_23 = arith.constant 3 : index
      %38 = vector.load %arg35[%c0_22, %c3_23] : memref<8x19xf32, #tpu.memory_space<vmem>>, vector<8x16xf32>
      tpu.vector_store %arg35[%c0_22, %c3_23], %30 {strides = array<i32>} : memref<8x19xf32, #tpu.memory_space<vmem>>, vector<8x16xf32>,
      %c0_24 = arith.constant 0 : index
      %c0_25 = arith.constant 0 : index
      %39 = vector.load %arg33[%c0_24, %c0_25] : memref<8x19xf32, #tpu.memory_space<vmem>>, vector<8x3xf32>
      tpu.vector_store %arg33[%c0_24, %c0_25], %18 {strides = array<i32>} : memref<8x19xf32, #tpu.memory_space<vmem>>, vector<8x3xf32>,
      %c0_26 = arith.constant 0 : index
      %c3_27 = arith.constant 3 : index
      %40 = vector.load %arg33[%c0_26, %c3_27] : memref<8x19xf32, #tpu.memory_space<vmem>>, vector<8x16xf32>
      tpu.vector_store %arg33[%c0_26, %c3_27], %30 {strides = array<i32>} : memref<8x19xf32, #tpu.memory_space<vmem>>, vector<8x16xf32>,
      %c0_28 = arith.constant 0 : index
      %c0_29 = arith.constant 0 : index
      %41 = vector.load %arg5[%c0_28, %c0_29] : memref<8x3xf32, #tpu.memory_space<vmem>>, vector<8x3xf32>
      %42 = arith.subf %41, %20 : vector<8x3xf32>
      %c0_30 = arith.constant 0 : index
      %c0_31 = arith.constant 0 : index
      %43 = vector.load %arg34[%c0_30, %c0_31] : memref<8x19xf32, #tpu.memory_space<vmem>>, vector<8x3xf32>
      tpu.vector_store %arg34[%c0_30, %c0_31], %42 {strides = array<i32>} : memref<8x19xf32, #tpu.memory_space<vmem>>, vector<8x3xf32>,
      %c0_32 = arith.constant 0 : index
      %c0_33 = arith.constant 0 : index
      %44 = vector.load %arg4[%c0_32, %c0_33] : memref<8x16xf32, #tpu.memory_space<vmem>>, vector<8x16xf32>
      %45 = arith.subf %44, %30 : vector<8x16xf32>
      %c0_34 = arith.constant 0 : index
      %c3_35 = arith.constant 3 : index
      %46 = vector.load %arg34[%c0_34, %c3_35] : memref<8x19xf32, #tpu.memory_space<vmem>>, vector<8x16xf32>
      tpu.vector_store %arg34[%c0_34, %c3_35], %45 {strides = array<i32>} : memref<8x19xf32, #tpu.memory_space<vmem>>, vector<8x16xf32>,
    } else {
    }
    %c14_i32 = arith.constant 14 : i32
    %13 = arith.cmpi slt, %arg0, %c14_i32 : i32
    %14 = arith.extui %13 : i1 to i32
    %c0_i32_6 = arith.constant 0 : i32
    %15 = arith.cmpi ne, %14, %c0_i32_6 : i32
    scf.if %15 {
      %c0_7 = arith.constant 0 : index
      %c0_8 = arith.constant 0 : index
      %c0_9 = arith.constant 0 : index
      %16 = vector.load %arg9[%c0_7, %c0_8, %c0_9] : memref<1x1x128xf32, #tpu.memory_space<vmem>>, vector<1x1x128xf32>
      %17 = vector.shape_cast %16 : vector<1x1x128xf32> to vector<1x128xf32>
      %18 = arith.index_cast %arg0 : i32 to index
      %19 = memref.load %arg1[%18] : memref<15xi32, #tpu.memory_space<smem>>
      %20 = arith.sitofp %19 : i32 to f32
      %cst_10 = arith.constant 5.000000e+00 : f32
      %21 = arith.subf %20, %cst_10 : f32
      %cst_11 = arith.constant 2.500000e+01 : f32
      %22 = arith.divf %21, %cst_11 : f32
      %cst_12 = arith.constant 0.000000e+00 : f32
      %cst_13 = arith.constant 1.000000e+00 : f32
      %23 = arith.maximumf %cst_12, %22 : f32
      %24 = arith.minimumf %cst_13, %23 : f32
      %c0_14 = arith.constant 0 : index
      %c0_15 = arith.constant 0 : index
      %25 = vector.load %arg33[%c0_14, %c0_15] : memref<8x19xf32, #tpu.memory_space<vmem>>, vector<8x19xf32>
      %26 = arith.truncf %25 : vector<8x19xf32> to vector<8x19xbf16>
      %c0_16 = arith.constant 0 : index
      %c0_17 = arith.constant 0 : index
      %27 = vector.load %arg10[%c0_16, %c0_17] : memref<19x256xbf16, #tpu.memory_space<vmem>>, vector<19x256xbf16>
      %cst_18 = arith.constant dense<0.000000e+00> : vector<8x256xf32>
      %28 = tpu.matmul %26, %27, %cst_18 {dimension_numbers = #tpu.dot_dimension_numbers<[1], [0], [0], [1], [0, 0, 1, 1], [], []>} : vector<8x19xbf16>, vector<19x256xbf16>, vector<8x256xf32> -> vector<8x256xf32>
      %c0_19 = arith.constant 0 : index
      %c0_20 = arith.constant 0 : index
      %29 = vector.load %arg11[%c0_19, %c0_20] : memref<1x256xf32, #tpu.memory_space<vmem>>, vector<1x256xf32>
      %30 = vector.broadcast %29 : vector<1x256xf32> to vector<8x256xf32>
      %31 = arith.addf %28, %30 : vector<8x256xf32>
      %cst_21 = arith.constant 1.000000e+00 : f32
      %32 = vector.broadcast %cst_21 : f32 to vector<8x256xf32>
      %33 = arith.addf %31, %32 : vector<8x256xf32>
      %cst_22 = arith.constant 1.000000e-01 : f32
      %34 = vector.broadcast %cst_22 : f32 to vector<8x256xf32>
      %35 = arith.mulf %34, %33 : vector<8x256xf32>
      %cst_23 = arith.constant 1.000000e+00 : f32
      %36 = vector.broadcast %cst_23 : f32 to vector<8x256xf32>
      %37 = arith.subf %35, %36 : vector<8x256xf32>
      %cst_24 = arith.constant 1.000000e+00 : f32
      %38 = vector.broadcast %cst_24 : f32 to vector<8x256xf32>
      %39 = arith.subf %31, %38 : vector<8x256xf32>
      %cst_25 = arith.constant 1.000000e-01 : f32
      %40 = vector.broadcast %cst_25 : f32 to vector<8x256xf32>
      %41 = arith.mulf %40, %39 : vector<8x256xf32>
      %cst_26 = arith.constant 1.000000e+00 : f32
      %42 = vector.broadcast %cst_26 : f32 to vector<8x256xf32>
      %43 = arith.addf %41, %42 : vector<8x256xf32>
      %44 = arith.subf %31, %43 : vector<8x256xf32>
      %cst_27 = arith.constant 0.000000e+00 : f32
      %45 = vector.broadcast %cst_27 : f32 to vector<8x256xf32>
      %46 = arith.maximumf %44, %45 : vector<8x256xf32>
      %47 = arith.subf %31, %46 : vector<8x256xf32>
      %48 = arith.subf %37, %47 : vector<8x256xf32>
      %cst_28 = arith.constant 0.000000e+00 : f32
      %49 = vector.broadcast %cst_28 : f32 to vector<8x256xf32>
      %50 = arith.maximumf %48, %49 : vector<8x256xf32>
      %51 = arith.addf %50, %47 : vector<8x256xf32>
      %52 = arith.truncf %51 : vector<8x256xf32> to vector<8x256xbf16>
      %c0_29 = arith.constant 0 : index
      %c0_30 = arith.constant 0 : index
      %53 = vector.load %arg12[%c0_29, %c0_30] : memref<256x128xbf16, #tpu.memory_space<vmem>>, vector<256x128xbf16>
      %cst_31 = arith.constant dense<0.000000e+00> : vector<8x128xf32>
      %54 = tpu.matmul %52, %53, %cst_31 {dimension_numbers = #tpu.dot_dimension_numbers<[1], [0], [0], [1], [0, 0, 1, 1], [], []>} : vector<8x256xbf16>, vector<256x128xbf16>, vector<8x128xf32> -> vector<8x128xf32>
      %c0_32 = arith.constant 0 : index
      %c0_33 = arith.constant 0 : index
      %55 = vector.load %arg13[%c0_32, %c0_33] : memref<1x128xf32, #tpu.memory_space<vmem>>, vector<1x128xf32>
      %56 = vector.broadcast %55 : vector<1x128xf32> to vector<8x128xf32>
      %57 = arith.addf %54, %56 : vector<8x128xf32>
      %58 = vector.broadcast %17 : vector<1x128xf32> to vector<8x128xf32>
      %59 = arith.addf %57, %58 : vector<8x128xf32>
      %c0_34 = arith.constant 0 : index
      %c0_35 = arith.constant 0 : index
      %60 = vector.load %arg34[%c0_34, %c0_35] : memref<8x19xf32, #tpu.memory_space<vmem>>, vector<8x19xf32>
      %61 = arith.truncf %60 : vector<8x19xf32> to vector<8x19xbf16>
      %c0_36 = arith.constant 0 : index
      %c0_37 = arith.constant 0 : index
      %62 = vector.load %arg14[%c0_36, %c0_37] : memref<19x256xbf16, #tpu.memory_space<vmem>>, vector<19x256xbf16>
      %cst_38 = arith.constant dense<0.000000e+00> : vector<8x256xf32>
      %63 = tpu.matmul %61, %62, %cst_38 {dimension_numbers = #tpu.dot_dimension_numbers<[1], [0], [0], [1], [0, 0, 1, 1], [], []>} : vector<8x19xbf16>, vector<19x256xbf16>, vector<8x256xf32> -> vector<8x256xf32>
      %c0_39 = arith.constant 0 : index
      %c0_40 = arith.constant 0 : index
      %64 = vector.load %arg15[%c0_39, %c0_40] : memref<1x256xf32, #tpu.memory_space<vmem>>, vector<1x256xf32>
      %65 = vector.broadcast %64 : vector<1x256xf32> to vector<8x256xf32>
      %66 = arith.addf %63, %65 : vector<8x256xf32>
      %cst_41 = arith.constant 1.000000e+00 : f32
      %67 = vector.broadcast %cst_41 : f32 to vector<8x256xf32>
      %68 = arith.addf %66, %67 : vector<8x256xf32>
      %cst_42 = arith.constant 1.000000e-01 : f32
      %69 = vector.broadcast %cst_42 : f32 to vector<8x256xf32>
      %70 = arith.mulf %69, %68 : vector<8x256xf32>
      %cst_43 = arith.constant 1.000000e+00 : f32
      %71 = vector.broadcast %cst_43 : f32 to vector<8x256xf32>
      %72 = arith.subf %70, %71 : vector<8x256xf32>
      %cst_44 = arith.constant 1.000000e+00 : f32
      %73 = vector.broadcast %cst_44 : f32 to vector<8x256xf32>
      %74 = arith.subf %66, %73 : vector<8x256xf32>
      %cst_45 = arith.constant 1.000000e-01 : f32
      %75 = vector.broadcast %cst_45 : f32 to vector<8x256xf32>
      %76 = arith.mulf %75, %74 : vector<8x256xf32>
      %cst_46 = arith.constant 1.000000e+00 : f32
      %77 = vector.broadcast %cst_46 : f32 to vector<8x256xf32>
      %78 = arith.addf %76, %77 : vector<8x256xf32>
      %79 = arith.subf %66, %78 : vector<8x256xf32>
      %cst_47 = arith.constant 0.000000e+00 : f32
      %80 = vector.broadcast %cst_47 : f32 to vector<8x256xf32>
      %81 = arith.maximumf %79, %80 : vector<8x256xf32>
      %82 = arith.subf %66, %81 : vector<8x256xf32>
      %83 = arith.subf %72, %82 : vector<8x256xf32>
      %cst_48 = arith.constant 0.000000e+00 : f32
      %84 = vector.broadcast %cst_48 : f32 to vector<8x256xf32>
      %85 = arith.maximumf %83, %84 : vector<8x256xf32>
      %86 = arith.addf %85, %82 : vector<8x256xf32>
      %87 = arith.truncf %86 : vector<8x256xf32> to vector<8x256xbf16>
      %c0_49 = arith.constant 0 : index
      %c0_50 = arith.constant 0 : index
      %88 = vector.load %arg16[%c0_49, %c0_50] : memref<256x128xbf16, #tpu.memory_space<vmem>>, vector<256x128xbf16>
      %cst_51 = arith.constant dense<0.000000e+00> : vector<8x128xf32>
      %89 = tpu.matmul %87, %88, %cst_51 {dimension_numbers = #tpu.dot_dimension_numbers<[1], [0], [0], [1], [0, 0, 1, 1], [], []>} : vector<8x256xbf16>, vector<256x128xbf16>, vector<8x128xf32> -> vector<8x128xf32>
      %c0_52 = arith.constant 0 : index
      %c0_53 = arith.constant 0 : index
      %90 = vector.load %arg17[%c0_52, %c0_53] : memref<1x128xf32, #tpu.memory_space<vmem>>, vector<1x128xf32>
      %91 = vector.broadcast %90 : vector<1x128xf32> to vector<8x128xf32>
      %92 = arith.addf %89, %91 : vector<8x128xf32>
      %93 = vector.broadcast %17 : vector<1x128xf32> to vector<8x128xf32>
      %94 = arith.addf %92, %93 : vector<8x128xf32>
      %c0_54 = arith.constant 0 : index
      %c0_55 = arith.constant 0 : index
      %95 = vector.load %arg4[%c0_54, %c0_55] : memref<8x16xf32, #tpu.memory_space<vmem>>, vector<8x16xf32>
      %96 = arith.truncf %95 : vector<8x16xf32> to vector<8x16xbf16>
      %c0_56 = arith.constant 0 : index
      %c0_57 = arith.constant 0 : index
      %97 = vector.load %arg18[%c0_56, %c0_57] : memref<16x256xbf16, #tpu.memory_space<vmem>>, vector<16x256xbf16>
      %cst_58 = arith.constant dense<0.000000e+00> : vector<8x256xf32>
      %98 = tpu.matmul %96, %97, %cst_58 {dimension_numbers = #tpu.dot_dimension_numbers<[1], [0], [0], [1], [0, 0, 1, 1], [], []>} : vector<8x16xbf16>, vector<16x256xbf16>, vector<8x256xf32> -> vector<8x256xf32>
      %c0_59 = arith.constant 0 : index
      %c0_60 = arith.constant 0 : index
      %99 = vector.load %arg19[%c0_59, %c0_60] : memref<1x256xf32, #tpu.memory_space<vmem>>, vector<1x256xf32>
      %100 = vector.broadcast %99 : vector<1x256xf32> to vector<8x256xf32>
      %101 = arith.addf %98, %100 : vector<8x256xf32>
      %cst_61 = arith.constant 1.000000e+00 : f32
      %102 = vector.broadcast %cst_61 : f32 to vector<8x256xf32>
      %103 = arith.addf %101, %102 : vector<8x256xf32>
      %cst_62 = arith.constant 1.000000e-01 : f32
      %104 = vector.broadcast %cst_62 : f32 to vector<8x256xf32>
      %105 = arith.mulf %104, %103 : vector<8x256xf32>
      %cst_63 = arith.constant 1.000000e+00 : f32
      %106 = vector.broadcast %cst_63 : f32 to vector<8x256xf32>
      %107 = arith.subf %105, %106 : vector<8x256xf32>
      %cst_64 = arith.constant 1.000000e+00 : f32
      %108 = vector.broadcast %cst_64 : f32 to vector<8x256xf32>
      %109 = arith.subf %101, %108 : vector<8x256xf32>
      %cst_65 = arith.constant 1.000000e-01 : f32
      %110 = vector.broadcast %cst_65 : f32 to vector<8x256xf32>
      %111 = arith.mulf %110, %109 : vector<8x256xf32>
      %cst_66 = arith.constant 1.000000e+00 : f32
      %112 = vector.broadcast %cst_66 : f32 to vector<8x256xf32>
      %113 = arith.addf %111, %112 : vector<8x256xf32>
      %114 = arith.subf %101, %113 : vector<8x256xf32>
      %cst_67 = arith.constant 0.000000e+00 : f32
      %115 = vector.broadcast %cst_67 : f32 to vector<8x256xf32>
      %116 = arith.maximumf %114, %115 : vector<8x256xf32>
      %117 = arith.subf %101, %116 : vector<8x256xf32>
      %118 = arith.subf %107, %117 : vector<8x256xf32>
      %cst_68 = arith.constant 0.000000e+00 : f32
      %119 = vector.broadcast %cst_68 : f32 to vector<8x256xf32>
      %120 = arith.maximumf %118, %119 : vector<8x256xf32>
      %121 = arith.addf %120, %117 : vector<8x256xf32>
      %122 = arith.truncf %121 : vector<8x256xf32> to vector<8x256xbf16>
      %c0_69 = arith.constant 0 : index
      %c0_70 = arith.constant 0 : index
      %123 = vector.load %arg20[%c0_69, %c0_70] : memref<256x128xbf16, #tpu.memory_space<vmem>>, vector<256x128xbf16>
      %cst_71 = arith.constant dense<0.000000e+00> : vector<8x128xf32>
      %124 = tpu.matmul %122, %123, %cst_71 {dimension_numbers = #tpu.dot_dimension_numbers<[1], [0], [0], [1], [0, 0, 1, 1], [], []>} : vector<8x256xbf16>, vector<256x128xbf16>, vector<8x128xf32> -> vector<8x128xf32>
      %c0_72 = arith.constant 0 : index
      %c0_73 = arith.constant 0 : index
      %125 = vector.load %arg21[%c0_72, %c0_73] : memref<1x128xf32, #tpu.memory_space<vmem>>, vector<1x128xf32>
      %126 = vector.broadcast %125 : vector<1x128xf32> to vector<8x128xf32>
      %127 = arith.addf %124, %126 : vector<8x128xf32>
      %128 = vector.broadcast %17 : vector<1x128xf32> to vector<8x128xf32>
      %129 = arith.addf %127, %128 : vector<8x128xf32>
      %c0_74 = arith.constant 0 : index
      %c0_75 = arith.constant 0 : index
      %130 = vector.load %arg6[%c0_74, %c0_75] : memref<8x256xf32, #tpu.memory_space<vmem>>, vector<8x256xf32>
      %131 = vector.broadcast %24 : f32 to vector<8x256xf32>
      %132 = arith.mulf %130, %131 : vector<8x256xf32>
      %133 = vector.extract_strided_slice %132 {offsets = [0, 0], sizes = [8, 128], strides = [1, 1]} : vector<8x256xf32> to vector<8x128xf32>
      %134 = arith.addf %94, %133 : vector<8x128xf32>
      %135 = vector.extract_strided_slice %132 {offsets = [0, 128], sizes = [8, 128], strides = [1, 1]} : vector<8x256xf32> to vector<8x128xf32>
      %136 = arith.addf %129, %135 : vector<8x128xf32>
      %c0_76 = arith.constant 0 : index
      %c0_77 = arith.constant 0 : index
      %137 = vector.load %arg31[%c0_76, %c0_77] : memref<8x384xf32, #tpu.memory_space<vmem>>, vector<8x384xf32>
      %138 = tpu.concatenate %59, %134, %136, %137 in 1 : vector<8x128xf32>, vector<8x128xf32>, vector<8x128xf32>, vector<8x384xf32> -> vector<8x768xf32>
      %139 = arith.truncf %138 : vector<8x768xf32> to vector<8x768xbf16>
      %c0_78 = arith.constant 0 : index
      %c0_79 = arith.constant 0 : index
      %140 = vector.load %arg22[%c0_78, %c0_79] : memref<768x1536xbf16, #tpu.memory_space<vmem>>, vector<768x1536xbf16>
      %cst_80 = arith.constant dense<0.000000e+00> : vector<8x1536xf32>
      %141 = tpu.matmul %139, %140, %cst_80 {dimension_numbers = #tpu.dot_dimension_numbers<[1], [0], [0], [1], [0, 0, 1, 1], [], []>} : vector<8x768xbf16>, vector<768x1536xbf16>, vector<8x1536xf32> -> vector<8x1536xf32>
      %c0_81 = arith.constant 0 : index
      %c0_82 = arith.constant 0 : index
      %142 = vector.load %arg23[%c0_81, %c0_82] : memref<1x1536xf32, #tpu.memory_space<vmem>>, vector<1x1536xf32>
      %143 = vector.broadcast %142 : vector<1x1536xf32> to vector<8x1536xf32>
      %144 = arith.addf %141, %143 : vector<8x1536xf32>
      %145 = vector.extract_strided_slice %144 {offsets = [0, 0], sizes = [8, 384], strides = [1, 1]} : vector<8x1536xf32> to vector<8x384xf32>
      %146 = arith.negf %145 : vector<8x384xf32>
      %147 = math.exp %146 : vector<8x384xf32>
      %cst_83 = arith.constant 1.000000e+00 : f32
      %148 = vector.broadcast %cst_83 : f32 to vector<8x384xf32>
      %149 = arith.addf %148, %147 : vector<8x384xf32>
      %150 = arith.divf %148, %149 : vector<8x384xf32>
      %151 = vector.extract_strided_slice %144 {offsets = [0, 384], sizes = [8, 384], strides = [1, 1]} : vector<8x1536xf32> to vector<8x384xf32>
      %152 = arith.negf %151 : vector<8x384xf32>
      %153 = math.exp %152 : vector<8x384xf32>
      %cst_84 = arith.constant 1.000000e+00 : f32
      %154 = vector.broadcast %cst_84 : f32 to vector<8x384xf32>
      %155 = arith.addf %154, %153 : vector<8x384xf32>
      %156 = arith.divf %154, %155 : vector<8x384xf32>
      %157 = vector.extract_strided_slice %144 {offsets = [0, 768], sizes = [8, 384], strides = [1, 1]} : vector<8x1536xf32> to vector<8x384xf32>
      %158 = math.tanh %157 : vector<8x384xf32>
      %159 = vector.extract_strided_slice %144 {offsets = [0, 1152], sizes = [8, 384], strides = [1, 1]} : vector<8x1536xf32> to vector<8x384xf32>
      %160 = arith.negf %159 : vector<8x384xf32>
      %161 = math.exp %160 : vector<8x384xf32>
      %cst_85 = arith.constant 1.000000e+00 : f32
      %162 = vector.broadcast %cst_85 : f32 to vector<8x384xf32>
      %163 = arith.addf %162, %161 : vector<8x384xf32>
      %164 = arith.divf %162, %163 : vector<8x384xf32>
      %c0_86 = arith.constant 0 : index
      %c0_87 = arith.constant 0 : index
      %165 = vector.load %arg32[%c0_86, %c0_87] : memref<8x384xf32, #tpu.memory_space<vmem>>, vector<8x384xf32>
      %166 = arith.mulf %156, %165 : vector<8x384xf32>
      %167 = arith.mulf %150, %158 : vector<8x384xf32>
      %168 = arith.addf %166, %167 : vector<8x384xf32>
      %169 = math.tanh %168 : vector<8x384xf32>
      %170 = arith.mulf %164, %169 : vector<8x384xf32>
      %c0_88 = arith.constant 0 : index
      %c0_89 = arith.constant 0 : index
      %171 = vector.load %arg31[%c0_88, %c0_89] : memref<8x384xf32, #tpu.memory_space<vmem>>, vector<8x384xf32>
      tpu.vector_store %arg31[%c0_88, %c0_89], %170 {strides = array<i32>} : memref<8x384xf32, #tpu.memory_space<vmem>>, vector<8x384xf32>,
      %c0_90 = arith.constant 0 : index
      %c0_91 = arith.constant 0 : index
      %172 = vector.load %arg32[%c0_90, %c0_91] : memref<8x384xf32, #tpu.memory_space<vmem>>, vector<8x384xf32>
      tpu.vector_store %arg32[%c0_90, %c0_91], %168 {strides = array<i32>} : memref<8x384xf32, #tpu.memory_space<vmem>>, vector<8x384xf32>,
      %173 = arith.truncf %170 : vector<8x384xf32> to vector<8x384xbf16>
      %c0_92 = arith.constant 0 : index
      %c0_93 = arith.constant 0 : index
      %174 = vector.load %arg24[%c0_92, %c0_93] : memref<384x256xbf16, #tpu.memory_space<vmem>>, vector<384x256xbf16>
      %cst_94 = arith.constant dense<0.000000e+00> : vector<8x256xf32>
      %175 = tpu.matmul %173, %174, %cst_94 {dimension_numbers = #tpu.dot_dimension_numbers<[1], [0], [0], [1], [0, 0, 1, 1], [], []>} : vector<8x384xbf16>, vector<384x256xbf16>, vector<8x256xf32> -> vector<8x256xf32>
      %c0_95 = arith.constant 0 : index
      %c0_96 = arith.constant 0 : index
      %176 = vector.load %arg25[%c0_95, %c0_96] : memref<1x256xf32, #tpu.memory_space<vmem>>, vector<1x256xf32>
      %177 = vector.broadcast %176 : vector<1x256xf32> to vector<8x256xf32>
      %178 = arith.addf %175, %177 : vector<8x256xf32>
      %cst_97 = arith.constant 1.000000e+00 : f32
      %179 = vector.broadcast %cst_97 : f32 to vector<8x256xf32>
      %180 = arith.addf %178, %179 : vector<8x256xf32>
      %cst_98 = arith.constant 1.000000e-01 : f32
      %181 = vector.broadcast %cst_98 : f32 to vector<8x256xf32>
      %182 = arith.mulf %181, %180 : vector<8x256xf32>
      %cst_99 = arith.constant 1.000000e+00 : f32
      %183 = vector.broadcast %cst_99 : f32 to vector<8x256xf32>
      %184 = arith.subf %182, %183 : vector<8x256xf32>
      %cst_100 = arith.constant 1.000000e+00 : f32
      %185 = vector.broadcast %cst_100 : f32 to vector<8x256xf32>
      %186 = arith.subf %178, %185 : vector<8x256xf32>
      %cst_101 = arith.constant 1.000000e-01 : f32
      %187 = vector.broadcast %cst_101 : f32 to vector<8x256xf32>
      %188 = arith.mulf %187, %186 : vector<8x256xf32>
      %cst_102 = arith.constant 1.000000e+00 : f32
      %189 = vector.broadcast %cst_102 : f32 to vector<8x256xf32>
      %190 = arith.addf %188, %189 : vector<8x256xf32>
      %191 = arith.subf %178, %190 : vector<8x256xf32>
      %cst_103 = arith.constant 0.000000e+00 : f32
      %192 = vector.broadcast %cst_103 : f32 to vector<8x256xf32>
      %193 = arith.maximumf %191, %192 : vector<8x256xf32>
      %194 = arith.subf %178, %193 : vector<8x256xf32>
      %195 = arith.subf %184, %194 : vector<8x256xf32>
      %cst_104 = arith.constant 0.000000e+00 : f32
      %196 = vector.broadcast %cst_104 : f32 to vector<8x256xf32>
      %197 = arith.maximumf %195, %196 : vector<8x256xf32>
      %198 = arith.addf %197, %194 : vector<8x256xf32>
      %199 = arith.truncf %198 : vector<8x256xf32> to vector<8x256xbf16>
      %c0_105 = arith.constant 0 : index
      %c0_106 = arith.constant 0 : index
      %200 = vector.load %arg26[%c0_105, %c0_106] : memref<256x128xbf16, #tpu.memory_space<vmem>>, vector<256x128xbf16>
      %cst_107 = arith.constant dense<0.000000e+00> : vector<8x128xf32>
      %201 = tpu.matmul %199, %200, %cst_107 {dimension_numbers = #tpu.dot_dimension_numbers<[1], [0], [0], [1], [0, 0, 1, 1], [], []>} : vector<8x256xbf16>, vector<256x128xbf16>, vector<8x128xf32> -> vector<8x128xf32>
      %c0_108 = arith.constant 0 : index
      %c0_109 = arith.constant 0 : index
      %202 = vector.load %arg27[%c0_108, %c0_109] : memref<1x128xf32, #tpu.memory_space<vmem>>, vector<1x128xf32>
      %203 = vector.broadcast %202 : vector<1x128xf32> to vector<8x128xf32>
      %204 = arith.addf %201, %203 : vector<8x128xf32>
      %cst_110 = arith.constant 1.000000e+00 : f32
      %205 = vector.broadcast %cst_110 : f32 to vector<8x128xf32>
      %206 = arith.addf %204, %205 : vector<8x128xf32>
      %cst_111 = arith.constant 1.000000e-01 : f32
      %207 = vector.broadcast %cst_111 : f32 to vector<8x128xf32>
      %208 = arith.mulf %207, %206 : vector<8x128xf32>
      %cst_112 = arith.constant 1.000000e+00 : f32
      %209 = vector.broadcast %cst_112 : f32 to vector<8x128xf32>
      %210 = arith.subf %208, %209 : vector<8x128xf32>
      %cst_113 = arith.constant 1.000000e+00 : f32
      %211 = vector.broadcast %cst_113 : f32 to vector<8x128xf32>
      %212 = arith.subf %204, %211 : vector<8x128xf32>
      %cst_114 = arith.constant 1.000000e-01 : f32
      %213 = vector.broadcast %cst_114 : f32 to vector<8x128xf32>
      %214 = arith.mulf %213, %212 : vector<8x128xf32>
      %cst_115 = arith.constant 1.000000e+00 : f32
      %215 = vector.broadcast %cst_115 : f32 to vector<8x128xf32>
      %216 = arith.addf %214, %215 : vector<8x128xf32>
      %217 = arith.subf %204, %216 : vector<8x128xf32>
      %cst_116 = arith.constant 0.000000e+00 : f32
      %218 = vector.broadcast %cst_116 : f32 to vector<8x128xf32>
      %219 = arith.maximumf %217, %218 : vector<8x128xf32>
      %220 = arith.subf %204, %219 : vector<8x128xf32>
      %221 = arith.subf %210, %220 : vector<8x128xf32>
      %cst_117 = arith.constant 0.000000e+00 : f32
      %222 = vector.broadcast %cst_117 : f32 to vector<8x128xf32>
      %223 = arith.maximumf %221, %222 : vector<8x128xf32>
      %224 = arith.addf %223, %220 : vector<8x128xf32>
      %225 = arith.truncf %224 : vector<8x128xf32> to vector<8x128xbf16>
      %c0_118 = arith.constant 0 : index
      %c0_119 = arith.constant 0 : index
      %226 = vector.load %arg28[%c0_118, %c0_119] : memref<128x128xbf16, #tpu.memory_space<vmem>>, vector<128x128xbf16>
      %cst_120 = arith.constant dense<0.000000e+00> : vector<8x128xf32>
      %227 = tpu.matmul %225, %226, %cst_120 {dimension_numbers = #tpu.dot_dimension_numbers<[1], [0], [0], [1], [0, 0, 1, 1], [], []>} : vector<8x128xbf16>, vector<128x128xbf16>, vector<8x128xf32> -> vector<8x128xf32>
      %c0_121 = arith.constant 0 : index
      %c0_122 = arith.constant 0 : index
      %228 = vector.load %arg29[%c0_121, %c0_122] : memref<1x128xf32, #tpu.memory_space<vmem>>, vector<1x128xf32>
      %229 = vector.broadcast %228 : vector<1x128xf32> to vector<8x128xf32>
      %230 = arith.addf %227, %229 : vector<8x128xf32>
      %c0_123 = arith.constant 0 : index
      %c0_124 = arith.constant 0 : index
      %231 = vector.load %arg36[%c0_123, %c0_124] : memref<8x128xf32, #tpu.memory_space<vmem>>, vector<8x128xf32>
      tpu.vector_store %arg36[%c0_123, %c0_124], %230 {strides = array<i32>} : memref<8x128xf32, #tpu.memory_space<vmem>>, vector<8x128xf32>,
    } else {
    }
    return
  }
  func.func @transform_0(%arg0: i32, %arg1: memref<15xi32, #tpu.memory_space<smem>>) -> (i32, i32, i32) {
    %c0_i32 = arith.constant 0 : i32
    %c0_i32_0 = arith.constant 0 : i32
    %c0_i32_1 = arith.constant 0 : i32
    %c0_i32_2 = arith.constant 0 : i32
    return %c0_i32, %c0_i32_0, %c0_i32_1 : i32, i32, i32
  }
  func.func @transform_1(%arg0: i32, %arg1: memref<15xi32, #tpu.memory_space<smem>>) -> (i32, i32, i32) {
    %c0_i32 = arith.constant 0 : i32
    %c0_i32_0 = arith.constant 0 : i32
    %c0_i32_1 = arith.constant 0 : i32
    %c0_i32_2 = arith.constant 0 : i32
    return %c0_i32, %c0_i32_0, %c0_i32_1 : i32, i32, i32
  }
  func.func @transform_2(%arg0: i32, %arg1: memref<15xi32, #tpu.memory_space<smem>>) -> (i32, i32) {
    %c0_i32 = arith.constant 0 : i32
    %c0_i32_0 = arith.constant 0 : i32
    %c0_i32_1 = arith.constant 0 : i32
    return %c0_i32, %c0_i32_0 : i32, i32
  }
  func.func @transform_3(%arg0: i32, %arg1: memref<15xi32, #tpu.memory_space<smem>>) -> (i32, i32) {
    %c0_i32 = arith.constant 0 : i32
    %c0_i32_0 = arith.constant 0 : i32
    %c0_i32_1 = arith.constant 0 : i32
    return %c0_i32, %c0_i32_0 : i32, i32
  }
  func.func @transform_4(%arg0: i32, %arg1: memref<15xi32, #tpu.memory_space<smem>>) -> (i32, i32) {
    %c0_i32 = arith.constant 0 : i32
    %c0_i32_0 = arith.constant 0 : i32
    %c0_i32_1 = arith.constant 0 : i32
    return %c0_i32, %c0_i32_0 : i32, i32
  }
  func.func @transform_5(%arg0: i32, %arg1: memref<15xi32, #tpu.memory_space<smem>>) -> (i32, i32) {
    %c0_i32 = arith.constant 0 : i32
    %c0_i32_0 = arith.constant 0 : i32
    %c0_i32_1 = arith.constant 0 : i32
    return %c0_i32, %c0_i32_0 : i32, i32
  }
  func.func @transform_6(%arg0: i32, %arg1: memref<15xi32, #tpu.memory_space<smem>>) -> (i32, i32) {
    %c0_i32 = arith.constant 0 : i32
    %c0_i32_0 = arith.constant 0 : i32
    %c0_i32_1 = arith.constant 0 : i32
    return %c0_i32, %c0_i32_0 : i32, i32
  }
  func.func @transform_7(%arg0: i32, %arg1: memref<15xi32, #tpu.memory_space<smem>>) -> (i32, i32, i32) {
    %0 = arith.index_cast %arg0 : i32 to index
    %1 = memref.load %arg1[%0] : memref<15xi32, #tpu.memory_space<smem>>
    %c0_i32 = arith.constant 0 : i32
    %c0_i32_0 = arith.constant 0 : i32
    %c0_i32_1 = arith.constant 0 : i32
    return %1, %c0_i32, %c0_i32_0 : i32, i32, i32
  }
  func.func @transform_8(%arg0: i32, %arg1: memref<15xi32, #tpu.memory_space<smem>>) -> (i32, i32) {
    %c0_i32 = arith.constant 0 : i32
    %c0_i32_0 = arith.constant 0 : i32
    %c0_i32_1 = arith.constant 0 : i32
    return %c0_i32, %c0_i32_0 : i32, i32
  }
  func.func @transform_9(%arg0: i32, %arg1: memref<15xi32, #tpu.memory_space<smem>>) -> (i32, i32) {
    %c0_i32 = arith.constant 0 : i32
    %c0_i32_0 = arith.constant 0 : i32
    %c0_i32_1 = arith.constant 0 : i32
    return %c0_i32, %c0_i32_0 : i32, i32
  }
  func.func @transform_10(%arg0: i32, %arg1: memref<15xi32, #tpu.memory_space<smem>>) -> (i32, i32) {
    %c0_i32 = arith.constant 0 : i32
    %c0_i32_0 = arith.constant 0 : i32
    %c0_i32_1 = arith.constant 0 : i32
    return %c0_i32, %c0_i32_0 : i32, i32
  }
  func.func @transform_11(%arg0: i32, %arg1: memref<15xi32, #tpu.memory_space<smem>>) -> (i32, i32) {
    %c0_i32 = arith.constant 0 : i32
    %c0_i32_0 = arith.constant 0 : i32
    %c0_i32_1 = arith.constant 0 : i32
    return %c0_i32, %c0_i32_0 : i32, i32
  }
  func.func @transform_12(%arg0: i32, %arg1: memref<15xi32, #tpu.memory_space<smem>>) -> (i32, i32) {
    %c0_i32 = arith.constant 0 : i32
    %c0_i32_0 = arith.constant 0 : i32
    %c0_i32_1 = arith.constant 0 : i32
    return %c0_i32, %c0_i32_0 : i32, i32
  }
  func.func @transform_13(%arg0: i32, %arg1: memref<15xi32, #tpu.memory_space<smem>>) -> (i32, i32) {
    %c0_i32 = arith.constant 0 : i32
    %c0_i32_0 = arith.constant 0 : i32
    %c0_i32_1 = arith.constant 0 : i32
    return %c0_i32, %c0_i32_0 : i32, i32
  }
  func.func @transform_14(%arg0: i32, %arg1: memref<15xi32, #tpu.memory_space<smem>>) -> (i32, i32) {
    %c0_i32 = arith.constant 0 : i32
    %c0_i32_0 = arith.constant 0 : i32
    %c0_i32_1 = arith.constant 0 : i32
    return %c0_i32, %c0_i32_0 : i32, i32
  }
  func.func @transform_15(%arg0: i32, %arg1: memref<15xi32, #tpu.memory_space<smem>>) -> (i32, i32) {
    %c0_i32 = arith.constant 0 : i32
    %c0_i32_0 = arith.constant 0 : i32
    %c0_i32_1 = arith.constant 0 : i32
    return %c0_i32, %c0_i32_0 : i32, i32
  }
  func.func @transform_16(%arg0: i32, %arg1: memref<15xi32, #tpu.memory_space<smem>>) -> (i32, i32) {
    %c0_i32 = arith.constant 0 : i32
    %c0_i32_0 = arith.constant 0 : i32
    %c0_i32_1 = arith.constant 0 : i32
    return %c0_i32, %c0_i32_0 : i32, i32
  }
  func.func @transform_17(%arg0: i32, %arg1: memref<15xi32, #tpu.memory_space<smem>>) -> (i32, i32) {
    %c0_i32 = arith.constant 0 : i32
    %c0_i32_0 = arith.constant 0 : i32
    %c0_i32_1 = arith.constant 0 : i32
    return %c0_i32, %c0_i32_0 : i32, i32
  }
  func.func @transform_18(%arg0: i32, %arg1: memref<15xi32, #tpu.memory_space<smem>>) -> (i32, i32) {
    %c0_i32 = arith.constant 0 : i32
    %c0_i32_0 = arith.constant 0 : i32
    %c0_i32_1 = arith.constant 0 : i32
    return %c0_i32, %c0_i32_0 : i32, i32
  }
  func.func @transform_19(%arg0: i32, %arg1: memref<15xi32, #tpu.memory_space<smem>>) -> (i32, i32) {
    %c0_i32 = arith.constant 0 : i32
    %c0_i32_0 = arith.constant 0 : i32
    %c0_i32_1 = arith.constant 0 : i32
    return %c0_i32, %c0_i32_0 : i32, i32
  }
  func.func @transform_20(%arg0: i32, %arg1: memref<15xi32, #tpu.memory_space<smem>>) -> (i32, i32) {
    %c0_i32 = arith.constant 0 : i32
    %c0_i32_0 = arith.constant 0 : i32
    %c0_i32_1 = arith.constant 0 : i32
    return %c0_i32, %c0_i32_0 : i32, i32
  }
  func.func @transform_21(%arg0: i32, %arg1: memref<15xi32, #tpu.memory_space<smem>>) -> (i32, i32) {
    %c0_i32 = arith.constant 0 : i32
    %c0_i32_0 = arith.constant 0 : i32
    %c0_i32_1 = arith.constant 0 : i32
    return %c0_i32, %c0_i32_0 : i32, i32
  }
  func.func @transform_22(%arg0: i32, %arg1: memref<15xi32, #tpu.memory_space<smem>>) -> (i32, i32) {
    %c0_i32 = arith.constant 0 : i32
    %c0_i32_0 = arith.constant 0 : i32
    %c0_i32_1 = arith.constant 0 : i32
    return %c0_i32, %c0_i32_0 : i32, i32
  }
  func.func @transform_23(%arg0: i32, %arg1: memref<15xi32, #tpu.memory_space<smem>>) -> (i32, i32) {
    %c0_i32 = arith.constant 0 : i32
    %c0_i32_0 = arith.constant 0 : i32
    %c0_i32_1 = arith.constant 0 : i32
    return %c0_i32, %c0_i32_0 : i32, i32
  }
  func.func @transform_24(%arg0: i32, %arg1: memref<15xi32, #tpu.memory_space<smem>>) -> (i32, i32) {
    %c0_i32 = arith.constant 0 : i32
    %c0_i32_0 = arith.constant 0 : i32
    %c0_i32_1 = arith.constant 0 : i32
    return %c0_i32, %c0_i32_0 : i32, i32
  }
  func.func @transform_25(%arg0: i32, %arg1: memref<15xi32, #tpu.memory_space<smem>>) -> (i32, i32) {
    %c0_i32 = arith.constant 0 : i32
    %c0_i32_0 = arith.constant 0 : i32
    %c0_i32_1 = arith.constant 0 : i32
    return %c0_i32, %c0_i32_0 : i32, i32
  }
  func.func @transform_26(%arg0: i32, %arg1: memref<15xi32, #tpu.memory_space<smem>>) -> (i32, i32) {
    %c0_i32 = arith.constant 0 : i32
    %c0_i32_0 = arith.constant 0 : i32
    %c0_i32_1 = arith.constant 0 : i32
    return %c0_i32, %c0_i32_0 : i32, i32
  }
  func.func @transform_27(%arg0: i32, %arg1: memref<15xi32, #tpu.memory_space<smem>>) -> (i32, i32) {
    %c0_i32 = arith.constant 0 : i32
    %c0_i32_0 = arith.constant 0 : i32
    %c0_i32_1 = arith.constant 0 : i32
    return %c0_i32, %c0_i32_0 : i32, i32
  }
  func.func @transform_28(%arg0: i32, %arg1: memref<15xi32, #tpu.memory_space<smem>>) -> (i32, i32, i32) {
    %c0_i32 = arith.constant 0 : i32
    %c0_i32_0 = arith.constant 0 : i32
    %c0_i32_1 = arith.constant 0 : i32
    return %arg0, %c0_i32, %c0_i32_0 : i32, i32, i32
  }
  func.func @transform_29(%arg0: i32, %arg1: memref<15xi32, #tpu.memory_space<smem>>) -> (i32, i32) {
    %c0_i32 = arith.constant 0 : i32
    %c0_i32_0 = arith.constant 0 : i32
    %c0_i32_1 = arith.constant 0 : i32
    return %c0_i32, %c0_i32_0 : i32, i32
  }
  func.func @transform_30(%arg0: i32, %arg1: memref<15xi32, #tpu.memory_space<smem>>) -> (i32, i32) {
    %c0_i32 = arith.constant 0 : i32
    %c0_i32_0 = arith.constant 0 : i32
    %c0_i32_1 = arith.constant 0 : i32
    return %c0_i32, %c0_i32_0 : i32, i32
  }
}

</mosaic_0001>

<llo_original>
// kernel: tpu_custom_call.1
$region0: #{tpu_custom_call.1}
  #allocation0 [shape = 'u32[]', space=smem, size = 0x4, offset = 0x4, fixed_abs, tag = 'smem constant byte address 0x4 - core index']
  #allocation1 [shape = 'u32[144,128]{1,0:T(1,128)}', space=vmem, size = 0x12000, scoped, tag = 'internal scratch']
  #allocation2 [shape = 'f32[8,19]{1,0:T(8,128)}', space=vmem, size = 0x1000, scoped, tag = 'scratch operand']
  #allocation3 [shape = 'f32[8,19]{1,0:T(8,128)}', space=vmem, size = 0x1000, scoped, tag = 'scratch operand']
  #allocation4 [shape = 'f32[8,19]{1,0:T(8,128)}', space=vmem, size = 0x1000, scoped, tag = 'scratch operand']
  #allocation5 [shape = 'f32[8,128]{1,0:T(8,128)}', space=vmem, size = 0x1000, scoped, tag = 'scratch operand']
  #allocation6 [shape = 's32[1]{0}', space=sflag, size = 0x4, scoped, tag = 'scoped memory for tpu_custom_call.1']
  #allocation7 [shape = 'u8[512]{0}', space=smem, size = 0x200, scoped, tag = 'prefetched SMEM operand 0']
  %s0 = inlined_call_operand.smem [shape: u32[32], index: -1, kind: input, shape index: {}]
  %s1 = sld [smem:[%s0]]
  %s2 = scalar_lea.smem %s0, 1
  %s3 = sld [smem:[%s2]]
  %s4 = scalar_lea.smem %s0, 2
  %s5 = sld [smem:[%s4]]
  %s6 = scalar_lea.smem %s0, 3
  %s7 = sld [smem:[%s6]]
  %s8 = scalar_lea.smem %s0, 4
  %s9 = sld [smem:[%s8]]
  %s10 = scalar_lea.smem %s0, 5
  %s11 = sld [smem:[%s10]]
  %s12 = scalar_lea.smem %s0, 6
  %s13 = sld [smem:[%s12]]
  %s14 = scalar_lea.smem %s0, 7
  %s15 = sld [smem:[%s14]]
  %s16 = scalar_lea.smem %s0, 8
  %s17 = sld [smem:[%s16]]
  %s18 = scalar_lea.smem %s0, 9
  %s19 = sld [smem:[%s18]]
  %s20 = scalar_lea.smem %s0, 10
  %s21 = sld [smem:[%s20]]
  %s22 = scalar_lea.smem %s0, 11
  %s23 = sld [smem:[%s22]]
  %s24 = scalar_lea.smem %s0, 12
  %s25 = sld [smem:[%s24]]
  %s26 = scalar_lea.smem %s0, 13
  %s27 = sld [smem:[%s26]]
  %s28 = scalar_lea.smem %s0, 14
  %s29 = sld [smem:[%s28]]
  %s30 = scalar_lea.smem %s0, 15
  %s31 = sld [smem:[%s30]]
  %s32 = scalar_lea.smem %s0, 16
  %s33 = sld [smem:[%s32]]
  %s34 = scalar_lea.smem %s0, 17
  %s35 = sld [smem:[%s34]]
  %s36 = scalar_lea.smem %s0, 18
  %s37 = sld [smem:[%s36]]
  %s38 = scalar_lea.smem %s0, 19
  %s39 = sld [smem:[%s38]]
  %s40 = scalar_lea.smem %s0, 20
  %s41 = sld [smem:[%s40]]
  %s42 = scalar_lea.smem %s0, 21
  %s43 = sld [smem:[%s42]]
  %s44 = scalar_lea.smem %s0, 22
  %s45 = sld [smem:[%s44]]
  %s46 = scalar_lea.smem %s0, 23
  %s47 = sld [smem:[%s46]]
  %s48 = scalar_lea.smem %s0, 24
  %s49 = sld [smem:[%s48]]
  %s50 = scalar_lea.smem %s0, 25
  %s51 = sld [smem:[%s50]]
  %s52 = scalar_lea.smem %s0, 26
  %s53 = sld [smem:[%s52]]
  %s54 = scalar_lea.smem %s0, 27
  %s55 = sld [smem:[%s54]]
  %s56 = scalar_lea.smem %s0, 28
  %s57 = sld [smem:[%s56]]
  %s58 = scalar_lea.smem %s0, 29
  %s59 = sld [smem:[%s58]]
  %s60 = scalar_lea.smem %s0, 30
  %s61 = sld [smem:[%s60]]
  %s62 = scalar_lea.smem %s0, 31
  %s63 = sld [smem:[%s62]]
  %64 = xla_tuple %s59, %s61, %s63
  %s65 = sld [smem:[#allocation0]]
  $region285: #{tpu_custom_call.1} parent=0
    _
  %s67 = ssub.s32 1, %s65
  %s68 = scalar_select 0, %s67, %s65
  %70 = dma.hbm_to_smem %s1, 16, [#allocation7], [#allocation6]
  %71 = dma.done [#allocation6], 16
  %72 = sfence
  $region1: #{tpu_custom_call.1} parent=0
    #allocation8 [shape = 'u8[16384]{0}', space=vmem, size = 0x4000, scoped, tag = 'input window, operand 1, single buffered']
    #allocation9 [shape = 's32[2]{0}', space=sflag, size = 0x8, scoped, tag = 'scoped memory for tpu_custom_call.1']
    #allocation10 [shape = 's32[2]{0}', space=sflag, size = 0x8, scoped, tag = 'scoped memory for tpu_custom_call.1']
    #allocation11 [shape = 'u8[16384]{0}', space=vmem, size = 0x4000, scoped, tag = 'input window, operand 2, single buffered']
    #allocation12 [shape = 's32[1]{0}', space=sflag, size = 0x4, scoped, tag = 'scoped memory for tpu_custom_call.1']
    #allocation13 [shape = 'u8[4096]{0}', space=vmem, size = 0x1000, scoped, tag = 'input window, operand 3, single buffered']
    #allocation14 [shape = 'u8[8192]{0}', space=vmem, size = 0x2000, scoped, tag = 'input window, operand 5, single buffered']
    #allocation15 [shape = 's32[1]{0}', space=sflag, size = 0x4, scoped, tag = 'scoped memory for tpu_custom_call.1']
    #allocation16 [shape = 'u8[4096]{0}', space=vmem, size = 0x1000, scoped, tag = 'input window, operand 6, single buffered']
    #allocation17 [shape = 'u8[8192]{0}', space=vmem, size = 0x2000, scoped, tag = 'input window, operand 7, single buffered']
    #allocation18 [shape = 's32[1]{0}', space=sflag, size = 0x4, scoped, tag = 'scoped memory for tpu_custom_call.1']
    #allocation19 [shape = 'u8[1024]{0}', space=vmem, size = 0x400, scoped, tag = 'input window, operand 8']
    #allocation20 [shape = 'u8[12288]{0}', space=vmem, size = 0x3000, scoped, tag = 'input window, operand 9, single buffered']
    #allocation21 [shape = 'u8[1024]{0}', space=vmem, size = 0x400, scoped, tag = 'input window, operand 10, single buffered']
    #allocation22 [shape = 'u8[65536]{0}', space=vmem, size = 0x10000, scoped, tag = 'input window, operand 11, single buffered']
    #allocation23 [shape = 'u8[512]{0}', space=vmem, size = 0x400, scoped, tag = 'input window, operand 12, single buffered']
    #allocation24 [shape = 's32[1]{0}', space=sflag, size = 0x4, scoped, tag = 'scoped memory for tpu_custom_call.1']
    #allocation25 [shape = 'u8[12288]{0}', space=vmem, size = 0x3000, scoped, tag = 'input window, operand 13, single buffered']
    #allocation26 [shape = 'u8[1024]{0}', space=vmem, size = 0x400, scoped, tag = 'input window, operand 14, single buffered']
    #allocation27 [shape = 's32[1]{0}', space=sflag, size = 0x4, scoped, tag = 'scoped memory for tpu_custom_call.1']
    #allocation28 [shape = 'u8[65536]{0}', space=vmem, size = 0x10000, scoped, tag = 'input window, operand 15, single buffered']
    #allocation29 [shape = 'u8[512]{0}', space=vmem, size = 0x400, scoped, tag = 'input window, operand 16, single buffered']
    #allocation30 [shape = 's32[1]{0}', space=sflag, size = 0x4, scoped, tag = 'scoped memory for tpu_custom_call.1']
    #allocation31 [shape = 'u8[8192]{0}', space=vmem, size = 0x2000, scoped, tag = 'input window, operand 17, single buffered']
    #allocation32 [shape = 'u8[1024]{0}', space=vmem, size = 0x400, scoped, tag = 'input window, operand 18, single buffered']
    #allocation33 [shape = 's32[1]{0}', space=sflag, size = 0x4, scoped, tag = 'scoped memory for tpu_custom_call.1']
    #allocation34 [shape = 'u8[65536]{0}', space=vmem, size = 0x10000, scoped, tag = 'input window, operand 19, single buffered']
    #allocation35 [shape = 'u8[512]{0}', space=vmem, size = 0x400, scoped, tag = 'input window, operand 20, single buffered']
    #allocation36 [shape = 's32[1]{0}', space=sflag, size = 0x4, scoped, tag = 'scoped memory for tpu_custom_call.1']
    #allocation37 [shape = 'u8[2359296]{0}', space=vmem, size = 0x240000, scoped, tag = 'input window, operand 21, single buffered']
    #allocation38 [shape = 'u8[6144]{0}', space=vmem, size = 0x1800, scoped, tag = 'input window, operand 22, single buffered']
    #allocation39 [shape = 's32[1]{0}', space=sflag, size = 0x4, scoped, tag = 'scoped memory for tpu_custom_call.1']
    #allocation40 [shape = 'u8[196608]{0}', space=vmem, size = 0x30000, scoped, tag = 'input window, operand 23, single buffered']
    #allocation41 [shape = 'u8[1024]{0}', space=vmem, size = 0x400, scoped, tag = 'input window, operand 24, single buffered']
    #allocation42 [shape = 's32[1]{0}', space=sflag, size = 0x4, scoped, tag = 'scoped memory for tpu_custom_call.1']
    #allocation43 [shape = 'u8[65536]{0}', space=vmem, size = 0x10000, scoped, tag = 'input window, operand 25, single buffered']
    #allocation44 [shape = 'u8[512]{0}', space=vmem, size = 0x400, scoped, tag = 'input window, operand 26, single buffered']
    #allocation45 [shape = 's32[1]{0}', space=sflag, size = 0x4, scoped, tag = 'scoped memory for tpu_custom_call.1']
    #allocation46 [shape = 'u8[32768]{0}', space=vmem, size = 0x8000, scoped, tag = 'input window, operand 27, single buffered']
    #allocation47 [shape = 'u8[512]{0}', space=vmem, size = 0x400, scoped, tag = 'input window, operand 28, single buffered']
    #allocation48 [shape = 's32[1]{0}', space=sflag, size = 0x4, scoped, tag = 'scoped memory for tpu_custom_call.1']
    #allocation49 [shape = 'u8[8192]{0}', space=vmem, size = 0x2000, scoped, tag = 'output window, operand 0']
    #allocation50 [shape = 'u8[12288]{0}', space=vmem, size = 0x3000, scoped, tag = 'output window, operand 1, single buffered']
    #allocation51 [shape = 's32[1]{0}', space=sflag, size = 0x4, scoped, tag = 'scoped memory for tpu_custom_call.1']
    #allocation52 [shape = 'u8[12288]{0}', space=vmem, size = 0x3000, scoped, tag = 'output window, operand 2, single buffered']
    %73 = vsyncpa [#allocation9], 0
    %74 = vsyncpa [#allocation12], 0
    %75 = vsyncpa [#allocation15], 0
    %76 = vsyncpa [#allocation18], 0
    %77 = vsyncpa [#allocation24], 0
    %78 = vsyncpa [#allocation27], 0
    %79 = vsyncpa [#allocation30], 0
    %80 = vsyncpa [#allocation33], 0
    %81 = vsyncpa [#allocation36], 0
    %82 = vsyncpa [#allocation39], 0
    %83 = vsyncpa [#allocation42], 0
    %84 = vsyncpa [#allocation45], 0
    %85 = vsyncpa [#allocation48], 0
    %86 = vsyncpa [#allocation10], 0
    %s87 = scalar_lea.sflag [#allocation10], 1
    %88 = vsyncpa %s87, 0
    %89 = vsyncpa [#allocation51], 0
    loop: start=0, step=1, limit=17
    $region2: #{tpu_custom_call.1} parent=1 // loop_pre_header
      _
    $region3: #{tpu_custom_call.1} parent=1 // loop_header
      %s91 = sphi 0, %s95
      %p92 = scmp.ge.s32.totalorder %s91, 17
      %s99 = sphi 0, %s99
      %s101 = sphi 0, %s99
      %s102 = sphi 0, %s101
      %s116 = sphi 0, %s102
      %s120 = sphi 0, %s120
      %s122 = sphi 0, %s120
      %s123 = sphi 0, %s122
      %s137 = sphi 0, %s123
      %s141 = sphi 0, %s141
      %s143 = sphi 0, %s141
      %s144 = sphi 0, %s143
      %s158 = sphi 0, %s144
      %s162 = sphi 0, %s162
      %s164 = sphi 0, %s162
      %s165 = sphi 0, %s164
      %s179 = sphi 0, %s165
      %s183 = sphi 0, %s183
      %s185 = sphi 0, %s183
      %s186 = sphi 0, %s185
      %s200 = sphi 0, %s186
      %s204 = sphi 0, %s204
      %s206 = sphi 0, %s204
      %s207 = sphi 0, %s206
      %s221 = sphi 0, %s207
      %s225 = sphi 0, %s225
      %s227 = sphi 0, %s225
      %s228 = sphi 0, %s227
      %s242 = sphi 0, %s228
      %s250 = sphi 0, %s252
      %s253 = sphi 0, %s250
      %s254 = sphi 0, %s253
      %s270 = sphi 0, %s254
      %s274 = sphi 0, %s274
      %s276 = sphi 0, %s274
      %s277 = sphi 0, %s276
      %s291 = sphi 0, %s277
      %s295 = sphi 0, %s295
      %s297 = sphi 0, %s295
      %s298 = sphi 0, %s297
      %s312 = sphi 0, %s298
      %s316 = sphi 0, %s316
      %s318 = sphi 0, %s316
      %s319 = sphi 0, %s318
      %s333 = sphi 0, %s319
      %s337 = sphi 0, %s337
      %s339 = sphi 0, %s337
      %s340 = sphi 0, %s339
      %s354 = sphi 0, %s340
      %s358 = sphi 0, %s358
      %s360 = sphi 0, %s358
      %s361 = sphi 0, %s360
      %s375 = sphi 0, %s361
      %s379 = sphi 0, %s379
      %s381 = sphi 0, %s379
      %s382 = sphi 0, %s381
      %s396 = sphi 0, %s382
      %s400 = sphi 0, %s400
      %s402 = sphi 0, %s400
      %s403 = sphi 0, %s402
      %s417 = sphi 0, %s403
      %s421 = sphi 0, %s421
      %s423 = sphi 0, %s421
      %s424 = sphi 0, %s423
      %s438 = sphi 0, %s424
      %s442 = sphi 0, %s442
      %s444 = sphi 0, %s442
      %s445 = sphi 0, %s444
      %s459 = sphi 0, %s445
      %s463 = sphi 0, %s463
      %s465 = sphi 0, %s463
      %s466 = sphi 0, %s465
      %s480 = sphi 0, %s466
      %s484 = sphi 0, %s484
      %s486 = sphi 0, %s484
      %s487 = sphi 0, %s486
      %s501 = sphi 0, %s487
      %s505 = sphi 0, %s505
      %s507 = sphi 0, %s505
      %s508 = sphi 0, %s507
      %s522 = sphi 0, %s508
      %s526 = sphi 0, %s526
      %s528 = sphi 0, %s526
      %s529 = sphi 0, %s528
      %s543 = sphi 0, %s529
      %s547 = sphi 0, %s547
      %s549 = sphi 0, %s547
      %s550 = sphi 0, %s549
      %s564 = sphi 0, %s550
      %s568 = sphi 0, %s568
      %s570 = sphi 0, %s568
      %s571 = sphi 0, %s570
      %s585 = sphi 0, %s571
      %s589 = sphi 0, %s589
      %s591 = sphi 0, %s589
      %s592 = sphi 0, %s591
      %s606 = sphi 0, %s592
      %s610 = sphi 0, %s610
      %s612 = sphi 0, %s610
      %s613 = sphi 0, %s612
      %s627 = sphi 0, %s613
      %s631 = sphi 0, %s631
      %s633 = sphi 0, %s631
      %s634 = sphi 0, %s633
      %s648 = sphi 0, %s634
      %s652 = sphi 0, %s652
      %s654 = sphi 0, %s652
      %s655 = sphi 0, %s654
      %s669 = sphi 0, %s655
      %s673 = sphi 0, %s673
      %s675 = sphi 0, %s673
      %s676 = sphi 0, %s675
      %s690 = sphi 0, %s676
      %s696 = sphi 0, %s698
      %s699 = sphi 0, %s696
      %s700 = sphi 0, %s699
      %s716 = sphi 0, %s700
      %s720 = sphi 0, %s720
      %s722 = sphi 0, %s720
      %s723 = sphi 0, %s722
      %s737 = sphi 0, %s723
      %s741 = sphi 0, %s741
      %s743 = sphi 0, %s741
      %s744 = sphi 0, %s743
      %s758 = sphi 0, %s744
    $region4: #{tpu_custom_call.1} parent=1 // loop_header_branch
      %94 = sbr.rel (%p92) target = $region8
    $region5: #{tpu_custom_call.1} parent=1 // loop_body
      %s96 = ssub.s32 %s91, 1
      %s97 = ssub.s32 %s91, 2
      %s98 = sadd.s32 %s91, 1
      %s100 = sadd.s32 %s99, 1
      %p103 = scmp.eq.s32.totalorder %s91, 14
      %p104 = scmp.ne.s32.totalorder %s99, %s101
      %p105 = scmp.eq.s32.totalorder %s91, 0
      %p106 = por %p104, %p105
      %p107 = scmp.ne.s32.totalorder %s99, %s101
      %p108 = scmp.eq.s32.totalorder %s96, 14
      %p109 = por %p107, %p108
      %p110 = scmp.ne.s32.totalorder %s101, %s102
      %p111 = scmp.eq.s32.totalorder %s96, 0
      %p112 = por %p110, %p111
      %p113 = scmp.ne.s32.totalorder %s101, %s102
      %p114 = scmp.eq.s32.totalorder %s97, 14
      %p115 = por %p113, %p114
      %p117 = scmp.ne.s32.totalorder %s102, %s116
      %p118 = scmp.eq.s32.totalorder %s97, 0
      %p119 = por %p117, %p118
      %s121 = sadd.s32 %s120, 1
      %p124 = scmp.eq.s32.totalorder %s91, 14
      %p125 = scmp.ne.s32.totalorder %s120, %s122
      %p126 = scmp.eq.s32.totalorder %s91, 0
      %p127 = por %p125, %p126
      %p128 = scmp.ne.s32.totalorder %s120, %s122
      %p129 = scmp.eq.s32.totalorder %s96, 14
      %p130 = por %p128, %p129
      %p131 = scmp.ne.s32.totalorder %s122, %s123
      %p132 = scmp.eq.s32.totalorder %s96, 0
      %p133 = por %p131, %p132
      %p134 = scmp.ne.s32.totalorder %s122, %s123
      %p135 = scmp.eq.s32.totalorder %s97, 14
      %p136 = por %p134, %p135
      %p138 = scmp.ne.s32.totalorder %s123, %s137
      %p139 = scmp.eq.s32.totalorder %s97, 0
      %p140 = por %p138, %p139
      %s142 = sadd.s32 %s141, 1
      %p145 = scmp.eq.s32.totalorder %s91, 14
      %p146 = scmp.ne.s32.totalorder %s141, %s143
      %p147 = scmp.eq.s32.totalorder %s91, 0
      %p148 = por %p146, %p147
      %p149 = scmp.ne.s32.totalorder %s141, %s143
      %p150 = scmp.eq.s32.totalorder %s96, 14
      %p151 = por %p149, %p150
      %p152 = scmp.ne.s32.totalorder %s143, %s144
      %p153 = scmp.eq.s32.totalorder %s96, 0
      %p154 = por %p152, %p153
      %p155 = scmp.ne.s32.totalorder %s143, %s144
      %p156 = scmp.eq.s32.totalorder %s97, 14
      %p157 = por %p155, %p156
      %p159 = scmp.ne.s32.totalorder %s144, %s158
      %p160 = scmp.eq.s32.totalorder %s97, 0
      %p161 = por %p159, %p160
      %s163 = sadd.s32 %s162, 1
      %p166 = scmp.eq.s32.totalorder %s91, 14
      %p167 = scmp.ne.s32.totalorder %s162, %s164
      %p168 = scmp.eq.s32.totalorder %s91, 0
      %p169 = por %p167, %p168
      %p170 = scmp.ne.s32.totalorder %s162, %s164
      %p171 = scmp.eq.s32.totalorder %s96, 14
      %p172 = por %p170, %p171
      %p173 = scmp.ne.s32.totalorder %s164, %s165
      %p174 = scmp.eq.s32.totalorder %s96, 0
      %p175 = por %p173, %p174
      %p176 = scmp.ne.s32.totalorder %s164, %s165
      %p177 = scmp.eq.s32.totalorder %s97, 14
      %p178 = por %p176, %p177
      %p180 = scmp.ne.s32.totalorder %s165, %s179
      %p181 = scmp.eq.s32.totalorder %s97, 0
      %p182 = por %p180, %p181
      %s184 = sadd.s32 %s183, 1
      %p187 = scmp.eq.s32.totalorder %s91, 14
      %p188 = scmp.ne.s32.totalorder %s183, %s185
      %p189 = scmp.eq.s32.totalorder %s91, 0
      %p190 = por %p188, %p189
      %p191 = scmp.ne.s32.totalorder %s183, %s185
      %p192 = scmp.eq.s32.totalorder %s96, 14
      %p193 = por %p191, %p192
      %p194 = scmp.ne.s32.totalorder %s185, %s186
      %p195 = scmp.eq.s32.totalorder %s96, 0
      %p196 = por %p194, %p195
      %p197 = scmp.ne.s32.totalorder %s185, %s186
      %p198 = scmp.eq.s32.totalorder %s97, 14
      %p199 = por %p197, %p198
      %p201 = scmp.ne.s32.totalorder %s186, %s200
      %p202 = scmp.eq.s32.totalorder %s97, 0
      %p203 = por %p201, %p202
      %s205 = sadd.s32 %s204, 1
      %p208 = scmp.eq.s32.totalorder %s91, 14
      %p209 = scmp.ne.s32.totalorder %s204, %s206
      %p210 = scmp.eq.s32.totalorder %s91, 0
      %p211 = por %p209, %p210
      %p212 = scmp.ne.s32.totalorder %s204, %s206
      %p213 = scmp.eq.s32.totalorder %s96, 14
      %p214 = por %p212, %p213
      %p215 = scmp.ne.s32.totalorder %s206, %s207
      %p216 = scmp.eq.s32.totalorder %s96, 0
      %p217 = por %p215, %p216
      %p218 = scmp.ne.s32.totalorder %s206, %s207
      %p219 = scmp.eq.s32.totalorder %s97, 14
      %p220 = por %p218, %p219
      %p222 = scmp.ne.s32.totalorder %s207, %s221
      %p223 = scmp.eq.s32.totalorder %s97, 0
      %p224 = por %p222, %p223
      %s226 = sadd.s32 %s225, 1
      %p229 = scmp.eq.s32.totalorder %s91, 14
      %p230 = scmp.ne.s32.totalorder %s225, %s227
      %p231 = scmp.eq.s32.totalorder %s91, 0
      %p232 = por %p230, %p231
      %p233 = scmp.ne.s32.totalorder %s225, %s227
      %p234 = scmp.eq.s32.totalorder %s96, 14
      %p235 = por %p233, %p234
      %p236 = scmp.ne.s32.totalorder %s227, %s228
      %p237 = scmp.eq.s32.totalorder %s96, 0
      %p238 = por %p236, %p237
      %p239 = scmp.ne.s32.totalorder %s227, %s228
      %p240 = scmp.eq.s32.totalorder %s97, 14
      %p241 = por %p239, %p240
      %p243 = scmp.ne.s32.totalorder %s228, %s242
      %p244 = scmp.eq.s32.totalorder %s97, 0
      %p245 = por %p243, %p244
      %s246 = sld [smem:[#allocation7 + %s91]]
      %s247 = sld [smem:[#allocation7 + %s98]]
      %s248 = ssub.s32 %s246, %s247
      %p249 = scmp.eq.s32.totalorder %s248, 0
      %s251 = sadd.s32 %s250, 1
      %s252 = scalar_select %p249, %s250, %s251
      %p255 = pneg %p249
      %p256 = scmp.eq.s32.totalorder %s91, 14
      %p257 = por %p255, %p256
      %p258 = scmp.ne.s32.totalorder %s250, %s253
      %p259 = scmp.eq.s32.totalorder %s91, 0
      %p260 = por %p258, %p259
      %p261 = scmp.ne.s32.totalorder %s250, %s253
      %p262 = scmp.eq.s32.totalorder %s96, 14
      %p263 = por %p261, %p262
      %p264 = scmp.ne.s32.totalorder %s253, %s254
      %p265 = scmp.eq.s32.totalorder %s96, 0
      %p266 = por %p264, %p265
      %p267 = scmp.ne.s32.totalorder %s253, %s254
      %p268 = scmp.eq.s32.totalorder %s97, 14
      %p269 = por %p267, %p268
      %p271 = scmp.ne.s32.totalorder %s254, %s270
      %p272 = scmp.eq.s32.totalorder %s97, 0
      %p273 = por %p271, %p272
      %s275 = sadd.s32 %s274, 1
      %p278 = scmp.eq.s32.totalorder %s91, 14
      %p279 = scmp.ne.s32.totalorder %s274, %s276
      %p280 = scmp.eq.s32.totalorder %s91, 0
      %p281 = por %p279, %p280
      %p282 = scmp.ne.s32.totalorder %s274, %s276
      %p283 = scmp.eq.s32.totalorder %s96, 14
      %p284 = por %p282, %p283
      %p285 = scmp.ne.s32.totalorder %s276, %s277
      %p286 = scmp.eq.s32.totalorder %s96, 0
      %p287 = por %p285, %p286
      %p288 = scmp.ne.s32.totalorder %s276, %s277
      %p289 = scmp.eq.s32.totalorder %s97, 14
      %p290 = por %p288, %p289
      %p292 = scmp.ne.s32.totalorder %s277, %s291
      %p293 = scmp.eq.s32.totalorder %s97, 0
      %p294 = por %p292, %p293
      %s296 = sadd.s32 %s295, 1
      %p299 = scmp.eq.s32.totalorder %s91, 14
      %p300 = scmp.ne.s32.totalorder %s295, %s297
      %p301 = scmp.eq.s32.totalorder %s91, 0
      %p302 = por %p300, %p301
      %p303 = scmp.ne.s32.totalorder %s295, %s297
      %p304 = scmp.eq.s32.totalorder %s96, 14
      %p305 = por %p303, %p304
      %p306 = scmp.ne.s32.totalorder %s297, %s298
      %p307 = scmp.eq.s32.totalorder %s96, 0
      %p308 = por %p306, %p307
      %p309 = scmp.ne.s32.totalorder %s297, %s298
      %p310 = scmp.eq.s32.totalorder %s97, 14
      %p311 = por %p309, %p310
      %p313 = scmp.ne.s32.totalorder %s298, %s312
      %p314 = scmp.eq.s32.totalorder %s97, 0
      %p315 = por %p313, %p314
      %s317 = sadd.s32 %s316, 1
      %p320 = scmp.eq.s32.totalorder %s91, 14
      %p321 = scmp.ne.s32.totalorder %s316, %s318
      %p322 = scmp.eq.s32.totalorder %s91, 0
      %p323 = por %p321, %p322
      %p324 = scmp.ne.s32.totalorder %s316, %s318
      %p325 = scmp.eq.s32.totalorder %s96, 14
      %p326 = por %p324, %p325
      %p327 = scmp.ne.s32.totalorder %s318, %s319
      %p328 = scmp.eq.s32.totalorder %s96, 0
      %p329 = por %p327, %p328
      %p330 = scmp.ne.s32.totalorder %s318, %s319
      %p331 = scmp.eq.s32.totalorder %s97, 14
      %p332 = por %p330, %p331
      %p334 = scmp.ne.s32.totalorder %s319, %s333
      %p335 = scmp.eq.s32.totalorder %s97, 0
      %p336 = por %p334, %p335
      %s338 = sadd.s32 %s337, 1
      %p341 = scmp.eq.s32.totalorder %s91, 14
      %p342 = scmp.ne.s32.totalorder %s337, %s339
      %p343 = scmp.eq.s32.totalorder %s91, 0
      %p344 = por %p342, %p343
      %p345 = scmp.ne.s32.totalorder %s337, %s339
      %p346 = scmp.eq.s32.totalorder %s96, 14
      %p347 = por %p345, %p346
      %p348 = scmp.ne.s32.totalorder %s339, %s340
      %p349 = scmp.eq.s32.totalorder %s96, 0
      %p350 = por %p348, %p349
      %p351 = scmp.ne.s32.totalorder %s339, %s340
      %p352 = scmp.eq.s32.totalorder %s97, 14
      %p353 = por %p351, %p352
      %p355 = scmp.ne.s32.totalorder %s340, %s354
      %p356 = scmp.eq.s32.totalorder %s97, 0
      %p357 = por %p355, %p356
      %s359 = sadd.s32 %s358, 1
      %p362 = scmp.eq.s32.totalorder %s91, 14
      %p363 = scmp.ne.s32.totalorder %s358, %s360
      %p364 = scmp.eq.s32.totalorder %s91, 0
      %p365 = por %p363, %p364
      %p366 = scmp.ne.s32.totalorder %s358, %s360
      %p367 = scmp.eq.s32.totalorder %s96, 14
      %p368 = por %p366, %p367
      %p369 = scmp.ne.s32.totalorder %s360, %s361
      %p370 = scmp.eq.s32.totalorder %s96, 0
      %p371 = por %p369, %p370
      %p372 = scmp.ne.s32.totalorder %s360, %s361
      %p373 = scmp.eq.s32.totalorder %s97, 14
      %p374 = por %p372, %p373
      %p376 = scmp.ne.s32.totalorder %s361, %s375
      %p377 = scmp.eq.s32.totalorder %s97, 0
      %p378 = por %p376, %p377
      %s380 = sadd.s32 %s379, 1
      %p383 = scmp.eq.s32.totalorder %s91, 14
      %p384 = scmp.ne.s32.totalorder %s379, %s381
      %p385 = scmp.eq.s32.totalorder %s91, 0
      %p386 = por %p384, %p385
      %p387 = scmp.ne.s32.totalorder %s379, %s381
      %p388 = scmp.eq.s32.totalorder %s96, 14
      %p389 = por %p387, %p388
      %p390 = scmp.ne.s32.totalorder %s381, %s382
      %p391 = scmp.eq.s32.totalorder %s96, 0
      %p392 = por %p390, %p391
      %p393 = scmp.ne.s32.totalorder %s381, %s382
      %p394 = scmp.eq.s32.totalorder %s97, 14
      %p395 = por %p393, %p394
      %p397 = scmp.ne.s32.totalorder %s382, %s396
      %p398 = scmp.eq.s32.totalorder %s97, 0
      %p399 = por %p397, %p398
      %s401 = sadd.s32 %s400, 1
      %p404 = scmp.eq.s32.totalorder %s91, 14
      %p405 = scmp.ne.s32.totalorder %s400, %s402
      %p406 = scmp.eq.s32.totalorder %s91, 0
      %p407 = por %p405, %p406
      %p408 = scmp.ne.s32.totalorder %s400, %s402
      %p409 = scmp.eq.s32.totalorder %s96, 14
      %p410 = por %p408, %p409
      %p411 = scmp.ne.s32.totalorder %s402, %s403
      %p412 = scmp.eq.s32.totalorder %s96, 0
      %p413 = por %p411, %p412
      %p414 = scmp.ne.s32.totalorder %s402, %s403
      %p415 = scmp.eq.s32.totalorder %s97, 14
      %p416 = por %p414, %p415
      %p418 = scmp.ne.s32.totalorder %s403, %s417
      %p419 = scmp.eq.s32.totalorder %s97, 0
      %p420 = por %p418, %p419
      %s422 = sadd.s32 %s421, 1
      %p425 = scmp.eq.s32.totalorder %s91, 14
      %p426 = scmp.ne.s32.totalorder %s421, %s423
      %p427 = scmp.eq.s32.totalorder %s91, 0
      %p428 = por %p426, %p427
      %p429 = scmp.ne.s32.totalorder %s421, %s423
      %p430 = scmp.eq.s32.totalorder %s96, 14
      %p431 = por %p429, %p430
      %p432 = scmp.ne.s32.totalorder %s423, %s424
      %p433 = scmp.eq.s32.totalorder %s96, 0
      %p434 = por %p432, %p433
      %p435 = scmp.ne.s32.totalorder %s423, %s424
      %p436 = scmp.eq.s32.totalorder %s97, 14
      %p437 = por %p435, %p436
      %p439 = scmp.ne.s32.totalorder %s424, %s438
      %p440 = scmp.eq.s32.totalorder %s97, 0
      %p441 = por %p439, %p440
      %s443 = sadd.s32 %s442, 1
      %p446 = scmp.eq.s32.totalorder %s91, 14
      %p447 = scmp.ne.s32.totalorder %s442, %s444
      %p448 = scmp.eq.s32.totalorder %s91, 0
      %p449 = por %p447, %p448
      %p450 = scmp.ne.s32.totalorder %s442, %s444
      %p451 = scmp.eq.s32.totalorder %s96, 14
      %p452 = por %p450, %p451
      %p453 = scmp.ne.s32.totalorder %s444, %s445
      %p454 = scmp.eq.s32.totalorder %s96, 0
      %p455 = por %p453, %p454
      %p456 = scmp.ne.s32.totalorder %s444, %s445
      %p457 = scmp.eq.s32.totalorder %s97, 14
      %p458 = por %p456, %p457
      %p460 = scmp.ne.s32.totalorder %s445, %s459
      %p461 = scmp.eq.s32.totalorder %s97, 0
      %p462 = por %p460, %p461
      %s464 = sadd.s32 %s463, 1
      %p467 = scmp.eq.s32.totalorder %s91, 14
      %p468 = scmp.ne.s32.totalorder %s463, %s465
      %p469 = scmp.eq.s32.totalorder %s91, 0
      %p470 = por %p468, %p469
      %p471 = scmp.ne.s32.totalorder %s463, %s465
      %p472 = scmp.eq.s32.totalorder %s96, 14
      %p473 = por %p471, %p472
      %p474 = scmp.ne.s32.totalorder %s465, %s466
      %p475 = scmp.eq.s32.totalorder %s96, 0
      %p476 = por %p474, %p475
      %p477 = scmp.ne.s32.totalorder %s465, %s466
      %p478 = scmp.eq.s32.totalorder %s97, 14
      %p479 = por %p477, %p478
      %p481 = scmp.ne.s32.totalorder %s466, %s480
      %p482 = scmp.eq.s32.totalorder %s97, 0
      %p483 = por %p481, %p482
      %s485 = sadd.s32 %s484, 1
      %p488 = scmp.eq.s32.totalorder %s91, 14
      %p489 = scmp.ne.s32.totalorder %s484, %s486
      %p490 = scmp.eq.s32.totalorder %s91, 0
      %p491 = por %p489, %p490
      %p492 = scmp.ne.s32.totalorder %s484, %s486
      %p493 = scmp.eq.s32.totalorder %s96, 14
      %p494 = por %p492, %p493
      %p495 = scmp.ne.s32.totalorder %s486, %s487
      %p496 = scmp.eq.s32.totalorder %s96, 0
      %p497 = por %p495, %p496
      %p498 = scmp.ne.s32.totalorder %s486, %s487
      %p499 = scmp.eq.s32.totalorder %s97, 14
      %p500 = por %p498, %p499
      %p502 = scmp.ne.s32.totalorder %s487, %s501
      %p503 = scmp.eq.s32.totalorder %s97, 0
      %p504 = por %p502, %p503
      %s506 = sadd.s32 %s505, 1
      %p509 = scmp.eq.s32.totalorder %s91, 14
      %p510 = scmp.ne.s32.totalorder %s505, %s507
      %p511 = scmp.eq.s32.totalorder %s91, 0
      %p512 = por %p510, %p511
      %p513 = scmp.ne.s32.totalorder %s505, %s507
      %p514 = scmp.eq.s32.totalorder %s96, 14
      %p515 = por %p513, %p514
      %p516 = scmp.ne.s32.totalorder %s507, %s508
      %p517 = scmp.eq.s32.totalorder %s96, 0
      %p518 = por %p516, %p517
      %p519 = scmp.ne.s32.totalorder %s507, %s508
      %p520 = scmp.eq.s32.totalorder %s97, 14
      %p521 = por %p519, %p520
      %p523 = scmp.ne.s32.totalorder %s508, %s522
      %p524 = scmp.eq.s32.totalorder %s97, 0
      %p525 = por %p523, %p524
      %s527 = sadd.s32 %s526, 1
      %p530 = scmp.eq.s32.totalorder %s91, 14
      %p531 = scmp.ne.s32.totalorder %s526, %s528
      %p532 = scmp.eq.s32.totalorder %s91, 0
      %p533 = por %p531, %p532
      %p534 = scmp.ne.s32.totalorder %s526, %s528
      %p535 = scmp.eq.s32.totalorder %s96, 14
      %p536 = por %p534, %p535
      %p537 = scmp.ne.s32.totalorder %s528, %s529
      %p538 = scmp.eq.s32.totalorder %s96, 0
      %p539 = por %p537, %p538
      %p540 = scmp.ne.s32.totalorder %s528, %s529
      %p541 = scmp.eq.s32.totalorder %s97, 14
      %p542 = por %p540, %p541
      %p544 = scmp.ne.s32.totalorder %s529, %s543
      %p545 = scmp.eq.s32.totalorder %s97, 0
      %p546 = por %p544, %p545
      %s548 = sadd.s32 %s547, 1
      %p551 = scmp.eq.s32.totalorder %s91, 14
      %p552 = scmp.ne.s32.totalorder %s547, %s549
      %p553 = scmp.eq.s32.totalorder %s91, 0
      %p554 = por %p552, %p553
      %p555 = scmp.ne.s32.totalorder %s547, %s549
      %p556 = scmp.eq.s32.totalorder %s96, 14
      %p557 = por %p555, %p556
      %p558 = scmp.ne.s32.totalorder %s549, %s550
      %p559 = scmp.eq.s32.totalorder %s96, 0
      %p560 = por %p558, %p559
      %p561 = scmp.ne.s32.totalorder %s549, %s550
      %p562 = scmp.eq.s32.totalorder %s97, 14
      %p563 = por %p561, %p562
      %p565 = scmp.ne.s32.totalorder %s550, %s564
      %p566 = scmp.eq.s32.totalorder %s97, 0
      %p567 = por %p565, %p566
      %s569 = sadd.s32 %s568, 1
      %p572 = scmp.eq.s32.totalorder %s91, 14
      %p573 = scmp.ne.s32.totalorder %s568, %s570
      %p574 = scmp.eq.s32.totalorder %s91, 0
      %p575 = por %p573, %p574
      %p576 = scmp.ne.s32.totalorder %s568, %s570
      %p577 = scmp.eq.s32.totalorder %s96, 14
      %p578 = por %p576, %p577
      %p579 = scmp.ne.s32.totalorder %s570, %s571
      %p580 = scmp.eq.s32.totalorder %s96, 0
      %p581 = por %p579, %p580
      %p582 = scmp.ne.s32.totalorder %s570, %s571
      %p583 = scmp.eq.s32.totalorder %s97, 14
      %p584 = por %p582, %p583
      %p586 = scmp.ne.s32.totalorder %s571, %s585
      %p587 = scmp.eq.s32.totalorder %s97, 0
      %p588 = por %p586, %p587
      %s590 = sadd.s32 %s589, 1
      %p593 = scmp.eq.s32.totalorder %s91, 14
      %p594 = scmp.ne.s32.totalorder %s589, %s591
      %p595 = scmp.eq.s32.totalorder %s91, 0
      %p596 = por %p594, %p595
      %p597 = scmp.ne.s32.totalorder %s589, %s591
      %p598 = scmp.eq.s32.totalorder %s96, 14
      %p599 = por %p597, %p598
      %p600 = scmp.ne.s32.totalorder %s591, %s592
      %p601 = scmp.eq.s32.totalorder %s96, 0
      %p602 = por %p600, %p601
      %p603 = scmp.ne.s32.totalorder %s591, %s592
      %p604 = scmp.eq.s32.totalorder %s97, 14
      %p605 = por %p603, %p604
      %p607 = scmp.ne.s32.totalorder %s592, %s606
      %p608 = scmp.eq.s32.totalorder %s97, 0
      %p609 = por %p607, %p608
      %s611 = sadd.s32 %s610, 1
      %p614 = scmp.eq.s32.totalorder %s91, 14
      %p615 = scmp.ne.s32.totalorder %s610, %s612
      %p616 = scmp.eq.s32.totalorder %s91, 0
      %p617 = por %p615, %p616
      %p618 = scmp.ne.s32.totalorder %s610, %s612
      %p619 = scmp.eq.s32.totalorder %s96, 14
      %p620 = por %p618, %p619
      %p621 = scmp.ne.s32.totalorder %s612, %s613
      %p622 = scmp.eq.s32.totalorder %s96, 0
      %p623 = por %p621, %p622
      %p624 = scmp.ne.s32.totalorder %s612, %s613
      %p625 = scmp.eq.s32.totalorder %s97, 14
      %p626 = por %p624, %p625
      %p628 = scmp.ne.s32.totalorder %s613, %s627
      %p629 = scmp.eq.s32.totalorder %s97, 0
      %p630 = por %p628, %p629
      %s632 = sadd.s32 %s631, 1
      %p635 = scmp.eq.s32.totalorder %s91, 14
      %p636 = scmp.ne.s32.totalorder %s631, %s633
      %p637 = scmp.eq.s32.totalorder %s91, 0
      %p638 = por %p636, %p637
      %p639 = scmp.ne.s32.totalorder %s631, %s633
      %p640 = scmp.eq.s32.totalorder %s96, 14
      %p641 = por %p639, %p640
      %p642 = scmp.ne.s32.totalorder %s633, %s634
      %p643 = scmp.eq.s32.totalorder %s96, 0
      %p644 = por %p642, %p643
      %p645 = scmp.ne.s32.totalorder %s633, %s634
      %p646 = scmp.eq.s32.totalorder %s97, 14
      %p647 = por %p645, %p646
      %p649 = scmp.ne.s32.totalorder %s634, %s648
      %p650 = scmp.eq.s32.totalorder %s97, 0
      %p651 = por %p649, %p650
      %s653 = sadd.s32 %s652, 1
      %p656 = scmp.eq.s32.totalorder %s91, 14
      %p657 = scmp.ne.s32.totalorder %s652, %s654
      %p658 = scmp.eq.s32.totalorder %s91, 0
      %p659 = por %p657, %p658
      %p660 = scmp.ne.s32.totalorder %s652, %s654
      %p661 = scmp.eq.s32.totalorder %s96, 14
      %p662 = por %p660, %p661
      %p663 = scmp.ne.s32.totalorder %s654, %s655
      %p664 = scmp.eq.s32.totalorder %s96, 0
      %p665 = por %p663, %p664
      %p666 = scmp.ne.s32.totalorder %s654, %s655
      %p667 = scmp.eq.s32.totalorder %s97, 14
      %p668 = por %p666, %p667
      %p670 = scmp.ne.s32.totalorder %s655, %s669
      %p671 = scmp.eq.s32.totalorder %s97, 0
      %p672 = por %p670, %p671
      %s674 = sadd.s32 %s673, 1
      %p677 = scmp.eq.s32.totalorder %s91, 14
      %p678 = scmp.ne.s32.totalorder %s673, %s675
      %p679 = scmp.eq.s32.totalorder %s91, 0
      %p680 = por %p678, %p679
      %p681 = scmp.ne.s32.totalorder %s673, %s675
      %p682 = scmp.eq.s32.totalorder %s96, 14
      %p683 = por %p681, %p682
      %p684 = scmp.ne.s32.totalorder %s675, %s676
      %p685 = scmp.eq.s32.totalorder %s96, 0
      %p686 = por %p684, %p685
      %p687 = scmp.ne.s32.totalorder %s675, %s676
      %p688 = scmp.eq.s32.totalorder %s97, 14
      %p689 = por %p687, %p688
      %p691 = scmp.ne.s32.totalorder %s676, %s690
      %p692 = scmp.eq.s32.totalorder %s97, 0
      %p693 = por %p691, %p692
      %s694 = ssub.s32 %s91, %s98
      %p695 = scmp.eq.s32.totalorder %s694, 0
      %s697 = sadd.s32 %s696, 1
      %s698 = scalar_select %p695, %s696, %s697
      %p701 = pneg %p695
      %p702 = scmp.eq.s32.totalorder %s91, 14
      %p703 = por %p701, %p702
      %p704 = scmp.ne.s32.totalorder %s696, %s699
      %p705 = scmp.eq.s32.totalorder %s91, 0
      %p706 = por %p704, %p705
      %p707 = scmp.ne.s32.totalorder %s696, %s699
      %p708 = scmp.eq.s32.totalorder %s96, 14
      %p709 = por %p707, %p708
      %p710 = scmp.ne.s32.totalorder %s699, %s700
      %p711 = scmp.eq.s32.totalorder %s96, 0
      %p712 = por %p710, %p711
      %p713 = scmp.ne.s32.totalorder %s699, %s700
      %p714 = scmp.eq.s32.totalorder %s97, 14
      %p715 = por %p713, %p714
      %p717 = scmp.ne.s32.totalorder %s700, %s716
      %p718 = scmp.eq.s32.totalorder %s97, 0
      %p719 = por %p717, %p718
      %s721 = sadd.s32 %s720, 1
      %p724 = scmp.eq.s32.totalorder %s91, 14
      %p725 = scmp.ne.s32.totalorder %s720, %s722
      %p726 = scmp.eq.s32.totalorder %s91, 0
      %p727 = por %p725, %p726
      %p728 = scmp.ne.s32.totalorder %s720, %s722
      %p729 = scmp.eq.s32.totalorder %s96, 14
      %p730 = por %p728, %p729
      %p731 = scmp.ne.s32.totalorder %s722, %s723
      %p732 = scmp.eq.s32.totalorder %s96, 0
      %p733 = por %p731, %p732
      %p734 = scmp.ne.s32.totalorder %s722, %s723
      %p735 = scmp.eq.s32.totalorder %s97, 14
      %p736 = por %p734, %p735
      %p738 = scmp.ne.s32.totalorder %s723, %s737
      %p739 = scmp.eq.s32.totalorder %s97, 0
      %p740 = por %p738, %p739
      %s742 = sadd.s32 %s741, 1
      %p745 = scmp.eq.s32.totalorder %s91, 14
      %p746 = scmp.ne.s32.totalorder %s741, %s743
      %p747 = scmp.eq.s32.totalorder %s91, 0
      %p748 = por %p746, %p747
      %p749 = scmp.ne.s32.totalorder %s741, %s743
      %p750 = scmp.eq.s32.totalorder %s96, 14
      %p751 = por %p749, %p750
      %p752 = scmp.ne.s32.totalorder %s743, %s744
      %p753 = scmp.eq.s32.totalorder %s96, 0
      %p754 = por %p752, %p753
      %p755 = scmp.ne.s32.totalorder %s743, %s744
      %p756 = scmp.eq.s32.totalorder %s97, 14
      %p757 = por %p755, %p756
      %p759 = scmp.ne.s32.totalorder %s744, %s758
      %p760 = scmp.eq.s32.totalorder %s97, 0
      %p761 = por %p759, %p760
      %p762 = scmp.le.s32.totalorder 1, %s91
      %p763 = scmp.lt.s32.totalorder %s91, 16
      %p764 = pnand %p762, %p763
      %p765 = pneg %p764
      // Predicated region
      $region9: #{tpu_custom_call.1} parent=5 // pred_check
        _
      $region10: #{tpu_custom_call.1} parent=5 // pred_check_branch
        %767 = sbr.rel (%p764) target = $region12
      $region11: #{tpu_custom_call.1} parent=5 // pred_region
        %s768 = ssub.s32 %s91, 1
        // Predicated region
        $region13: #{tpu_custom_call.1} parent=11 // pred_check
          %p769 = pneg %p112
        $region14: #{tpu_custom_call.1} parent=11 // pred_check_branch
          %771 = sbr.rel (%p769) target = $region16
        $region15: #{tpu_custom_call.1} parent=11 // pred_region
          %s773 = ssub.s32 512, 512
          %774 = vsyncadd [#allocation9], %s773
          %s775 = sshll.u32 [#allocation8], 4
          %s776 = int_to_ptr.vmem [resolvable:$true] %s775
          %781 = dma.hbm_to_vmem [thread:$0]  %s3, 512, %s776, [#allocation9], 128, 128, 8
        $region16: #{tpu_custom_call.1} parent=11 // pred_fallthru
          _
        // Predicated region
        $region17: #{tpu_custom_call.1} parent=11 // pred_check
          %p782 = pneg %p133
        $region18: #{tpu_custom_call.1} parent=11 // pred_check_branch
          %784 = sbr.rel (%p782) target = $region20
        $region19: #{tpu_custom_call.1} parent=11 // pred_region
          %s786 = ssub.s32 512, 512
          %787 = vsyncadd [#allocation12], %s786
          %s788 = sshll.u32 [#allocation11], 4
          %s789 = int_to_ptr.vmem [resolvable:$true] %s788
          %794 = dma.hbm_to_vmem [thread:$0]  %s5, 512, %s789, [#allocation12], 128, 128, 8
        $region20: #{tpu_custom_call.1} parent=11 // pred_fallthru
          _
        // Predicated region
        $region21: #{tpu_custom_call.1} parent=11 // pred_check
          %p795 = pneg %p154
        $region22: #{tpu_custom_call.1} parent=11 // pred_check_branch
          %797 = sbr.rel (%p795) target = $region24
        $region23: #{tpu_custom_call.1} parent=11 // pred_region
          %s799 = ssub.s32 128, 128
          %800 = vsyncadd [#allocation12], %s799
          %s802 = sshll.u32 [#allocation13], 4
          %s803 = int_to_ptr.vmem [resolvable:$true] %s802
          %805 = dma.hbm_to_vmem [thread:$0]  %s7, 128, %s803, [#allocation12]
        $region24: #{tpu_custom_call.1} parent=11 // pred_fallthru
          _
        // Predicated region
        $region25: #{tpu_custom_call.1} parent=11 // pred_check
          %p806 = pneg %p175
        $region26: #{tpu_custom_call.1} parent=11 // pred_check_branch
          %808 = sbr.rel (%p806) target = $region28
        $region27: #{tpu_custom_call.1} parent=11 // pred_region
          _
        $region28: #{tpu_custom_call.1} parent=11 // pred_fallthru
          _
        // Predicated region
        $region29: #{tpu_custom_call.1} parent=11 // pred_check
          %p809 = pneg %p196
        $region30: #{tpu_custom_call.1} parent=11 // pred_check_branch
          %811 = sbr.rel (%p809) target = $region32
        $region31: #{tpu_custom_call.1} parent=11 // pred_region
          %s813 = ssub.s32 256, 256
          %814 = vsyncadd [#allocation15], %s813
          %s816 = sshll.u32 [#allocation14], 4
          %s817 = int_to_ptr.vmem [resolvable:$true] %s816
          %819 = dma.hbm_to_vmem [thread:$0]  %s11, 256, %s817, [#allocation15]
        $region32: #{tpu_custom_call.1} parent=11 // pred_fallthru
          _
        // Predicated region
        $region33: #{tpu_custom_call.1} parent=11 // pred_check
          %p820 = pneg %p217
        $region34: #{tpu_custom_call.1} parent=11 // pred_check_branch
          %822 = sbr.rel (%p820) target = $region36
        $region35: #{tpu_custom_call.1} parent=11 // pred_region
          %s824 = ssub.s32 128, 128
          %825 = vsyncadd [#allocation15], %s824
          %s827 = sshll.u32 [#allocation16], 4
          %s828 = int_to_ptr.vmem [resolvable:$true] %s827
          %830 = dma.hbm_to_vmem [thread:$0]  %s13, 128, %s828, [#allocation15]
        $region36: #{tpu_custom_call.1} parent=11 // pred_fallthru
          _
        // Predicated region
        $region37: #{tpu_custom_call.1} parent=11 // pred_check
          %p831 = pneg %p238
        $region38: #{tpu_custom_call.1} parent=11 // pred_check_branch
          %833 = sbr.rel (%p831) target = $region40
        $region39: #{tpu_custom_call.1} parent=11 // pred_region
          %s835 = ssub.s32 256, 256
          %836 = vsyncadd [#allocation18], %s835
          %s837 = sshll.u32 [#allocation17], 4
          %s838 = int_to_ptr.vmem [resolvable:$true] %s837
          %843 = dma.hbm_to_vmem [thread:$0]  %s15, 256, %s838, [#allocation18], 128, 128, 8
        $region40: #{tpu_custom_call.1} parent=11 // pred_fallthru
          _
        // Predicated region
        $region41: #{tpu_custom_call.1} parent=11 // pred_check
          %p844 = pneg %p287
        $region42: #{tpu_custom_call.1} parent=11 // pred_check_branch
          %846 = sbr.rel (%p844) target = $region44
        $region43: #{tpu_custom_call.1} parent=11 // pred_region
          %s848 = ssub.s32 384, 384
          %849 = vsyncadd [#allocation12], %s848
          %s850 = sshll.u32 [#allocation20], 4
          %s851 = int_to_ptr.vmem [resolvable:$true] %s850
          %856 = dma.hbm_to_vmem [thread:$0]  %s19, 384, %s851, [#allocation12], 128, 128, 8
        $region44: #{tpu_custom_call.1} parent=11 // pred_fallthru
          _
        // Predicated region
        $region45: #{tpu_custom_call.1} parent=11 // pred_check
          %p857 = pneg %p308
        $region46: #{tpu_custom_call.1} parent=11 // pred_check_branch
          %859 = sbr.rel (%p857) target = $region48
        $region47: #{tpu_custom_call.1} parent=11 // pred_region
          %s861 = ssub.s32 32, 32
          %862 = vsyncadd [#allocation15], %s861
          %s864 = sshll.u32 [#allocation21], 4
          %s865 = int_to_ptr.vmem [resolvable:$true] %s864
          %867 = dma.hbm_to_vmem [thread:$0]  %s21, 32, %s865, [#allocation15]
        $region48: #{tpu_custom_call.1} parent=11 // pred_fallthru
          _
        // Predicated region
        $region49: #{tpu_custom_call.1} parent=11 // pred_check
          %p868 = pneg %p329
        $region50: #{tpu_custom_call.1} parent=11 // pred_check_branch
          %870 = sbr.rel (%p868) target = $region52
        $region51: #{tpu_custom_call.1} parent=11 // pred_region
          %s872 = ssub.s32 2048, 2048
          %873 = vsyncadd [#allocation18], %s872
          %s874 = sshll.u32 [#allocation22], 4
          %s875 = int_to_ptr.vmem [resolvable:$true] %s874
          %880 = dma.hbm_to_vmem [thread:$0]  %s23, 2048, %s875, [#allocation18], 64, 64, 4
        $region52: #{tpu_custom_call.1} parent=11 // pred_fallthru
          _
        // Predicated region
        $region53: #{tpu_custom_call.1} parent=11 // pred_check
          %p881 = pneg %p350
        $region54: #{tpu_custom_call.1} parent=11 // pred_check_branch
          %883 = sbr.rel (%p881) target = $region56
        $region55: #{tpu_custom_call.1} parent=11 // pred_region
          %s885 = ssub.s32 16, 16
          %886 = vsyncadd [#allocation24], %s885
          %s888 = sshll.u32 [#allocation23], 4
          %s889 = int_to_ptr.vmem [resolvable:$true] %s888
          %891 = dma.hbm_to_vmem [thread:$0]  %s25, 16, %s889, [#allocation24]
        $region56: #{tpu_custom_call.1} parent=11 // pred_fallthru
          _
        // Predicated region
        $region57: #{tpu_custom_call.1} parent=11 // pred_check
          %p892 = pneg %p371
        $region58: #{tpu_custom_call.1} parent=11 // pred_check_branch
          %894 = sbr.rel (%p892) target = $region60
        $region59: #{tpu_custom_call.1} parent=11 // pred_region
          %s896 = ssub.s32 384, 384
          %897 = vsyncadd [#allocation24], %s896
          %s898 = sshll.u32 [#allocation25], 4
          %s899 = int_to_ptr.vmem [resolvable:$true] %s898
          %904 = dma.hbm_to_vmem [thread:$0]  %s27, 384, %s899, [#allocation24], 128, 128, 8
        $region60: #{tpu_custom_call.1} parent=11 // pred_fallthru
          _
        // Predicated region
        $region61: #{tpu_custom_call.1} parent=11 // pred_check
          %p905 = pneg %p392
        $region62: #{tpu_custom_call.1} parent=11 // pred_check_branch
          %907 = sbr.rel (%p905) target = $region64
        $region63: #{tpu_custom_call.1} parent=11 // pred_region
          %s909 = ssub.s32 32, 32
          %910 = vsyncadd [#allocation27], %s909
          %s912 = sshll.u32 [#allocation26], 4
          %s913 = int_to_ptr.vmem [resolvable:$true] %s912
          %915 = dma.hbm_to_vmem [thread:$0]  %s29, 32, %s913, [#allocation27]
        $region64: #{tpu_custom_call.1} parent=11 // pred_fallthru
          _
        // Predicated region
        $region65: #{tpu_custom_call.1} parent=11 // pred_check
          %p916 = pneg %p413
        $region66: #{tpu_custom_call.1} parent=11 // pred_check_branch
          %918 = sbr.rel (%p916) target = $region68
        $region67: #{tpu_custom_call.1} parent=11 // pred_region
          %s920 = ssub.s32 2048, 2048
          %921 = vsyncadd [#allocation27], %s920
          %s922 = sshll.u32 [#allocation28], 4
          %s923 = int_to_ptr.vmem [resolvable:$true] %s922
          %928 = dma.hbm_to_vmem [thread:$0]  %s31, 2048, %s923, [#allocation27], 64, 64, 4
        $region68: #{tpu_custom_call.1} parent=11 // pred_fallthru
          _
        // Predicated region
        $region69: #{tpu_custom_call.1} parent=11 // pred_check
          %p929 = pneg %p434
        $region70: #{tpu_custom_call.1} parent=11 // pred_check_branch
          %931 = sbr.rel (%p929) target = $region72
        $region71: #{tpu_custom_call.1} parent=11 // pred_region
          %s933 = ssub.s32 16, 16
          %934 = vsyncadd [#allocation30], %s933
          %s936 = sshll.u32 [#allocation29], 4
          %s937 = int_to_ptr.vmem [resolvable:$true] %s936
          %939 = dma.hbm_to_vmem [thread:$0]  %s33, 16, %s937, [#allocation30]
        $region72: #{tpu_custom_call.1} parent=11 // pred_fallthru
          _
        // Predicated region
        $region73: #{tpu_custom_call.1} parent=11 // pred_check
          %p940 = pneg %p455
        $region74: #{tpu_custom_call.1} parent=11 // pred_check_branch
          %942 = sbr.rel (%p940) target = $region76
        $region75: #{tpu_custom_call.1} parent=11 // pred_region
          %s944 = ssub.s32 256, 256
          %945 = vsyncadd [#allocation30], %s944
          %s946 = sshll.u32 [#allocation31], 4
          %s947 = int_to_ptr.vmem [resolvable:$true] %s946
          %952 = dma.hbm_to_vmem [thread:$0]  %s35, 256, %s947, [#allocation30], 128, 128, 8
        $region76: #{tpu_custom_call.1} parent=11 // pred_fallthru
          _
        // Predicated region
        $region77: #{tpu_custom_call.1} parent=11 // pred_check
          %p953 = pneg %p476
        $region78: #{tpu_custom_call.1} parent=11 // pred_check_branch
          %955 = sbr.rel (%p953) target = $region80
        $region79: #{tpu_custom_call.1} parent=11 // pred_region
          %s957 = ssub.s32 32, 32
          %958 = vsyncadd [#allocation33], %s957
          %s960 = sshll.u32 [#allocation32], 4
          %s961 = int_to_ptr.vmem [resolvable:$true] %s960
          %963 = dma.hbm_to_vmem [thread:$0]  %s37, 32, %s961, [#allocation33]
        $region80: #{tpu_custom_call.1} parent=11 // pred_fallthru
          _
        // Predicated region
        $region81: #{tpu_custom_call.1} parent=11 // pred_check
          %p964 = pneg %p497
        $region82: #{tpu_custom_call.1} parent=11 // pred_check_branch
          %966 = sbr.rel (%p964) target = $region84
        $region83: #{tpu_custom_call.1} parent=11 // pred_region
          %s968 = ssub.s32 2048, 2048
          %969 = vsyncadd [#allocation33], %s968
          %s970 = sshll.u32 [#allocation34], 4
          %s971 = int_to_ptr.vmem [resolvable:$true] %s970
          %976 = dma.hbm_to_vmem [thread:$0]  %s39, 2048, %s971, [#allocation33], 64, 64, 4
        $region84: #{tpu_custom_call.1} parent=11 // pred_fallthru
          _
        // Predicated region
        $region85: #{tpu_custom_call.1} parent=11 // pred_check
          %p977 = pneg %p518
        $region86: #{tpu_custom_call.1} parent=11 // pred_check_branch
          %979 = sbr.rel (%p977) target = $region88
        $region87: #{tpu_custom_call.1} parent=11 // pred_region
          %s981 = ssub.s32 16, 16
          %982 = vsyncadd [#allocation36], %s981
          %s984 = sshll.u32 [#allocation35], 4
          %s985 = int_to_ptr.vmem [resolvable:$true] %s984
          %987 = dma.hbm_to_vmem [thread:$0]  %s41, 16, %s985, [#allocation36]
        $region88: #{tpu_custom_call.1} parent=11 // pred_fallthru
          _
        // Predicated region
        $region89: #{tpu_custom_call.1} parent=11 // pred_check
          %p988 = pneg %p539
        $region90: #{tpu_custom_call.1} parent=11 // pred_check_branch
          %990 = sbr.rel (%p988) target = $region92
        $region91: #{tpu_custom_call.1} parent=11 // pred_region
          %s992 = ssub.s32 73728, 73728
          %993 = vsyncadd [#allocation36], %s992
          %s994 = sshll.u32 [#allocation37], 4
          %s995 = int_to_ptr.vmem [resolvable:$true] %s994
          %1000 = dma.hbm_to_vmem [thread:$0]  %s43, 73728, %s995, [#allocation36], 768, 768, 48
        $region92: #{tpu_custom_call.1} parent=11 // pred_fallthru
          _
        // Predicated region
        $region93: #{tpu_custom_call.1} parent=11 // pred_check
          %p1001 = pneg %p560
        $region94: #{tpu_custom_call.1} parent=11 // pred_check_branch
          %1003 = sbr.rel (%p1001) target = $region96
        $region95: #{tpu_custom_call.1} parent=11 // pred_region
          %s1005 = ssub.s32 192, 192
          %1006 = vsyncadd [#allocation39], %s1005
          %s1008 = sshll.u32 [#allocation38], 4
          %s1009 = int_to_ptr.vmem [resolvable:$true] %s1008
          %1011 = dma.hbm_to_vmem [thread:$0]  %s45, 192, %s1009, [#allocation39]
        $region96: #{tpu_custom_call.1} parent=11 // pred_fallthru
          _
        // Predicated region
        $region97: #{tpu_custom_call.1} parent=11 // pred_check
          %p1012 = pneg %p581
        $region98: #{tpu_custom_call.1} parent=11 // pred_check_branch
          %1014 = sbr.rel (%p1012) target = $region100
        $region99: #{tpu_custom_call.1} parent=11 // pred_region
          %s1016 = ssub.s32 6144, 6144
          %1017 = vsyncadd [#allocation39], %s1016
          %s1018 = sshll.u32 [#allocation40], 4
          %s1019 = int_to_ptr.vmem [resolvable:$true] %s1018
          %1024 = dma.hbm_to_vmem [thread:$0]  %s47, 6144, %s1019, [#allocation39], 128, 128, 8
        $region100: #{tpu_custom_call.1} parent=11 // pred_fallthru
          _
        // Predicated region
        $region101: #{tpu_custom_call.1} parent=11 // pred_check
          %p1025 = pneg %p602
        $region102: #{tpu_custom_call.1} parent=11 // pred_check_branch
          %1027 = sbr.rel (%p1025) target = $region104
        $region103: #{tpu_custom_call.1} parent=11 // pred_region
          %s1029 = ssub.s32 32, 32
          %1030 = vsyncadd [#allocation42], %s1029
          %s1032 = sshll.u32 [#allocation41], 4
          %s1033 = int_to_ptr.vmem [resolvable:$true] %s1032
          %1035 = dma.hbm_to_vmem [thread:$0]  %s49, 32, %s1033, [#allocation42]
        $region104: #{tpu_custom_call.1} parent=11 // pred_fallthru
          _
        // Predicated region
        $region105: #{tpu_custom_call.1} parent=11 // pred_check
          %p1036 = pneg %p623
        $region106: #{tpu_custom_call.1} parent=11 // pred_check_branch
          %1038 = sbr.rel (%p1036) target = $region108
        $region107: #{tpu_custom_call.1} parent=11 // pred_region
          %s1040 = ssub.s32 2048, 2048
          %1041 = vsyncadd [#allocation42], %s1040
          %s1042 = sshll.u32 [#allocation43], 4
          %s1043 = int_to_ptr.vmem [resolvable:$true] %s1042
          %1048 = dma.hbm_to_vmem [thread:$0]  %s51, 2048, %s1043, [#allocation42], 64, 64, 4
        $region108: #{tpu_custom_call.1} parent=11 // pred_fallthru
          _
        // Predicated region
        $region109: #{tpu_custom_call.1} parent=11 // pred_check
          %p1049 = pneg %p644
        $region110: #{tpu_custom_call.1} parent=11 // pred_check_branch
          %1051 = sbr.rel (%p1049) target = $region112
        $region111: #{tpu_custom_call.1} parent=11 // pred_region
          %s1053 = ssub.s32 16, 16
          %1054 = vsyncadd [#allocation45], %s1053
          %s1056 = sshll.u32 [#allocation44], 4
          %s1057 = int_to_ptr.vmem [resolvable:$true] %s1056
          %1059 = dma.hbm_to_vmem [thread:$0]  %s53, 16, %s1057, [#allocation45]
        $region112: #{tpu_custom_call.1} parent=11 // pred_fallthru
          _
        // Predicated region
        $region113: #{tpu_custom_call.1} parent=11 // pred_check
          %p1060 = pneg %p665
        $region114: #{tpu_custom_call.1} parent=11 // pred_check_branch
          %1062 = sbr.rel (%p1060) target = $region116
        $region115: #{tpu_custom_call.1} parent=11 // pred_region
          %s1064 = ssub.s32 1024, 1024
          %1065 = vsyncadd [#allocation45], %s1064
          %s1066 = sshll.u32 [#allocation46], 4
          %s1067 = int_to_ptr.vmem [resolvable:$true] %s1066
          %1072 = dma.hbm_to_vmem [thread:$0]  %s55, 1024, %s1067, [#allocation45], 64, 64, 4
        $region116: #{tpu_custom_call.1} parent=11 // pred_fallthru
          _
        // Predicated region
        $region117: #{tpu_custom_call.1} parent=11 // pred_check
          %p1073 = pneg %p686
        $region118: #{tpu_custom_call.1} parent=11 // pred_check_branch
          %1075 = sbr.rel (%p1073) target = $region120
        $region119: #{tpu_custom_call.1} parent=11 // pred_region
          %s1077 = ssub.s32 16, 16
          %1078 = vsyncadd [#allocation48], %s1077
          %s1080 = sshll.u32 [#allocation47], 4
          %s1081 = int_to_ptr.vmem [resolvable:$true] %s1080
          %1083 = dma.hbm_to_vmem [thread:$0]  %s57, 16, %s1081, [#allocation48]
        $region120: #{tpu_custom_call.1} parent=11 // pred_fallthru
          _
      $region12: #{tpu_custom_call.1} parent=5 // pred_fallthru
        _
      %p1084 = scmp.lt.s32.totalorder %s91, 15
      // Predicated region
      $region121: #{tpu_custom_call.1} parent=5 // pred_check
        %p1085 = pneg %p1084
      $region122: #{tpu_custom_call.1} parent=5 // pred_check_branch
        %1087 = sbr.rel (%p1085) target = $region124
      $region123: #{tpu_custom_call.1} parent=5 // pred_region
        // Predicated region
        $region125: #{tpu_custom_call.1} parent=123 // pred_check
          %p1088 = pneg %p260
        $region126: #{tpu_custom_call.1} parent=123 // pred_check_branch
          %1090 = sbr.rel (%p1088) target = $region128
        $region127: #{tpu_custom_call.1} parent=123 // pred_region
          %s1091 = sand.u32 %s91, 1
          %s1092 = scalar_lea.sflag [#allocation9], %s1091
          %s1093 = sand.u32 %s250, 1
          %s1094 = scalar_lea.vmem [#allocation19], %s1093
          %s1095 = sld [smem:[#allocation7 + %s91]]
          %s1097 = ssub.s32 16, 16
          %1098 = vsyncadd %s1092, %s1097
          %s1099 = smul.addr %s1095, 16
          %s1100 = scalar_lea.hbm %s17, %s1099
          %s1102 = sshll.u32 %s1094, 4
          %s1103 = int_to_ptr.vmem [resolvable:$true] %s1102
          %1105 = dma.hbm_to_vmem [thread:$0]  %s1100, 16, %s1103, %s1092
        $region128: #{tpu_custom_call.1} parent=123 // pred_fallthru
          _
      $region124: #{tpu_custom_call.1} parent=5 // pred_fallthru
        _
      %p1106 = scmp.le.s32.totalorder 1, %s91
      %p1107 = scmp.lt.s32.totalorder %s91, 16
      %p1108 = pnand %p1106, %p1107
      %p1109 = pneg %p1108
      // Predicated region
      $region129: #{tpu_custom_call.1} parent=5 // pred_check
        _
      $region130: #{tpu_custom_call.1} parent=5 // pred_check_branch
        %1111 = sbr.rel (%p1108) target = $region132
      $region131: #{tpu_custom_call.1} parent=5 // pred_region
        %s1112 = ssub.s32 %s91, 1
        // Predicated region
        $region133: #{tpu_custom_call.1} parent=131 // pred_check
          %p1113 = pneg %p112
        $region134: #{tpu_custom_call.1} parent=131 // pred_check_branch
          %1115 = sbr.rel (%p1113) target = $region136
        $region135: #{tpu_custom_call.1} parent=131 // pred_region
          %1116 = dma.done [#allocation9], 512
        $region136: #{tpu_custom_call.1} parent=131 // pred_fallthru
          _
        // Predicated region
        $region137: #{tpu_custom_call.1} parent=131 // pred_check
          %p1117 = pneg %p133
        $region138: #{tpu_custom_call.1} parent=131 // pred_check_branch
          %1119 = sbr.rel (%p1117) target = $region140
        $region139: #{tpu_custom_call.1} parent=131 // pred_region
          %1120 = dma.done [#allocation12], 512
        $region140: #{tpu_custom_call.1} parent=131 // pred_fallthru
          _
        // Predicated region
        $region141: #{tpu_custom_call.1} parent=131 // pred_check
          %p1121 = pneg %p154
        $region142: #{tpu_custom_call.1} parent=131 // pred_check_branch
          %1123 = sbr.rel (%p1121) target = $region144
        $region143: #{tpu_custom_call.1} parent=131 // pred_region
          %1124 = dma.done [#allocation12], 128
        $region144: #{tpu_custom_call.1} parent=131 // pred_fallthru
          _
        // Predicated region
        $region145: #{tpu_custom_call.1} parent=131 // pred_check
          %p1125 = pneg %p196
        $region146: #{tpu_custom_call.1} parent=131 // pred_check_branch
          %1127 = sbr.rel (%p1125) target = $region148
        $region147: #{tpu_custom_call.1} parent=131 // pred_region
          %1128 = dma.done [#allocation15], 256
        $region148: #{tpu_custom_call.1} parent=131 // pred_fallthru
          _
        // Predicated region
        $region149: #{tpu_custom_call.1} parent=131 // pred_check
          %p1129 = pneg %p217
        $region150: #{tpu_custom_call.1} parent=131 // pred_check_branch
          %1131 = sbr.rel (%p1129) target = $region152
        $region151: #{tpu_custom_call.1} parent=131 // pred_region
          %1132 = dma.done [#allocation15], 128
        $region152: #{tpu_custom_call.1} parent=131 // pred_fallthru
          _
        // Predicated region
        $region153: #{tpu_custom_call.1} parent=131 // pred_check
          %p1133 = pneg %p238
        $region154: #{tpu_custom_call.1} parent=131 // pred_check_branch
          %1135 = sbr.rel (%p1133) target = $region156
        $region155: #{tpu_custom_call.1} parent=131 // pred_region
          %1136 = dma.done [#allocation18], 256
        $region156: #{tpu_custom_call.1} parent=131 // pred_fallthru
          _
        %s1137 = sand.u32 %s96, 1
        %s1138 = scalar_lea.sflag [#allocation9], %s1137
        %s1139 = sand.u32 %s253, 1
        %s1140 = scalar_lea.vmem [#allocation19], %s1139
        // Predicated region
        $region157: #{tpu_custom_call.1} parent=131 // pred_check
          %p1141 = pneg %p266
        $region158: #{tpu_custom_call.1} parent=131 // pred_check_branch
          %1143 = sbr.rel (%p1141) target = $region160
        $region159: #{tpu_custom_call.1} parent=131 // pred_region
          %1144 = dma.done %s1138, 16
        $region160: #{tpu_custom_call.1} parent=131 // pred_fallthru
          _
        // Predicated region
        $region161: #{tpu_custom_call.1} parent=131 // pred_check
          %p1145 = pneg %p287
        $region162: #{tpu_custom_call.1} parent=131 // pred_check_branch
          %1147 = sbr.rel (%p1145) target = $region164
        $region163: #{tpu_custom_call.1} parent=131 // pred_region
          %1148 = dma.done [#allocation12], 384
        $region164: #{tpu_custom_call.1} parent=131 // pred_fallthru
          _
        // Predicated region
        $region165: #{tpu_custom_call.1} parent=131 // pred_check
          %p1149 = pneg %p308
        $region166: #{tpu_custom_call.1} parent=131 // pred_check_branch
          %1151 = sbr.rel (%p1149) target = $region168
        $region167: #{tpu_custom_call.1} parent=131 // pred_region
          %1152 = dma.done [#allocation15], 32
        $region168: #{tpu_custom_call.1} parent=131 // pred_fallthru
          _
        // Predicated region
        $region169: #{tpu_custom_call.1} parent=131 // pred_check
          %p1153 = pneg %p329
        $region170: #{tpu_custom_call.1} parent=131 // pred_check_branch
          %1155 = sbr.rel (%p1153) target = $region172
        $region171: #{tpu_custom_call.1} parent=131 // pred_region
          %1156 = dma.done [#allocation18], 2048
        $region172: #{tpu_custom_call.1} parent=131 // pred_fallthru
          _
        // Predicated region
        $region173: #{tpu_custom_call.1} parent=131 // pred_check
          %p1157 = pneg %p350
        $region174: #{tpu_custom_call.1} parent=131 // pred_check_branch
          %1159 = sbr.rel (%p1157) target = $region176
        $region175: #{tpu_custom_call.1} parent=131 // pred_region
          %1160 = dma.done [#allocation24], 16
        $region176: #{tpu_custom_call.1} parent=131 // pred_fallthru
          _
        // Predicated region
        $region177: #{tpu_custom_call.1} parent=131 // pred_check
          %p1161 = pneg %p371
        $region178: #{tpu_custom_call.1} parent=131 // pred_check_branch
          %1163 = sbr.rel (%p1161) target = $region180
        $region179: #{tpu_custom_call.1} parent=131 // pred_region
          %1164 = dma.done [#allocation24], 384
        $region180: #{tpu_custom_call.1} parent=131 // pred_fallthru
          _
        // Predicated region
        $region181: #{tpu_custom_call.1} parent=131 // pred_check
          %p1165 = pneg %p392
        $region182: #{tpu_custom_call.1} parent=131 // pred_check_branch
          %1167 = sbr.rel (%p1165) target = $region184
        $region183: #{tpu_custom_call.1} parent=131 // pred_region
          %1168 = dma.done [#allocation27], 32
        $region184: #{tpu_custom_call.1} parent=131 // pred_fallthru
          _
        // Predicated region
        $region185: #{tpu_custom_call.1} parent=131 // pred_check
          %p1169 = pneg %p413
        $region186: #{tpu_custom_call.1} parent=131 // pred_check_branch
          %1171 = sbr.rel (%p1169) target = $region188
        $region187: #{tpu_custom_call.1} parent=131 // pred_region
          %1172 = dma.done [#allocation27], 2048
        $region188: #{tpu_custom_call.1} parent=131 // pred_fallthru
          _
        // Predicated region
        $region189: #{tpu_custom_call.1} parent=131 // pred_check
          %p1173 = pneg %p434
        $region190: #{tpu_custom_call.1} parent=131 // pred_check_branch
          %1175 = sbr.rel (%p1173) target = $region192
        $region191: #{tpu_custom_call.1} parent=131 // pred_region
          %1176 = dma.done [#allocation30], 16
        $region192: #{tpu_custom_call.1} parent=131 // pred_fallthru
          _
        // Predicated region
        $region193: #{tpu_custom_call.1} parent=131 // pred_check
          %p1177 = pneg %p455
        $region194: #{tpu_custom_call.1} parent=131 // pred_check_branch
          %1179 = sbr.rel (%p1177) target = $region196
        $region195: #{tpu_custom_call.1} parent=131 // pred_region
          %1180 = dma.done [#allocation30], 256
        $region196: #{tpu_custom_call.1} parent=131 // pred_fallthru
          _
        // Predicated region
        $region197: #{tpu_custom_call.1} parent=131 // pred_check
          %p1181 = pneg %p476
        $region198: #{tpu_custom_call.1} parent=131 // pred_check_branch
          %1183 = sbr.rel (%p1181) target = $region200
        $region199: #{tpu_custom_call.1} parent=131 // pred_region
          %1184 = dma.done [#allocation33], 32
        $region200: #{tpu_custom_call.1} parent=131 // pred_fallthru
          _
        // Predicated region
        $region201: #{tpu_custom_call.1} parent=131 // pred_check
          %p1185 = pneg %p497
        $region202: #{tpu_custom_call.1} parent=131 // pred_check_branch
          %1187 = sbr.rel (%p1185) target = $region204
        $region203: #{tpu_custom_call.1} parent=131 // pred_region
          %1188 = dma.done [#allocation33], 2048
        $region204: #{tpu_custom_call.1} parent=131 // pred_fallthru
          _
        // Predicated region
        $region205: #{tpu_custom_call.1} parent=131 // pred_check
          %p1189 = pneg %p518
        $region206: #{tpu_custom_call.1} parent=131 // pred_check_branch
          %1191 = sbr.rel (%p1189) target = $region208
        $region207: #{tpu_custom_call.1} parent=131 // pred_region
          %1192 = dma.done [#allocation36], 16
        $region208: #{tpu_custom_call.1} parent=131 // pred_fallthru
          _
        // Predicated region
        $region209: #{tpu_custom_call.1} parent=131 // pred_check
          %p1193 = pneg %p539
        $region210: #{tpu_custom_call.1} parent=131 // pred_check_branch
          %1195 = sbr.rel (%p1193) target = $region212
        $region211: #{tpu_custom_call.1} parent=131 // pred_region
          %1196 = dma.done [#allocation36], 73728
        $region212: #{tpu_custom_call.1} parent=131 // pred_fallthru
          _
        // Predicated region
        $region213: #{tpu_custom_call.1} parent=131 // pred_check
          %p1197 = pneg %p560
        $region214: #{tpu_custom_call.1} parent=131 // pred_check_branch
          %1199 = sbr.rel (%p1197) target = $region216
        $region215: #{tpu_custom_call.1} parent=131 // pred_region
          %1200 = dma.done [#allocation39], 192
        $region216: #{tpu_custom_call.1} parent=131 // pred_fallthru
          _
        // Predicated region
        $region217: #{tpu_custom_call.1} parent=131 // pred_check
          %p1201 = pneg %p581
        $region218: #{tpu_custom_call.1} parent=131 // pred_check_branch
          %1203 = sbr.rel (%p1201) target = $region220
        $region219: #{tpu_custom_call.1} parent=131 // pred_region
          %1204 = dma.done [#allocation39], 6144
        $region220: #{tpu_custom_call.1} parent=131 // pred_fallthru
          _
        // Predicated region
        $region221: #{tpu_custom_call.1} parent=131 // pred_check
          %p1205 = pneg %p602
        $region222: #{tpu_custom_call.1} parent=131 // pred_check_branch
          %1207 = sbr.rel (%p1205) target = $region224
        $region223: #{tpu_custom_call.1} parent=131 // pred_region
          %1208 = dma.done [#allocation42], 32
        $region224: #{tpu_custom_call.1} parent=131 // pred_fallthru
          _
        // Predicated region
        $region225: #{tpu_custom_call.1} parent=131 // pred_check
          %p1209 = pneg %p623
        $region226: #{tpu_custom_call.1} parent=131 // pred_check_branch
          %1211 = sbr.rel (%p1209) target = $region228
        $region227: #{tpu_custom_call.1} parent=131 // pred_region
          %1212 = dma.done [#allocation42], 2048
        $region228: #{tpu_custom_call.1} parent=131 // pred_fallthru
          _
        // Predicated region
        $region229: #{tpu_custom_call.1} parent=131 // pred_check
          %p1213 = pneg %p644
        $region230: #{tpu_custom_call.1} parent=131 // pred_check_branch
          %1215 = sbr.rel (%p1213) target = $region232
        $region231: #{tpu_custom_call.1} parent=131 // pred_region
          %1216 = dma.done [#allocation45], 16
        $region232: #{tpu_custom_call.1} parent=131 // pred_fallthru
          _
        // Predicated region
        $region233: #{tpu_custom_call.1} parent=131 // pred_check
          %p1217 = pneg %p665
        $region234: #{tpu_custom_call.1} parent=131 // pred_check_branch
          %1219 = sbr.rel (%p1217) target = $region236
        $region235: #{tpu_custom_call.1} parent=131 // pred_region
          %1220 = dma.done [#allocation45], 1024
        $region236: #{tpu_custom_call.1} parent=131 // pred_fallthru
          _
        // Predicated region
        $region237: #{tpu_custom_call.1} parent=131 // pred_check
          %p1221 = pneg %p686
        $region238: #{tpu_custom_call.1} parent=131 // pred_check_branch
          %1223 = sbr.rel (%p1221) target = $region240
        $region239: #{tpu_custom_call.1} parent=131 // pred_region
          %1224 = dma.done [#allocation48], 16
        $region240: #{tpu_custom_call.1} parent=131 // pred_fallthru
          _
        %p1225 = pneg %p112
        %p1226 = pneg %p109
        %p1227 = pneg %p133
        %p1228 = pneg %p130
        %p1229 = pneg %p154
        %p1230 = pneg %p151
        %p1231 = pneg %p175
        %p1232 = pneg %p172
        %p1233 = pneg %p196
        %p1234 = pneg %p193
        %p1235 = pneg %p217
        %p1236 = pneg %p214
        %p1237 = pneg %p238
        %p1238 = pneg %p235
        %s1239 = sand.u32 %s96, 1
        %s1240 = scalar_lea.sflag [#allocation9], %s1239
        %s1241 = sand.u32 %s253, 1
        %s1242 = scalar_lea.vmem [#allocation19], %s1241
        %p1243 = pneg %p266
        %p1244 = pneg %p263
        %p1245 = pneg %p287
        %p1246 = pneg %p284
        %p1247 = pneg %p308
        %p1248 = pneg %p305
        %p1249 = pneg %p329
        %p1250 = pneg %p326
        %p1251 = pneg %p350
        %p1252 = pneg %p347
        %p1253 = pneg %p371
        %p1254 = pneg %p368
        %p1255 = pneg %p392
        %p1256 = pneg %p389
        %p1257 = pneg %p413
        %p1258 = pneg %p410
        %p1259 = pneg %p434
        %p1260 = pneg %p431
        %p1261 = pneg %p455
        %p1262 = pneg %p452
        %p1263 = pneg %p476
        %p1264 = pneg %p473
        %p1265 = pneg %p497
        %p1266 = pneg %p494
        %p1267 = pneg %p518
        %p1268 = pneg %p515
        %p1269 = pneg %p539
        %p1270 = pneg %p536
        %p1271 = pneg %p560
        %p1272 = pneg %p557
        %p1273 = pneg %p581
        %p1274 = pneg %p578
        %p1275 = pneg %p602
        %p1276 = pneg %p599
        %p1277 = pneg %p623
        %p1278 = pneg %p620
        %p1279 = pneg %p644
        %p1280 = pneg %p641
        %p1281 = pneg %p665
        %p1282 = pneg %p662
        %p1283 = pneg %p686
        %p1284 = pneg %p683
        %p1285 = pneg %p712
        %p1286 = pneg %p709
        %s1287 = sand.u32 %s699, 1
        %s1288 = scalar_lea.sflag [#allocation10], %s1287
        %s1289 = sand.u32 %s699, 1
        %s1290 = smul.addr %s1289, 8
        %s1291 = scalar_lea.vmem [#allocation49], %s1290
        %p1292 = pneg %p733
        %p1293 = pneg %p730
        %p1294 = pneg %p754
        %p1295 = pneg %p751
        %s1296 = sld [smem:[#allocation7 + %s96]]
        %1298 = vst [vmem:[%s1291] sm:$0xff] 0.0
        %p1299 = scmp.eq.s32.totalorder %s96, 0
        // Predicated region
        $region241: #{tpu_custom_call.1} parent=131 // pred_check
          %p1300 = pneg %p1299
        $region242: #{tpu_custom_call.1} parent=131 // pred_check_branch
          %1302 = sbr.rel (%p1300) target = $region244
        $region243: #{tpu_custom_call.1} parent=131 // pred_region
          %1303 = vst [vmem:[#allocation50] sm:$0xff] 0.0
          %1304 = vst [vmem:[#allocation50 + $0x8] sm:$0xff] 0.0
          %1305 = vst [vmem:[#allocation50 + $0x10] sm:$0xff] 0.0
          %1306 = vst [vmem:[#allocation52] sm:$0xff] 0.0
          %1307 = vst [vmem:[#allocation52 + $0x8] sm:$0xff] 0.0
          %1308 = vst [vmem:[#allocation52 + $0x10] sm:$0xff] 0.0
          %v1309 = vld [vmem:[#allocation16] sm:$0xff]
          %vm1310 = vcmask 154624
          %1311 = vst.msk [vmem:[#allocation4] sm:$0xff] %vm1310, %v1309
        $region244: #{tpu_custom_call.1} parent=131 // pred_fallthru
          _
        %p1312 = scmp.lt.s32.totalorder %s96, 4
        // Predicated region
        $region245: #{tpu_custom_call.1} parent=131 // pred_check
          %p1313 = pneg %p1312
        $region246: #{tpu_custom_call.1} parent=131 // pred_check_branch
          %1315 = sbr.rel (%p1313) target = $region248
        $region247: #{tpu_custom_call.1} parent=131 // pred_region
          %s1316 = smul.u32 %s96, 8
          %s1317 = scalar_lea.vmem [#allocation8], %s1316
          %v1318 = vld [vmem:[%s1317] sm:$0xff]
          %vm1319 = vcmask 154624
          %1320 = vst.msk [vmem:[#allocation2] sm:$0xff] %vm1319, %v1318
          %s1321 = scalar_lea.vmem [#allocation11], %s1316
          %v1322 = vld [vmem:[%s1321] sm:$0xff]
          %1323 = vst.msk [vmem:[#allocation3] sm:$0xff] %vm1319, %v1322
        $region248: #{tpu_custom_call.1} parent=131 // pred_fallthru
          _
        %p1324 = scmp.ge.s32.totalorder %s96, 4
        // Predicated region
        $region249: #{tpu_custom_call.1} parent=131 // pred_check
          %p1325 = pneg %p1324
        $region250: #{tpu_custom_call.1} parent=131 // pred_check_branch
          %1327 = sbr.rel (%p1325) target = $region252
        $region251: #{tpu_custom_call.1} parent=131 // pred_region
          %v1328 = vld [vmem:[#allocation5] sm:$0xff]
          %v1329 = vld [vmem:[#allocation4] sm:$0xff]
          %v1330 = vadd.f32 %v1329, %v1328
          %v1331 = vmul.f32 %v1330, %v1330
          %v1332 = vld [vmem:[#allocation17] sm:$0xff]
          %v1333 = vld [vmem:[#allocation17 + $0x8] sm:$0xff]
          %1335 = vrot.lane.b32.xlu0 %v1331, 125
          %v1336 = vpop.permute.xlu0 %1335
          %vm1337 = vcmask 130048
          %v1338 = vsel %vm1337, %v1336, 0
          %1340 = vmatprep.subr.mxu0 0.0
          %1341 = vmatpush1.msra.mxu0 %v1332
          %1342 = vmatprep.subr.mxu0 0.0
          %1343 = vmatpush1.msra.mxu0 %v1333
          %1344 = vmatprep.subr.mxu0 0.0
          %1345 = vmatpush1.msra.mxu0 0.0
          %1346 = vmatprep.subr.mxu0 0.0
          %1347 = vmatpush1.msra.mxu0 0.0
          %1348 = vmatprep.subr.mxu0 0.0
          %1349 = vmatpush1.msra.mxu0 0.0
          %1350 = vmatprep.subr.mxu0 0.0
          %1351 = vmatpush1.msra.mxu0 0.0
          %1352 = vmatprep.subr.mxu0 0.0
          %1353 = vmatpush1.msra.mxu0 0.0
          %1354 = vmatprep.subr.mxu0 0.0
          %1355 = vmatpush1.msra.mxu0 0.0
          %1356 = vmatprep.subr.mxu0 0.0
          %1357 = vmatpush1.msra.mxu0 0.0
          %1358 = vmatprep.subr.mxu0 0.0
          %1359 = vmatpush1.msra.mxu0 0.0
          %1360 = vmatprep.subr.mxu0 0.0
          %1361 = vmatpush1.msra.mxu0 0.0
          %1362 = vmatprep.subr.mxu0 0.0
          %1363 = vmatpush1.msra.mxu0 0.0
          %1364 = vmatprep.subr.mxu0 0.0
          %1365 = vmatpush1.msra.mxu0 0.0
          %1366 = vmatprep.subr.mxu0 0.0
          %1367 = vmatpush1.msra.mxu0 0.0
          %1368 = vmatprep.subr.mxu0 0.0
          %1369 = vmatpush1.msra.mxu0 0.0
          %1370 = vmatprep.subr.mxu0 0.0
          %1371 = vmatpush1.msra.mxu0 0.0
          %1372 = vmatprep.subr.mxu0 0.0
          %1373 = vmatpush1.msra.mxu0 0.0
          %1374 = vmatprep.subr.mxu0 0.0
          %1375 = vmatpush1.msra.mxu0 0.0
          %1376 = vmatprep.subr.mxu0 0.0
          %1377 = vmatpush1.msra.mxu0 0.0
          %1378 = vmatprep.subr.mxu0 0.0
          %1379 = vmatpush1.msra.mxu0 0.0
          %1380 = vmatprep.subr.mxu0 0.0
          %1381 = vmatpush1.msra.mxu0 0.0
          %1382 = vmatprep.subr.mxu0 0.0
          %1383 = vmatpush1.msra.mxu0 0.0
          %1384 = vmatprep.subr.mxu0 0.0
          %1385 = vmatpush1.msra.mxu0 0.0
          %1386 = vmatprep.subr.mxu0 0.0
          %1387 = vmatpush1.msra.mxu0 0.0
          %1388 = vmatprep.subr.mxu0 0.0
          %1389 = vmatpush1.msra.mxu0 0.0
          %1390 = vmatprep.subr.mxu0 0.0
          %1391 = vmatpush1.msra.mxu0 0.0
          %1392 = vmatprep.subr.mxu0 0.0
          %1393 = vmatpush1.msra.mxu0 0.0
          %1394 = vmatprep.subr.mxu0 0.0
          %1395 = vmatpush1.msra.mxu0 0.0
          %1396 = vmatprep.subr.mxu0 0.0
          %1397 = vmatpush1.msra.mxu0 0.0
          %1398 = vmatprep.subr.mxu0 0.0
          %1399 = vmatpush1.msra.mxu0 0.0
          %1400 = vmatprep.subr.mxu0 0.0
          %1401 = vmatpush1.msra.mxu0 0.0
          %1402 = vmatprep.subr.mxu0 0.0
          %1403 = vmatpush1.msra.mxu0 0.0
          %1404 = vmatprep.mubr.f32.mxu0 0.0
          %1405 = vmatmul.mubr.f32.gmra.mrb[0].mxu0 %v1338
          %v1406 = vpop.f32.mrb[0].mxu0
          %v1407 = vadd.f32 0.0, %v1406
          %v1408 = vpop.f32.mrb[0].mxu0
          %1409 = vdwg.mxu0
          %v1410 = vrsqrt.pop %v1407
          %v1411 = vmul.f32 %v1407, %v1410
          %vm1412 = vcmp.eq.f32.partialorder %v1407, inf
          %v1413 = vsel %vm1412, %v1407, %v1411
          %vm1414 = vcmp.eq.f32.partialorder %v1407, 0.0
          %v1415 = vand.u32 %v1407, 2147483648
          %v1416 = vsel %vm1414, %v1415, %v1413
          %v1417 = vmax.f32 %v1416, 1e-06
          %1419 = vrot.lane.b32.xlu0 %v1417, 3
          %v1420 = vpop.permute.xlu0 %1419
          %v1422 = vrcp.pop %v1420
          %v1423 = vmul.f32 %v1330, %v1422
          %vm1424 = vcmask 23552
          %1425 = vst.msk [vmem:[%s1291] sm:$0xff] %vm1424, %v1330
          %vm1426 = vcmask 154648
          %1427 = vst.msk [vmem:[%s1291] sm:$0xff] %vm1426, %v1423
          %1428 = vst.msk [vmem:[#allocation4] sm:$0xff] %vm1424, %v1330
          %1429 = vst.msk [vmem:[#allocation4] sm:$0xff] %vm1426, %v1423
          %1430 = vst.msk [vmem:[#allocation2] sm:$0xff] %vm1424, %v1328
          %1431 = vst.msk [vmem:[#allocation2] sm:$0xff] %vm1426, %v1423
          %v1432 = vld [vmem:[%s9] sm:$0xff]
          %v1433 = vsub.f32 %v1432, %v1330
          %1434 = vst.msk [vmem:[#allocation3] sm:$0xff] %vm1424, %v1433
          %v1435 = vld [vmem:[#allocation13] sm:$0xff]
          %1437 = vrot.lane.b32.xlu0 %v1423, 125
          %v1438 = vpop.permute.xlu0 %1437
          %v1440 = vsub.f32 %v1435, %v1438
          %1442 = vrot.lane.b32.xlu0 %v1440, 3
          %v1443 = vpop.permute.xlu0 %1442
          %1445 = vst.msk [vmem:[#allocation3] sm:$0xff] %vm1426, %v1443
        $region252: #{tpu_custom_call.1} parent=131 // pred_fallthru
          _
        %p1446 = scmp.lt.s32.totalorder %s96, 14
        // Predicated region
        $region253: #{tpu_custom_call.1} parent=131 // pred_check
          %p1447 = pneg %p1446
        $region254: #{tpu_custom_call.1} parent=131 // pred_check_branch
          %1449 = sbr.rel (%p1447) target = $region256
        $region255: #{tpu_custom_call.1} parent=131 // pred_region
          %v1450 = vld [vmem:[%s1140] sm:$0x1]
          %s1451 = sld [smem:[#allocation7 + %s96]]
          %s1452 = scvt.s32.f32 %s1451
          %s1453 = ssub.f32 %s1452, 5.0
          %v1454 = vrcp.pop 25.0
          %s1455 = vtos %v1454
          %s1456 = smul.f32 %s1453, %s1455
          %s1457 = smax.f32 %s1456, 0.0
          %s1458 = smin.f32 %s1457, 1.0
          %v1459 = vld [vmem:[#allocation2] sm:$0xff]
          %v1460 = vpack.c.bf16 %v1459, %v1459
          %v1461 = vld [vmem:[#allocation20] sm:$0xff]
          %v1462 = vld [vmem:[#allocation20 + $0x8] sm:$0xff]
          %v1463 = vld [vmem:[#allocation20 + $0x10] sm:$0x33]
          %v1464 = vld [vmem:[#allocation21] sm:$0x3]
          %v1466 = vlaneseq
          %v1467 = vshrl.u32 %v1466, 7
          %v1468 = vsub.s32 0, %v1467
          %v1469 = vrot.slane %v1464, %v1468
          %v1470 = vlaneseq
          %v1471 = vshrl.u32 %v1470, 7
          %v1472 = vsub.s32 1, %v1471
          %v1473 = vrot.slane %v1464, %v1472
          %v1479 = vunpack.c.l.b16 %v1461
          %v1480 = vunpack.c.h.b16 %v1461
          %v1481 = vunpack.c.l.b16 %v1462
          %v1482 = vunpack.c.h.b16 %v1462
          %v1483 = vunpack.c.l.b16 %v1463
          %v1484 = vunpack.c.h.b16 %v1463
          %v1485 = vpack.c.b16 %v1481, %v1479
          %v1486 = vpack.c.b16 %v1482, %v1480
          %v1487 = vpack.c.b16 %v1483, %v1483
          %v1488 = vpack.c.b16 %v1484, %v1484
          %vm1491 = vcmask 154624
          %v1493 = vsel %vm1491, %v1460, 0
          %vm1495 = vcmask 1040384
          %vm1496 = vcmask 1041408
          %v1497 = vsel %vm1495, 4294967295, 65535
          %v1498 = vsel %vm1496, %v1497, 0
          %v1500 = vand.u32 %v1487, %v1498
          %v1503 = vand.u32 %v1488, %v1498
          %1505 = vmatprep.subr.bf16.mxu0 %v1486
          %1506 = vmatpush1.bf16.msra.mxu0 %v1485
          %1507 = vmatprep.subr.bf16.mxu0 %v1503
          %1508 = vmatpush1.bf16.msra.mxu0 %v1500
          %1509 = vmatprep.subr.bf16.mxu0 0
          %1510 = vmatpush1.bf16.msra.mxu0 0
          %1511 = vmatprep.subr.bf16.mxu0 0
          %1512 = vmatpush1.bf16.msra.mxu0 0
          %1513 = vmatprep.subr.bf16.mxu0 0
          %1514 = vmatpush1.bf16.msra.mxu0 0
          %1515 = vmatprep.subr.bf16.mxu0 0
          %1516 = vmatpush1.bf16.msra.mxu0 0
          %1517 = vmatprep.subr.bf16.mxu0 0
          %1518 = vmatpush1.bf16.msra.mxu0 0
          %1519 = vmatprep.subr.bf16.mxu0 0
          %1520 = vmatpush1.bf16.msra.mxu0 0
          %1521 = vmatprep.subr.bf16.mxu0 0
          %1522 = vmatpush1.bf16.msra.mxu0 0
          %1523 = vmatprep.subr.bf16.mxu0 0
          %1524 = vmatpush1.bf16.msra.mxu0 0
          %1525 = vmatprep.subr.bf16.mxu0 0
          %1526 = vmatpush1.bf16.msra.mxu0 0
          %1527 = vmatprep.subr.bf16.mxu0 0
          %1528 = vmatpush1.bf16.msra.mxu0 0
          %1529 = vmatprep.subr.bf16.mxu0 0
          %1530 = vmatpush1.bf16.msra.mxu0 0
          %1531 = vmatprep.subr.bf16.mxu0 0
          %1532 = vmatpush1.bf16.msra.mxu0 0
          %1533 = vmatprep.subr.bf16.mxu0 0
          %1534 = vmatpush1.bf16.msra.mxu0 0
          %1535 = vmatprep.subr.bf16.mxu0 0
          %1536 = vmatpush1.bf16.msra.mxu0 0
          %1537 = vmatprep.mubr.bf16.mxu0 0
          %1538 = vmatmul.mubr.bf16.gmra.mrb[0].mxu0 %v1493
          %v1539 = vpop.f32.mrb[0].mxu0
          %v1540 = vadd.f32 %v1469, %v1539
          %v1541 = vpop.f32.mrb[0].mxu0
          %v1542 = vadd.f32 %v1473, %v1541
          %v1543 = vpop.f32.mrb[0].mxu0
          %v1544 = vpop.f32.mrb[0].mxu0
          %1545 = vdwg.mxu0
          %v1546 = vadd.f32 %v1540, 1.0
          %v1547 = vadd.f32 %v1542, 1.0
          %v1548 = vmul.f32 %v1546, 0.1
          %v1549 = vmul.f32 %v1547, 0.1
          %v1550 = vsub.f32 %v1548, 1.0
          %v1551 = vsub.f32 %v1549, 1.0
          %v1552 = vsub.f32 %v1540, 1.0
          %v1553 = vsub.f32 %v1542, 1.0
          %v1554 = vmul.f32 %v1552, 0.1
          %v1555 = vmul.f32 %v1553, 0.1
          %v1556 = vadd.f32 %v1554, 1.0
          %v1557 = vadd.f32 %v1555, 1.0
          %v1558 = vsub.f32 %v1540, %v1556
          %v1559 = vsub.f32 %v1542, %v1557
          %v1560 = vmax.f32 %v1558, 0.0
          %v1561 = vmax.f32 %v1559, 0.0
          %v1562 = vsub.f32 %v1540, %v1560
          %v1563 = vsub.f32 %v1542, %v1561
          %v1564 = vsub.f32 %v1550, %v1562
          %v1565 = vsub.f32 %v1551, %v1563
          %v1566 = vmax.f32 %v1564, 0.0
          %v1567 = vmax.f32 %v1565, 0.0
          %v1568 = vadd.f32 %v1566, %v1562
          %v1569 = vadd.f32 %v1567, %v1563
          %v1570 = vpack.c.bf16 %v1568, %v1568
          %v1571 = vpack.c.bf16 %v1569, %v1569
          %v1572 = vld [vmem:[#allocation22] sm:$0xf]
          %v1573 = vld [vmem:[#allocation22 + $0x4] sm:$0xf]
          %v1574 = vld [vmem:[#allocation22 + $0x8] sm:$0xf]
          %v1575 = vld [vmem:[#allocation22 + $0xc] sm:$0xf]
          %v1576 = vld [vmem:[#allocation22 + $0x10] sm:$0xf]
          %v1577 = vld [vmem:[#allocation22 + $0x14] sm:$0xf]
          %v1578 = vld [vmem:[#allocation22 + $0x18] sm:$0xf]
          %v1579 = vld [vmem:[#allocation22 + $0x1c] sm:$0xf]
          %v1580 = vld [vmem:[#allocation22 + $0x20] sm:$0xf]
          %v1581 = vld [vmem:[#allocation22 + $0x24] sm:$0xf]
          %v1582 = vld [vmem:[#allocation22 + $0x28] sm:$0xf]
          %v1583 = vld [vmem:[#allocation22 + $0x2c] sm:$0xf]
          %v1584 = vld [vmem:[#allocation22 + $0x30] sm:$0xf]
          %v1585 = vld [vmem:[#allocation22 + $0x34] sm:$0xf]
          %v1586 = vld [vmem:[#allocation22 + $0x38] sm:$0xf]
          %v1587 = vld [vmem:[#allocation22 + $0x3c] sm:$0xf]
          %v1588 = vld [vmem:[#allocation22 + $0x40] sm:$0xf]
          %v1589 = vld [vmem:[#allocation22 + $0x44] sm:$0xf]
          %v1590 = vld [vmem:[#allocation22 + $0x48] sm:$0xf]
          %v1591 = vld [vmem:[#allocation22 + $0x4c] sm:$0xf]
          %v1592 = vld [vmem:[#allocation22 + $0x50] sm:$0xf]
          %v1593 = vld [vmem:[#allocation22 + $0x54] sm:$0xf]
          %v1594 = vld [vmem:[#allocation22 + $0x58] sm:$0xf]
          %v1595 = vld [vmem:[#allocation22 + $0x5c] sm:$0xf]
          %v1596 = vld [vmem:[#allocation22 + $0x60] sm:$0xf]
          %v1597 = vld [vmem:[#allocation22 + $0x64] sm:$0xf]
          %v1598 = vld [vmem:[#allocation22 + $0x68] sm:$0xf]
          %v1599 = vld [vmem:[#allocation22 + $0x6c] sm:$0xf]
          %v1600 = vld [vmem:[#allocation22 + $0x70] sm:$0xf]
          %v1601 = vld [vmem:[#allocation22 + $0x74] sm:$0xf]
          %v1602 = vld [vmem:[#allocation22 + $0x78] sm:$0xf]
          %v1603 = vld [vmem:[#allocation22 + $0x7c] sm:$0xf]
          %v1604 = vld [vmem:[#allocation23] sm:$0x1]
          %v1606 = vlaneseq
          %v1607 = vshrl.u32 %v1606, 7
          %v1608 = vsub.s32 0, %v1607
          %v1609 = vrot.slane %v1604, %v1608
          %v1643 = vunpack.c.l.b16 %v1572
          %v1644 = vunpack.c.l.b16 %v1573
          %v1645 = vunpack.c.l.b16 %v1574
          %v1646 = vunpack.c.l.b16 %v1575
          %v1647 = vunpack.c.l.b16 %v1576
          %v1648 = vunpack.c.l.b16 %v1577
          %v1649 = vunpack.c.l.b16 %v1578
          %v1650 = vunpack.c.l.b16 %v1579
          %v1651 = vunpack.c.l.b16 %v1580
          %v1652 = vunpack.c.l.b16 %v1581
          %v1653 = vunpack.c.l.b16 %v1582
          %v1654 = vunpack.c.l.b16 %v1583
          %v1655 = vunpack.c.l.b16 %v1584
          %v1656 = vunpack.c.l.b16 %v1585
          %v1657 = vunpack.c.l.b16 %v1586
          %v1658 = vunpack.c.l.b16 %v1587
          %v1659 = vunpack.c.l.b16 %v1588
          %v1660 = vunpack.c.l.b16 %v1589
          %v1661 = vunpack.c.l.b16 %v1590
          %v1662 = vunpack.c.l.b16 %v1591
          %v1663 = vunpack.c.l.b16 %v1592
          %v1664 = vunpack.c.l.b16 %v1593
          %v1665 = vunpack.c.l.b16 %v1594
          %v1666 = vunpack.c.l.b16 %v1595
          %v1667 = vunpack.c.l.b16 %v1596
          %v1668 = vunpack.c.l.b16 %v1597
          %v1669 = vunpack.c.l.b16 %v1598
          %v1670 = vunpack.c.l.b16 %v1599
          %v1671 = vunpack.c.l.b16 %v1600
          %v1672 = vunpack.c.l.b16 %v1601
          %v1673 = vunpack.c.l.b16 %v1602
          %v1674 = vunpack.c.l.b16 %v1603
          %v1675 = vpack.c.b16 %v1644, %v1643
          %v1676 = vpack.c.b16 %v1646, %v1645
          %v1677 = vpack.c.b16 %v1648, %v1647
          %v1678 = vpack.c.b16 %v1650, %v1649
          %v1679 = vpack.c.b16 %v1652, %v1651
          %v1680 = vpack.c.b16 %v1654, %v1653
          %v1681 = vpack.c.b16 %v1656, %v1655
          %v1682 = vpack.c.b16 %v1658, %v1657
          %v1683 = vpack.c.b16 %v1660, %v1659
          %v1684 = vpack.c.b16 %v1662, %v1661
          %v1685 = vpack.c.b16 %v1664, %v1663
          %v1686 = vpack.c.b16 %v1666, %v1665
          %v1687 = vpack.c.b16 %v1668, %v1667
          %v1688 = vpack.c.b16 %v1670, %v1669
          %v1689 = vpack.c.b16 %v1672, %v1671
          %v1690 = vpack.c.b16 %v1674, %v1673
          %1707 = vmatprep.subr.bf16.mxu0 0
          %1708 = vmatpush1.bf16.msra.mxu0 %v1675
          %1709 = vmatprep.subr.bf16.mxu0 0
          %1710 = vmatpush1.bf16.msra.mxu0 %v1676
          %1711 = vmatprep.subr.bf16.mxu0 0
          %1712 = vmatpush1.bf16.msra.mxu0 %v1677
          %1713 = vmatprep.subr.bf16.mxu0 0
          %1714 = vmatpush1.bf16.msra.mxu0 %v1678
          %1715 = vmatprep.subr.bf16.mxu0 0
          %1716 = vmatpush1.bf16.msra.mxu0 %v1679
          %1717 = vmatprep.subr.bf16.mxu0 0
          %1718 = vmatpush1.bf16.msra.mxu0 %v1680
          %1719 = vmatprep.subr.bf16.mxu0 0
          %1720 = vmatpush1.bf16.msra.mxu0 %v1681
          %1721 = vmatprep.subr.bf16.mxu0 0
          %1722 = vmatpush1.bf16.msra.mxu0 %v1682
          %1723 = vmatprep.subr.bf16.mxu0 0
          %1724 = vmatpush1.bf16.msra.mxu0 %v1683
          %1725 = vmatprep.subr.bf16.mxu0 0
          %1726 = vmatpush1.bf16.msra.mxu0 %v1684
          %1727 = vmatprep.subr.bf16.mxu0 0
          %1728 = vmatpush1.bf16.msra.mxu0 %v1685
          %1729 = vmatprep.subr.bf16.mxu0 0
          %1730 = vmatpush1.bf16.msra.mxu0 %v1686
          %1731 = vmatprep.subr.bf16.mxu0 0
          %1732 = vmatpush1.bf16.msra.mxu0 %v1687
          %1733 = vmatprep.subr.bf16.mxu0 0
          %1734 = vmatpush1.bf16.msra.mxu0 %v1688
          %1735 = vmatprep.subr.bf16.mxu0 0
          %1736 = vmatpush1.bf16.msra.mxu0 %v1689
          %1737 = vmatprep.subr.bf16.mxu0 0
          %1738 = vmatpush1.bf16.msra.mxu0 %v1690
          %1739 = vmatprep.mubr.bf16.mxu0 %v1571
          %1740 = vmatmul.mubr.bf16.gmra.mrb[0].mxu0 %v1570
          %v1741 = vpop.f32.mrb[0].mxu0
          %v1742 = vadd.f32 %v1609, %v1741
          %v1743 = vpop.f32.mrb[0].mxu0
          %v1744 = vpop.f32.mrb[0].mxu0
          %v1745 = vpop.f32.mrb[0].mxu0
          %1746 = vdwg.mxu0
          %v1748 = vlaneseq
          %v1749 = vshrl.u32 %v1748, 7
          %v1750 = vsub.s32 0, %v1749
          %v1751 = vrot.slane %v1450, %v1750
          %v1753 = vadd.f32 %v1742, %v1751
          %v1754 = vld [vmem:[#allocation3] sm:$0xff]
          %v1755 = vpack.c.bf16 %v1754, %v1754
          %v1756 = vld [vmem:[#allocation25] sm:$0xff]
          %v1757 = vld [vmem:[#allocation25 + $0x8] sm:$0xff]
          %v1758 = vld [vmem:[#allocation25 + $0x10] sm:$0x33]
          %v1759 = vld [vmem:[#allocation26] sm:$0x3]
          %v1761 = vlaneseq
          %v1762 = vshrl.u32 %v1761, 7
          %v1763 = vsub.s32 0, %v1762
          %v1764 = vrot.slane %v1759, %v1763
          %v1765 = vlaneseq
          %v1766 = vshrl.u32 %v1765, 7
          %v1767 = vsub.s32 1, %v1766
          %v1768 = vrot.slane %v1759, %v1767
          %v1774 = vunpack.c.l.b16 %v1756
          %v1775 = vunpack.c.h.b16 %v1756
          %v1776 = vunpack.c.l.b16 %v1757
          %v1777 = vunpack.c.h.b16 %v1757
          %v1778 = vunpack.c.l.b16 %v1758
          %v1779 = vunpack.c.h.b16 %v1758
          %v1780 = vpack.c.b16 %v1776, %v1774
          %v1781 = vpack.c.b16 %v1777, %v1775
          %v1782 = vpack.c.b16 %v1778, %v1778
          %v1783 = vpack.c.b16 %v1779, %v1779
          %v1787 = vsel %vm1491, %v1755, 0
          %v1790 = vand.u32 %v1782, %v1498
          %v1793 = vand.u32 %v1783, %v1498
          %1795 = vmatprep.subr.bf16.mxu0 %v1781
          %1796 = vmatpush1.bf16.msra.mxu0 %v1780
          %1797 = vmatprep.subr.bf16.mxu0 %v1793
          %1798 = vmatpush1.bf16.msra.mxu0 %v1790
          %1799 = vmatprep.subr.bf16.mxu0 0
          %1800 = vmatpush1.bf16.msra.mxu0 0
          %1801 = vmatprep.subr.bf16.mxu0 0
          %1802 = vmatpush1.bf16.msra.mxu0 0
          %1803 = vmatprep.subr.bf16.mxu0 0
          %1804 = vmatpush1.bf16.msra.mxu0 0
          %1805 = vmatprep.subr.bf16.mxu0 0
          %1806 = vmatpush1.bf16.msra.mxu0 0
          %1807 = vmatprep.subr.bf16.mxu0 0
          %1808 = vmatpush1.bf16.msra.mxu0 0
          %1809 = vmatprep.subr.bf16.mxu0 0
          %1810 = vmatpush1.bf16.msra.mxu0 0
          %1811 = vmatprep.subr.bf16.mxu0 0
          %1812 = vmatpush1.bf16.msra.mxu0 0
          %1813 = vmatprep.subr.bf16.mxu0 0
          %1814 = vmatpush1.bf16.msra.mxu0 0
          %1815 = vmatprep.subr.bf16.mxu0 0
          %1816 = vmatpush1.bf16.msra.mxu0 0
          %1817 = vmatprep.subr.bf16.mxu0 0
          %1818 = vmatpush1.bf16.msra.mxu0 0
          %1819 = vmatprep.subr.bf16.mxu0 0
          %1820 = vmatpush1.bf16.msra.mxu0 0
          %1821 = vmatprep.subr.bf16.mxu0 0
          %1822 = vmatpush1.bf16.msra.mxu0 0
          %1823 = vmatprep.subr.bf16.mxu0 0
          %1824 = vmatpush1.bf16.msra.mxu0 0
          %1825 = vmatprep.subr.bf16.mxu0 0
          %1826 = vmatpush1.bf16.msra.mxu0 0
          %1827 = vmatprep.mubr.bf16.mxu0 0
          %1828 = vmatmul.mubr.bf16.gmra.mrb[0].mxu0 %v1787
          %v1829 = vpop.f32.mrb[0].mxu0
          %v1830 = vadd.f32 %v1764, %v1829
          %v1831 = vpop.f32.mrb[0].mxu0
          %v1832 = vadd.f32 %v1768, %v1831
          %v1833 = vpop.f32.mrb[0].mxu0
          %v1834 = vpop.f32.mrb[0].mxu0
          %1835 = vdwg.mxu0
          %v1836 = vadd.f32 %v1830, 1.0
          %v1837 = vadd.f32 %v1832, 1.0
          %v1838 = vmul.f32 %v1836, 0.1
          %v1839 = vmul.f32 %v1837, 0.1
          %v1840 = vsub.f32 %v1838, 1.0
          %v1841 = vsub.f32 %v1839, 1.0
          %v1842 = vsub.f32 %v1830, 1.0
          %v1843 = vsub.f32 %v1832, 1.0
          %v1844 = vmul.f32 %v1842, 0.1
          %v1845 = vmul.f32 %v1843, 0.1
          %v1846 = vadd.f32 %v1844, 1.0
          %v1847 = vadd.f32 %v1845, 1.0
          %v1848 = vsub.f32 %v1830, %v1846
          %v1849 = vsub.f32 %v1832, %v1847
          %v1850 = vmax.f32 %v1848, 0.0
          %v1851 = vmax.f32 %v1849, 0.0
          %v1852 = vsub.f32 %v1830, %v1850
          %v1853 = vsub.f32 %v1832, %v1851
          %v1854 = vsub.f32 %v1840, %v1852
          %v1855 = vsub.f32 %v1841, %v1853
          %v1856 = vmax.f32 %v1854, 0.0
          %v1857 = vmax.f32 %v1855, 0.0
          %v1858 = vadd.f32 %v1856, %v1852
          %v1859 = vadd.f32 %v1857, %v1853
          %v1860 = vpack.c.bf16 %v1858, %v1858
          %v1861 = vpack.c.bf16 %v1859, %v1859
          %v1862 = vld [vmem:[#allocation28] sm:$0xf]
          %v1863 = vld [vmem:[#allocation28 + $0x4] sm:$0xf]
          %v1864 = vld [vmem:[#allocation28 + $0x8] sm:$0xf]
          %v1865 = vld [vmem:[#allocation28 + $0xc] sm:$0xf]
          %v1866 = vld [vmem:[#allocation28 + $0x10] sm:$0xf]
          %v1867 = vld [vmem:[#allocation28 + $0x14] sm:$0xf]
          %v1868 = vld [vmem:[#allocation28 + $0x18] sm:$0xf]
          %v1869 = vld [vmem:[#allocation28 + $0x1c] sm:$0xf]
          %v1870 = vld [vmem:[#allocation28 + $0x20] sm:$0xf]
          %v1871 = vld [vmem:[#allocation28 + $0x24] sm:$0xf]
          %v1872 = vld [vmem:[#allocation28 + $0x28] sm:$0xf]
          %v1873 = vld [vmem:[#allocation28 + $0x2c] sm:$0xf]
          %v1874 = vld [vmem:[#allocation28 + $0x30] sm:$0xf]
          %v1875 = vld [vmem:[#allocation28 + $0x34] sm:$0xf]
          %v1876 = vld [vmem:[#allocation28 + $0x38] sm:$0xf]
          %v1877 = vld [vmem:[#allocation28 + $0x3c] sm:$0xf]
          %v1878 = vld [vmem:[#allocation28 + $0x40] sm:$0xf]
          %v1879 = vld [vmem:[#allocation28 + $0x44] sm:$0xf]
          %v1880 = vld [vmem:[#allocation28 + $0x48] sm:$0xf]
          %v1881 = vld [vmem:[#allocation28 + $0x4c] sm:$0xf]
          %v1882 = vld [vmem:[#allocation28 + $0x50] sm:$0xf]
          %v1883 = vld [vmem:[#allocation28 + $0x54] sm:$0xf]
          %v1884 = vld [vmem:[#allocation28 + $0x58] sm:$0xf]
          %v1885 = vld [vmem:[#allocation28 + $0x5c] sm:$0xf]
          %v1886 = vld [vmem:[#allocation28 + $0x60] sm:$0xf]
          %v1887 = vld [vmem:[#allocation28 + $0x64] sm:$0xf]
          %v1888 = vld [vmem:[#allocation28 + $0x68] sm:$0xf]
          %v1889 = vld [vmem:[#allocation28 + $0x6c] sm:$0xf]
          %v1890 = vld [vmem:[#allocation28 + $0x70] sm:$0xf]
          %v1891 = vld [vmem:[#allocation28 + $0x74] sm:$0xf]
          %v1892 = vld [vmem:[#allocation28 + $0x78] sm:$0xf]
          %v1893 = vld [vmem:[#allocation28 + $0x7c] sm:$0xf]
          %v1894 = vld [vmem:[#allocation29] sm:$0x1]
          %v1896 = vlaneseq
          %v1897 = vshrl.u32 %v1896, 7
          %v1898 = vsub.s32 0, %v1897
          %v1899 = vrot.slane %v1894, %v1898
          %v1933 = vunpack.c.l.b16 %v1862
          %v1934 = vunpack.c.l.b16 %v1863
          %v1935 = vunpack.c.l.b16 %v1864
          %v1936 = vunpack.c.l.b16 %v1865
          %v1937 = vunpack.c.l.b16 %v1866
          %v1938 = vunpack.c.l.b16 %v1867
          %v1939 = vunpack.c.l.b16 %v1868
          %v1940 = vunpack.c.l.b16 %v1869
          %v1941 = vunpack.c.l.b16 %v1870
          %v1942 = vunpack.c.l.b16 %v1871
          %v1943 = vunpack.c.l.b16 %v1872
          %v1944 = vunpack.c.l.b16 %v1873
          %v1945 = vunpack.c.l.b16 %v1874
          %v1946 = vunpack.c.l.b16 %v1875
          %v1947 = vunpack.c.l.b16 %v1876
          %v1948 = vunpack.c.l.b16 %v1877
          %v1949 = vunpack.c.l.b16 %v1878
          %v1950 = vunpack.c.l.b16 %v1879
          %v1951 = vunpack.c.l.b16 %v1880
          %v1952 = vunpack.c.l.b16 %v1881
          %v1953 = vunpack.c.l.b16 %v1882
          %v1954 = vunpack.c.l.b16 %v1883
          %v1955 = vunpack.c.l.b16 %v1884
          %v1956 = vunpack.c.l.b16 %v1885
          %v1957 = vunpack.c.l.b16 %v1886
          %v1958 = vunpack.c.l.b16 %v1887
          %v1959 = vunpack.c.l.b16 %v1888
          %v1960 = vunpack.c.l.b16 %v1889
          %v1961 = vunpack.c.l.b16 %v1890
          %v1962 = vunpack.c.l.b16 %v1891
          %v1963 = vunpack.c.l.b16 %v1892
          %v1964 = vunpack.c.l.b16 %v1893
          %v1965 = vpack.c.b16 %v1934, %v1933
          %v1966 = vpack.c.b16 %v1936, %v1935
          %v1967 = vpack.c.b16 %v1938, %v1937
          %v1968 = vpack.c.b16 %v1940, %v1939
          %v1969 = vpack.c.b16 %v1942, %v1941
          %v1970 = vpack.c.b16 %v1944, %v1943
          %v1971 = vpack.c.b16 %v1946, %v1945
          %v1972 = vpack.c.b16 %v1948, %v1947
          %v1973 = vpack.c.b16 %v1950, %v1949
          %v1974 = vpack.c.b16 %v1952, %v1951
          %v1975 = vpack.c.b16 %v1954, %v1953
          %v1976 = vpack.c.b16 %v1956, %v1955
          %v1977 = vpack.c.b16 %v1958, %v1957
          %v1978 = vpack.c.b16 %v1960, %v1959
          %v1979 = vpack.c.b16 %v1962, %v1961
          %v1980 = vpack.c.b16 %v1964, %v1963
          %1997 = vmatprep.subr.bf16.mxu0 0
          %1998 = vmatpush1.bf16.msra.mxu0 %v1965
          %1999 = vmatprep.subr.bf16.mxu0 0
          %2000 = vmatpush1.bf16.msra.mxu0 %v1966
          %2001 = vmatprep.subr.bf16.mxu0 0
          %2002 = vmatpush1.bf16.msra.mxu0 %v1967
          %2003 = vmatprep.subr.bf16.mxu0 0
          %2004 = vmatpush1.bf16.msra.mxu0 %v1968
          %2005 = vmatprep.subr.bf16.mxu0 0
          %2006 = vmatpush1.bf16.msra.mxu0 %v1969
          %2007 = vmatprep.subr.bf16.mxu0 0
          %2008 = vmatpush1.bf16.msra.mxu0 %v1970
          %2009 = vmatprep.subr.bf16.mxu0 0
          %2010 = vmatpush1.bf16.msra.mxu0 %v1971
          %2011 = vmatprep.subr.bf16.mxu0 0
          %2012 = vmatpush1.bf16.msra.mxu0 %v1972
          %2013 = vmatprep.subr.bf16.mxu0 0
          %2014 = vmatpush1.bf16.msra.mxu0 %v1973
          %2015 = vmatprep.subr.bf16.mxu0 0
          %2016 = vmatpush1.bf16.msra.mxu0 %v1974
          %2017 = vmatprep.subr.bf16.mxu0 0
          %2018 = vmatpush1.bf16.msra.mxu0 %v1975
          %2019 = vmatprep.subr.bf16.mxu0 0
          %2020 = vmatpush1.bf16.msra.mxu0 %v1976
          %2021 = vmatprep.subr.bf16.mxu0 0
          %2022 = vmatpush1.bf16.msra.mxu0 %v1977
          %2023 = vmatprep.subr.bf16.mxu0 0
          %2024 = vmatpush1.bf16.msra.mxu0 %v1978
          %2025 = vmatprep.subr.bf16.mxu0 0
          %2026 = vmatpush1.bf16.msra.mxu0 %v1979
          %2027 = vmatprep.subr.bf16.mxu0 0
          %2028 = vmatpush1.bf16.msra.mxu0 %v1980
          %2029 = vmatprep.mubr.bf16.mxu0 %v1861
          %2030 = vmatmul.mubr.bf16.gmra.mrb[0].mxu0 %v1860
          %v2031 = vpop.f32.mrb[0].mxu0
          %v2032 = vadd.f32 %v1899, %v2031
          %v2033 = vpop.f32.mrb[0].mxu0
          %v2034 = vpop.f32.mrb[0].mxu0
          %v2035 = vpop.f32.mrb[0].mxu0
          %2036 = vdwg.mxu0
          %v2037 = vadd.f32 %v2032, %v1751
          %v2038 = vld [vmem:[#allocation13] sm:$0xff]
          %v2039 = vpack.c.bf16 %v2038, %v2038
          %v2040 = vld [vmem:[#allocation31] sm:$0xff]
          %v2041 = vld [vmem:[#allocation31 + $0x8] sm:$0xff]
          %v2042 = vld [vmem:[#allocation32] sm:$0x3]
          %v2044 = vlaneseq
          %v2045 = vshrl.u32 %v2044, 7
          %v2046 = vsub.s32 0, %v2045
          %v2047 = vrot.slane %v2042, %v2046
          %v2048 = vlaneseq
          %v2049 = vshrl.u32 %v2048, 7
          %v2050 = vsub.s32 1, %v2049
          %v2051 = vrot.slane %v2042, %v2050
          %v2056 = vunpack.c.l.b16 %v2040
          %v2057 = vunpack.c.h.b16 %v2040
          %v2058 = vunpack.c.l.b16 %v2041
          %v2059 = vunpack.c.h.b16 %v2041
          %v2060 = vpack.c.b16 %v2058, %v2056
          %v2061 = vpack.c.b16 %v2059, %v2057
          %vm2064 = vcmask 130048
          %v2066 = vsel %vm2064, %v2039, 0
          %2068 = vmatprep.subr.bf16.mxu0 %v2061
          %2069 = vmatpush1.bf16.msra.mxu0 %v2060
          %2070 = vmatprep.subr.bf16.mxu0 0
          %2071 = vmatpush1.bf16.msra.mxu0 0
          %2072 = vmatprep.subr.bf16.mxu0 0
          %2073 = vmatpush1.bf16.msra.mxu0 0
          %2074 = vmatprep.subr.bf16.mxu0 0
          %2075 = vmatpush1.bf16.msra.mxu0 0
          %2076 = vmatprep.subr.bf16.mxu0 0
          %2077 = vmatpush1.bf16.msra.mxu0 0
          %2078 = vmatprep.subr.bf16.mxu0 0
          %2079 = vmatpush1.bf16.msra.mxu0 0
          %2080 = vmatprep.subr.bf16.mxu0 0
          %2081 = vmatpush1.bf16.msra.mxu0 0
          %2082 = vmatprep.subr.bf16.mxu0 0
          %2083 = vmatpush1.bf16.msra.mxu0 0
          %2084 = vmatprep.subr.bf16.mxu0 0
          %2085 = vmatpush1.bf16.msra.mxu0 0
          %2086 = vmatprep.subr.bf16.mxu0 0
          %2087 = vmatpush1.bf16.msra.mxu0 0
          %2088 = vmatprep.subr.bf16.mxu0 0
          %2089 = vmatpush1.bf16.msra.mxu0 0
          %2090 = vmatprep.subr.bf16.mxu0 0
          %2091 = vmatpush1.bf16.msra.mxu0 0
          %2092 = vmatprep.subr.bf16.mxu0 0
          %2093 = vmatpush1.bf16.msra.mxu0 0
          %2094 = vmatprep.subr.bf16.mxu0 0
          %2095 = vmatpush1.bf16.msra.mxu0 0
          %2096 = vmatprep.subr.bf16.mxu0 0
          %2097 = vmatpush1.bf16.msra.mxu0 0
          %2098 = vmatprep.subr.bf16.mxu0 0
          %2099 = vmatpush1.bf16.msra.mxu0 0
          %2100 = vmatprep.mubr.bf16.mxu0 0
          %2101 = vmatmul.mubr.bf16.gmra.mrb[0].mxu0 %v2066
          %v2102 = vpop.f32.mrb[0].mxu0
          %v2103 = vadd.f32 %v2047, %v2102
          %v2104 = vpop.f32.mrb[0].mxu0
          %v2105 = vadd.f32 %v2051, %v2104
          %v2106 = vpop.f32.mrb[0].mxu0
          %v2107 = vpop.f32.mrb[0].mxu0
          %2108 = vdwg.mxu0
          %v2109 = vadd.f32 %v2103, 1.0
          %v2110 = vadd.f32 %v2105, 1.0
          %v2111 = vmul.f32 %v2109, 0.1
          %v2112 = vmul.f32 %v2110, 0.1
          %v2113 = vsub.f32 %v2111, 1.0
          %v2114 = vsub.f32 %v2112, 1.0
          %v2115 = vsub.f32 %v2103, 1.0
          %v2116 = vsub.f32 %v2105, 1.0
          %v2117 = vmul.f32 %v2115, 0.1
          %v2118 = vmul.f32 %v2116, 0.1
          %v2119 = vadd.f32 %v2117, 1.0
          %v2120 = vadd.f32 %v2118, 1.0
          %v2121 = vsub.f32 %v2103, %v2119
          %v2122 = vsub.f32 %v2105, %v2120
          %v2123 = vmax.f32 %v2121, 0.0
          %v2124 = vmax.f32 %v2122, 0.0
          %v2125 = vsub.f32 %v2103, %v2123
          %v2126 = vsub.f32 %v2105, %v2124
          %v2127 = vsub.f32 %v2113, %v2125
          %v2128 = vsub.f32 %v2114, %v2126
          %v2129 = vmax.f32 %v2127, 0.0
          %v2130 = vmax.f32 %v2128, 0.0
          %v2131 = vadd.f32 %v2129, %v2125
          %v2132 = vadd.f32 %v2130, %v2126
          %v2133 = vpack.c.bf16 %v2131, %v2131
          %v2134 = vpack.c.bf16 %v2132, %v2132
          %v2135 = vld [vmem:[#allocation34] sm:$0xf]
          %v2136 = vld [vmem:[#allocation34 + $0x4] sm:$0xf]
          %v2137 = vld [vmem:[#allocation34 + $0x8] sm:$0xf]
          %v2138 = vld [vmem:[#allocation34 + $0xc] sm:$0xf]
          %v2139 = vld [vmem:[#allocation34 + $0x10] sm:$0xf]
          %v2140 = vld [vmem:[#allocation34 + $0x14] sm:$0xf]
          %v2141 = vld [vmem:[#allocation34 + $0x18] sm:$0xf]
          %v2142 = vld [vmem:[#allocation34 + $0x1c] sm:$0xf]
          %v2143 = vld [vmem:[#allocation34 + $0x20] sm:$0xf]
          %v2144 = vld [vmem:[#allocation34 + $0x24] sm:$0xf]
          %v2145 = vld [vmem:[#allocation34 + $0x28] sm:$0xf]
          %v2146 = vld [vmem:[#allocation34 + $0x2c] sm:$0xf]
          %v2147 = vld [vmem:[#allocation34 + $0x30] sm:$0xf]
          %v2148 = vld [vmem:[#allocation34 + $0x34] sm:$0xf]
          %v2149 = vld [vmem:[#allocation34 + $0x38] sm:$0xf]
          %v2150 = vld [vmem:[#allocation34 + $0x3c] sm:$0xf]
          %v2151 = vld [vmem:[#allocation34 + $0x40] sm:$0xf]
          %v2152 = vld [vmem:[#allocation34 + $0x44] sm:$0xf]
          %v2153 = vld [vmem:[#allocation34 + $0x48] sm:$0xf]
          %v2154 = vld [vmem:[#allocation34 + $0x4c] sm:$0xf]
          %v2155 = vld [vmem:[#allocation34 + $0x50] sm:$0xf]
          %v2156 = vld [vmem:[#allocation34 + $0x54] sm:$0xf]
          %v2157 = vld [vmem:[#allocation34 + $0x58] sm:$0xf]
          %v2158 = vld [vmem:[#allocation34 + $0x5c] sm:$0xf]
          %v2159 = vld [vmem:[#allocation34 + $0x60] sm:$0xf]
          %v2160 = vld [vmem:[#allocation34 + $0x64] sm:$0xf]
          %v2161 = vld [vmem:[#allocation34 + $0x68] sm:$0xf]
          %v2162 = vld [vmem:[#allocation34 + $0x6c] sm:$0xf]
          %v2163 = vld [vmem:[#allocation34 + $0x70] sm:$0xf]
          %v2164 = vld [vmem:[#allocation34 + $0x74] sm:$0xf]
          %v2165 = vld [vmem:[#allocation34 + $0x78] sm:$0xf]
          %v2166 = vld [vmem:[#allocation34 + $0x7c] sm:$0xf]
          %v2167 = vld [vmem:[#allocation35] sm:$0x1]
          %v2169 = vlaneseq
          %v2170 = vshrl.u32 %v2169, 7
          %v2171 = vsub.s32 0, %v2170
          %v2172 = vrot.slane %v2167, %v2171
          %v2206 = vunpack.c.l.b16 %v2135
          %v2207 = vunpack.c.l.b16 %v2136
          %v2208 = vunpack.c.l.b16 %v2137
          %v2209 = vunpack.c.l.b16 %v2138
          %v2210 = vunpack.c.l.b16 %v2139
          %v2211 = vunpack.c.l.b16 %v2140
          %v2212 = vunpack.c.l.b16 %v2141
          %v2213 = vunpack.c.l.b16 %v2142
          %v2214 = vunpack.c.l.b16 %v2143
          %v2215 = vunpack.c.l.b16 %v2144
          %v2216 = vunpack.c.l.b16 %v2145
          %v2217 = vunpack.c.l.b16 %v2146
          %v2218 = vunpack.c.l.b16 %v2147
          %v2219 = vunpack.c.l.b16 %v2148
          %v2220 = vunpack.c.l.b16 %v2149
          %v2221 = vunpack.c.l.b16 %v2150
          %v2222 = vunpack.c.l.b16 %v2151
          %v2223 = vunpack.c.l.b16 %v2152
          %v2224 = vunpack.c.l.b16 %v2153
          %v2225 = vunpack.c.l.b16 %v2154
          %v2226 = vunpack.c.l.b16 %v2155
          %v2227 = vunpack.c.l.b16 %v2156
          %v2228 = vunpack.c.l.b16 %v2157
          %v2229 = vunpack.c.l.b16 %v2158
          %v2230 = vunpack.c.l.b16 %v2159
          %v2231 = vunpack.c.l.b16 %v2160
          %v2232 = vunpack.c.l.b16 %v2161
          %v2233 = vunpack.c.l.b16 %v2162
          %v2234 = vunpack.c.l.b16 %v2163
          %v2235 = vunpack.c.l.b16 %v2164
          %v2236 = vunpack.c.l.b16 %v2165
          %v2237 = vunpack.c.l.b16 %v2166
          %v2238 = vpack.c.b16 %v2207, %v2206
          %v2239 = vpack.c.b16 %v2209, %v2208
          %v2240 = vpack.c.b16 %v2211, %v2210
          %v2241 = vpack.c.b16 %v2213, %v2212
          %v2242 = vpack.c.b16 %v2215, %v2214
          %v2243 = vpack.c.b16 %v2217, %v2216
          %v2244 = vpack.c.b16 %v2219, %v2218
          %v2245 = vpack.c.b16 %v2221, %v2220
          %v2246 = vpack.c.b16 %v2223, %v2222
          %v2247 = vpack.c.b16 %v2225, %v2224
          %v2248 = vpack.c.b16 %v2227, %v2226
          %v2249 = vpack.c.b16 %v2229, %v2228
          %v2250 = vpack.c.b16 %v2231, %v2230
          %v2251 = vpack.c.b16 %v2233, %v2232
          %v2252 = vpack.c.b16 %v2235, %v2234
          %v2253 = vpack.c.b16 %v2237, %v2236
          %2270 = vmatprep.subr.bf16.mxu0 0
          %2271 = vmatpush1.bf16.msra.mxu0 %v2238
          %2272 = vmatprep.subr.bf16.mxu0 0
          %2273 = vmatpush1.bf16.msra.mxu0 %v2239
          %2274 = vmatprep.subr.bf16.mxu0 0
          %2275 = vmatpush1.bf16.msra.mxu0 %v2240
          %2276 = vmatprep.subr.bf16.mxu0 0
          %2277 = vmatpush1.bf16.msra.mxu0 %v2241
          %2278 = vmatprep.subr.bf16.mxu0 0
          %2279 = vmatpush1.bf16.msra.mxu0 %v2242
          %2280 = vmatprep.subr.bf16.mxu0 0
          %2281 = vmatpush1.bf16.msra.mxu0 %v2243
          %2282 = vmatprep.subr.bf16.mxu0 0
          %2283 = vmatpush1.bf16.msra.mxu0 %v2244
          %2284 = vmatprep.subr.bf16.mxu0 0
          %2285 = vmatpush1.bf16.msra.mxu0 %v2245
          %2286 = vmatprep.subr.bf16.mxu0 0
          %2287 = vmatpush1.bf16.msra.mxu0 %v2246
          %2288 = vmatprep.subr.bf16.mxu0 0
          %2289 = vmatpush1.bf16.msra.mxu0 %v2247
          %2290 = vmatprep.subr.bf16.mxu0 0
          %2291 = vmatpush1.bf16.msra.mxu0 %v2248
          %2292 = vmatprep.subr.bf16.mxu0 0
          %2293 = vmatpush1.bf16.msra.mxu0 %v2249
          %2294 = vmatprep.subr.bf16.mxu0 0
          %2295 = vmatpush1.bf16.msra.mxu0 %v2250
          %2296 = vmatprep.subr.bf16.mxu0 0
          %2297 = vmatpush1.bf16.msra.mxu0 %v2251
          %2298 = vmatprep.subr.bf16.mxu0 0
          %2299 = vmatpush1.bf16.msra.mxu0 %v2252
          %2300 = vmatprep.subr.bf16.mxu0 0
          %2301 = vmatpush1.bf16.msra.mxu0 %v2253
          %2302 = vmatprep.mubr.bf16.mxu0 %v2134
          %2303 = vmatmul.mubr.bf16.gmra.mrb[0].mxu0 %v2133
          %v2304 = vpop.f32.mrb[0].mxu0
          %v2305 = vadd.f32 %v2172, %v2304
          %v2306 = vpop.f32.mrb[0].mxu0
          %v2307 = vpop.f32.mrb[0].mxu0
          %v2308 = vpop.f32.mrb[0].mxu0
          %2309 = vdwg.mxu0
          %v2310 = vadd.f32 %v2305, %v1751
          %v2311 = vld [vmem:[#allocation14] sm:$0xff]
          %v2312 = vld [vmem:[#allocation14 + $0x8] sm:$0xff]
          %v2313 = vstv %s1458
          %v2314 = vmul.f32 %v2311, %v2313
          %v2315 = vmul.f32 %v2312, %v2313
          %v2316 = vadd.f32 %v2037, %v2314
          %v2317 = vadd.f32 %v2310, %v2315
          %v2318 = vld [vmem:[#allocation50] sm:$0xff]
          %v2319 = vld [vmem:[#allocation50 + $0x8] sm:$0xff]
          %v2320 = vld [vmem:[#allocation50 + $0x10] sm:$0xff]
          %v2321 = vpack.c.bf16 %v1753, %v1753
          %v2322 = vpack.c.bf16 %v2316, %v2316
          %v2323 = vpack.c.bf16 %v2317, %v2317
          %v2324 = vpack.c.bf16 %v2318, %v2318
          %v2325 = vpack.c.bf16 %v2319, %v2319
          %v2326 = vpack.c.bf16 %v2320, %v2320
          %v2327 = vld [vmem:[#allocation37] sm:$0xff]
          %v2328 = vld [vmem:[#allocation37 + $0x8] sm:$0xff]
          %v2329 = vld [vmem:[#allocation37 + $0x10] sm:$0xff]
          %v2330 = vld [vmem:[#allocation37 + $0x18] sm:$0xff]
          %v2331 = vld [vmem:[#allocation37 + $0x20] sm:$0xff]
          %v2332 = vld [vmem:[#allocation37 + $0x28] sm:$0xff]
          %v2333 = vld [vmem:[#allocation37 + $0x30] sm:$0xff]
          %v2334 = vld [vmem:[#allocation37 + $0x38] sm:$0xff]
          %v2335 = vld [vmem:[#allocation37 + $0x40] sm:$0xff]
          %v2336 = vld [vmem:[#allocation37 + $0x48] sm:$0xff]
          %v2337 = vld [vmem:[#allocation37 + $0x50] sm:$0xff]
          %v2338 = vld [vmem:[#allocation37 + $0x58] sm:$0xff]
          %v2339 = vld [vmem:[#allocation37 + $0x60] sm:$0xff]
          %v2340 = vld [vmem:[#allocation37 + $0x68] sm:$0xff]
          %v2341 = vld [vmem:[#allocation37 + $0x70] sm:$0xff]
          %v2342 = vld [vmem:[#allocation37 + $0x78] sm:$0xff]
          %v2343 = vld [vmem:[#allocation37 + $0x80] sm:$0xff]
          %v2344 = vld [vmem:[#allocation37 + $0x88] sm:$0xff]
          %v2345 = vld [vmem:[#allocation37 + $0x90] sm:$0xff]
          %v2346 = vld [vmem:[#allocation37 + $0x98] sm:$0xff]
          %v2347 = vld [vmem:[#allocation37 + $0xa0] sm:$0xff]
          %v2348 = vld [vmem:[#allocation37 + $0xa8] sm:$0xff]
          %v2349 = vld [vmem:[#allocation37 + $0xb0] sm:$0xff]
          %v2350 = vld [vmem:[#allocation37 + $0xb8] sm:$0xff]
          %v2351 = vld [vmem:[#allocation37 + $0xc0] sm:$0xff]
          %v2352 = vld [vmem:[#allocation37 + $0xc8] sm:$0xff]
          %v2353 = vld [vmem:[#allocation37 + $0xd0] sm:$0xff]
          %v2354 = vld [vmem:[#allocation37 + $0xd8] sm:$0xff]
          %v2355 = vld [vmem:[#allocation37 + $0xe0] sm:$0xff]
          %v2356 = vld [vmem:[#allocation37 + $0xe8] sm:$0xff]
          %v2357 = vld [vmem:[#allocation37 + $0xf0] sm:$0xff]
          %v2358 = vld [vmem:[#allocation37 + $0xf8] sm:$0xff]
          %v2359 = vld [vmem:[#allocation37 + $0x100] sm:$0xff]
          %v2360 = vld [vmem:[#allocation37 + $0x108] sm:$0xff]
          %v2361 = vld [vmem:[#allocation37 + $0x110] sm:$0xff]
          %v2362 = vld [vmem:[#allocation37 + $0x118] sm:$0xff]
          %v2363 = vld [vmem:[#allocation37 + $0x120] sm:$0xff]
          %v2364 = vld [vmem:[#allocation37 + $0x128] sm:$0xff]
          %v2365 = vld [vmem:[#allocation37 + $0x130] sm:$0xff]
          %v2366 = vld [vmem:[#allocation37 + $0x138] sm:$0xff]
          %v2367 = vld [vmem:[#allocation37 + $0x140] sm:$0xff]
          %v2368 = vld [vmem:[#allocation37 + $0x148] sm:$0xff]
          %v2369 = vld [vmem:[#allocation37 + $0x150] sm:$0xff]
          %v2370 = vld [vmem:[#allocation37 + $0x158] sm:$0xff]
          %v2371 = vld [vmem:[#allocation37 + $0x160] sm:$0xff]
          %v2372 = vld [vmem:[#allocation37 + $0x168] sm:$0xff]
          %v2373 = vld [vmem:[#allocation37 + $0x170] sm:$0xff]
          %v2374 = vld [vmem:[#allocation37 + $0x178] sm:$0xff]
          %v2375 = vld [vmem:[#allocation37 + $0x180] sm:$0xff]
          %v2376 = vld [vmem:[#allocation37 + $0x188] sm:$0xff]
          %v2377 = vld [vmem:[#allocation37 + $0x190] sm:$0xff]
          %v2378 = vld [vmem:[#allocation37 + $0x198] sm:$0xff]
          %v2379 = vld [vmem:[#allocation37 + $0x1a0] sm:$0xff]
          %v2380 = vld [vmem:[#allocation37 + $0x1a8] sm:$0xff]
          %v2381 = vld [vmem:[#allocation37 + $0x1b0] sm:$0xff]
          %v2382 = vld [vmem:[#allocation37 + $0x1b8] sm:$0xff]
          %v2383 = vld [vmem:[#allocation37 + $0x1c0] sm:$0xff]
          %v2384 = vld [vmem:[#allocation37 + $0x1c8] sm:$0xff]
          %v2385 = vld [vmem:[#allocation37 + $0x1d0] sm:$0xff]
          %v2386 = vld [vmem:[#allocation37 + $0x1d8] sm:$0xff]
          %v2387 = vld [vmem:[#allocation37 + $0x1e0] sm:$0xff]
          %v2388 = vld [vmem:[#allocation37 + $0x1e8] sm:$0xff]
          %v2389 = vld [vmem:[#allocation37 + $0x1f0] sm:$0xff]
          %v2390 = vld [vmem:[#allocation37 + $0x1f8] sm:$0xff]
          %v2391 = vld [vmem:[#allocation37 + $0x200] sm:$0xff]
          %v2392 = vld [vmem:[#allocation37 + $0x208] sm:$0xff]
          %v2393 = vld [vmem:[#allocation37 + $0x210] sm:$0xff]
          %v2394 = vld [vmem:[#allocation37 + $0x218] sm:$0xff]
          %v2395 = vld [vmem:[#allocation37 + $0x220] sm:$0xff]
          %v2396 = vld [vmem:[#allocation37 + $0x228] sm:$0xff]
          %v2397 = vld [vmem:[#allocation37 + $0x230] sm:$0xff]
          %v2398 = vld [vmem:[#allocation37 + $0x238] sm:$0xff]
          %v2399 = vld [vmem:[#allocation37 + $0x240] sm:$0xff]
          %v2400 = vld [vmem:[#allocation37 + $0x248] sm:$0xff]
          %v2401 = vld [vmem:[#allocation37 + $0x250] sm:$0xff]
          %v2402 = vld [vmem:[#allocation37 + $0x258] sm:$0xff]
          %v2403 = vld [vmem:[#allocation37 + $0x260] sm:$0xff]
          %v2404 = vld [vmem:[#allocation37 + $0x268] sm:$0xff]
          %v2405 = vld [vmem:[#allocation37 + $0x270] sm:$0xff]
          %v2406 = vld [vmem:[#allocation37 + $0x278] sm:$0xff]
          %v2407 = vld [vmem:[#allocation37 + $0x280] sm:$0xff]
          %v2408 = vld [vmem:[#allocation37 + $0x288] sm:$0xff]
          %v2409 = vld [vmem:[#allocation37 + $0x290] sm:$0xff]
          %v2410 = vld [vmem:[#allocation37 + $0x298] sm:$0xff]
          %v2411 = vld [vmem:[#allocation37 + $0x2a0] sm:$0xff]
          %v2412 = vld [vmem:[#allocation37 + $0x2a8] sm:$0xff]
          %v2413 = vld [vmem:[#allocation37 + $0x2b0] sm:$0xff]
          %v2414 = vld [vmem:[#allocation37 + $0x2b8] sm:$0xff]
          %v2415 = vld [vmem:[#allocation37 + $0x2c0] sm:$0xff]
          %v2416 = vld [vmem:[#allocation37 + $0x2c8] sm:$0xff]
          %v2417 = vld [vmem:[#allocation37 + $0x2d0] sm:$0xff]
          %v2418 = vld [vmem:[#allocation37 + $0x2d8] sm:$0xff]
          %v2419 = vld [vmem:[#allocation37 + $0x2e0] sm:$0xff]
          %v2420 = vld [vmem:[#allocation37 + $0x2e8] sm:$0xff]
          %v2421 = vld [vmem:[#allocation37 + $0x2f0] sm:$0xff]
          %v2422 = vld [vmem:[#allocation37 + $0x2f8] sm:$0xff]
          %v2423 = vld [vmem:[#allocation37 + $0x300] sm:$0xff]
          %v2424 = vld [vmem:[#allocation37 + $0x308] sm:$0xff]
          %v2425 = vld [vmem:[#allocation37 + $0x310] sm:$0xff]
          %v2426 = vld [vmem:[#allocation37 + $0x318] sm:$0xff]
          %v2427 = vld [vmem:[#allocation37 + $0x320] sm:$0xff]
          %v2428 = vld [vmem:[#allocation37 + $0x328] sm:$0xff]
          %v2429 = vld [vmem:[#allocation37 + $0x330] sm:$0xff]
          %v2430 = vld [vmem:[#allocation37 + $0x338] sm:$0xff]
          %v2431 = vld [vmem:[#allocation37 + $0x340] sm:$0xff]
          %v2432 = vld [vmem:[#allocation37 + $0x348] sm:$0xff]
          %v2433 = vld [vmem:[#allocation37 + $0x350] sm:$0xff]
          %v2434 = vld [vmem:[#allocation37 + $0x358] sm:$0xff]
          %v2435 = vld [vmem:[#allocation37 + $0x360] sm:$0xff]
          %v2436 = vld [vmem:[#allocation37 + $0x368] sm:$0xff]
          %v2437 = vld [vmem:[#allocation37 + $0x370] sm:$0xff]
          %v2438 = vld [vmem:[#allocation37 + $0x378] sm:$0xff]
          %v2439 = vld [vmem:[#allocation37 + $0x380] sm:$0xff]
          %v2440 = vld [vmem:[#allocation37 + $0x388] sm:$0xff]
          %v2441 = vld [vmem:[#allocation37 + $0x390] sm:$0xff]
          %v2442 = vld [vmem:[#allocation37 + $0x398] sm:$0xff]
          %v2443 = vld [vmem:[#allocation37 + $0x3a0] sm:$0xff]
          %v2444 = vld [vmem:[#allocation37 + $0x3a8] sm:$0xff]
          %v2445 = vld [vmem:[#allocation37 + $0x3b0] sm:$0xff]
          %v2446 = vld [vmem:[#allocation37 + $0x3b8] sm:$0xff]
          %v2447 = vld [vmem:[#allocation37 + $0x3c0] sm:$0xff]
          %v2448 = vld [vmem:[#allocation37 + $0x3c8] sm:$0xff]
          %v2449 = vld [vmem:[#allocation37 + $0x3d0] sm:$0xff]
          %v2450 = vld [vmem:[#allocation37 + $0x3d8] sm:$0xff]
          %v2451 = vld [vmem:[#allocation37 + $0x3e0] sm:$0xff]
          %v2452 = vld [vmem:[#allocation37 + $0x3e8] sm:$0xff]
          %v2453 = vld [vmem:[#allocation37 + $0x3f0] sm:$0xff]
          %v2454 = vld [vmem:[#allocation37 + $0x3f8] sm:$0xff]
          %v2455 = vld [vmem:[#allocation37 + $0x400] sm:$0xff]
          %v2456 = vld [vmem:[#allocation37 + $0x408] sm:$0xff]
          %v2457 = vld [vmem:[#allocation37 + $0x410] sm:$0xff]
          %v2458 = vld [vmem:[#allocation37 + $0x418] sm:$0xff]
          %v2459 = vld [vmem:[#allocation37 + $0x420] sm:$0xff]
          %v2460 = vld [vmem:[#allocation37 + $0x428] sm:$0xff]
          %v2461 = vld [vmem:[#allocation37 + $0x430] sm:$0xff]
          %v2462 = vld [vmem:[#allocation37 + $0x438] sm:$0xff]
          %v2463 = vld [vmem:[#allocation37 + $0x440] sm:$0xff]
          %v2464 = vld [vmem:[#allocation37 + $0x448] sm:$0xff]
          %v2465 = vld [vmem:[#allocation37 + $0x450] sm:$0xff]
          %v2466 = vld [vmem:[#allocation37 + $0x458] sm:$0xff]
          %v2467 = vld [vmem:[#allocation37 + $0x460] sm:$0xff]
          %v2468 = vld [vmem:[#allocation37 + $0x468] sm:$0xff]
          %v2469 = vld [vmem:[#allocation37 + $0x470] sm:$0xff]
          %v2470 = vld [vmem:[#allocation37 + $0x478] sm:$0xff]
          %v2471 = vld [vmem:[#allocation37 + $0x480] sm:$0xff]
          %v2472 = vld [vmem:[#allocation37 + $0x488] sm:$0xff]
          %v2473 = vld [vmem:[#allocation37 + $0x490] sm:$0xff]
          %v2474 = vld [vmem:[#allocation37 + $0x498] sm:$0xff]
          %v2475 = vld [vmem:[#allocation37 + $0x4a0] sm:$0xff]
          %v2476 = vld [vmem:[#allocation37 + $0x4a8] sm:$0xff]
          %v2477 = vld [vmem:[#allocation37 + $0x4b0] sm:$0xff]
          %v2478 = vld [vmem:[#allocation37 + $0x4b8] sm:$0xff]
          %v2479 = vld [vmem:[#allocation37 + $0x4c0] sm:$0xff]
          %v2480 = vld [vmem:[#allocation37 + $0x4c8] sm:$0xff]
          %v2481 = vld [vmem:[#allocation37 + $0x4d0] sm:$0xff]
          %v2482 = vld [vmem:[#allocation37 + $0x4d8] sm:$0xff]
          %v2483 = vld [vmem:[#allocation37 + $0x4e0] sm:$0xff]
          %v2484 = vld [vmem:[#allocation37 + $0x4e8] sm:$0xff]
          %v2485 = vld [vmem:[#allocation37 + $0x4f0] sm:$0xff]
          %v2486 = vld [vmem:[#allocation37 + $0x4f8] sm:$0xff]
          %v2487 = vld [vmem:[#allocation37 + $0x500] sm:$0xff]
          %v2488 = vld [vmem:[#allocation37 + $0x508] sm:$0xff]
          %v2489 = vld [vmem:[#allocation37 + $0x510] sm:$0xff]
          %v2490 = vld [vmem:[#allocation37 + $0x518] sm:$0xff]
          %v2491 = vld [vmem:[#allocation37 + $0x520] sm:$0xff]
          %v2492 = vld [vmem:[#allocation37 + $0x528] sm:$0xff]
          %v2493 = vld [vmem:[#allocation37 + $0x530] sm:$0xff]
          %v2494 = vld [vmem:[#allocation37 + $0x538] sm:$0xff]
          %v2495 = vld [vmem:[#allocation37 + $0x540] sm:$0xff]
          %v2496 = vld [vmem:[#allocation37 + $0x548] sm:$0xff]
          %v2497 = vld [vmem:[#allocation37 + $0x550] sm:$0xff]
          %v2498 = vld [vmem:[#allocation37 + $0x558] sm:$0xff]
          %v2499 = vld [vmem:[#allocation37 + $0x560] sm:$0xff]
          %v2500 = vld [vmem:[#allocation37 + $0x568] sm:$0xff]
          %v2501 = vld [vmem:[#allocation37 + $0x570] sm:$0xff]
          %v2502 = vld [vmem:[#allocation37 + $0x578] sm:$0xff]
          %v2503 = vld [vmem:[#allocation37 + $0x580] sm:$0xff]
          %v2504 = vld [vmem:[#allocation37 + $0x588] sm:$0xff]
          %v2505 = vld [vmem:[#allocation37 + $0x590] sm:$0xff]
          %v2506 = vld [vmem:[#allocation37 + $0x598] sm:$0xff]
          %v2507 = vld [vmem:[#allocation37 + $0x5a0] sm:$0xff]
          %v2508 = vld [vmem:[#allocation37 + $0x5a8] sm:$0xff]
          %v2509 = vld [vmem:[#allocation37 + $0x5b0] sm:$0xff]
          %v2510 = vld [vmem:[#allocation37 + $0x5b8] sm:$0xff]
          %v2511 = vld [vmem:[#allocation37 + $0x5c0] sm:$0xff]
          %v2512 = vld [vmem:[#allocation37 + $0x5c8] sm:$0xff]
          %v2513 = vld [vmem:[#allocation37 + $0x5d0] sm:$0xff]
          %v2514 = vld [vmem:[#allocation37 + $0x5d8] sm:$0xff]
          %v2515 = vld [vmem:[#allocation37 + $0x5e0] sm:$0xff]
          %v2516 = vld [vmem:[#allocation37 + $0x5e8] sm:$0xff]
          %v2517 = vld [vmem:[#allocation37 + $0x5f0] sm:$0xff]
          %v2518 = vld [vmem:[#allocation37 + $0x5f8] sm:$0xff]
          %v2519 = vld [vmem:[#allocation37 + $0x600] sm:$0xff]
          %v2520 = vld [vmem:[#allocation37 + $0x608] sm:$0xff]
          %v2521 = vld [vmem:[#allocation37 + $0x610] sm:$0xff]
          %v2522 = vld [vmem:[#allocation37 + $0x618] sm:$0xff]
          %v2523 = vld [vmem:[#allocation37 + $0x620] sm:$0xff]
          %v2524 = vld [vmem:[#allocation37 + $0x628] sm:$0xff]
          %v2525 = vld [vmem:[#allocation37 + $0x630] sm:$0xff]
          %v2526 = vld [vmem:[#allocation37 + $0x638] sm:$0xff]
          %v2527 = vld [vmem:[#allocation37 + $0x640] sm:$0xff]
          %v2528 = vld [vmem:[#allocation37 + $0x648] sm:$0xff]
          %v2529 = vld [vmem:[#allocation37 + $0x650] sm:$0xff]
          %v2530 = vld [vmem:[#allocation37 + $0x658] sm:$0xff]
          %v2531 = vld [vmem:[#allocation37 + $0x660] sm:$0xff]
          %v2532 = vld [vmem:[#allocation37 + $0x668] sm:$0xff]
          %v2533 = vld [vmem:[#allocation37 + $0x670] sm:$0xff]
          %v2534 = vld [vmem:[#allocation37 + $0x678] sm:$0xff]
          %v2535 = vld [vmem:[#allocation37 + $0x680] sm:$0xff]
          %v2536 = vld [vmem:[#allocation37 + $0x688] sm:$0xff]
          %v2537 = vld [vmem:[#allocation37 + $0x690] sm:$0xff]
          %v2538 = vld [vmem:[#allocation37 + $0x698] sm:$0xff]
          %v2539 = vld [vmem:[#allocation37 + $0x6a0] sm:$0xff]
          %v2540 = vld [vmem:[#allocation37 + $0x6a8] sm:$0xff]
          %v2541 = vld [vmem:[#allocation37 + $0x6b0] sm:$0xff]
          %v2542 = vld [vmem:[#allocation37 + $0x6b8] sm:$0xff]
          %v2543 = vld [vmem:[#allocation37 + $0x6c0] sm:$0xff]
          %v2544 = vld [vmem:[#allocation37 + $0x6c8] sm:$0xff]
          %v2545 = vld [vmem:[#allocation37 + $0x6d0] sm:$0xff]
          %v2546 = vld [vmem:[#allocation37 + $0x6d8] sm:$0xff]
          %v2547 = vld [vmem:[#allocation37 + $0x6e0] sm:$0xff]
          %v2548 = vld [vmem:[#allocation37 + $0x6e8] sm:$0xff]
          %v2549 = vld [vmem:[#allocation37 + $0x6f0] sm:$0xff]
          %v2550 = vld [vmem:[#allocation37 + $0x6f8] sm:$0xff]
          %v2551 = vld [vmem:[#allocation37 + $0x700] sm:$0xff]
          %v2552 = vld [vmem:[#allocation37 + $0x708] sm:$0xff]
          %v2553 = vld [vmem:[#allocation37 + $0x710] sm:$0xff]
          %v2554 = vld [vmem:[#allocation37 + $0x718] sm:$0xff]
          %v2555 = vld [vmem:[#allocation37 + $0x720] sm:$0xff]
          %v2556 = vld [vmem:[#allocation37 + $0x728] sm:$0xff]
          %v2557 = vld [vmem:[#allocation37 + $0x730] sm:$0xff]
          %v2558 = vld [vmem:[#allocation37 + $0x738] sm:$0xff]
          %v2559 = vld [vmem:[#allocation37 + $0x740] sm:$0xff]
          %v2560 = vld [vmem:[#allocation37 + $0x748] sm:$0xff]
          %v2561 = vld [vmem:[#allocation37 + $0x750] sm:$0xff]
          %v2562 = vld [vmem:[#allocation37 + $0x758] sm:$0xff]
          %v2563 = vld [vmem:[#allocation37 + $0x760] sm:$0xff]
          %v2564 = vld [vmem:[#allocation37 + $0x768] sm:$0xff]
          %v2565 = vld [vmem:[#allocation37 + $0x770] sm:$0xff]
          %v2566 = vld [vmem:[#allocation37 + $0x778] sm:$0xff]
          %v2567 = vld [vmem:[#allocation37 + $0x780] sm:$0xff]
          %v2568 = vld [vmem:[#allocation37 + $0x788] sm:$0xff]
          %v2569 = vld [vmem:[#allocation37 + $0x790] sm:$0xff]
          %v2570 = vld [vmem:[#allocation37 + $0x798] sm:$0xff]
          %v2571 = vld [vmem:[#allocation37 + $0x7a0] sm:$0xff]
          %v2572 = vld [vmem:[#allocation37 + $0x7a8] sm:$0xff]
          %v2573 = vld [vmem:[#allocation37 + $0x7b0] sm:$0xff]
          %v2574 = vld [vmem:[#allocation37 + $0x7b8] sm:$0xff]
          %v2575 = vld [vmem:[#allocation37 + $0x7c0] sm:$0xff]
          %v2576 = vld [vmem:[#allocation37 + $0x7c8] sm:$0xff]
          %v2577 = vld [vmem:[#allocation37 + $0x7d0] sm:$0xff]
          %v2578 = vld [vmem:[#allocation37 + $0x7d8] sm:$0xff]
          %v2579 = vld [vmem:[#allocation37 + $0x7e0] sm:$0xff]
          %v2580 = vld [vmem:[#allocation37 + $0x7e8] sm:$0xff]
          %v2581 = vld [vmem:[#allocation37 + $0x7f0] sm:$0xff]
          %v2582 = vld [vmem:[#allocation37 + $0x7f8] sm:$0xff]
          %v2583 = vld [vmem:[#allocation37 + $0x800] sm:$0xff]
          %v2584 = vld [vmem:[#allocation37 + $0x808] sm:$0xff]
          %v2585 = vld [vmem:[#allocation37 + $0x810] sm:$0xff]
          %v2586 = vld [vmem:[#allocation37 + $0x818] sm:$0xff]
          %v2587 = vld [vmem:[#allocation37 + $0x820] sm:$0xff]
          %v2588 = vld [vmem:[#allocation37 + $0x828] sm:$0xff]
          %v2589 = vld [vmem:[#allocation37 + $0x830] sm:$0xff]
          %v2590 = vld [vmem:[#allocation37 + $0x838] sm:$0xff]
          %v2591 = vld [vmem:[#allocation37 + $0x840] sm:$0xff]
          %v2592 = vld [vmem:[#allocation37 + $0x848] sm:$0xff]
          %v2593 = vld [vmem:[#allocation37 + $0x850] sm:$0xff]
          %v2594 = vld [vmem:[#allocation37 + $0x858] sm:$0xff]
          %v2595 = vld [vmem:[#allocation37 + $0x860] sm:$0xff]
          %v2596 = vld [vmem:[#allocation37 + $0x868] sm:$0xff]
          %v2597 = vld [vmem:[#allocation37 + $0x870] sm:$0xff]
          %v2598 = vld [vmem:[#allocation37 + $0x878] sm:$0xff]
          %v2599 = vld [vmem:[#allocation37 + $0x880] sm:$0xff]
          %v2600 = vld [vmem:[#allocation37 + $0x888] sm:$0xff]
          %v2601 = vld [vmem:[#allocation37 + $0x890] sm:$0xff]
          %v2602 = vld [vmem:[#allocation37 + $0x898] sm:$0xff]
          %v2603 = vld [vmem:[#allocation37 + $0x8a0] sm:$0xff]
          %v2604 = vld [vmem:[#allocation37 + $0x8a8] sm:$0xff]
          %v2605 = vld [vmem:[#allocation37 + $0x8b0] sm:$0xff]
          %v2606 = vld [vmem:[#allocation37 + $0x8b8] sm:$0xff]
          %v2607 = vld [vmem:[#allocation37 + $0x8c0] sm:$0xff]
          %v2608 = vld [vmem:[#allocation37 + $0x8c8] sm:$0xff]
          %v2609 = vld [vmem:[#allocation37 + $0x8d0] sm:$0xff]
          %v2610 = vld [vmem:[#allocation37 + $0x8d8] sm:$0xff]
          %v2611 = vld [vmem:[#allocation37 + $0x8e0] sm:$0xff]
          %v2612 = vld [vmem:[#allocation37 + $0x8e8] sm:$0xff]
          %v2613 = vld [vmem:[#allocation37 + $0x8f0] sm:$0xff]
          %v2614 = vld [vmem:[#allocation37 + $0x8f8] sm:$0xff]
          %v2615 = vld [vmem:[#allocation37 + $0x900] sm:$0xff]
          %v2616 = vld [vmem:[#allocation37 + $0x908] sm:$0xff]
          %v2617 = vld [vmem:[#allocation37 + $0x910] sm:$0xff]
          %v2618 = vld [vmem:[#allocation37 + $0x918] sm:$0xff]
          %v2619 = vld [vmem:[#allocation37 + $0x920] sm:$0xff]
          %v2620 = vld [vmem:[#allocation37 + $0x928] sm:$0xff]
          %v2621 = vld [vmem:[#allocation37 + $0x930] sm:$0xff]
          %v2622 = vld [vmem:[#allocation37 + $0x938] sm:$0xff]
          %v2623 = vld [vmem:[#allocation37 + $0x940] sm:$0xff]
          %v2624 = vld [vmem:[#allocation37 + $0x948] sm:$0xff]
          %v2625 = vld [vmem:[#allocation37 + $0x950] sm:$0xff]
          %v2626 = vld [vmem:[#allocation37 + $0x958] sm:$0xff]
          %v2627 = vld [vmem:[#allocation37 + $0x960] sm:$0xff]
          %v2628 = vld [vmem:[#allocation37 + $0x968] sm:$0xff]
          %v2629 = vld [vmem:[#allocation37 + $0x970] sm:$0xff]
          %v2630 = vld [vmem:[#allocation37 + $0x978] sm:$0xff]
          %v2631 = vld [vmem:[#allocation37 + $0x980] sm:$0xff]
          %v2632 = vld [vmem:[#allocation37 + $0x988] sm:$0xff]
          %v2633 = vld [vmem:[#allocation37 + $0x990] sm:$0xff]
          %v2634 = vld [vmem:[#allocation37 + $0x998] sm:$0xff]
          %v2635 = vld [vmem:[#allocation37 + $0x9a0] sm:$0xff]
          %v2636 = vld [vmem:[#allocation37 + $0x9a8] sm:$0xff]
          %v2637 = vld [vmem:[#allocation37 + $0x9b0] sm:$0xff]
          %v2638 = vld [vmem:[#allocation37 + $0x9b8] sm:$0xff]
          %v2639 = vld [vmem:[#allocation37 + $0x9c0] sm:$0xff]
          %v2640 = vld [vmem:[#allocation37 + $0x9c8] sm:$0xff]
          %v2641 = vld [vmem:[#allocation37 + $0x9d0] sm:$0xff]
          %v2642 = vld [vmem:[#allocation37 + $0x9d8] sm:$0xff]
          %v2643 = vld [vmem:[#allocation37 + $0x9e0] sm:$0xff]
          %v2644 = vld [vmem:[#allocation37 + $0x9e8] sm:$0xff]
          %v2645 = vld [vmem:[#allocation37 + $0x9f0] sm:$0xff]
          %v2646 = vld [vmem:[#allocation37 + $0x9f8] sm:$0xff]
          %v2647 = vld [vmem:[#allocation37 + $0xa00] sm:$0xff]
          %v2648 = vld [vmem:[#allocation37 + $0xa08] sm:$0xff]
          %v2649 = vld [vmem:[#allocation37 + $0xa10] sm:$0xff]
          %v2650 = vld [vmem:[#allocation37 + $0xa18] sm:$0xff]
          %v2651 = vld [vmem:[#allocation37 + $0xa20] sm:$0xff]
          %v2652 = vld [vmem:[#allocation37 + $0xa28] sm:$0xff]
          %v2653 = vld [vmem:[#allocation37 + $0xa30] sm:$0xff]
          %v2654 = vld [vmem:[#allocation37 + $0xa38] sm:$0xff]
          %v2655 = vld [vmem:[#allocation37 + $0xa40] sm:$0xff]
          %v2656 = vld [vmem:[#allocation37 + $0xa48] sm:$0xff]
          %v2657 = vld [vmem:[#allocation37 + $0xa50] sm:$0xff]
          %v2658 = vld [vmem:[#allocation37 + $0xa58] sm:$0xff]
          %v2659 = vld [vmem:[#allocation37 + $0xa60] sm:$0xff]
          %v2660 = vld [vmem:[#allocation37 + $0xa68] sm:$0xff]
          %v2661 = vld [vmem:[#allocation37 + $0xa70] sm:$0xff]
          %v2662 = vld [vmem:[#allocation37 + $0xa78] sm:$0xff]
          %v2663 = vld [vmem:[#allocation37 + $0xa80] sm:$0xff]
          %v2664 = vld [vmem:[#allocation37 + $0xa88] sm:$0xff]
          %v2665 = vld [vmem:[#allocation37 + $0xa90] sm:$0xff]
          %v2666 = vld [vmem:[#allocation37 + $0xa98] sm:$0xff]
          %v2667 = vld [vmem:[#allocation37 + $0xaa0] sm:$0xff]
          %v2668 = vld [vmem:[#allocation37 + $0xaa8] sm:$0xff]
          %v2669 = vld [vmem:[#allocation37 + $0xab0] sm:$0xff]
          %v2670 = vld [vmem:[#allocation37 + $0xab8] sm:$0xff]
          %v2671 = vld [vmem:[#allocation37 + $0xac0] sm:$0xff]
          %v2672 = vld [vmem:[#allocation37 + $0xac8] sm:$0xff]
          %v2673 = vld [vmem:[#allocation37 + $0xad0] sm:$0xff]
          %v2674 = vld [vmem:[#allocation37 + $0xad8] sm:$0xff]
          %v2675 = vld [vmem:[#allocation37 + $0xae0] sm:$0xff]
          %v2676 = vld [vmem:[#allocation37 + $0xae8] sm:$0xff]
          %v2677 = vld [vmem:[#allocation37 + $0xaf0] sm:$0xff]
          %v2678 = vld [vmem:[#allocation37 + $0xaf8] sm:$0xff]
          %v2679 = vld [vmem:[#allocation37 + $0xb00] sm:$0xff]
          %v2680 = vld [vmem:[#allocation37 + $0xb08] sm:$0xff]
          %v2681 = vld [vmem:[#allocation37 + $0xb10] sm:$0xff]
          %v2682 = vld [vmem:[#allocation37 + $0xb18] sm:$0xff]
          %v2683 = vld [vmem:[#allocation37 + $0xb20] sm:$0xff]
          %v2684 = vld [vmem:[#allocation37 + $0xb28] sm:$0xff]
          %v2685 = vld [vmem:[#allocation37 + $0xb30] sm:$0xff]
          %v2686 = vld [vmem:[#allocation37 + $0xb38] sm:$0xff]
          %v2687 = vld [vmem:[#allocation37 + $0xb40] sm:$0xff]
          %v2688 = vld [vmem:[#allocation37 + $0xb48] sm:$0xff]
          %v2689 = vld [vmem:[#allocation37 + $0xb50] sm:$0xff]
          %v2690 = vld [vmem:[#allocation37 + $0xb58] sm:$0xff]
          %v2691 = vld [vmem:[#allocation37 + $0xb60] sm:$0xff]
          %v2692 = vld [vmem:[#allocation37 + $0xb68] sm:$0xff]
          %v2693 = vld [vmem:[#allocation37 + $0xb70] sm:$0xff]
          %v2694 = vld [vmem:[#allocation37 + $0xb78] sm:$0xff]
          %v2695 = vld [vmem:[#allocation37 + $0xb80] sm:$0xff]
          %v2696 = vld [vmem:[#allocation37 + $0xb88] sm:$0xff]
          %v2697 = vld [vmem:[#allocation37 + $0xb90] sm:$0xff]
          %v2698 = vld [vmem:[#allocation37 + $0xb98] sm:$0xff]
          %v2699 = vld [vmem:[#allocation37 + $0xba0] sm:$0xff]
          %v2700 = vld [vmem:[#allocation37 + $0xba8] sm:$0xff]
          %v2701 = vld [vmem:[#allocation37 + $0xbb0] sm:$0xff]
          %v2702 = vld [vmem:[#allocation37 + $0xbb8] sm:$0xff]
          %v2703 = vld [vmem:[#allocation37 + $0xbc0] sm:$0xff]
          %v2704 = vld [vmem:[#allocation37 + $0xbc8] sm:$0xff]
          %v2705 = vld [vmem:[#allocation37 + $0xbd0] sm:$0xff]
          %v2706 = vld [vmem:[#allocation37 + $0xbd8] sm:$0xff]
          %v2707 = vld [vmem:[#allocation37 + $0xbe0] sm:$0xff]
          %v2708 = vld [vmem:[#allocation37 + $0xbe8] sm:$0xff]
          %v2709 = vld [vmem:[#allocation37 + $0xbf0] sm:$0xff]
          %v2710 = vld [vmem:[#allocation37 + $0xbf8] sm:$0xff]
          %v2711 = vld [vmem:[#allocation37 + $0xc00] sm:$0xff]
          %v2712 = vld [vmem:[#allocation37 + $0xc08] sm:$0xff]
          %v2713 = vld [vmem:[#allocation37 + $0xc10] sm:$0xff]
          %v2714 = vld [vmem:[#allocation37 + $0xc18] sm:$0xff]
          %v2715 = vld [vmem:[#allocation37 + $0xc20] sm:$0xff]
          %v2716 = vld [vmem:[#allocation37 + $0xc28] sm:$0xff]
          %v2717 = vld [vmem:[#allocation37 + $0xc30] sm:$0xff]
          %v2718 = vld [vmem:[#allocation37 + $0xc38] sm:$0xff]
          %v2719 = vld [vmem:[#allocation37 + $0xc40] sm:$0xff]
          %v2720 = vld [vmem:[#allocation37 + $0xc48] sm:$0xff]
          %v2721 = vld [vmem:[#allocation37 + $0xc50] sm:$0xff]
          %v2722 = vld [vmem:[#allocation37 + $0xc58] sm:$0xff]
          %v2723 = vld [vmem:[#allocation37 + $0xc60] sm:$0xff]
          %v2724 = vld [vmem:[#allocation37 + $0xc68] sm:$0xff]
          %v2725 = vld [vmem:[#allocation37 + $0xc70] sm:$0xff]
          %v2726 = vld [vmem:[#allocation37 + $0xc78] sm:$0xff]
          %v2727 = vld [vmem:[#allocation37 + $0xc80] sm:$0xff]
          %v2728 = vld [vmem:[#allocation37 + $0xc88] sm:$0xff]
          %v2729 = vld [vmem:[#allocation37 + $0xc90] sm:$0xff]
          %v2730 = vld [vmem:[#allocation37 + $0xc98] sm:$0xff]
          %v2731 = vld [vmem:[#allocation37 + $0xca0] sm:$0xff]
          %v2732 = vld [vmem:[#allocation37 + $0xca8] sm:$0xff]
          %v2733 = vld [vmem:[#allocation37 + $0xcb0] sm:$0xff]
          %v2734 = vld [vmem:[#allocation37 + $0xcb8] sm:$0xff]
          %v2735 = vld [vmem:[#allocation37 + $0xcc0] sm:$0xff]
          %v2736 = vld [vmem:[#allocation37 + $0xcc8] sm:$0xff]
          %v2737 = vld [vmem:[#allocation37 + $0xcd0] sm:$0xff]
          %v2738 = vld [vmem:[#allocation37 + $0xcd8] sm:$0xff]
          %v2739 = vld [vmem:[#allocation37 + $0xce0] sm:$0xff]
          %v2740 = vld [vmem:[#allocation37 + $0xce8] sm:$0xff]
          %v2741 = vld [vmem:[#allocation37 + $0xcf0] sm:$0xff]
          %v2742 = vld [vmem:[#allocation37 + $0xcf8] sm:$0xff]
          %v2743 = vld [vmem:[#allocation37 + $0xd00] sm:$0xff]
          %v2744 = vld [vmem:[#allocation37 + $0xd08] sm:$0xff]
          %v2745 = vld [vmem:[#allocation37 + $0xd10] sm:$0xff]
          %v2746 = vld [vmem:[#allocation37 + $0xd18] sm:$0xff]
          %v2747 = vld [vmem:[#allocation37 + $0xd20] sm:$0xff]
          %v2748 = vld [vmem:[#allocation37 + $0xd28] sm:$0xff]
          %v2749 = vld [vmem:[#allocation37 + $0xd30] sm:$0xff]
          %v2750 = vld [vmem:[#allocation37 + $0xd38] sm:$0xff]
          %v2751 = vld [vmem:[#allocation37 + $0xd40] sm:$0xff]
          %v2752 = vld [vmem:[#allocation37 + $0xd48] sm:$0xff]
          %v2753 = vld [vmem:[#allocation37 + $0xd50] sm:$0xff]
          %v2754 = vld [vmem:[#allocation37 + $0xd58] sm:$0xff]
          %v2755 = vld [vmem:[#allocation37 + $0xd60] sm:$0xff]
          %v2756 = vld [vmem:[#allocation37 + $0xd68] sm:$0xff]
          %v2757 = vld [vmem:[#allocation37 + $0xd70] sm:$0xff]
          %v2758 = vld [vmem:[#allocation37 + $0xd78] sm:$0xff]
          %v2759 = vld [vmem:[#allocation37 + $0xd80] sm:$0xff]
          %v2760 = vld [vmem:[#allocation37 + $0xd88] sm:$0xff]
          %v2761 = vld [vmem:[#allocation37 + $0xd90] sm:$0xff]
          %v2762 = vld [vmem:[#allocation37 + $0xd98] sm:$0xff]
          %v2763 = vld [vmem:[#allocation37 + $0xda0] sm:$0xff]
          %v2764 = vld [vmem:[#allocation37 + $0xda8] sm:$0xff]
          %v2765 = vld [vmem:[#allocation37 + $0xdb0] sm:$0xff]
          %v2766 = vld [vmem:[#allocation37 + $0xdb8] sm:$0xff]
          %v2767 = vld [vmem:[#allocation37 + $0xdc0] sm:$0xff]
          %v2768 = vld [vmem:[#allocation37 + $0xdc8] sm:$0xff]
          %v2769 = vld [vmem:[#allocation37 + $0xdd0] sm:$0xff]
          %v2770 = vld [vmem:[#allocation37 + $0xdd8] sm:$0xff]
          %v2771 = vld [vmem:[#allocation37 + $0xde0] sm:$0xff]
          %v2772 = vld [vmem:[#allocation37 + $0xde8] sm:$0xff]
          %v2773 = vld [vmem:[#allocation37 + $0xdf0] sm:$0xff]
          %v2774 = vld [vmem:[#allocation37 + $0xdf8] sm:$0xff]
          %v2775 = vld [vmem:[#allocation37 + $0xe00] sm:$0xff]
          %v2776 = vld [vmem:[#allocation37 + $0xe08] sm:$0xff]
          %v2777 = vld [vmem:[#allocation37 + $0xe10] sm:$0xff]
          %v2778 = vld [vmem:[#allocation37 + $0xe18] sm:$0xff]
          %v2779 = vld [vmem:[#allocation37 + $0xe20] sm:$0xff]
          %v2780 = vld [vmem:[#allocation37 + $0xe28] sm:$0xff]
          %v2781 = vld [vmem:[#allocation37 + $0xe30] sm:$0xff]
          %v2782 = vld [vmem:[#allocation37 + $0xe38] sm:$0xff]
          %v2783 = vld [vmem:[#allocation37 + $0xe40] sm:$0xff]
          %v2784 = vld [vmem:[#allocation37 + $0xe48] sm:$0xff]
          %v2785 = vld [vmem:[#allocation37 + $0xe50] sm:$0xff]
          %v2786 = vld [vmem:[#allocation37 + $0xe58] sm:$0xff]
          %v2787 = vld [vmem:[#allocation37 + $0xe60] sm:$0xff]
          %v2788 = vld [vmem:[#allocation37 + $0xe68] sm:$0xff]
          %v2789 = vld [vmem:[#allocation37 + $0xe70] sm:$0xff]
          %v2790 = vld [vmem:[#allocation37 + $0xe78] sm:$0xff]
          %v2791 = vld [vmem:[#allocation37 + $0xe80] sm:$0xff]
          %v2792 = vld [vmem:[#allocation37 + $0xe88] sm:$0xff]
          %v2793 = vld [vmem:[#allocation37 + $0xe90] sm:$0xff]
          %v2794 = vld [vmem:[#allocation37 + $0xe98] sm:$0xff]
          %v2795 = vld [vmem:[#allocation37 + $0xea0] sm:$0xff]
          %v2796 = vld [vmem:[#allocation37 + $0xea8] sm:$0xff]
          %v2797 = vld [vmem:[#allocation37 + $0xeb0] sm:$0xff]
          %v2798 = vld [vmem:[#allocation37 + $0xeb8] sm:$0xff]
          %v2799 = vld [vmem:[#allocation37 + $0xec0] sm:$0xff]
          %v2800 = vld [vmem:[#allocation37 + $0xec8] sm:$0xff]
          %v2801 = vld [vmem:[#allocation37 + $0xed0] sm:$0xff]
          %v2802 = vld [vmem:[#allocation37 + $0xed8] sm:$0xff]
          %v2803 = vld [vmem:[#allocation37 + $0xee0] sm:$0xff]
          %v2804 = vld [vmem:[#allocation37 + $0xee8] sm:$0xff]
          %v2805 = vld [vmem:[#allocation37 + $0xef0] sm:$0xff]
          %v2806 = vld [vmem:[#allocation37 + $0xef8] sm:$0xff]
          %v2807 = vld [vmem:[#allocation37 + $0xf00] sm:$0xff]
          %v2808 = vld [vmem:[#allocation37 + $0xf08] sm:$0xff]
          %v2809 = vld [vmem:[#allocation37 + $0xf10] sm:$0xff]
          %v2810 = vld [vmem:[#allocation37 + $0xf18] sm:$0xff]
          %v2811 = vld [vmem:[#allocation37 + $0xf20] sm:$0xff]
          %v2812 = vld [vmem:[#allocation37 + $0xf28] sm:$0xff]
          %v2813 = vld [vmem:[#allocation37 + $0xf30] sm:$0xff]
          %v2814 = vld [vmem:[#allocation37 + $0xf38] sm:$0xff]
          %v2815 = vld [vmem:[#allocation37 + $0xf40] sm:$0xff]
          %v2816 = vld [vmem:[#allocation37 + $0xf48] sm:$0xff]
          %v2817 = vld [vmem:[#allocation37 + $0xf50] sm:$0xff]
          %v2818 = vld [vmem:[#allocation37 + $0xf58] sm:$0xff]
          %v2819 = vld [vmem:[#allocation37 + $0xf60] sm:$0xff]
          %v2820 = vld [vmem:[#allocation37 + $0xf68] sm:$0xff]
          %v2821 = vld [vmem:[#allocation37 + $0xf70] sm:$0xff]
          %v2822 = vld [vmem:[#allocation37 + $0xf78] sm:$0xff]
          %v2823 = vld [vmem:[#allocation37 + $0xf80] sm:$0xff]
          %v2824 = vld [vmem:[#allocation37 + $0xf88] sm:$0xff]
          %v2825 = vld [vmem:[#allocation37 + $0xf90] sm:$0xff]
          %v2826 = vld [vmem:[#allocation37 + $0xf98] sm:$0xff]
          %v2827 = vld [vmem:[#allocation37 + $0xfa0] sm:$0xff]
          %v2828 = vld [vmem:[#allocation37 + $0xfa8] sm:$0xff]
          %v2829 = vld [vmem:[#allocation37 + $0xfb0] sm:$0xff]
          %v2830 = vld [vmem:[#allocation37 + $0xfb8] sm:$0xff]
          %v2831 = vld [vmem:[#allocation37 + $0xfc0] sm:$0xff]
          %v2832 = vld [vmem:[#allocation37 + $0xfc8] sm:$0xff]
          %v2833 = vld [vmem:[#allocation37 + $0xfd0] sm:$0xff]
          %v2834 = vld [vmem:[#allocation37 + $0xfd8] sm:$0xff]
          %v2835 = vld [vmem:[#allocation37 + $0xfe0] sm:$0xff]
          %v2836 = vld [vmem:[#allocation37 + $0xfe8] sm:$0xff]
          %v2837 = vld [vmem:[#allocation37 + $0xff0] sm:$0xff]
          %v2838 = vld [vmem:[#allocation37 + $0xff8] sm:$0xff]
          %v2839 = vld [vmem:[#allocation37 + $0x1000] sm:$0xff]
          %v2840 = vld [vmem:[#allocation37 + $0x1008] sm:$0xff]
          %v2841 = vld [vmem:[#allocation37 + $0x1010] sm:$0xff]
          %v2842 = vld [vmem:[#allocation37 + $0x1018] sm:$0xff]
          %v2843 = vld [vmem:[#allocation37 + $0x1020] sm:$0xff]
          %v2844 = vld [vmem:[#allocation37 + $0x1028] sm:$0xff]
          %v2845 = vld [vmem:[#allocation37 + $0x1030] sm:$0xff]
          %v2846 = vld [vmem:[#allocation37 + $0x1038] sm:$0xff]
          %v2847 = vld [vmem:[#allocation37 + $0x1040] sm:$0xff]
          %v2848 = vld [vmem:[#allocation37 + $0x1048] sm:$0xff]
          %v2849 = vld [vmem:[#allocation37 + $0x1050] sm:$0xff]
          %v2850 = vld [vmem:[#allocation37 + $0x1058] sm:$0xff]
          %v2851 = vld [vmem:[#allocation37 + $0x1060] sm:$0xff]
          %v2852 = vld [vmem:[#allocation37 + $0x1068] sm:$0xff]
          %v2853 = vld [vmem:[#allocation37 + $0x1070] sm:$0xff]
          %v2854 = vld [vmem:[#allocation37 + $0x1078] sm:$0xff]
          %v2855 = vld [vmem:[#allocation37 + $0x1080] sm:$0xff]
          %v2856 = vld [vmem:[#allocation37 + $0x1088] sm:$0xff]
          %v2857 = vld [vmem:[#allocation37 + $0x1090] sm:$0xff]
          %v2858 = vld [vmem:[#allocation37 + $0x1098] sm:$0xff]
          %v2859 = vld [vmem:[#allocation37 + $0x10a0] sm:$0xff]
          %v2860 = vld [vmem:[#allocation37 + $0x10a8] sm:$0xff]
          %v2861 = vld [vmem:[#allocation37 + $0x10b0] sm:$0xff]
          %v2862 = vld [vmem:[#allocation37 + $0x10b8] sm:$0xff]
          %v2863 = vld [vmem:[#allocation37 + $0x10c0] sm:$0xff]
          %v2864 = vld [vmem:[#allocation37 + $0x10c8] sm:$0xff]
          %v2865 = vld [vmem:[#allocation37 + $0x10d0] sm:$0xff]
          %v2866 = vld [vmem:[#allocation37 + $0x10d8] sm:$0xff]
          %v2867 = vld [vmem:[#allocation37 + $0x10e0] sm:$0xff]
          %v2868 = vld [vmem:[#allocation37 + $0x10e8] sm:$0xff]
          %v2869 = vld [vmem:[#allocation37 + $0x10f0] sm:$0xff]
          %v2870 = vld [vmem:[#allocation37 + $0x10f8] sm:$0xff]
          %v2871 = vld [vmem:[#allocation37 + $0x1100] sm:$0xff]
          %v2872 = vld [vmem:[#allocation37 + $0x1108] sm:$0xff]
          %v2873 = vld [vmem:[#allocation37 + $0x1110] sm:$0xff]
          %v2874 = vld [vmem:[#allocation37 + $0x1118] sm:$0xff]
          %v2875 = vld [vmem:[#allocation37 + $0x1120] sm:$0xff]
          %v2876 = vld [vmem:[#allocation37 + $0x1128] sm:$0xff]
          %v2877 = vld [vmem:[#allocation37 + $0x1130] sm:$0xff]
          %v2878 = vld [vmem:[#allocation37 + $0x1138] sm:$0xff]
          %v2879 = vld [vmem:[#allocation37 + $0x1140] sm:$0xff]
          %v2880 = vld [vmem:[#allocation37 + $0x1148] sm:$0xff]
          %v2881 = vld [vmem:[#allocation37 + $0x1150] sm:$0xff]
          %v2882 = vld [vmem:[#allocation37 + $0x1158] sm:$0xff]
          %v2883 = vld [vmem:[#allocation37 + $0x1160] sm:$0xff]
          %v2884 = vld [vmem:[#allocation37 + $0x1168] sm:$0xff]
          %v2885 = vld [vmem:[#allocation37 + $0x1170] sm:$0xff]
          %v2886 = vld [vmem:[#allocation37 + $0x1178] sm:$0xff]
          %v2887 = vld [vmem:[#allocation37 + $0x1180] sm:$0xff]
          %v2888 = vld [vmem:[#allocation37 + $0x1188] sm:$0xff]
          %v2889 = vld [vmem:[#allocation37 + $0x1190] sm:$0xff]
          %v2890 = vld [vmem:[#allocation37 + $0x1198] sm:$0xff]
          %v2891 = vld [vmem:[#allocation37 + $0x11a0] sm:$0xff]
          %v2892 = vld [vmem:[#allocation37 + $0x11a8] sm:$0xff]
          %v2893 = vld [vmem:[#allocation37 + $0x11b0] sm:$0xff]
          %v2894 = vld [vmem:[#allocation37 + $0x11b8] sm:$0xff]
          %v2895 = vld [vmem:[#allocation37 + $0x11c0] sm:$0xff]
          %v2896 = vld [vmem:[#allocation37 + $0x11c8] sm:$0xff]
          %v2897 = vld [vmem:[#allocation37 + $0x11d0] sm:$0xff]
          %v2898 = vld [vmem:[#allocation37 + $0x11d8] sm:$0xff]
          %v2899 = vld [vmem:[#allocation37 + $0x11e0] sm:$0xff]
          %v2900 = vld [vmem:[#allocation37 + $0x11e8] sm:$0xff]
          %v2901 = vld [vmem:[#allocation37 + $0x11f0] sm:$0xff]
          %v2902 = vld [vmem:[#allocation37 + $0x11f8] sm:$0xff]
          %v2903 = vld [vmem:[#allocation38] sm:$0xff]
          %v2904 = vld [vmem:[#allocation38 + $0x8] sm:$0xf]
          %v2907 = vlaneseq
          %v2908 = vshrl.u32 %v2907, 7
          %v2909 = vsub.s32 0, %v2908
          %v2910 = vrot.slane %v2903, %v2909
          %v2911 = vlaneseq
          %v2912 = vshrl.u32 %v2911, 7
          %v2913 = vsub.s32 1, %v2912
          %v2914 = vrot.slane %v2903, %v2913
          %v2915 = vlaneseq
          %v2916 = vshrl.u32 %v2915, 7
          %v2917 = vsub.s32 2, %v2916
          %v2918 = vrot.slane %v2903, %v2917
          %v2919 = vlaneseq
          %v2920 = vshrl.u32 %v2919, 7
          %v2921 = vsub.s32 3, %v2920
          %v2922 = vrot.slane %v2903, %v2921
          %v2923 = vlaneseq
          %v2924 = vshrl.u32 %v2923, 7
          %v2925 = vsub.s32 4, %v2924
          %v2926 = vrot.slane %v2903, %v2925
          %v2927 = vlaneseq
          %v2928 = vshrl.u32 %v2927, 7
          %v2929 = vsub.s32 5, %v2928
          %v2930 = vrot.slane %v2903, %v2929
          %v2931 = vlaneseq
          %v2932 = vshrl.u32 %v2931, 7
          %v2933 = vsub.s32 6, %v2932
          %v2934 = vrot.slane %v2903, %v2933
          %v2935 = vlaneseq
          %v2936 = vshrl.u32 %v2935, 7
          %v2937 = vsub.s32 7, %v2936
          %v2938 = vrot.slane %v2903, %v2937
          %v2939 = vlaneseq
          %v2940 = vshrl.u32 %v2939, 7
          %v2941 = vsub.s32 0, %v2940
          %v2942 = vrot.slane %v2904, %v2941
          %v2943 = vlaneseq
          %v2944 = vshrl.u32 %v2943, 7
          %v2945 = vsub.s32 1, %v2944
          %v2946 = vrot.slane %v2904, %v2945
          %v2947 = vlaneseq
          %v2948 = vshrl.u32 %v2947, 7
          %v2949 = vsub.s32 2, %v2948
          %v2950 = vrot.slane %v2904, %v2949
          %v2951 = vlaneseq
          %v2952 = vshrl.u32 %v2951, 7
          %v2953 = vsub.s32 3, %v2952
          %v2954 = vrot.slane %v2904, %v2953
          %v3543 = vunpack.c.l.b16 %v2327
          %v3544 = vunpack.c.h.b16 %v2327
          %v3545 = vunpack.c.l.b16 %v2328
          %v3546 = vunpack.c.h.b16 %v2328
          %v3547 = vunpack.c.l.b16 %v2329
          %v3548 = vunpack.c.h.b16 %v2329
          %v3549 = vunpack.c.l.b16 %v2330
          %v3550 = vunpack.c.h.b16 %v2330
          %v3551 = vunpack.c.l.b16 %v2331
          %v3552 = vunpack.c.h.b16 %v2331
          %v3553 = vunpack.c.l.b16 %v2332
          %v3554 = vunpack.c.h.b16 %v2332
          %v3555 = vunpack.c.l.b16 %v2333
          %v3556 = vunpack.c.h.b16 %v2333
          %v3557 = vunpack.c.l.b16 %v2334
          %v3558 = vunpack.c.h.b16 %v2334
          %v3559 = vunpack.c.l.b16 %v2335
          %v3560 = vunpack.c.h.b16 %v2335
          %v3561 = vunpack.c.l.b16 %v2336
          %v3562 = vunpack.c.h.b16 %v2336
          %v3563 = vunpack.c.l.b16 %v2337
          %v3564 = vunpack.c.h.b16 %v2337
          %v3565 = vunpack.c.l.b16 %v2338
          %v3566 = vunpack.c.h.b16 %v2338
          %v3567 = vunpack.c.l.b16 %v2339
          %v3568 = vunpack.c.h.b16 %v2339
          %v3569 = vunpack.c.l.b16 %v2340
          %v3570 = vunpack.c.h.b16 %v2340
          %v3571 = vunpack.c.l.b16 %v2341
          %v3572 = vunpack.c.h.b16 %v2341
          %v3573 = vunpack.c.l.b16 %v2342
          %v3574 = vunpack.c.h.b16 %v2342
          %v3575 = vunpack.c.l.b16 %v2343
          %v3576 = vunpack.c.h.b16 %v2343
          %v3577 = vunpack.c.l.b16 %v2344
          %v3578 = vunpack.c.h.b16 %v2344
          %v3579 = vunpack.c.l.b16 %v2345
          %v3580 = vunpack.c.h.b16 %v2345
          %v3581 = vunpack.c.l.b16 %v2346
          %v3582 = vunpack.c.h.b16 %v2346
          %v3583 = vunpack.c.l.b16 %v2347
          %v3584 = vunpack.c.h.b16 %v2347
          %v3585 = vunpack.c.l.b16 %v2348
          %v3586 = vunpack.c.h.b16 %v2348
          %v3587 = vunpack.c.l.b16 %v2349
          %v3588 = vunpack.c.h.b16 %v2349
          %v3589 = vunpack.c.l.b16 %v2350
          %v3590 = vunpack.c.h.b16 %v2350
          %v3591 = vunpack.c.l.b16 %v2351
          %v3592 = vunpack.c.h.b16 %v2351
          %v3593 = vunpack.c.l.b16 %v2352
          %v3594 = vunpack.c.h.b16 %v2352
          %v3595 = vunpack.c.l.b16 %v2353
          %v3596 = vunpack.c.h.b16 %v2353
          %v3597 = vunpack.c.l.b16 %v2354
          %v3598 = vunpack.c.h.b16 %v2354
          %v3599 = vunpack.c.l.b16 %v2355
          %v3600 = vunpack.c.h.b16 %v2355
          %v3601 = vunpack.c.l.b16 %v2356
          %v3602 = vunpack.c.h.b16 %v2356
          %v3603 = vunpack.c.l.b16 %v2357
          %v3604 = vunpack.c.h.b16 %v2357
          %v3605 = vunpack.c.l.b16 %v2358
          %v3606 = vunpack.c.h.b16 %v2358
          %v3607 = vunpack.c.l.b16 %v2359
          %v3608 = vunpack.c.h.b16 %v2359
          %v3609 = vunpack.c.l.b16 %v2360
          %v3610 = vunpack.c.h.b16 %v2360
          %v3611 = vunpack.c.l.b16 %v2361
          %v3612 = vunpack.c.h.b16 %v2361
          %v3613 = vunpack.c.l.b16 %v2362
          %v3614 = vunpack.c.h.b16 %v2362
          %v3615 = vunpack.c.l.b16 %v2363
          %v3616 = vunpack.c.h.b16 %v2363
          %v3617 = vunpack.c.l.b16 %v2364
          %v3618 = vunpack.c.h.b16 %v2364
          %v3619 = vunpack.c.l.b16 %v2365
          %v3620 = vunpack.c.h.b16 %v2365
          %v3621 = vunpack.c.l.b16 %v2366
          %v3622 = vunpack.c.h.b16 %v2366
          %v3623 = vunpack.c.l.b16 %v2367
          %v3624 = vunpack.c.h.b16 %v2367
          %v3625 = vunpack.c.l.b16 %v2368
          %v3626 = vunpack.c.h.b16 %v2368
          %v3627 = vunpack.c.l.b16 %v2369
          %v3628 = vunpack.c.h.b16 %v2369
          %v3629 = vunpack.c.l.b16 %v2370
          %v3630 = vunpack.c.h.b16 %v2370
          %v3631 = vunpack.c.l.b16 %v2371
          %v3632 = vunpack.c.h.b16 %v2371
          %v3633 = vunpack.c.l.b16 %v2372
          %v3634 = vunpack.c.h.b16 %v2372
          %v3635 = vunpack.c.l.b16 %v2373
          %v3636 = vunpack.c.h.b16 %v2373
          %v3637 = vunpack.c.l.b16 %v2374
          %v3638 = vunpack.c.h.b16 %v2374
          %v3639 = vunpack.c.l.b16 %v2375
          %v3640 = vunpack.c.h.b16 %v2375
          %v3641 = vunpack.c.l.b16 %v2376
          %v3642 = vunpack.c.h.b16 %v2376
          %v3643 = vunpack.c.l.b16 %v2377
          %v3644 = vunpack.c.h.b16 %v2377
          %v3645 = vunpack.c.l.b16 %v2378
          %v3646 = vunpack.c.h.b16 %v2378
          %v3647 = vunpack.c.l.b16 %v2379
          %v3648 = vunpack.c.h.b16 %v2379
          %v3649 = vunpack.c.l.b16 %v2380
          %v3650 = vunpack.c.h.b16 %v2380
          %v3651 = vunpack.c.l.b16 %v2381
          %v3652 = vunpack.c.h.b16 %v2381
          %v3653 = vunpack.c.l.b16 %v2382
          %v3654 = vunpack.c.h.b16 %v2382
          %v3655 = vunpack.c.l.b16 %v2383
          %v3656 = vunpack.c.h.b16 %v2383
          %v3657 = vunpack.c.l.b16 %v2384
          %v3658 = vunpack.c.h.b16 %v2384
          %v3659 = vunpack.c.l.b16 %v2385
          %v3660 = vunpack.c.h.b16 %v2385
          %v3661 = vunpack.c.l.b16 %v2386
          %v3662 = vunpack.c.h.b16 %v2386
          %v3663 = vunpack.c.l.b16 %v2387
          %v3664 = vunpack.c.h.b16 %v2387
          %v3665 = vunpack.c.l.b16 %v2388
          %v3666 = vunpack.c.h.b16 %v2388
          %v3667 = vunpack.c.l.b16 %v2389
          %v3668 = vunpack.c.h.b16 %v2389
          %v3669 = vunpack.c.l.b16 %v2390
          %v3670 = vunpack.c.h.b16 %v2390
          %v3671 = vunpack.c.l.b16 %v2391
          %v3672 = vunpack.c.h.b16 %v2391
          %v3673 = vunpack.c.l.b16 %v2392
          %v3674 = vunpack.c.h.b16 %v2392
          %v3675 = vunpack.c.l.b16 %v2393
          %v3676 = vunpack.c.h.b16 %v2393
          %v3677 = vunpack.c.l.b16 %v2394
          %v3678 = vunpack.c.h.b16 %v2394
          %v3679 = vunpack.c.l.b16 %v2395
          %v3680 = vunpack.c.h.b16 %v2395
          %v3681 = vunpack.c.l.b16 %v2396
          %v3682 = vunpack.c.h.b16 %v2396
          %v3683 = vunpack.c.l.b16 %v2397
          %v3684 = vunpack.c.h.b16 %v2397
          %v3685 = vunpack.c.l.b16 %v2398
          %v3686 = vunpack.c.h.b16 %v2398
          %v3687 = vunpack.c.l.b16 %v2399
          %v3688 = vunpack.c.h.b16 %v2399
          %v3689 = vunpack.c.l.b16 %v2400
          %v3690 = vunpack.c.h.b16 %v2400
          %v3691 = vunpack.c.l.b16 %v2401
          %v3692 = vunpack.c.h.b16 %v2401
          %v3693 = vunpack.c.l.b16 %v2402
          %v3694 = vunpack.c.h.b16 %v2402
          %v3695 = vunpack.c.l.b16 %v2403
          %v3696 = vunpack.c.h.b16 %v2403
          %v3697 = vunpack.c.l.b16 %v2404
          %v3698 = vunpack.c.h.b16 %v2404
          %v3699 = vunpack.c.l.b16 %v2405
          %v3700 = vunpack.c.h.b16 %v2405
          %v3701 = vunpack.c.l.b16 %v2406
          %v3702 = vunpack.c.h.b16 %v2406
          %v3703 = vunpack.c.l.b16 %v2407
          %v3704 = vunpack.c.h.b16 %v2407
          %v3705 = vunpack.c.l.b16 %v2408
          %v3706 = vunpack.c.h.b16 %v2408
          %v3707 = vunpack.c.l.b16 %v2409
          %v3708 = vunpack.c.h.b16 %v2409
          %v3709 = vunpack.c.l.b16 %v2410
          %v3710 = vunpack.c.h.b16 %v2410
          %v3711 = vunpack.c.l.b16 %v2411
          %v3712 = vunpack.c.h.b16 %v2411
          %v3713 = vunpack.c.l.b16 %v2412
          %v3714 = vunpack.c.h.b16 %v2412
          %v3715 = vunpack.c.l.b16 %v2413
          %v3716 = vunpack.c.h.b16 %v2413
          %v3717 = vunpack.c.l.b16 %v2414
          %v3718 = vunpack.c.h.b16 %v2414
          %v3719 = vunpack.c.l.b16 %v2415
          %v3720 = vunpack.c.h.b16 %v2415
          %v3721 = vunpack.c.l.b16 %v2416
          %v3722 = vunpack.c.h.b16 %v2416
          %v3723 = vunpack.c.l.b16 %v2417
          %v3724 = vunpack.c.h.b16 %v2417
          %v3725 = vunpack.c.l.b16 %v2418
          %v3726 = vunpack.c.h.b16 %v2418
          %v3727 = vunpack.c.l.b16 %v2419
          %v3728 = vunpack.c.h.b16 %v2419
          %v3729 = vunpack.c.l.b16 %v2420
          %v3730 = vunpack.c.h.b16 %v2420
          %v3731 = vunpack.c.l.b16 %v2421
          %v3732 = vunpack.c.h.b16 %v2421
          %v3733 = vunpack.c.l.b16 %v2422
          %v3734 = vunpack.c.h.b16 %v2422
          %v3735 = vunpack.c.l.b16 %v2423
          %v3736 = vunpack.c.h.b16 %v2423
          %v3737 = vunpack.c.l.b16 %v2424
          %v3738 = vunpack.c.h.b16 %v2424
          %v3739 = vunpack.c.l.b16 %v2425
          %v3740 = vunpack.c.h.b16 %v2425
          %v3741 = vunpack.c.l.b16 %v2426
          %v3742 = vunpack.c.h.b16 %v2426
          %v3743 = vunpack.c.l.b16 %v2427
          %v3744 = vunpack.c.h.b16 %v2427
          %v3745 = vunpack.c.l.b16 %v2428
          %v3746 = vunpack.c.h.b16 %v2428
          %v3747 = vunpack.c.l.b16 %v2429
          %v3748 = vunpack.c.h.b16 %v2429
          %v3749 = vunpack.c.l.b16 %v2430
          %v3750 = vunpack.c.h.b16 %v2430
          %v3751 = vunpack.c.l.b16 %v2431
          %v3752 = vunpack.c.h.b16 %v2431
          %v3753 = vunpack.c.l.b16 %v2432
          %v3754 = vunpack.c.h.b16 %v2432
          %v3755 = vunpack.c.l.b16 %v2433
          %v3756 = vunpack.c.h.b16 %v2433
          %v3757 = vunpack.c.l.b16 %v2434
          %v3758 = vunpack.c.h.b16 %v2434
          %v3759 = vunpack.c.l.b16 %v2435
          %v3760 = vunpack.c.h.b16 %v2435
          %v3761 = vunpack.c.l.b16 %v2436
          %v3762 = vunpack.c.h.b16 %v2436
          %v3763 = vunpack.c.l.b16 %v2437
          %v3764 = vunpack.c.h.b16 %v2437
          %v3765 = vunpack.c.l.b16 %v2438
          %v3766 = vunpack.c.h.b16 %v2438
          %v3767 = vunpack.c.l.b16 %v2439
          %v3768 = vunpack.c.h.b16 %v2439
          %v3769 = vunpack.c.l.b16 %v2440
          %v3770 = vunpack.c.h.b16 %v2440
          %v3771 = vunpack.c.l.b16 %v2441
          %v3772 = vunpack.c.h.b16 %v2441
          %v3773 = vunpack.c.l.b16 %v2442
          %v3774 = vunpack.c.h.b16 %v2442
          %v3775 = vunpack.c.l.b16 %v2443
          %v3776 = vunpack.c.h.b16 %v2443
          %v3777 = vunpack.c.l.b16 %v2444
          %v3778 = vunpack.c.h.b16 %v2444
          %v3779 = vunpack.c.l.b16 %v2445
          %v3780 = vunpack.c.h.b16 %v2445
          %v3781 = vunpack.c.l.b16 %v2446
          %v3782 = vunpack.c.h.b16 %v2446
          %v3783 = vunpack.c.l.b16 %v2447
          %v3784 = vunpack.c.h.b16 %v2447
          %v3785 = vunpack.c.l.b16 %v2448
          %v3786 = vunpack.c.h.b16 %v2448
          %v3787 = vunpack.c.l.b16 %v2449
          %v3788 = vunpack.c.h.b16 %v2449
          %v3789 = vunpack.c.l.b16 %v2450
          %v3790 = vunpack.c.h.b16 %v2450
          %v3791 = vunpack.c.l.b16 %v2451
          %v3792 = vunpack.c.h.b16 %v2451
          %v3793 = vunpack.c.l.b16 %v2452
          %v3794 = vunpack.c.h.b16 %v2452
          %v3795 = vunpack.c.l.b16 %v2453
          %v3796 = vunpack.c.h.b16 %v2453
          %v3797 = vunpack.c.l.b16 %v2454
          %v3798 = vunpack.c.h.b16 %v2454
          %v3799 = vunpack.c.l.b16 %v2455
          %v3800 = vunpack.c.h.b16 %v2455
          %v3801 = vunpack.c.l.b16 %v2456
          %v3802 = vunpack.c.h.b16 %v2456
          %v3803 = vunpack.c.l.b16 %v2457
          %v3804 = vunpack.c.h.b16 %v2457
          %v3805 = vunpack.c.l.b16 %v2458
          %v3806 = vunpack.c.h.b16 %v2458
          %v3807 = vunpack.c.l.b16 %v2459
          %v3808 = vunpack.c.h.b16 %v2459
          %v3809 = vunpack.c.l.b16 %v2460
          %v3810 = vunpack.c.h.b16 %v2460
          %v3811 = vunpack.c.l.b16 %v2461
          %v3812 = vunpack.c.h.b16 %v2461
          %v3813 = vunpack.c.l.b16 %v2462
          %v3814 = vunpack.c.h.b16 %v2462
          %v3815 = vunpack.c.l.b16 %v2463
          %v3816 = vunpack.c.h.b16 %v2463
          %v3817 = vunpack.c.l.b16 %v2464
          %v3818 = vunpack.c.h.b16 %v2464
          %v3819 = vunpack.c.l.b16 %v2465
          %v3820 = vunpack.c.h.b16 %v2465
          %v3821 = vunpack.c.l.b16 %v2466
          %v3822 = vunpack.c.h.b16 %v2466
          %v3823 = vunpack.c.l.b16 %v2467
          %v3824 = vunpack.c.h.b16 %v2467
          %v3825 = vunpack.c.l.b16 %v2468
          %v3826 = vunpack.c.h.b16 %v2468
          %v3827 = vunpack.c.l.b16 %v2469
          %v3828 = vunpack.c.h.b16 %v2469
          %v3829 = vunpack.c.l.b16 %v2470
          %v3830 = vunpack.c.h.b16 %v2470
          %v3831 = vunpack.c.l.b16 %v2471
          %v3832 = vunpack.c.h.b16 %v2471
          %v3833 = vunpack.c.l.b16 %v2472
          %v3834 = vunpack.c.h.b16 %v2472
          %v3835 = vunpack.c.l.b16 %v2473
          %v3836 = vunpack.c.h.b16 %v2473
          %v3837 = vunpack.c.l.b16 %v2474
          %v3838 = vunpack.c.h.b16 %v2474
          %v3839 = vunpack.c.l.b16 %v2475
          %v3840 = vunpack.c.h.b16 %v2475
          %v3841 = vunpack.c.l.b16 %v2476
          %v3842 = vunpack.c.h.b16 %v2476
          %v3843 = vunpack.c.l.b16 %v2477
          %v3844 = vunpack.c.h.b16 %v2477
          %v3845 = vunpack.c.l.b16 %v2478
          %v3846 = vunpack.c.h.b16 %v2478
          %v3847 = vunpack.c.l.b16 %v2479
          %v3848 = vunpack.c.h.b16 %v2479
          %v3849 = vunpack.c.l.b16 %v2480
          %v3850 = vunpack.c.h.b16 %v2480
          %v3851 = vunpack.c.l.b16 %v2481
          %v3852 = vunpack.c.h.b16 %v2481
          %v3853 = vunpack.c.l.b16 %v2482
          %v3854 = vunpack.c.h.b16 %v2482
          %v3855 = vunpack.c.l.b16 %v2483
          %v3856 = vunpack.c.h.b16 %v2483
          %v3857 = vunpack.c.l.b16 %v2484
          %v3858 = vunpack.c.h.b16 %v2484
          %v3859 = vunpack.c.l.b16 %v2485
          %v3860 = vunpack.c.h.b16 %v2485
          %v3861 = vunpack.c.l.b16 %v2486
          %v3862 = vunpack.c.h.b16 %v2486
          %v3863 = vunpack.c.l.b16 %v2487
          %v3864 = vunpack.c.h.b16 %v2487
          %v3865 = vunpack.c.l.b16 %v2488
          %v3866 = vunpack.c.h.b16 %v2488
          %v3867 = vunpack.c.l.b16 %v2489
          %v3868 = vunpack.c.h.b16 %v2489
          %v3869 = vunpack.c.l.b16 %v2490
          %v3870 = vunpack.c.h.b16 %v2490
          %v3871 = vunpack.c.l.b16 %v2491
          %v3872 = vunpack.c.h.b16 %v2491
          %v3873 = vunpack.c.l.b16 %v2492
          %v3874 = vunpack.c.h.b16 %v2492
          %v3875 = vunpack.c.l.b16 %v2493
          %v3876 = vunpack.c.h.b16 %v2493
          %v3877 = vunpack.c.l.b16 %v2494
          %v3878 = vunpack.c.h.b16 %v2494
          %v3879 = vunpack.c.l.b16 %v2495
          %v3880 = vunpack.c.h.b16 %v2495
          %v3881 = vunpack.c.l.b16 %v2496
          %v3882 = vunpack.c.h.b16 %v2496
          %v3883 = vunpack.c.l.b16 %v2497
          %v3884 = vunpack.c.h.b16 %v2497
          %v3885 = vunpack.c.l.b16 %v2498
          %v3886 = vunpack.c.h.b16 %v2498
          %v3887 = vunpack.c.l.b16 %v2499
          %v3888 = vunpack.c.h.b16 %v2499
          %v3889 = vunpack.c.l.b16 %v2500
          %v3890 = vunpack.c.h.b16 %v2500
          %v3891 = vunpack.c.l.b16 %v2501
          %v3892 = vunpack.c.h.b16 %v2501
          %v3893 = vunpack.c.l.b16 %v2502
          %v3894 = vunpack.c.h.b16 %v2502
          %v3895 = vunpack.c.l.b16 %v2503
          %v3896 = vunpack.c.h.b16 %v2503
          %v3897 = vunpack.c.l.b16 %v2504
          %v3898 = vunpack.c.h.b16 %v2504
          %v3899 = vunpack.c.l.b16 %v2505
          %v3900 = vunpack.c.h.b16 %v2505
          %v3901 = vunpack.c.l.b16 %v2506
          %v3902 = vunpack.c.h.b16 %v2506
          %v3903 = vunpack.c.l.b16 %v2507
          %v3904 = vunpack.c.h.b16 %v2507
          %v3905 = vunpack.c.l.b16 %v2508
          %v3906 = vunpack.c.h.b16 %v2508
          %v3907 = vunpack.c.l.b16 %v2509
          %v3908 = vunpack.c.h.b16 %v2509
          %v3909 = vunpack.c.l.b16 %v2510
          %v3910 = vunpack.c.h.b16 %v2510
          %v3911 = vunpack.c.l.b16 %v2511
          %v3912 = vunpack.c.h.b16 %v2511
          %v3913 = vunpack.c.l.b16 %v2512
          %v3914 = vunpack.c.h.b16 %v2512
          %v3915 = vunpack.c.l.b16 %v2513
          %v3916 = vunpack.c.h.b16 %v2513
          %v3917 = vunpack.c.l.b16 %v2514
          %v3918 = vunpack.c.h.b16 %v2514
          %v3919 = vunpack.c.l.b16 %v2515
          %v3920 = vunpack.c.h.b16 %v2515
          %v3921 = vunpack.c.l.b16 %v2516
          %v3922 = vunpack.c.h.b16 %v2516
          %v3923 = vunpack.c.l.b16 %v2517
          %v3924 = vunpack.c.h.b16 %v2517
          %v3925 = vunpack.c.l.b16 %v2518
          %v3926 = vunpack.c.h.b16 %v2518
          %v3927 = vunpack.c.l.b16 %v2519
          %v3928 = vunpack.c.h.b16 %v2519
          %v3929 = vunpack.c.l.b16 %v2520
          %v3930 = vunpack.c.h.b16 %v2520
          %v3931 = vunpack.c.l.b16 %v2521
          %v3932 = vunpack.c.h.b16 %v2521
          %v3933 = vunpack.c.l.b16 %v2522
          %v3934 = vunpack.c.h.b16 %v2522
          %v3935 = vunpack.c.l.b16 %v2523
          %v3936 = vunpack.c.h.b16 %v2523
          %v3937 = vunpack.c.l.b16 %v2524
          %v3938 = vunpack.c.h.b16 %v2524
          %v3939 = vunpack.c.l.b16 %v2525
          %v3940 = vunpack.c.h.b16 %v2525
          %v3941 = vunpack.c.l.b16 %v2526
          %v3942 = vunpack.c.h.b16 %v2526
          %v3943 = vunpack.c.l.b16 %v2527
          %v3944 = vunpack.c.h.b16 %v2527
          %v3945 = vunpack.c.l.b16 %v2528
          %v3946 = vunpack.c.h.b16 %v2528
          %v3947 = vunpack.c.l.b16 %v2529
          %v3948 = vunpack.c.h.b16 %v2529
          %v3949 = vunpack.c.l.b16 %v2530
          %v3950 = vunpack.c.h.b16 %v2530
          %v3951 = vunpack.c.l.b16 %v2531
          %v3952 = vunpack.c.h.b16 %v2531
          %v3953 = vunpack.c.l.b16 %v2532
          %v3954 = vunpack.c.h.b16 %v2532
          %v3955 = vunpack.c.l.b16 %v2533
          %v3956 = vunpack.c.h.b16 %v2533
          %v3957 = vunpack.c.l.b16 %v2534
          %v3958 = vunpack.c.h.b16 %v2534
          %v3959 = vunpack.c.l.b16 %v2535
          %v3960 = vunpack.c.h.b16 %v2535
          %v3961 = vunpack.c.l.b16 %v2536
          %v3962 = vunpack.c.h.b16 %v2536
          %v3963 = vunpack.c.l.b16 %v2537
          %v3964 = vunpack.c.h.b16 %v2537
          %v3965 = vunpack.c.l.b16 %v2538
          %v3966 = vunpack.c.h.b16 %v2538
          %v3967 = vunpack.c.l.b16 %v2539
          %v3968 = vunpack.c.h.b16 %v2539
          %v3969 = vunpack.c.l.b16 %v2540
          %v3970 = vunpack.c.h.b16 %v2540
          %v3971 = vunpack.c.l.b16 %v2541
          %v3972 = vunpack.c.h.b16 %v2541
          %v3973 = vunpack.c.l.b16 %v2542
          %v3974 = vunpack.c.h.b16 %v2542
          %v3975 = vunpack.c.l.b16 %v2543
          %v3976 = vunpack.c.h.b16 %v2543
          %v3977 = vunpack.c.l.b16 %v2544
          %v3978 = vunpack.c.h.b16 %v2544
          %v3979 = vunpack.c.l.b16 %v2545
          %v3980 = vunpack.c.h.b16 %v2545
          %v3981 = vunpack.c.l.b16 %v2546
          %v3982 = vunpack.c.h.b16 %v2546
          %v3983 = vunpack.c.l.b16 %v2547
          %v3984 = vunpack.c.h.b16 %v2547
          %v3985 = vunpack.c.l.b16 %v2548
          %v3986 = vunpack.c.h.b16 %v2548
          %v3987 = vunpack.c.l.b16 %v2549
          %v3988 = vunpack.c.h.b16 %v2549
          %v3989 = vunpack.c.l.b16 %v2550
          %v3990 = vunpack.c.h.b16 %v2550
          %v3991 = vunpack.c.l.b16 %v2551
          %v3992 = vunpack.c.h.b16 %v2551
          %v3993 = vunpack.c.l.b16 %v2552
          %v3994 = vunpack.c.h.b16 %v2552
          %v3995 = vunpack.c.l.b16 %v2553
          %v3996 = vunpack.c.h.b16 %v2553
          %v3997 = vunpack.c.l.b16 %v2554
          %v3998 = vunpack.c.h.b16 %v2554
          %v3999 = vunpack.c.l.b16 %v2555
          %v4000 = vunpack.c.h.b16 %v2555
          %v4001 = vunpack.c.l.b16 %v2556
          %v4002 = vunpack.c.h.b16 %v2556
          %v4003 = vunpack.c.l.b16 %v2557
          %v4004 = vunpack.c.h.b16 %v2557
          %v4005 = vunpack.c.l.b16 %v2558
          %v4006 = vunpack.c.h.b16 %v2558
          %v4007 = vunpack.c.l.b16 %v2559
          %v4008 = vunpack.c.h.b16 %v2559
          %v4009 = vunpack.c.l.b16 %v2560
          %v4010 = vunpack.c.h.b16 %v2560
          %v4011 = vunpack.c.l.b16 %v2561
          %v4012 = vunpack.c.h.b16 %v2561
          %v4013 = vunpack.c.l.b16 %v2562
          %v4014 = vunpack.c.h.b16 %v2562
          %v4015 = vunpack.c.l.b16 %v2563
          %v4016 = vunpack.c.h.b16 %v2563
          %v4017 = vunpack.c.l.b16 %v2564
          %v4018 = vunpack.c.h.b16 %v2564
          %v4019 = vunpack.c.l.b16 %v2565
          %v4020 = vunpack.c.h.b16 %v2565
          %v4021 = vunpack.c.l.b16 %v2566
          %v4022 = vunpack.c.h.b16 %v2566
          %v4023 = vunpack.c.l.b16 %v2567
          %v4024 = vunpack.c.h.b16 %v2567
          %v4025 = vunpack.c.l.b16 %v2568
          %v4026 = vunpack.c.h.b16 %v2568
          %v4027 = vunpack.c.l.b16 %v2569
          %v4028 = vunpack.c.h.b16 %v2569
          %v4029 = vunpack.c.l.b16 %v2570
          %v4030 = vunpack.c.h.b16 %v2570
          %v4031 = vunpack.c.l.b16 %v2571
          %v4032 = vunpack.c.h.b16 %v2571
          %v4033 = vunpack.c.l.b16 %v2572
          %v4034 = vunpack.c.h.b16 %v2572
          %v4035 = vunpack.c.l.b16 %v2573
          %v4036 = vunpack.c.h.b16 %v2573
          %v4037 = vunpack.c.l.b16 %v2574
          %v4038 = vunpack.c.h.b16 %v2574
          %v4039 = vunpack.c.l.b16 %v2575
          %v4040 = vunpack.c.h.b16 %v2575
          %v4041 = vunpack.c.l.b16 %v2576
          %v4042 = vunpack.c.h.b16 %v2576
          %v4043 = vunpack.c.l.b16 %v2577
          %v4044 = vunpack.c.h.b16 %v2577
          %v4045 = vunpack.c.l.b16 %v2578
          %v4046 = vunpack.c.h.b16 %v2578
          %v4047 = vunpack.c.l.b16 %v2579
          %v4048 = vunpack.c.h.b16 %v2579
          %v4049 = vunpack.c.l.b16 %v2580
          %v4050 = vunpack.c.h.b16 %v2580
          %v4051 = vunpack.c.l.b16 %v2581
          %v4052 = vunpack.c.h.b16 %v2581
          %v4053 = vunpack.c.l.b16 %v2582
          %v4054 = vunpack.c.h.b16 %v2582
          %v4055 = vunpack.c.l.b16 %v2583
          %v4056 = vunpack.c.h.b16 %v2583
          %v4057 = vunpack.c.l.b16 %v2584
          %v4058 = vunpack.c.h.b16 %v2584
          %v4059 = vunpack.c.l.b16 %v2585
          %v4060 = vunpack.c.h.b16 %v2585
          %v4061 = vunpack.c.l.b16 %v2586
          %v4062 = vunpack.c.h.b16 %v2586
          %v4063 = vunpack.c.l.b16 %v2587
          %v4064 = vunpack.c.h.b16 %v2587
          %v4065 = vunpack.c.l.b16 %v2588
          %v4066 = vunpack.c.h.b16 %v2588
          %v4067 = vunpack.c.l.b16 %v2589
          %v4068 = vunpack.c.h.b16 %v2589
          %v4069 = vunpack.c.l.b16 %v2590
          %v4070 = vunpack.c.h.b16 %v2590
          %v4071 = vunpack.c.l.b16 %v2591
          %v4072 = vunpack.c.h.b16 %v2591
          %v4073 = vunpack.c.l.b16 %v2592
          %v4074 = vunpack.c.h.b16 %v2592
          %v4075 = vunpack.c.l.b16 %v2593
          %v4076 = vunpack.c.h.b16 %v2593
          %v4077 = vunpack.c.l.b16 %v2594
          %v4078 = vunpack.c.h.b16 %v2594
          %v4079 = vunpack.c.l.b16 %v2595
          %v4080 = vunpack.c.h.b16 %v2595
          %v4081 = vunpack.c.l.b16 %v2596
          %v4082 = vunpack.c.h.b16 %v2596
          %v4083 = vunpack.c.l.b16 %v2597
          %v4084 = vunpack.c.h.b16 %v2597
          %v4085 = vunpack.c.l.b16 %v2598
          %v4086 = vunpack.c.h.b16 %v2598
          %v4087 = vunpack.c.l.b16 %v2599
          %v4088 = vunpack.c.h.b16 %v2599
          %v4089 = vunpack.c.l.b16 %v2600
          %v4090 = vunpack.c.h.b16 %v2600
          %v4091 = vunpack.c.l.b16 %v2601
          %v4092 = vunpack.c.h.b16 %v2601
          %v4093 = vunpack.c.l.b16 %v2602
          %v4094 = vunpack.c.h.b16 %v2602
          %v4095 = vunpack.c.l.b16 %v2603
          %v4096 = vunpack.c.h.b16 %v2603
          %v4097 = vunpack.c.l.b16 %v2604
          %v4098 = vunpack.c.h.b16 %v2604
          %v4099 = vunpack.c.l.b16 %v2605
          %v4100 = vunpack.c.h.b16 %v2605
          %v4101 = vunpack.c.l.b16 %v2606
          %v4102 = vunpack.c.h.b16 %v2606
          %v4103 = vunpack.c.l.b16 %v2607
          %v4104 = vunpack.c.h.b16 %v2607
          %v4105 = vunpack.c.l.b16 %v2608
          %v4106 = vunpack.c.h.b16 %v2608
          %v4107 = vunpack.c.l.b16 %v2609
          %v4108 = vunpack.c.h.b16 %v2609
          %v4109 = vunpack.c.l.b16 %v2610
          %v4110 = vunpack.c.h.b16 %v2610
          %v4111 = vunpack.c.l.b16 %v2611
          %v4112 = vunpack.c.h.b16 %v2611
          %v4113 = vunpack.c.l.b16 %v2612
          %v4114 = vunpack.c.h.b16 %v2612
          %v4115 = vunpack.c.l.b16 %v2613
          %v4116 = vunpack.c.h.b16 %v2613
          %v4117 = vunpack.c.l.b16 %v2614
          %v4118 = vunpack.c.h.b16 %v2614
          %v4119 = vunpack.c.l.b16 %v2615
          %v4120 = vunpack.c.h.b16 %v2615
          %v4121 = vunpack.c.l.b16 %v2616
          %v4122 = vunpack.c.h.b16 %v2616
          %v4123 = vunpack.c.l.b16 %v2617
          %v4124 = vunpack.c.h.b16 %v2617
          %v4125 = vunpack.c.l.b16 %v2618
          %v4126 = vunpack.c.h.b16 %v2618
          %v4127 = vunpack.c.l.b16 %v2619
          %v4128 = vunpack.c.h.b16 %v2619
          %v4129 = vunpack.c.l.b16 %v2620
          %v4130 = vunpack.c.h.b16 %v2620
          %v4131 = vunpack.c.l.b16 %v2621
          %v4132 = vunpack.c.h.b16 %v2621
          %v4133 = vunpack.c.l.b16 %v2622
          %v4134 = vunpack.c.h.b16 %v2622
          %v4135 = vunpack.c.l.b16 %v2623
          %v4136 = vunpack.c.h.b16 %v2623
          %v4137 = vunpack.c.l.b16 %v2624
          %v4138 = vunpack.c.h.b16 %v2624
          %v4139 = vunpack.c.l.b16 %v2625
          %v4140 = vunpack.c.h.b16 %v2625
          %v4141 = vunpack.c.l.b16 %v2626
          %v4142 = vunpack.c.h.b16 %v2626
          %v4143 = vunpack.c.l.b16 %v2627
          %v4144 = vunpack.c.h.b16 %v2627
          %v4145 = vunpack.c.l.b16 %v2628
          %v4146 = vunpack.c.h.b16 %v2628
          %v4147 = vunpack.c.l.b16 %v2629
          %v4148 = vunpack.c.h.b16 %v2629
          %v4149 = vunpack.c.l.b16 %v2630
          %v4150 = vunpack.c.h.b16 %v2630
          %v4151 = vunpack.c.l.b16 %v2631
          %v4152 = vunpack.c.h.b16 %v2631
          %v4153 = vunpack.c.l.b16 %v2632
          %v4154 = vunpack.c.h.b16 %v2632
          %v4155 = vunpack.c.l.b16 %v2633
          %v4156 = vunpack.c.h.b16 %v2633
          %v4157 = vunpack.c.l.b16 %v2634
          %v4158 = vunpack.c.h.b16 %v2634
          %v4159 = vunpack.c.l.b16 %v2635
          %v4160 = vunpack.c.h.b16 %v2635
          %v4161 = vunpack.c.l.b16 %v2636
          %v4162 = vunpack.c.h.b16 %v2636
          %v4163 = vunpack.c.l.b16 %v2637
          %v4164 = vunpack.c.h.b16 %v2637
          %v4165 = vunpack.c.l.b16 %v2638
          %v4166 = vunpack.c.h.b16 %v2638
          %v4167 = vunpack.c.l.b16 %v2639
          %v4168 = vunpack.c.h.b16 %v2639
          %v4169 = vunpack.c.l.b16 %v2640
          %v4170 = vunpack.c.h.b16 %v2640
          %v4171 = vunpack.c.l.b16 %v2641
          %v4172 = vunpack.c.h.b16 %v2641
          %v4173 = vunpack.c.l.b16 %v2642
          %v4174 = vunpack.c.h.b16 %v2642
          %v4175 = vunpack.c.l.b16 %v2643
          %v4176 = vunpack.c.h.b16 %v2643
          %v4177 = vunpack.c.l.b16 %v2644
          %v4178 = vunpack.c.h.b16 %v2644
          %v4179 = vunpack.c.l.b16 %v2645
          %v4180 = vunpack.c.h.b16 %v2645
          %v4181 = vunpack.c.l.b16 %v2646
          %v4182 = vunpack.c.h.b16 %v2646
          %v4183 = vunpack.c.l.b16 %v2647
          %v4184 = vunpack.c.h.b16 %v2647
          %v4185 = vunpack.c.l.b16 %v2648
          %v4186 = vunpack.c.h.b16 %v2648
          %v4187 = vunpack.c.l.b16 %v2649
          %v4188 = vunpack.c.h.b16 %v2649
          %v4189 = vunpack.c.l.b16 %v2650
          %v4190 = vunpack.c.h.b16 %v2650
          %v4191 = vunpack.c.l.b16 %v2651
          %v4192 = vunpack.c.h.b16 %v2651
          %v4193 = vunpack.c.l.b16 %v2652
          %v4194 = vunpack.c.h.b16 %v2652
          %v4195 = vunpack.c.l.b16 %v2653
          %v4196 = vunpack.c.h.b16 %v2653
          %v4197 = vunpack.c.l.b16 %v2654
          %v4198 = vunpack.c.h.b16 %v2654
          %v4199 = vunpack.c.l.b16 %v2655
          %v4200 = vunpack.c.h.b16 %v2655
          %v4201 = vunpack.c.l.b16 %v2656
          %v4202 = vunpack.c.h.b16 %v2656
          %v4203 = vunpack.c.l.b16 %v2657
          %v4204 = vunpack.c.h.b16 %v2657
          %v4205 = vunpack.c.l.b16 %v2658
          %v4206 = vunpack.c.h.b16 %v2658
          %v4207 = vunpack.c.l.b16 %v2659
          %v4208 = vunpack.c.h.b16 %v2659
          %v4209 = vunpack.c.l.b16 %v2660
          %v4210 = vunpack.c.h.b16 %v2660
          %v4211 = vunpack.c.l.b16 %v2661
          %v4212 = vunpack.c.h.b16 %v2661
          %v4213 = vunpack.c.l.b16 %v2662
          %v4214 = vunpack.c.h.b16 %v2662
          %v4215 = vunpack.c.l.b16 %v2663
          %v4216 = vunpack.c.h.b16 %v2663
          %v4217 = vunpack.c.l.b16 %v2664
          %v4218 = vunpack.c.h.b16 %v2664
          %v4219 = vunpack.c.l.b16 %v2665
          %v4220 = vunpack.c.h.b16 %v2665
          %v4221 = vunpack.c.l.b16 %v2666
          %v4222 = vunpack.c.h.b16 %v2666
          %v4223 = vunpack.c.l.b16 %v2667
          %v4224 = vunpack.c.h.b16 %v2667
          %v4225 = vunpack.c.l.b16 %v2668
          %v4226 = vunpack.c.h.b16 %v2668
          %v4227 = vunpack.c.l.b16 %v2669
          %v4228 = vunpack.c.h.b16 %v2669
          %v4229 = vunpack.c.l.b16 %v2670
          %v4230 = vunpack.c.h.b16 %v2670
          %v4231 = vunpack.c.l.b16 %v2671
          %v4232 = vunpack.c.h.b16 %v2671
          %v4233 = vunpack.c.l.b16 %v2672
          %v4234 = vunpack.c.h.b16 %v2672
          %v4235 = vunpack.c.l.b16 %v2673
          %v4236 = vunpack.c.h.b16 %v2673
          %v4237 = vunpack.c.l.b16 %v2674
          %v4238 = vunpack.c.h.b16 %v2674
          %v4239 = vunpack.c.l.b16 %v2675
          %v4240 = vunpack.c.h.b16 %v2675
          %v4241 = vunpack.c.l.b16 %v2676
          %v4242 = vunpack.c.h.b16 %v2676
          %v4243 = vunpack.c.l.b16 %v2677
          %v4244 = vunpack.c.h.b16 %v2677
          %v4245 = vunpack.c.l.b16 %v2678
          %v4246 = vunpack.c.h.b16 %v2678
          %v4247 = vunpack.c.l.b16 %v2679
          %v4248 = vunpack.c.h.b16 %v2679
          %v4249 = vunpack.c.l.b16 %v2680
          %v4250 = vunpack.c.h.b16 %v2680
          %v4251 = vunpack.c.l.b16 %v2681
          %v4252 = vunpack.c.h.b16 %v2681
          %v4253 = vunpack.c.l.b16 %v2682
          %v4254 = vunpack.c.h.b16 %v2682
          %v4255 = vunpack.c.l.b16 %v2683
          %v4256 = vunpack.c.h.b16 %v2683
          %v4257 = vunpack.c.l.b16 %v2684
          %v4258 = vunpack.c.h.b16 %v2684
          %v4259 = vunpack.c.l.b16 %v2685
          %v4260 = vunpack.c.h.b16 %v2685
          %v4261 = vunpack.c.l.b16 %v2686
          %v4262 = vunpack.c.h.b16 %v2686
          %v4263 = vunpack.c.l.b16 %v2687
          %v4264 = vunpack.c.h.b16 %v2687
          %v4265 = vunpack.c.l.b16 %v2688
          %v4266 = vunpack.c.h.b16 %v2688
          %v4267 = vunpack.c.l.b16 %v2689
          %v4268 = vunpack.c.h.b16 %v2689
          %v4269 = vunpack.c.l.b16 %v2690
          %v4270 = vunpack.c.h.b16 %v2690
          %v4271 = vunpack.c.l.b16 %v2691
          %v4272 = vunpack.c.h.b16 %v2691
          %v4273 = vunpack.c.l.b16 %v2692
          %v4274 = vunpack.c.h.b16 %v2692
          %v4275 = vunpack.c.l.b16 %v2693
          %v4276 = vunpack.c.h.b16 %v2693
          %v4277 = vunpack.c.l.b16 %v2694
          %v4278 = vunpack.c.h.b16 %v2694
          %v4279 = vunpack.c.l.b16 %v2695
          %v4280 = vunpack.c.h.b16 %v2695
          %v4281 = vunpack.c.l.b16 %v2696
          %v4282 = vunpack.c.h.b16 %v2696
          %v4283 = vunpack.c.l.b16 %v2697
          %v4284 = vunpack.c.h.b16 %v2697
          %v4285 = vunpack.c.l.b16 %v2698
          %v4286 = vunpack.c.h.b16 %v2698
          %v4287 = vunpack.c.l.b16 %v2699
          %v4288 = vunpack.c.h.b16 %v2699
          %v4289 = vunpack.c.l.b16 %v2700
          %v4290 = vunpack.c.h.b16 %v2700
          %v4291 = vunpack.c.l.b16 %v2701
          %v4292 = vunpack.c.h.b16 %v2701
          %v4293 = vunpack.c.l.b16 %v2702
          %v4294 = vunpack.c.h.b16 %v2702
          %v4295 = vunpack.c.l.b16 %v2703
          %v4296 = vunpack.c.h.b16 %v2703
          %v4297 = vunpack.c.l.b16 %v2704
          %v4298 = vunpack.c.h.b16 %v2704
          %v4299 = vunpack.c.l.b16 %v2705
          %v4300 = vunpack.c.h.b16 %v2705
          %v4301 = vunpack.c.l.b16 %v2706
          %v4302 = vunpack.c.h.b16 %v2706
          %v4303 = vunpack.c.l.b16 %v2707
          %v4304 = vunpack.c.h.b16 %v2707
          %v4305 = vunpack.c.l.b16 %v2708
          %v4306 = vunpack.c.h.b16 %v2708
          %v4307 = vunpack.c.l.b16 %v2709
          %v4308 = vunpack.c.h.b16 %v2709
          %v4309 = vunpack.c.l.b16 %v2710
          %v4310 = vunpack.c.h.b16 %v2710
          %v4311 = vunpack.c.l.b16 %v2711
          %v4312 = vunpack.c.h.b16 %v2711
          %v4313 = vunpack.c.l.b16 %v2712
          %v4314 = vunpack.c.h.b16 %v2712
          %v4315 = vunpack.c.l.b16 %v2713
          %v4316 = vunpack.c.h.b16 %v2713
          %v4317 = vunpack.c.l.b16 %v2714
          %v4318 = vunpack.c.h.b16 %v2714
          %v4319 = vunpack.c.l.b16 %v2715
          %v4320 = vunpack.c.h.b16 %v2715
          %v4321 = vunpack.c.l.b16 %v2716
          %v4322 = vunpack.c.h.b16 %v2716
          %v4323 = vunpack.c.l.b16 %v2717
          %v4324 = vunpack.c.h.b16 %v2717
          %v4325 = vunpack.c.l.b16 %v2718
          %v4326 = vunpack.c.h.b16 %v2718
          %v4327 = vunpack.c.l.b16 %v2719
          %v4328 = vunpack.c.h.b16 %v2719
          %v4329 = vunpack.c.l.b16 %v2720
          %v4330 = vunpack.c.h.b16 %v2720
          %v4331 = vunpack.c.l.b16 %v2721
          %v4332 = vunpack.c.h.b16 %v2721
          %v4333 = vunpack.c.l.b16 %v2722
          %v4334 = vunpack.c.h.b16 %v2722
          %v4335 = vunpack.c.l.b16 %v2723
          %v4336 = vunpack.c.h.b16 %v2723
          %v4337 = vunpack.c.l.b16 %v2724
          %v4338 = vunpack.c.h.b16 %v2724
          %v4339 = vunpack.c.l.b16 %v2725
          %v4340 = vunpack.c.h.b16 %v2725
          %v4341 = vunpack.c.l.b16 %v2726
          %v4342 = vunpack.c.h.b16 %v2726
          %v4343 = vunpack.c.l.b16 %v2727
          %v4344 = vunpack.c.h.b16 %v2727
          %v4345 = vunpack.c.l.b16 %v2728
          %v4346 = vunpack.c.h.b16 %v2728
          %v4347 = vunpack.c.l.b16 %v2729
          %v4348 = vunpack.c.h.b16 %v2729
          %v4349 = vunpack.c.l.b16 %v2730
          %v4350 = vunpack.c.h.b16 %v2730
          %v4351 = vunpack.c.l.b16 %v2731
          %v4352 = vunpack.c.h.b16 %v2731
          %v4353 = vunpack.c.l.b16 %v2732
          %v4354 = vunpack.c.h.b16 %v2732
          %v4355 = vunpack.c.l.b16 %v2733
          %v4356 = vunpack.c.h.b16 %v2733
          %v4357 = vunpack.c.l.b16 %v2734
          %v4358 = vunpack.c.h.b16 %v2734
          %v4359 = vunpack.c.l.b16 %v2735
          %v4360 = vunpack.c.h.b16 %v2735
          %v4361 = vunpack.c.l.b16 %v2736
          %v4362 = vunpack.c.h.b16 %v2736
          %v4363 = vunpack.c.l.b16 %v2737
          %v4364 = vunpack.c.h.b16 %v2737
          %v4365 = vunpack.c.l.b16 %v2738
          %v4366 = vunpack.c.h.b16 %v2738
          %v4367 = vunpack.c.l.b16 %v2739
          %v4368 = vunpack.c.h.b16 %v2739
          %v4369 = vunpack.c.l.b16 %v2740
          %v4370 = vunpack.c.h.b16 %v2740
          %v4371 = vunpack.c.l.b16 %v2741
          %v4372 = vunpack.c.h.b16 %v2741
          %v4373 = vunpack.c.l.b16 %v2742
          %v4374 = vunpack.c.h.b16 %v2742
          %v4375 = vunpack.c.l.b16 %v2743
          %v4376 = vunpack.c.h.b16 %v2743
          %v4377 = vunpack.c.l.b16 %v2744
          %v4378 = vunpack.c.h.b16 %v2744
          %v4379 = vunpack.c.l.b16 %v2745
          %v4380 = vunpack.c.h.b16 %v2745
          %v4381 = vunpack.c.l.b16 %v2746
          %v4382 = vunpack.c.h.b16 %v2746
          %v4383 = vunpack.c.l.b16 %v2747
          %v4384 = vunpack.c.h.b16 %v2747
          %v4385 = vunpack.c.l.b16 %v2748
          %v4386 = vunpack.c.h.b16 %v2748
          %v4387 = vunpack.c.l.b16 %v2749
          %v4388 = vunpack.c.h.b16 %v2749
          %v4389 = vunpack.c.l.b16 %v2750
          %v4390 = vunpack.c.h.b16 %v2750
          %v4391 = vunpack.c.l.b16 %v2751
          %v4392 = vunpack.c.h.b16 %v2751
          %v4393 = vunpack.c.l.b16 %v2752
          %v4394 = vunpack.c.h.b16 %v2752
          %v4395 = vunpack.c.l.b16 %v2753
          %v4396 = vunpack.c.h.b16 %v2753
          %v4397 = vunpack.c.l.b16 %v2754
          %v4398 = vunpack.c.h.b16 %v2754
          %v4399 = vunpack.c.l.b16 %v2755
          %v4400 = vunpack.c.h.b16 %v2755
          %v4401 = vunpack.c.l.b16 %v2756
          %v4402 = vunpack.c.h.b16 %v2756
          %v4403 = vunpack.c.l.b16 %v2757
          %v4404 = vunpack.c.h.b16 %v2757
          %v4405 = vunpack.c.l.b16 %v2758
          %v4406 = vunpack.c.h.b16 %v2758
          %v4407 = vunpack.c.l.b16 %v2759
          %v4408 = vunpack.c.h.b16 %v2759
          %v4409 = vunpack.c.l.b16 %v2760
          %v4410 = vunpack.c.h.b16 %v2760
          %v4411 = vunpack.c.l.b16 %v2761
          %v4412 = vunpack.c.h.b16 %v2761
          %v4413 = vunpack.c.l.b16 %v2762
          %v4414 = vunpack.c.h.b16 %v2762
          %v4415 = vunpack.c.l.b16 %v2763
          %v4416 = vunpack.c.h.b16 %v2763
          %v4417 = vunpack.c.l.b16 %v2764
          %v4418 = vunpack.c.h.b16 %v2764
          %v4419 = vunpack.c.l.b16 %v2765
          %v4420 = vunpack.c.h.b16 %v2765
          %v4421 = vunpack.c.l.b16 %v2766
          %v4422 = vunpack.c.h.b16 %v2766
          %v4423 = vunpack.c.l.b16 %v2767
          %v4424 = vunpack.c.h.b16 %v2767
          %v4425 = vunpack.c.l.b16 %v2768
          %v4426 = vunpack.c.h.b16 %v2768
          %v4427 = vunpack.c.l.b16 %v2769
          %v4428 = vunpack.c.h.b16 %v2769
          %v4429 = vunpack.c.l.b16 %v2770
          %v4430 = vunpack.c.h.b16 %v2770
          %v4431 = vunpack.c.l.b16 %v2771
          %v4432 = vunpack.c.h.b16 %v2771
          %v4433 = vunpack.c.l.b16 %v2772
          %v4434 = vunpack.c.h.b16 %v2772
          %v4435 = vunpack.c.l.b16 %v2773
          %v4436 = vunpack.c.h.b16 %v2773
          %v4437 = vunpack.c.l.b16 %v2774
          %v4438 = vunpack.c.h.b16 %v2774
          %v4439 = vunpack.c.l.b16 %v2775
          %v4440 = vunpack.c.h.b16 %v2775
          %v4441 = vunpack.c.l.b16 %v2776
          %v4442 = vunpack.c.h.b16 %v2776
          %v4443 = vunpack.c.l.b16 %v2777
          %v4444 = vunpack.c.h.b16 %v2777
          %v4445 = vunpack.c.l.b16 %v2778
          %v4446 = vunpack.c.h.b16 %v2778
          %v4447 = vunpack.c.l.b16 %v2779
          %v4448 = vunpack.c.h.b16 %v2779
          %v4449 = vunpack.c.l.b16 %v2780
          %v4450 = vunpack.c.h.b16 %v2780
          %v4451 = vunpack.c.l.b16 %v2781
          %v4452 = vunpack.c.h.b16 %v2781
          %v4453 = vunpack.c.l.b16 %v2782
          %v4454 = vunpack.c.h.b16 %v2782
          %v4455 = vunpack.c.l.b16 %v2783
          %v4456 = vunpack.c.h.b16 %v2783
          %v4457 = vunpack.c.l.b16 %v2784
          %v4458 = vunpack.c.h.b16 %v2784
          %v4459 = vunpack.c.l.b16 %v2785
          %v4460 = vunpack.c.h.b16 %v2785
          %v4461 = vunpack.c.l.b16 %v2786
          %v4462 = vunpack.c.h.b16 %v2786
          %v4463 = vunpack.c.l.b16 %v2787
          %v4464 = vunpack.c.h.b16 %v2787
          %v4465 = vunpack.c.l.b16 %v2788
          %v4466 = vunpack.c.h.b16 %v2788
          %v4467 = vunpack.c.l.b16 %v2789
          %v4468 = vunpack.c.h.b16 %v2789
          %v4469 = vunpack.c.l.b16 %v2790
          %v4470 = vunpack.c.h.b16 %v2790
          %v4471 = vunpack.c.l.b16 %v2791
          %v4472 = vunpack.c.h.b16 %v2791
          %v4473 = vunpack.c.l.b16 %v2792
          %v4474 = vunpack.c.h.b16 %v2792
          %v4475 = vunpack.c.l.b16 %v2793
          %v4476 = vunpack.c.h.b16 %v2793
          %v4477 = vunpack.c.l.b16 %v2794
          %v4478 = vunpack.c.h.b16 %v2794
          %v4479 = vunpack.c.l.b16 %v2795
          %v4480 = vunpack.c.h.b16 %v2795
          %v4481 = vunpack.c.l.b16 %v2796
          %v4482 = vunpack.c.h.b16 %v2796
          %v4483 = vunpack.c.l.b16 %v2797
          %v4484 = vunpack.c.h.b16 %v2797
          %v4485 = vunpack.c.l.b16 %v2798
          %v4486 = vunpack.c.h.b16 %v2798
          %v4487 = vunpack.c.l.b16 %v2799
          %v4488 = vunpack.c.h.b16 %v2799
          %v4489 = vunpack.c.l.b16 %v2800
          %v4490 = vunpack.c.h.b16 %v2800
          %v4491 = vunpack.c.l.b16 %v2801
          %v4492 = vunpack.c.h.b16 %v2801
          %v4493 = vunpack.c.l.b16 %v2802
          %v4494 = vunpack.c.h.b16 %v2802
          %v4495 = vunpack.c.l.b16 %v2803
          %v4496 = vunpack.c.h.b16 %v2803
          %v4497 = vunpack.c.l.b16 %v2804
          %v4498 = vunpack.c.h.b16 %v2804
          %v4499 = vunpack.c.l.b16 %v2805
          %v4500 = vunpack.c.h.b16 %v2805
          %v4501 = vunpack.c.l.b16 %v2806
          %v4502 = vunpack.c.h.b16 %v2806
          %v4503 = vunpack.c.l.b16 %v2807
          %v4504 = vunpack.c.h.b16 %v2807
          %v4505 = vunpack.c.l.b16 %v2808
          %v4506 = vunpack.c.h.b16 %v2808
          %v4507 = vunpack.c.l.b16 %v2809
          %v4508 = vunpack.c.h.b16 %v2809
          %v4509 = vunpack.c.l.b16 %v2810
          %v4510 = vunpack.c.h.b16 %v2810
          %v4511 = vunpack.c.l.b16 %v2811
          %v4512 = vunpack.c.h.b16 %v2811
          %v4513 = vunpack.c.l.b16 %v2812
          %v4514 = vunpack.c.h.b16 %v2812
          %v4515 = vunpack.c.l.b16 %v2813
          %v4516 = vunpack.c.h.b16 %v2813
          %v4517 = vunpack.c.l.b16 %v2814
          %v4518 = vunpack.c.h.b16 %v2814
          %v4519 = vunpack.c.l.b16 %v2815
          %v4520 = vunpack.c.h.b16 %v2815
          %v4521 = vunpack.c.l.b16 %v2816
          %v4522 = vunpack.c.h.b16 %v2816
          %v4523 = vunpack.c.l.b16 %v2817
          %v4524 = vunpack.c.h.b16 %v2817
          %v4525 = vunpack.c.l.b16 %v2818
          %v4526 = vunpack.c.h.b16 %v2818
          %v4527 = vunpack.c.l.b16 %v2819
          %v4528 = vunpack.c.h.b16 %v2819
          %v4529 = vunpack.c.l.b16 %v2820
          %v4530 = vunpack.c.h.b16 %v2820
          %v4531 = vunpack.c.l.b16 %v2821
          %v4532 = vunpack.c.h.b16 %v2821
          %v4533 = vunpack.c.l.b16 %v2822
          %v4534 = vunpack.c.h.b16 %v2822
          %v4535 = vunpack.c.l.b16 %v2823
          %v4536 = vunpack.c.h.b16 %v2823
          %v4537 = vunpack.c.l.b16 %v2824
          %v4538 = vunpack.c.h.b16 %v2824
          %v4539 = vunpack.c.l.b16 %v2825
          %v4540 = vunpack.c.h.b16 %v2825
          %v4541 = vunpack.c.l.b16 %v2826
          %v4542 = vunpack.c.h.b16 %v2826
          %v4543 = vunpack.c.l.b16 %v2827
          %v4544 = vunpack.c.h.b16 %v2827
          %v4545 = vunpack.c.l.b16 %v2828
          %v4546 = vunpack.c.h.b16 %v2828
          %v4547 = vunpack.c.l.b16 %v2829
          %v4548 = vunpack.c.h.b16 %v2829
          %v4549 = vunpack.c.l.b16 %v2830
          %v4550 = vunpack.c.h.b16 %v2830
          %v4551 = vunpack.c.l.b16 %v2831
          %v4552 = vunpack.c.h.b16 %v2831
          %v4553 = vunpack.c.l.b16 %v2832
          %v4554 = vunpack.c.h.b16 %v2832
          %v4555 = vunpack.c.l.b16 %v2833
          %v4556 = vunpack.c.h.b16 %v2833
          %v4557 = vunpack.c.l.b16 %v2834
          %v4558 = vunpack.c.h.b16 %v2834
          %v4559 = vunpack.c.l.b16 %v2835
          %v4560 = vunpack.c.h.b16 %v2835
          %v4561 = vunpack.c.l.b16 %v2836
          %v4562 = vunpack.c.h.b16 %v2836
          %v4563 = vunpack.c.l.b16 %v2837
          %v4564 = vunpack.c.h.b16 %v2837
          %v4565 = vunpack.c.l.b16 %v2838
          %v4566 = vunpack.c.h.b16 %v2838
          %v4567 = vunpack.c.l.b16 %v2839
          %v4568 = vunpack.c.h.b16 %v2839
          %v4569 = vunpack.c.l.b16 %v2840
          %v4570 = vunpack.c.h.b16 %v2840
          %v4571 = vunpack.c.l.b16 %v2841
          %v4572 = vunpack.c.h.b16 %v2841
          %v4573 = vunpack.c.l.b16 %v2842
          %v4574 = vunpack.c.h.b16 %v2842
          %v4575 = vunpack.c.l.b16 %v2843
          %v4576 = vunpack.c.h.b16 %v2843
          %v4577 = vunpack.c.l.b16 %v2844
          %v4578 = vunpack.c.h.b16 %v2844
          %v4579 = vunpack.c.l.b16 %v2845
          %v4580 = vunpack.c.h.b16 %v2845
          %v4581 = vunpack.c.l.b16 %v2846
          %v4582 = vunpack.c.h.b16 %v2846
          %v4583 = vunpack.c.l.b16 %v2847
          %v4584 = vunpack.c.h.b16 %v2847
          %v4585 = vunpack.c.l.b16 %v2848
          %v4586 = vunpack.c.h.b16 %v2848
          %v4587 = vunpack.c.l.b16 %v2849
          %v4588 = vunpack.c.h.b16 %v2849
          %v4589 = vunpack.c.l.b16 %v2850
          %v4590 = vunpack.c.h.b16 %v2850
          %v4591 = vunpack.c.l.b16 %v2851
          %v4592 = vunpack.c.h.b16 %v2851
          %v4593 = vunpack.c.l.b16 %v2852
          %v4594 = vunpack.c.h.b16 %v2852
          %v4595 = vunpack.c.l.b16 %v2853
          %v4596 = vunpack.c.h.b16 %v2853
          %v4597 = vunpack.c.l.b16 %v2854
          %v4598 = vunpack.c.h.b16 %v2854
          %v4599 = vunpack.c.l.b16 %v2855
          %v4600 = vunpack.c.h.b16 %v2855
          %v4601 = vunpack.c.l.b16 %v2856
          %v4602 = vunpack.c.h.b16 %v2856
          %v4603 = vunpack.c.l.b16 %v2857
          %v4604 = vunpack.c.h.b16 %v2857
          %v4605 = vunpack.c.l.b16 %v2858
          %v4606 = vunpack.c.h.b16 %v2858
          %v4607 = vunpack.c.l.b16 %v2859
          %v4608 = vunpack.c.h.b16 %v2859
          %v4609 = vunpack.c.l.b16 %v2860
          %v4610 = vunpack.c.h.b16 %v2860
          %v4611 = vunpack.c.l.b16 %v2861
          %v4612 = vunpack.c.h.b16 %v2861
          %v4613 = vunpack.c.l.b16 %v2862
          %v4614 = vunpack.c.h.b16 %v2862
          %v4615 = vunpack.c.l.b16 %v2863
          %v4616 = vunpack.c.h.b16 %v2863
          %v4617 = vunpack.c.l.b16 %v2864
          %v4618 = vunpack.c.h.b16 %v2864
          %v4619 = vunpack.c.l.b16 %v2865
          %v4620 = vunpack.c.h.b16 %v2865
          %v4621 = vunpack.c.l.b16 %v2866
          %v4622 = vunpack.c.h.b16 %v2866
          %v4623 = vunpack.c.l.b16 %v2867
          %v4624 = vunpack.c.h.b16 %v2867
          %v4625 = vunpack.c.l.b16 %v2868
          %v4626 = vunpack.c.h.b16 %v2868
          %v4627 = vunpack.c.l.b16 %v2869
          %v4628 = vunpack.c.h.b16 %v2869
          %v4629 = vunpack.c.l.b16 %v2870
          %v4630 = vunpack.c.h.b16 %v2870
          %v4631 = vunpack.c.l.b16 %v2871
          %v4632 = vunpack.c.h.b16 %v2871
          %v4633 = vunpack.c.l.b16 %v2872
          %v4634 = vunpack.c.h.b16 %v2872
          %v4635 = vunpack.c.l.b16 %v2873
          %v4636 = vunpack.c.h.b16 %v2873
          %v4637 = vunpack.c.l.b16 %v2874
          %v4638 = vunpack.c.h.b16 %v2874
          %v4639 = vunpack.c.l.b16 %v2875
          %v4640 = vunpack.c.h.b16 %v2875
          %v4641 = vunpack.c.l.b16 %v2876
          %v4642 = vunpack.c.h.b16 %v2876
          %v4643 = vunpack.c.l.b16 %v2877
          %v4644 = vunpack.c.h.b16 %v2877
          %v4645 = vunpack.c.l.b16 %v2878
          %v4646 = vunpack.c.h.b16 %v2878
          %v4647 = vunpack.c.l.b16 %v2879
          %v4648 = vunpack.c.h.b16 %v2879
          %v4649 = vunpack.c.l.b16 %v2880
          %v4650 = vunpack.c.h.b16 %v2880
          %v4651 = vunpack.c.l.b16 %v2881
          %v4652 = vunpack.c.h.b16 %v2881
          %v4653 = vunpack.c.l.b16 %v2882
          %v4654 = vunpack.c.h.b16 %v2882
          %v4655 = vunpack.c.l.b16 %v2883
          %v4656 = vunpack.c.h.b16 %v2883
          %v4657 = vunpack.c.l.b16 %v2884
          %v4658 = vunpack.c.h.b16 %v2884
          %v4659 = vunpack.c.l.b16 %v2885
          %v4660 = vunpack.c.h.b16 %v2885
          %v4661 = vunpack.c.l.b16 %v2886
          %v4662 = vunpack.c.h.b16 %v2886
          %v4663 = vunpack.c.l.b16 %v2887
          %v4664 = vunpack.c.h.b16 %v2887
          %v4665 = vunpack.c.l.b16 %v2888
          %v4666 = vunpack.c.h.b16 %v2888
          %v4667 = vunpack.c.l.b16 %v2889
          %v4668 = vunpack.c.h.b16 %v2889
          %v4669 = vunpack.c.l.b16 %v2890
          %v4670 = vunpack.c.h.b16 %v2890
          %v4671 = vunpack.c.l.b16 %v2891
          %v4672 = vunpack.c.h.b16 %v2891
          %v4673 = vunpack.c.l.b16 %v2892
          %v4674 = vunpack.c.h.b16 %v2892
          %v4675 = vunpack.c.l.b16 %v2893
          %v4676 = vunpack.c.h.b16 %v2893
          %v4677 = vunpack.c.l.b16 %v2894
          %v4678 = vunpack.c.h.b16 %v2894
          %v4679 = vunpack.c.l.b16 %v2895
          %v4680 = vunpack.c.h.b16 %v2895
          %v4681 = vunpack.c.l.b16 %v2896
          %v4682 = vunpack.c.h.b16 %v2896
          %v4683 = vunpack.c.l.b16 %v2897
          %v4684 = vunpack.c.h.b16 %v2897
          %v4685 = vunpack.c.l.b16 %v2898
          %v4686 = vunpack.c.h.b16 %v2898
          %v4687 = vunpack.c.l.b16 %v2899
          %v4688 = vunpack.c.h.b16 %v2899
          %v4689 = vunpack.c.l.b16 %v2900
          %v4690 = vunpack.c.h.b16 %v2900
          %v4691 = vunpack.c.l.b16 %v2901
          %v4692 = vunpack.c.h.b16 %v2901
          %v4693 = vunpack.c.l.b16 %v2902
          %v4694 = vunpack.c.h.b16 %v2902
          %v4695 = vpack.c.b16 %v3555, %v3543
          %v4696 = vpack.c.b16 %v3556, %v3544
          %v4697 = vpack.c.b16 %v3557, %v3545
          %v4698 = vpack.c.b16 %v3558, %v3546
          %v4699 = vpack.c.b16 %v3559, %v3547
          %v4700 = vpack.c.b16 %v3560, %v3548
          %v4701 = vpack.c.b16 %v3561, %v3549
          %v4702 = vpack.c.b16 %v3562, %v3550
          %v4703 = vpack.c.b16 %v3563, %v3551
          %v4704 = vpack.c.b16 %v3564, %v3552
          %v4705 = vpack.c.b16 %v3565, %v3553
          %v4706 = vpack.c.b16 %v3566, %v3554
          %v4707 = vpack.c.b16 %v3579, %v3567
          %v4708 = vpack.c.b16 %v3580, %v3568
          %v4709 = vpack.c.b16 %v3581, %v3569
          %v4710 = vpack.c.b16 %v3582, %v3570
          %v4711 = vpack.c.b16 %v3583, %v3571
          %v4712 = vpack.c.b16 %v3584, %v3572
          %v4713 = vpack.c.b16 %v3585, %v3573
          %v4714 = vpack.c.b16 %v3586, %v3574
          %v4715 = vpack.c.b16 %v3587, %v3575
          %v4716 = vpack.c.b16 %v3588, %v3576
          %v4717 = vpack.c.b16 %v3589, %v3577
          %v4718 = vpack.c.b16 %v3590, %v3578
          %v4719 = vpack.c.b16 %v3603, %v3591
          %v4720 = vpack.c.b16 %v3604, %v3592
          %v4721 = vpack.c.b16 %v3605, %v3593
          %v4722 = vpack.c.b16 %v3606, %v3594
          %v4723 = vpack.c.b16 %v3607, %v3595
          %v4724 = vpack.c.b16 %v3608, %v3596
          %v4725 = vpack.c.b16 %v3609, %v3597
          %v4726 = vpack.c.b16 %v3610, %v3598
          %v4727 = vpack.c.b16 %v3611, %v3599
          %v4728 = vpack.c.b16 %v3612, %v3600
          %v4729 = vpack.c.b16 %v3613, %v3601
          %v4730 = vpack.c.b16 %v3614, %v3602
          %v4731 = vpack.c.b16 %v3627, %v3615
          %v4732 = vpack.c.b16 %v3628, %v3616
          %v4733 = vpack.c.b16 %v3629, %v3617
          %v4734 = vpack.c.b16 %v3630, %v3618
          %v4735 = vpack.c.b16 %v3631, %v3619
          %v4736 = vpack.c.b16 %v3632, %v3620
          %v4737 = vpack.c.b16 %v3633, %v3621
          %v4738 = vpack.c.b16 %v3634, %v3622
          %v4739 = vpack.c.b16 %v3635, %v3623
          %v4740 = vpack.c.b16 %v3636, %v3624
          %v4741 = vpack.c.b16 %v3637, %v3625
          %v4742 = vpack.c.b16 %v3638, %v3626
          %v4743 = vpack.c.b16 %v3651, %v3639
          %v4744 = vpack.c.b16 %v3652, %v3640
          %v4745 = vpack.c.b16 %v3653, %v3641
          %v4746 = vpack.c.b16 %v3654, %v3642
          %v4747 = vpack.c.b16 %v3655, %v3643
          %v4748 = vpack.c.b16 %v3656, %v3644
          %v4749 = vpack.c.b16 %v3657, %v3645
          %v4750 = vpack.c.b16 %v3658, %v3646
          %v4751 = vpack.c.b16 %v3659, %v3647
          %v4752 = vpack.c.b16 %v3660, %v3648
          %v4753 = vpack.c.b16 %v3661, %v3649
          %v4754 = vpack.c.b16 %v3662, %v3650
          %v4755 = vpack.c.b16 %v3675, %v3663
          %v4756 = vpack.c.b16 %v3676, %v3664
          %v4757 = vpack.c.b16 %v3677, %v3665
          %v4758 = vpack.c.b16 %v3678, %v3666
          %v4759 = vpack.c.b16 %v3679, %v3667
          %v4760 = vpack.c.b16 %v3680, %v3668
          %v4761 = vpack.c.b16 %v3681, %v3669
          %v4762 = vpack.c.b16 %v3682, %v3670
          %v4763 = vpack.c.b16 %v3683, %v3671
          %v4764 = vpack.c.b16 %v3684, %v3672
          %v4765 = vpack.c.b16 %v3685, %v3673
          %v4766 = vpack.c.b16 %v3686, %v3674
          %v4767 = vpack.c.b16 %v3699, %v3687
          %v4768 = vpack.c.b16 %v3700, %v3688
          %v4769 = vpack.c.b16 %v3701, %v3689
          %v4770 = vpack.c.b16 %v3702, %v3690
          %v4771 = vpack.c.b16 %v3703, %v3691
          %v4772 = vpack.c.b16 %v3704, %v3692
          %v4773 = vpack.c.b16 %v3705, %v3693
          %v4774 = vpack.c.b16 %v3706, %v3694
          %v4775 = vpack.c.b16 %v3707, %v3695
          %v4776 = vpack.c.b16 %v3708, %v3696
          %v4777 = vpack.c.b16 %v3709, %v3697
          %v4778 = vpack.c.b16 %v3710, %v3698
          %v4779 = vpack.c.b16 %v3723, %v3711
          %v4780 = vpack.c.b16 %v3724, %v3712
          %v4781 = vpack.c.b16 %v3725, %v3713
          %v4782 = vpack.c.b16 %v3726, %v3714
          %v4783 = vpack.c.b16 %v3727, %v3715
          %v4784 = vpack.c.b16 %v3728, %v3716
          %v4785 = vpack.c.b16 %v3729, %v3717
          %v4786 = vpack.c.b16 %v3730, %v3718
          %v4787 = vpack.c.b16 %v3731, %v3719
          %v4788 = vpack.c.b16 %v3732, %v3720
          %v4789 = vpack.c.b16 %v3733, %v3721
          %v4790 = vpack.c.b16 %v3734, %v3722
          %v4791 = vpack.c.b16 %v3747, %v3735
          %v4792 = vpack.c.b16 %v3748, %v3736
          %v4793 = vpack.c.b16 %v3749, %v3737
          %v4794 = vpack.c.b16 %v3750, %v3738
          %v4795 = vpack.c.b16 %v3751, %v3739
          %v4796 = vpack.c.b16 %v3752, %v3740
          %v4797 = vpack.c.b16 %v3753, %v3741
          %v4798 = vpack.c.b16 %v3754, %v3742
          %v4799 = vpack.c.b16 %v3755, %v3743
          %v4800 = vpack.c.b16 %v3756, %v3744
          %v4801 = vpack.c.b16 %v3757, %v3745
          %v4802 = vpack.c.b16 %v3758, %v3746
          %v4803 = vpack.c.b16 %v3771, %v3759
          %v4804 = vpack.c.b16 %v3772, %v3760
          %v4805 = vpack.c.b16 %v3773, %v3761
          %v4806 = vpack.c.b16 %v3774, %v3762
          %v4807 = vpack.c.b16 %v3775, %v3763
          %v4808 = vpack.c.b16 %v3776, %v3764
          %v4809 = vpack.c.b16 %v3777, %v3765
          %v4810 = vpack.c.b16 %v3778, %v3766
          %v4811 = vpack.c.b16 %v3779, %v3767
          %v4812 = vpack.c.b16 %v3780, %v3768
          %v4813 = vpack.c.b16 %v3781, %v3769
          %v4814 = vpack.c.b16 %v3782, %v3770
          %v4815 = vpack.c.b16 %v3795, %v3783
          %v4816 = vpack.c.b16 %v3796, %v3784
          %v4817 = vpack.c.b16 %v3797, %v3785
          %v4818 = vpack.c.b16 %v3798, %v3786
          %v4819 = vpack.c.b16 %v3799, %v3787
          %v4820 = vpack.c.b16 %v3800, %v3788
          %v4821 = vpack.c.b16 %v3801, %v3789
          %v4822 = vpack.c.b16 %v3802, %v3790
          %v4823 = vpack.c.b16 %v3803, %v3791
          %v4824 = vpack.c.b16 %v3804, %v3792
          %v4825 = vpack.c.b16 %v3805, %v3793
          %v4826 = vpack.c.b16 %v3806, %v3794
          %v4827 = vpack.c.b16 %v3819, %v3807
          %v4828 = vpack.c.b16 %v3820, %v3808
          %v4829 = vpack.c.b16 %v3821, %v3809
          %v4830 = vpack.c.b16 %v3822, %v3810
          %v4831 = vpack.c.b16 %v3823, %v3811
          %v4832 = vpack.c.b16 %v3824, %v3812
          %v4833 = vpack.c.b16 %v3825, %v3813
          %v4834 = vpack.c.b16 %v3826, %v3814
          %v4835 = vpack.c.b16 %v3827, %v3815
          %v4836 = vpack.c.b16 %v3828, %v3816
          %v4837 = vpack.c.b16 %v3829, %v3817
          %v4838 = vpack.c.b16 %v3830, %v3818
          %v4839 = vpack.c.b16 %v3843, %v3831
          %v4840 = vpack.c.b16 %v3844, %v3832
          %v4841 = vpack.c.b16 %v3845, %v3833
          %v4842 = vpack.c.b16 %v3846, %v3834
          %v4843 = vpack.c.b16 %v3847, %v3835
          %v4844 = vpack.c.b16 %v3848, %v3836
          %v4845 = vpack.c.b16 %v3849, %v3837
          %v4846 = vpack.c.b16 %v3850, %v3838
          %v4847 = vpack.c.b16 %v3851, %v3839
          %v4848 = vpack.c.b16 %v3852, %v3840
          %v4849 = vpack.c.b16 %v3853, %v3841
          %v4850 = vpack.c.b16 %v3854, %v3842
          %v4851 = vpack.c.b16 %v3867, %v3855
          %v4852 = vpack.c.b16 %v3868, %v3856
          %v4853 = vpack.c.b16 %v3869, %v3857
          %v4854 = vpack.c.b16 %v3870, %v3858
          %v4855 = vpack.c.b16 %v3871, %v3859
          %v4856 = vpack.c.b16 %v3872, %v3860
          %v4857 = vpack.c.b16 %v3873, %v3861
          %v4858 = vpack.c.b16 %v3874, %v3862
          %v4859 = vpack.c.b16 %v3875, %v3863
          %v4860 = vpack.c.b16 %v3876, %v3864
          %v4861 = vpack.c.b16 %v3877, %v3865
          %v4862 = vpack.c.b16 %v3878, %v3866
          %v4863 = vpack.c.b16 %v3891, %v3879
          %v4864 = vpack.c.b16 %v3892, %v3880
          %v4865 = vpack.c.b16 %v3893, %v3881
          %v4866 = vpack.c.b16 %v3894, %v3882
          %v4867 = vpack.c.b16 %v3895, %v3883
          %v4868 = vpack.c.b16 %v3896, %v3884
          %v4869 = vpack.c.b16 %v3897, %v3885
          %v4870 = vpack.c.b16 %v3898, %v3886
          %v4871 = vpack.c.b16 %v3899, %v3887
          %v4872 = vpack.c.b16 %v3900, %v3888
          %v4873 = vpack.c.b16 %v3901, %v3889
          %v4874 = vpack.c.b16 %v3902, %v3890
          %v4875 = vpack.c.b16 %v3915, %v3903
          %v4876 = vpack.c.b16 %v3916, %v3904
          %v4877 = vpack.c.b16 %v3917, %v3905
          %v4878 = vpack.c.b16 %v3918, %v3906
          %v4879 = vpack.c.b16 %v3919, %v3907
          %v4880 = vpack.c.b16 %v3920, %v3908
          %v4881 = vpack.c.b16 %v3921, %v3909
          %v4882 = vpack.c.b16 %v3922, %v3910
          %v4883 = vpack.c.b16 %v3923, %v3911
          %v4884 = vpack.c.b16 %v3924, %v3912
          %v4885 = vpack.c.b16 %v3925, %v3913
          %v4886 = vpack.c.b16 %v3926, %v3914
          %v4887 = vpack.c.b16 %v3939, %v3927
          %v4888 = vpack.c.b16 %v3940, %v3928
          %v4889 = vpack.c.b16 %v3941, %v3929
          %v4890 = vpack.c.b16 %v3942, %v3930
          %v4891 = vpack.c.b16 %v3943, %v3931
          %v4892 = vpack.c.b16 %v3944, %v3932
          %v4893 = vpack.c.b16 %v3945, %v3933
          %v4894 = vpack.c.b16 %v3946, %v3934
          %v4895 = vpack.c.b16 %v3947, %v3935
          %v4896 = vpack.c.b16 %v3948, %v3936
          %v4897 = vpack.c.b16 %v3949, %v3937
          %v4898 = vpack.c.b16 %v3950, %v3938
          %v4899 = vpack.c.b16 %v3963, %v3951
          %v4900 = vpack.c.b16 %v3964, %v3952
          %v4901 = vpack.c.b16 %v3965, %v3953
          %v4902 = vpack.c.b16 %v3966, %v3954
          %v4903 = vpack.c.b16 %v3967, %v3955
          %v4904 = vpack.c.b16 %v3968, %v3956
          %v4905 = vpack.c.b16 %v3969, %v3957
          %v4906 = vpack.c.b16 %v3970, %v3958
          %v4907 = vpack.c.b16 %v3971, %v3959
          %v4908 = vpack.c.b16 %v3972, %v3960
          %v4909 = vpack.c.b16 %v3973, %v3961
          %v4910 = vpack.c.b16 %v3974, %v3962
          %v4911 = vpack.c.b16 %v3987, %v3975
          %v4912 = vpack.c.b16 %v3988, %v3976
          %v4913 = vpack.c.b16 %v3989, %v3977
          %v4914 = vpack.c.b16 %v3990, %v3978
          %v4915 = vpack.c.b16 %v3991, %v3979
          %v4916 = vpack.c.b16 %v3992, %v3980
          %v4917 = vpack.c.b16 %v3993, %v3981
          %v4918 = vpack.c.b16 %v3994, %v3982
          %v4919 = vpack.c.b16 %v3995, %v3983
          %v4920 = vpack.c.b16 %v3996, %v3984
          %v4921 = vpack.c.b16 %v3997, %v3985
          %v4922 = vpack.c.b16 %v3998, %v3986
          %v4923 = vpack.c.b16 %v4011, %v3999
          %v4924 = vpack.c.b16 %v4012, %v4000
          %v4925 = vpack.c.b16 %v4013, %v4001
          %v4926 = vpack.c.b16 %v4014, %v4002
          %v4927 = vpack.c.b16 %v4015, %v4003
          %v4928 = vpack.c.b16 %v4016, %v4004
          %v4929 = vpack.c.b16 %v4017, %v4005
          %v4930 = vpack.c.b16 %v4018, %v4006
          %v4931 = vpack.c.b16 %v4019, %v4007
          %v4932 = vpack.c.b16 %v4020, %v4008
          %v4933 = vpack.c.b16 %v4021, %v4009
          %v4934 = vpack.c.b16 %v4022, %v4010
          %v4935 = vpack.c.b16 %v4035, %v4023
          %v4936 = vpack.c.b16 %v4036, %v4024
          %v4937 = vpack.c.b16 %v4037, %v4025
          %v4938 = vpack.c.b16 %v4038, %v4026
          %v4939 = vpack.c.b16 %v4039, %v4027
          %v4940 = vpack.c.b16 %v4040, %v4028
          %v4941 = vpack.c.b16 %v4041, %v4029
          %v4942 = vpack.c.b16 %v4042, %v4030
          %v4943 = vpack.c.b16 %v4043, %v4031
          %v4944 = vpack.c.b16 %v4044, %v4032
          %v4945 = vpack.c.b16 %v4045, %v4033
          %v4946 = vpack.c.b16 %v4046, %v4034
          %v4947 = vpack.c.b16 %v4059, %v4047
          %v4948 = vpack.c.b16 %v4060, %v4048
          %v4949 = vpack.c.b16 %v4061, %v4049
          %v4950 = vpack.c.b16 %v4062, %v4050
          %v4951 = vpack.c.b16 %v4063, %v4051
          %v4952 = vpack.c.b16 %v4064, %v4052
          %v4953 = vpack.c.b16 %v4065, %v4053
          %v4954 = vpack.c.b16 %v4066, %v4054
          %v4955 = vpack.c.b16 %v4067, %v4055
          %v4956 = vpack.c.b16 %v4068, %v4056
          %v4957 = vpack.c.b16 %v4069, %v4057
          %v4958 = vpack.c.b16 %v4070, %v4058
          %v4959 = vpack.c.b16 %v4083, %v4071
          %v4960 = vpack.c.b16 %v4084, %v4072
          %v4961 = vpack.c.b16 %v4085, %v4073
          %v4962 = vpack.c.b16 %v4086, %v4074
          %v4963 = vpack.c.b16 %v4087, %v4075
          %v4964 = vpack.c.b16 %v4088, %v4076
          %v4965 = vpack.c.b16 %v4089, %v4077
          %v4966 = vpack.c.b16 %v4090, %v4078
          %v4967 = vpack.c.b16 %v4091, %v4079
          %v4968 = vpack.c.b16 %v4092, %v4080
          %v4969 = vpack.c.b16 %v4093, %v4081
          %v4970 = vpack.c.b16 %v4094, %v4082
          %v4971 = vpack.c.b16 %v4107, %v4095
          %v4972 = vpack.c.b16 %v4108, %v4096
          %v4973 = vpack.c.b16 %v4109, %v4097
          %v4974 = vpack.c.b16 %v4110, %v4098
          %v4975 = vpack.c.b16 %v4111, %v4099
          %v4976 = vpack.c.b16 %v4112, %v4100
          %v4977 = vpack.c.b16 %v4113, %v4101
          %v4978 = vpack.c.b16 %v4114, %v4102
          %v4979 = vpack.c.b16 %v4115, %v4103
          %v4980 = vpack.c.b16 %v4116, %v4104
          %v4981 = vpack.c.b16 %v4117, %v4105
          %v4982 = vpack.c.b16 %v4118, %v4106
          %v4983 = vpack.c.b16 %v4131, %v4119
          %v4984 = vpack.c.b16 %v4132, %v4120
          %v4985 = vpack.c.b16 %v4133, %v4121
          %v4986 = vpack.c.b16 %v4134, %v4122
          %v4987 = vpack.c.b16 %v4135, %v4123
          %v4988 = vpack.c.b16 %v4136, %v4124
          %v4989 = vpack.c.b16 %v4137, %v4125
          %v4990 = vpack.c.b16 %v4138, %v4126
          %v4991 = vpack.c.b16 %v4139, %v4127
          %v4992 = vpack.c.b16 %v4140, %v4128
          %v4993 = vpack.c.b16 %v4141, %v4129
          %v4994 = vpack.c.b16 %v4142, %v4130
          %v4995 = vpack.c.b16 %v4155, %v4143
          %v4996 = vpack.c.b16 %v4156, %v4144
          %v4997 = vpack.c.b16 %v4157, %v4145
          %v4998 = vpack.c.b16 %v4158, %v4146
          %v4999 = vpack.c.b16 %v4159, %v4147
          %v5000 = vpack.c.b16 %v4160, %v4148
          %v5001 = vpack.c.b16 %v4161, %v4149
          %v5002 = vpack.c.b16 %v4162, %v4150
          %v5003 = vpack.c.b16 %v4163, %v4151
          %v5004 = vpack.c.b16 %v4164, %v4152
          %v5005 = vpack.c.b16 %v4165, %v4153
          %v5006 = vpack.c.b16 %v4166, %v4154
          %v5007 = vpack.c.b16 %v4179, %v4167
          %v5008 = vpack.c.b16 %v4180, %v4168
          %v5009 = vpack.c.b16 %v4181, %v4169
          %v5010 = vpack.c.b16 %v4182, %v4170
          %v5011 = vpack.c.b16 %v4183, %v4171
          %v5012 = vpack.c.b16 %v4184, %v4172
          %v5013 = vpack.c.b16 %v4185, %v4173
          %v5014 = vpack.c.b16 %v4186, %v4174
          %v5015 = vpack.c.b16 %v4187, %v4175
          %v5016 = vpack.c.b16 %v4188, %v4176
          %v5017 = vpack.c.b16 %v4189, %v4177
          %v5018 = vpack.c.b16 %v4190, %v4178
          %v5019 = vpack.c.b16 %v4203, %v4191
          %v5020 = vpack.c.b16 %v4204, %v4192
          %v5021 = vpack.c.b16 %v4205, %v4193
          %v5022 = vpack.c.b16 %v4206, %v4194
          %v5023 = vpack.c.b16 %v4207, %v4195
          %v5024 = vpack.c.b16 %v4208, %v4196
          %v5025 = vpack.c.b16 %v4209, %v4197
          %v5026 = vpack.c.b16 %v4210, %v4198
          %v5027 = vpack.c.b16 %v4211, %v4199
          %v5028 = vpack.c.b16 %v4212, %v4200
          %v5029 = vpack.c.b16 %v4213, %v4201
          %v5030 = vpack.c.b16 %v4214, %v4202
          %v5031 = vpack.c.b16 %v4227, %v4215
          %v5032 = vpack.c.b16 %v4228, %v4216
          %v5033 = vpack.c.b16 %v4229, %v4217
          %v5034 = vpack.c.b16 %v4230, %v4218
          %v5035 = vpack.c.b16 %v4231, %v4219
          %v5036 = vpack.c.b16 %v4232, %v4220
          %v5037 = vpack.c.b16 %v4233, %v4221
          %v5038 = vpack.c.b16 %v4234, %v4222
          %v5039 = vpack.c.b16 %v4235, %v4223
          %v5040 = vpack.c.b16 %v4236, %v4224
          %v5041 = vpack.c.b16 %v4237, %v4225
          %v5042 = vpack.c.b16 %v4238, %v4226
          %v5043 = vpack.c.b16 %v4251, %v4239
          %v5044 = vpack.c.b16 %v4252, %v4240
          %v5045 = vpack.c.b16 %v4253, %v4241
          %v5046 = vpack.c.b16 %v4254, %v4242
          %v5047 = vpack.c.b16 %v4255, %v4243
          %v5048 = vpack.c.b16 %v4256, %v4244
          %v5049 = vpack.c.b16 %v4257, %v4245
          %v5050 = vpack.c.b16 %v4258, %v4246
          %v5051 = vpack.c.b16 %v4259, %v4247
          %v5052 = vpack.c.b16 %v4260, %v4248
          %v5053 = vpack.c.b16 %v4261, %v4249
          %v5054 = vpack.c.b16 %v4262, %v4250
          %v5055 = vpack.c.b16 %v4275, %v4263
          %v5056 = vpack.c.b16 %v4276, %v4264
          %v5057 = vpack.c.b16 %v4277, %v4265
          %v5058 = vpack.c.b16 %v4278, %v4266
          %v5059 = vpack.c.b16 %v4279, %v4267
          %v5060 = vpack.c.b16 %v4280, %v4268
          %v5061 = vpack.c.b16 %v4281, %v4269
          %v5062 = vpack.c.b16 %v4282, %v4270
          %v5063 = vpack.c.b16 %v4283, %v4271
          %v5064 = vpack.c.b16 %v4284, %v4272
          %v5065 = vpack.c.b16 %v4285, %v4273
          %v5066 = vpack.c.b16 %v4286, %v4274
          %v5067 = vpack.c.b16 %v4299, %v4287
          %v5068 = vpack.c.b16 %v4300, %v4288
          %v5069 = vpack.c.b16 %v4301, %v4289
          %v5070 = vpack.c.b16 %v4302, %v4290
          %v5071 = vpack.c.b16 %v4303, %v4291
          %v5072 = vpack.c.b16 %v4304, %v4292
          %v5073 = vpack.c.b16 %v4305, %v4293
          %v5074 = vpack.c.b16 %v4306, %v4294
          %v5075 = vpack.c.b16 %v4307, %v4295
          %v5076 = vpack.c.b16 %v4308, %v4296
          %v5077 = vpack.c.b16 %v4309, %v4297
          %v5078 = vpack.c.b16 %v4310, %v4298
          %v5079 = vpack.c.b16 %v4323, %v4311
          %v5080 = vpack.c.b16 %v4324, %v4312
          %v5081 = vpack.c.b16 %v4325, %v4313
          %v5082 = vpack.c.b16 %v4326, %v4314
          %v5083 = vpack.c.b16 %v4327, %v4315
          %v5084 = vpack.c.b16 %v4328, %v4316
          %v5085 = vpack.c.b16 %v4329, %v4317
          %v5086 = vpack.c.b16 %v4330, %v4318
          %v5087 = vpack.c.b16 %v4331, %v4319
          %v5088 = vpack.c.b16 %v4332, %v4320
          %v5089 = vpack.c.b16 %v4333, %v4321
          %v5090 = vpack.c.b16 %v4334, %v4322
          %v5091 = vpack.c.b16 %v4347, %v4335
          %v5092 = vpack.c.b16 %v4348, %v4336
          %v5093 = vpack.c.b16 %v4349, %v4337
          %v5094 = vpack.c.b16 %v4350, %v4338
          %v5095 = vpack.c.b16 %v4351, %v4339
          %v5096 = vpack.c.b16 %v4352, %v4340
          %v5097 = vpack.c.b16 %v4353, %v4341
          %v5098 = vpack.c.b16 %v4354, %v4342
          %v5099 = vpack.c.b16 %v4355, %v4343
          %v5100 = vpack.c.b16 %v4356, %v4344
          %v5101 = vpack.c.b16 %v4357, %v4345
          %v5102 = vpack.c.b16 %v4358, %v4346
          %v5103 = vpack.c.b16 %v4371, %v4359
          %v5104 = vpack.c.b16 %v4372, %v4360
          %v5105 = vpack.c.b16 %v4373, %v4361
          %v5106 = vpack.c.b16 %v4374, %v4362
          %v5107 = vpack.c.b16 %v4375, %v4363
          %v5108 = vpack.c.b16 %v4376, %v4364
          %v5109 = vpack.c.b16 %v4377, %v4365
          %v5110 = vpack.c.b16 %v4378, %v4366
          %v5111 = vpack.c.b16 %v4379, %v4367
          %v5112 = vpack.c.b16 %v4380, %v4368
          %v5113 = vpack.c.b16 %v4381, %v4369
          %v5114 = vpack.c.b16 %v4382, %v4370
          %v5115 = vpack.c.b16 %v4395, %v4383
          %v5116 = vpack.c.b16 %v4396, %v4384
          %v5117 = vpack.c.b16 %v4397, %v4385
          %v5118 = vpack.c.b16 %v4398, %v4386
          %v5119 = vpack.c.b16 %v4399, %v4387
          %v5120 = vpack.c.b16 %v4400, %v4388
          %v5121 = vpack.c.b16 %v4401, %v4389
          %v5122 = vpack.c.b16 %v4402, %v4390
          %v5123 = vpack.c.b16 %v4403, %v4391
          %v5124 = vpack.c.b16 %v4404, %v4392
          %v5125 = vpack.c.b16 %v4405, %v4393
          %v5126 = vpack.c.b16 %v4406, %v4394
          %v5127 = vpack.c.b16 %v4419, %v4407
          %v5128 = vpack.c.b16 %v4420, %v4408
          %v5129 = vpack.c.b16 %v4421, %v4409
          %v5130 = vpack.c.b16 %v4422, %v4410
          %v5131 = vpack.c.b16 %v4423, %v4411
          %v5132 = vpack.c.b16 %v4424, %v4412
          %v5133 = vpack.c.b16 %v4425, %v4413
          %v5134 = vpack.c.b16 %v4426, %v4414
          %v5135 = vpack.c.b16 %v4427, %v4415
          %v5136 = vpack.c.b16 %v4428, %v4416
          %v5137 = vpack.c.b16 %v4429, %v4417
          %v5138 = vpack.c.b16 %v4430, %v4418
          %v5139 = vpack.c.b16 %v4443, %v4431
          %v5140 = vpack.c.b16 %v4444, %v4432
          %v5141 = vpack.c.b16 %v4445, %v4433
          %v5142 = vpack.c.b16 %v4446, %v4434
          %v5143 = vpack.c.b16 %v4447, %v4435
          %v5144 = vpack.c.b16 %v4448, %v4436
          %v5145 = vpack.c.b16 %v4449, %v4437
          %v5146 = vpack.c.b16 %v4450, %v4438
          %v5147 = vpack.c.b16 %v4451, %v4439
          %v5148 = vpack.c.b16 %v4452, %v4440
          %v5149 = vpack.c.b16 %v4453, %v4441
          %v5150 = vpack.c.b16 %v4454, %v4442
          %v5151 = vpack.c.b16 %v4467, %v4455
          %v5152 = vpack.c.b16 %v4468, %v4456
          %v5153 = vpack.c.b16 %v4469, %v4457
          %v5154 = vpack.c.b16 %v4470, %v4458
          %v5155 = vpack.c.b16 %v4471, %v4459
          %v5156 = vpack.c.b16 %v4472, %v4460
          %v5157 = vpack.c.b16 %v4473, %v4461
          %v5158 = vpack.c.b16 %v4474, %v4462
          %v5159 = vpack.c.b16 %v4475, %v4463
          %v5160 = vpack.c.b16 %v4476, %v4464
          %v5161 = vpack.c.b16 %v4477, %v4465
          %v5162 = vpack.c.b16 %v4478, %v4466
          %v5163 = vpack.c.b16 %v4491, %v4479
          %v5164 = vpack.c.b16 %v4492, %v4480
          %v5165 = vpack.c.b16 %v4493, %v4481
          %v5166 = vpack.c.b16 %v4494, %v4482
          %v5167 = vpack.c.b16 %v4495, %v4483
          %v5168 = vpack.c.b16 %v4496, %v4484
          %v5169 = vpack.c.b16 %v4497, %v4485
          %v5170 = vpack.c.b16 %v4498, %v4486
          %v5171 = vpack.c.b16 %v4499, %v4487
          %v5172 = vpack.c.b16 %v4500, %v4488
          %v5173 = vpack.c.b16 %v4501, %v4489
          %v5174 = vpack.c.b16 %v4502, %v4490
          %v5175 = vpack.c.b16 %v4515, %v4503
          %v5176 = vpack.c.b16 %v4516, %v4504
          %v5177 = vpack.c.b16 %v4517, %v4505
          %v5178 = vpack.c.b16 %v4518, %v4506
          %v5179 = vpack.c.b16 %v4519, %v4507
          %v5180 = vpack.c.b16 %v4520, %v4508
          %v5181 = vpack.c.b16 %v4521, %v4509
          %v5182 = vpack.c.b16 %v4522, %v4510
          %v5183 = vpack.c.b16 %v4523, %v4511
          %v5184 = vpack.c.b16 %v4524, %v4512
          %v5185 = vpack.c.b16 %v4525, %v4513
          %v5186 = vpack.c.b16 %v4526, %v4514
          %v5187 = vpack.c.b16 %v4539, %v4527
          %v5188 = vpack.c.b16 %v4540, %v4528
          %v5189 = vpack.c.b16 %v4541, %v4529
          %v5190 = vpack.c.b16 %v4542, %v4530
          %v5191 = vpack.c.b16 %v4543, %v4531
          %v5192 = vpack.c.b16 %v4544, %v4532
          %v5193 = vpack.c.b16 %v4545, %v4533
          %v5194 = vpack.c.b16 %v4546, %v4534
          %v5195 = vpack.c.b16 %v4547, %v4535
          %v5196 = vpack.c.b16 %v4548, %v4536
          %v5197 = vpack.c.b16 %v4549, %v4537
          %v5198 = vpack.c.b16 %v4550, %v4538
          %v5199 = vpack.c.b16 %v4563, %v4551
          %v5200 = vpack.c.b16 %v4564, %v4552
          %v5201 = vpack.c.b16 %v4565, %v4553
          %v5202 = vpack.c.b16 %v4566, %v4554
          %v5203 = vpack.c.b16 %v4567, %v4555
          %v5204 = vpack.c.b16 %v4568, %v4556
          %v5205 = vpack.c.b16 %v4569, %v4557
          %v5206 = vpack.c.b16 %v4570, %v4558
          %v5207 = vpack.c.b16 %v4571, %v4559
          %v5208 = vpack.c.b16 %v4572, %v4560
          %v5209 = vpack.c.b16 %v4573, %v4561
          %v5210 = vpack.c.b16 %v4574, %v4562
          %v5211 = vpack.c.b16 %v4587, %v4575
          %v5212 = vpack.c.b16 %v4588, %v4576
          %v5213 = vpack.c.b16 %v4589, %v4577
          %v5214 = vpack.c.b16 %v4590, %v4578
          %v5215 = vpack.c.b16 %v4591, %v4579
          %v5216 = vpack.c.b16 %v4592, %v4580
          %v5217 = vpack.c.b16 %v4593, %v4581
          %v5218 = vpack.c.b16 %v4594, %v4582
          %v5219 = vpack.c.b16 %v4595, %v4583
          %v5220 = vpack.c.b16 %v4596, %v4584
          %v5221 = vpack.c.b16 %v4597, %v4585
          %v5222 = vpack.c.b16 %v4598, %v4586
          %v5223 = vpack.c.b16 %v4611, %v4599
          %v5224 = vpack.c.b16 %v4612, %v4600
          %v5225 = vpack.c.b16 %v4613, %v4601
          %v5226 = vpack.c.b16 %v4614, %v4602
          %v5227 = vpack.c.b16 %v4615, %v4603
          %v5228 = vpack.c.b16 %v4616, %v4604
          %v5229 = vpack.c.b16 %v4617, %v4605
          %v5230 = vpack.c.b16 %v4618, %v4606
          %v5231 = vpack.c.b16 %v4619, %v4607
          %v5232 = vpack.c.b16 %v4620, %v4608
          %v5233 = vpack.c.b16 %v4621, %v4609
          %v5234 = vpack.c.b16 %v4622, %v4610
          %v5235 = vpack.c.b16 %v4635, %v4623
          %v5236 = vpack.c.b16 %v4636, %v4624
          %v5237 = vpack.c.b16 %v4637, %v4625
          %v5238 = vpack.c.b16 %v4638, %v4626
          %v5239 = vpack.c.b16 %v4639, %v4627
          %v5240 = vpack.c.b16 %v4640, %v4628
          %v5241 = vpack.c.b16 %v4641, %v4629
          %v5242 = vpack.c.b16 %v4642, %v4630
          %v5243 = vpack.c.b16 %v4643, %v4631
          %v5244 = vpack.c.b16 %v4644, %v4632
          %v5245 = vpack.c.b16 %v4645, %v4633
          %v5246 = vpack.c.b16 %v4646, %v4634
          %v5247 = vpack.c.b16 %v4659, %v4647
          %v5248 = vpack.c.b16 %v4660, %v4648
          %v5249 = vpack.c.b16 %v4661, %v4649
          %v5250 = vpack.c.b16 %v4662, %v4650
          %v5251 = vpack.c.b16 %v4663, %v4651
          %v5252 = vpack.c.b16 %v4664, %v4652
          %v5253 = vpack.c.b16 %v4665, %v4653
          %v5254 = vpack.c.b16 %v4666, %v4654
          %v5255 = vpack.c.b16 %v4667, %v4655
          %v5256 = vpack.c.b16 %v4668, %v4656
          %v5257 = vpack.c.b16 %v4669, %v4657
          %v5258 = vpack.c.b16 %v4670, %v4658
          %v5259 = vpack.c.b16 %v4683, %v4671
          %v5260 = vpack.c.b16 %v4684, %v4672
          %v5261 = vpack.c.b16 %v4685, %v4673
          %v5262 = vpack.c.b16 %v4686, %v4674
          %v5263 = vpack.c.b16 %v4687, %v4675
          %v5264 = vpack.c.b16 %v4688, %v4676
          %v5265 = vpack.c.b16 %v4689, %v4677
          %v5266 = vpack.c.b16 %v4690, %v4678
          %v5267 = vpack.c.b16 %v4691, %v4679
          %v5268 = vpack.c.b16 %v4692, %v4680
          %v5269 = vpack.c.b16 %v4693, %v4681
          %v5270 = vpack.c.b16 %v4694, %v4682
          %5847 = vmatprep.subr.bf16.mxu0 %v4696
          %5848 = vmatpush1.bf16.msra.mxu0 %v4695
          %5849 = vmatprep.subr.bf16.mxu0 %v4708
          %5850 = vmatpush1.bf16.msra.mxu0 %v4707
          %5851 = vmatprep.subr.bf16.mxu0 %v4720
          %5852 = vmatpush1.bf16.msra.mxu0 %v4719
          %5853 = vmatprep.subr.bf16.mxu0 %v4732
          %5854 = vmatpush1.bf16.msra.mxu0 %v4731
          %5855 = vmatprep.subr.bf16.mxu0 %v4744
          %5856 = vmatpush1.bf16.msra.mxu0 %v4743
          %5857 = vmatprep.subr.bf16.mxu0 %v4756
          %5858 = vmatpush1.bf16.msra.mxu0 %v4755
          %5859 = vmatprep.subr.bf16.mxu0 %v4768
          %5860 = vmatpush1.bf16.msra.mxu0 %v4767
          %5861 = vmatprep.subr.bf16.mxu0 %v4780
          %5862 = vmatpush1.bf16.msra.mxu0 %v4779
          %5863 = vmatprep.subr.bf16.mxu0 %v4792
          %5864 = vmatpush1.bf16.msra.mxu0 %v4791
          %5865 = vmatprep.subr.bf16.mxu0 %v4804
          %5866 = vmatpush1.bf16.msra.mxu0 %v4803
          %5867 = vmatprep.subr.bf16.mxu0 %v4816
          %5868 = vmatpush1.bf16.msra.mxu0 %v4815
          %5869 = vmatprep.subr.bf16.mxu0 %v4828
          %5870 = vmatpush1.bf16.msra.mxu0 %v4827
          %5871 = vmatprep.subr.bf16.mxu0 %v4840
          %5872 = vmatpush1.bf16.msra.mxu0 %v4839
          %5873 = vmatprep.subr.bf16.mxu0 %v4852
          %5874 = vmatpush1.bf16.msra.mxu0 %v4851
          %5875 = vmatprep.subr.bf16.mxu0 %v4864
          %5876 = vmatpush1.bf16.msra.mxu0 %v4863
          %5877 = vmatprep.subr.bf16.mxu0 %v4876
          %5878 = vmatpush1.bf16.msra.mxu0 %v4875
          %5879 = vmatprep.mubr.bf16.mxu0 %v2322
          %5880 = vmatmul.mubr.bf16.gmra.mrb[0].mxu0 %v2321
          %v5881 = vpop.f32.mrb[0].mxu0
          %v5882 = vadd.f32 %v2910, %v5881
          %v5883 = vpop.f32.mrb[0].mxu0
          %v5884 = vadd.f32 %v2914, %v5883
          %v5885 = vpop.f32.mrb[0].mxu0
          %v5886 = vpop.f32.mrb[0].mxu0
          %5887 = vdwg.mxu0
          %5888 = vmatprep.subr.bf16.mxu0 %v4888
          %5889 = vmatpush1.bf16.msra.mxu0 %v4887
          %5890 = vmatprep.subr.bf16.mxu0 %v4900
          %5891 = vmatpush1.bf16.msra.mxu0 %v4899
          %5892 = vmatprep.subr.bf16.mxu0 %v4912
          %5893 = vmatpush1.bf16.msra.mxu0 %v4911
          %5894 = vmatprep.subr.bf16.mxu0 %v4924
          %5895 = vmatpush1.bf16.msra.mxu0 %v4923
          %5896 = vmatprep.subr.bf16.mxu0 %v4936
          %5897 = vmatpush1.bf16.msra.mxu0 %v4935
          %5898 = vmatprep.subr.bf16.mxu0 %v4948
          %5899 = vmatpush1.bf16.msra.mxu0 %v4947
          %5900 = vmatprep.subr.bf16.mxu0 %v4960
          %5901 = vmatpush1.bf16.msra.mxu0 %v4959
          %5902 = vmatprep.subr.bf16.mxu0 %v4972
          %5903 = vmatpush1.bf16.msra.mxu0 %v4971
          %5904 = vmatprep.subr.bf16.mxu0 %v4984
          %5905 = vmatpush1.bf16.msra.mxu0 %v4983
          %5906 = vmatprep.subr.bf16.mxu0 %v4996
          %5907 = vmatpush1.bf16.msra.mxu0 %v4995
          %5908 = vmatprep.subr.bf16.mxu0 %v5008
          %5909 = vmatpush1.bf16.msra.mxu0 %v5007
          %5910 = vmatprep.subr.bf16.mxu0 %v5020
          %5911 = vmatpush1.bf16.msra.mxu0 %v5019
          %5912 = vmatprep.subr.bf16.mxu0 %v5032
          %5913 = vmatpush1.bf16.msra.mxu0 %v5031
          %5914 = vmatprep.subr.bf16.mxu0 %v5044
          %5915 = vmatpush1.bf16.msra.mxu0 %v5043
          %5916 = vmatprep.subr.bf16.mxu0 %v5056
          %5917 = vmatpush1.bf16.msra.mxu0 %v5055
          %5918 = vmatprep.subr.bf16.mxu0 %v5068
          %5919 = vmatpush1.bf16.msra.mxu0 %v5067
          %5920 = vmatprep.mubr.bf16.mxu0 %v2324
          %5921 = vmatmul.mubr.bf16.gmra.mrb[0].mxu0 %v2323
          %v5922 = vpop.f32.mrb[0].mxu0
          %v5923 = vadd.f32 %v5882, %v5922
          %v5924 = vpop.f32.mrb[0].mxu0
          %v5925 = vadd.f32 %v5884, %v5924
          %v5926 = vpop.f32.mrb[0].mxu0
          %v5927 = vpop.f32.mrb[0].mxu0
          %5928 = vdwg.mxu0
          %5929 = vmatprep.subr.bf16.mxu0 %v5080
          %5930 = vmatpush1.bf16.msra.mxu0 %v5079
          %5931 = vmatprep.subr.bf16.mxu0 %v5092
          %5932 = vmatpush1.bf16.msra.mxu0 %v5091
          %5933 = vmatprep.subr.bf16.mxu0 %v5104
          %5934 = vmatpush1.bf16.msra.mxu0 %v5103
          %5935 = vmatprep.subr.bf16.mxu0 %v5116
          %5936 = vmatpush1.bf16.msra.mxu0 %v5115
          %5937 = vmatprep.subr.bf16.mxu0 %v5128
          %5938 = vmatpush1.bf16.msra.mxu0 %v5127
          %5939 = vmatprep.subr.bf16.mxu0 %v5140
          %5940 = vmatpush1.bf16.msra.mxu0 %v5139
          %5941 = vmatprep.subr.bf16.mxu0 %v5152
          %5942 = vmatpush1.bf16.msra.mxu0 %v5151
          %5943 = vmatprep.subr.bf16.mxu0 %v5164
          %5944 = vmatpush1.bf16.msra.mxu0 %v5163
          %5945 = vmatprep.subr.bf16.mxu0 %v5176
          %5946 = vmatpush1.bf16.msra.mxu0 %v5175
          %5947 = vmatprep.subr.bf16.mxu0 %v5188
          %5948 = vmatpush1.bf16.msra.mxu0 %v5187
          %5949 = vmatprep.subr.bf16.mxu0 %v5200
          %5950 = vmatpush1.bf16.msra.mxu0 %v5199
          %5951 = vmatprep.subr.bf16.mxu0 %v5212
          %5952 = vmatpush1.bf16.msra.mxu0 %v5211
          %5953 = vmatprep.subr.bf16.mxu0 %v5224
          %5954 = vmatpush1.bf16.msra.mxu0 %v5223
          %5955 = vmatprep.subr.bf16.mxu0 %v5236
          %5956 = vmatpush1.bf16.msra.mxu0 %v5235
          %5957 = vmatprep.subr.bf16.mxu0 %v5248
          %5958 = vmatpush1.bf16.msra.mxu0 %v5247
          %5959 = vmatprep.subr.bf16.mxu0 %v5260
          %5960 = vmatpush1.bf16.msra.mxu0 %v5259
          %5961 = vmatprep.mubr.bf16.mxu0 %v2326
          %5962 = vmatmul.mubr.bf16.gmra.mrb[0].mxu0 %v2325
          %v5963 = vpop.f32.mrb[0].mxu0
          %v5964 = vadd.f32 %v5923, %v5963
          %v5965 = vpop.f32.mrb[0].mxu0
          %v5966 = vadd.f32 %v5925, %v5965
          %v5967 = vpop.f32.mrb[0].mxu0
          %v5968 = vpop.f32.mrb[0].mxu0
          %5969 = vdwg.mxu0
          %5970 = vmatprep.subr.bf16.mxu0 %v4698
          %5971 = vmatpush1.bf16.msra.mxu0 %v4697
          %5972 = vmatprep.subr.bf16.mxu0 %v4710
          %5973 = vmatpush1.bf16.msra.mxu0 %v4709
          %5974 = vmatprep.subr.bf16.mxu0 %v4722
          %5975 = vmatpush1.bf16.msra.mxu0 %v4721
          %5976 = vmatprep.subr.bf16.mxu0 %v4734
          %5977 = vmatpush1.bf16.msra.mxu0 %v4733
          %5978 = vmatprep.subr.bf16.mxu0 %v4746
          %5979 = vmatpush1.bf16.msra.mxu0 %v4745
          %5980 = vmatprep.subr.bf16.mxu0 %v4758
          %5981 = vmatpush1.bf16.msra.mxu0 %v4757
          %5982 = vmatprep.subr.bf16.mxu0 %v4770
          %5983 = vmatpush1.bf16.msra.mxu0 %v4769
          %5984 = vmatprep.subr.bf16.mxu0 %v4782
          %5985 = vmatpush1.bf16.msra.mxu0 %v4781
          %5986 = vmatprep.subr.bf16.mxu0 %v4794
          %5987 = vmatpush1.bf16.msra.mxu0 %v4793
          %5988 = vmatprep.subr.bf16.mxu0 %v4806
          %5989 = vmatpush1.bf16.msra.mxu0 %v4805
          %5990 = vmatprep.subr.bf16.mxu0 %v4818
          %5991 = vmatpush1.bf16.msra.mxu0 %v4817
          %5992 = vmatprep.subr.bf16.mxu0 %v4830
          %5993 = vmatpush1.bf16.msra.mxu0 %v4829
          %5994 = vmatprep.subr.bf16.mxu0 %v4842
          %5995 = vmatpush1.bf16.msra.mxu0 %v4841
          %5996 = vmatprep.subr.bf16.mxu0 %v4854
          %5997 = vmatpush1.bf16.msra.mxu0 %v4853
          %5998 = vmatprep.subr.bf16.mxu0 %v4866
          %5999 = vmatpush1.bf16.msra.mxu0 %v4865
          %6000 = vmatprep.subr.bf16.mxu0 %v4878
          %6001 = vmatpush1.bf16.msra.mxu0 %v4877
          %6002 = vmatprep.mubr.bf16.mxu0 %v2322
          %6003 = vmatmul.mubr.bf16.gmra.mrb[0].mxu0 %v2321
          %v6004 = vpop.f32.mrb[0].mxu0
          %v6005 = vadd.f32 %v2918, %v6004
          %v6006 = vpop.f32.mrb[0].mxu0
          %v6007 = vadd.f32 %v2922, %v6006
          %v6008 = vpop.f32.mrb[0].mxu0
          %v6009 = vpop.f32.mrb[0].mxu0
          %6010 = vdwg.mxu0
          %6011 = vmatprep.subr.bf16.mxu0 %v4890
          %6012 = vmatpush1.bf16.msra.mxu0 %v4889
          %6013 = vmatprep.subr.bf16.mxu0 %v4902
          %6014 = vmatpush1.bf16.msra.mxu0 %v4901
          %6015 = vmatprep.subr.bf16.mxu0 %v4914
          %6016 = vmatpush1.bf16.msra.mxu0 %v4913
          %6017 = vmatprep.subr.bf16.mxu0 %v4926
          %6018 = vmatpush1.bf16.msra.mxu0 %v4925
          %6019 = vmatprep.subr.bf16.mxu0 %v4938
          %6020 = vmatpush1.bf16.msra.mxu0 %v4937
          %6021 = vmatprep.subr.bf16.mxu0 %v4950
          %6022 = vmatpush1.bf16.msra.mxu0 %v4949
          %6023 = vmatprep.subr.bf16.mxu0 %v4962
          %6024 = vmatpush1.bf16.msra.mxu0 %v4961
          %6025 = vmatprep.subr.bf16.mxu0 %v4974
          %6026 = vmatpush1.bf16.msra.mxu0 %v4973
          %6027 = vmatprep.subr.bf16.mxu0 %v4986
          %6028 = vmatpush1.bf16.msra.mxu0 %v4985
          %6029 = vmatprep.subr.bf16.mxu0 %v4998
          %6030 = vmatpush1.bf16.msra.mxu0 %v4997
          %6031 = vmatprep.subr.bf16.mxu0 %v5010
          %6032 = vmatpush1.bf16.msra.mxu0 %v5009
          %6033 = vmatprep.subr.bf16.mxu0 %v5022
          %6034 = vmatpush1.bf16.msra.mxu0 %v5021
          %6035 = vmatprep.subr.bf16.mxu0 %v5034
          %6036 = vmatpush1.bf16.msra.mxu0 %v5033
          %6037 = vmatprep.subr.bf16.mxu0 %v5046
          %6038 = vmatpush1.bf16.msra.mxu0 %v5045
          %6039 = vmatprep.subr.bf16.mxu0 %v5058
          %6040 = vmatpush1.bf16.msra.mxu0 %v5057
          %6041 = vmatprep.subr.bf16.mxu0 %v5070
          %6042 = vmatpush1.bf16.msra.mxu0 %v5069
          %6043 = vmatprep.mubr.bf16.mxu0 %v2324
          %6044 = vmatmul.mubr.bf16.gmra.mrb[0].mxu0 %v2323
          %v6045 = vpop.f32.mrb[0].mxu0
          %v6046 = vadd.f32 %v6005, %v6045
          %v6047 = vpop.f32.mrb[0].mxu0
          %v6048 = vadd.f32 %v6007, %v6047
          %v6049 = vpop.f32.mrb[0].mxu0
          %v6050 = vpop.f32.mrb[0].mxu0
          %6051 = vdwg.mxu0
          %6052 = vmatprep.subr.bf16.mxu0 %v5082
          %6053 = vmatpush1.bf16.msra.mxu0 %v5081
          %6054 = vmatprep.subr.bf16.mxu0 %v5094
          %6055 = vmatpush1.bf16.msra.mxu0 %v5093
          %6056 = vmatprep.subr.bf16.mxu0 %v5106
          %6057 = vmatpush1.bf16.msra.mxu0 %v5105
          %6058 = vmatprep.subr.bf16.mxu0 %v5118
          %6059 = vmatpush1.bf16.msra.mxu0 %v5117
          %6060 = vmatprep.subr.bf16.mxu0 %v5130
          %6061 = vmatpush1.bf16.msra.mxu0 %v5129
          %6062 = vmatprep.subr.bf16.mxu0 %v5142
          %6063 = vmatpush1.bf16.msra.mxu0 %v5141
          %6064 = vmatprep.subr.bf16.mxu0 %v5154
          %6065 = vmatpush1.bf16.msra.mxu0 %v5153
          %6066 = vmatprep.subr.bf16.mxu0 %v5166
          %6067 = vmatpush1.bf16.msra.mxu0 %v5165
          %6068 = vmatprep.subr.bf16.mxu0 %v5178
          %6069 = vmatpush1.bf16.msra.mxu0 %v5177
          %6070 = vmatprep.subr.bf16.mxu0 %v5190
          %6071 = vmatpush1.bf16.msra.mxu0 %v5189
          %6072 = vmatprep.subr.bf16.mxu0 %v5202
          %6073 = vmatpush1.bf16.msra.mxu0 %v5201
          %6074 = vmatprep.subr.bf16.mxu0 %v5214
          %6075 = vmatpush1.bf16.msra.mxu0 %v5213
          %6076 = vmatprep.subr.bf16.mxu0 %v5226
          %6077 = vmatpush1.bf16.msra.mxu0 %v5225
          %6078 = vmatprep.subr.bf16.mxu0 %v5238
          %6079 = vmatpush1.bf16.msra.mxu0 %v5237
          %6080 = vmatprep.subr.bf16.mxu0 %v5250
          %6081 = vmatpush1.bf16.msra.mxu0 %v5249
          %6082 = vmatprep.subr.bf16.mxu0 %v5262
          %6083 = vmatpush1.bf16.msra.mxu0 %v5261
          %6084 = vmatprep.mubr.bf16.mxu0 %v2326
          %6085 = vmatmul.mubr.bf16.gmra.mrb[0].mxu0 %v2325
          %v6086 = vpop.f32.mrb[0].mxu0
          %v6087 = vadd.f32 %v6046, %v6086
          %v6088 = vpop.f32.mrb[0].mxu0
          %v6089 = vadd.f32 %v6048, %v6088
          %v6090 = vpop.f32.mrb[0].mxu0
          %v6091 = vpop.f32.mrb[0].mxu0
          %6092 = vdwg.mxu0
          %6093 = vmatprep.subr.bf16.mxu0 %v4700
          %6094 = vmatpush1.bf16.msra.mxu0 %v4699
          %6095 = vmatprep.subr.bf16.mxu0 %v4712
          %6096 = vmatpush1.bf16.msra.mxu0 %v4711
          %6097 = vmatprep.subr.bf16.mxu0 %v4724
          %6098 = vmatpush1.bf16.msra.mxu0 %v4723
          %6099 = vmatprep.subr.bf16.mxu0 %v4736
          %6100 = vmatpush1.bf16.msra.mxu0 %v4735
          %6101 = vmatprep.subr.bf16.mxu0 %v4748
          %6102 = vmatpush1.bf16.msra.mxu0 %v4747
          %6103 = vmatprep.subr.bf16.mxu0 %v4760
          %6104 = vmatpush1.bf16.msra.mxu0 %v4759
          %6105 = vmatprep.subr.bf16.mxu0 %v4772
          %6106 = vmatpush1.bf16.msra.mxu0 %v4771
          %6107 = vmatprep.subr.bf16.mxu0 %v4784
          %6108 = vmatpush1.bf16.msra.mxu0 %v4783
          %6109 = vmatprep.subr.bf16.mxu0 %v4796
          %6110 = vmatpush1.bf16.msra.mxu0 %v4795
          %6111 = vmatprep.subr.bf16.mxu0 %v4808
          %6112 = vmatpush1.bf16.msra.mxu0 %v4807
          %6113 = vmatprep.subr.bf16.mxu0 %v4820
          %6114 = vmatpush1.bf16.msra.mxu0 %v4819
          %6115 = vmatprep.subr.bf16.mxu0 %v4832
          %6116 = vmatpush1.bf16.msra.mxu0 %v4831
          %6117 = vmatprep.subr.bf16.mxu0 %v4844
          %6118 = vmatpush1.bf16.msra.mxu0 %v4843
          %6119 = vmatprep.subr.bf16.mxu0 %v4856
          %6120 = vmatpush1.bf16.msra.mxu0 %v4855
          %6121 = vmatprep.subr.bf16.mxu0 %v4868
          %6122 = vmatpush1.bf16.msra.mxu0 %v4867
          %6123 = vmatprep.subr.bf16.mxu0 %v4880
          %6124 = vmatpush1.bf16.msra.mxu0 %v4879
          %6125 = vmatprep.mubr.bf16.mxu0 %v2322
          %6126 = vmatmul.mubr.bf16.gmra.mrb[0].mxu0 %v2321
          %v6127 = vpop.f32.mrb[0].mxu0
          %v6128 = vadd.f32 %v2926, %v6127
          %v6129 = vpop.f32.mrb[0].mxu0
          %v6130 = vadd.f32 %v2930, %v6129
          %v6131 = vpop.f32.mrb[0].mxu0
          %v6132 = vpop.f32.mrb[0].mxu0
          %6133 = vdwg.mxu0
          %6134 = vmatprep.subr.bf16.mxu0 %v4892
          %6135 = vmatpush1.bf16.msra.mxu0 %v4891
          %6136 = vmatprep.subr.bf16.mxu0 %v4904
          %6137 = vmatpush1.bf16.msra.mxu0 %v4903
          %6138 = vmatprep.subr.bf16.mxu0 %v4916
          %6139 = vmatpush1.bf16.msra.mxu0 %v4915
          %6140 = vmatprep.subr.bf16.mxu0 %v4928
          %6141 = vmatpush1.bf16.msra.mxu0 %v4927
          %6142 = vmatprep.subr.bf16.mxu0 %v4940
          %6143 = vmatpush1.bf16.msra.mxu0 %v4939
          %6144 = vmatprep.subr.bf16.mxu0 %v4952
          %6145 = vmatpush1.bf16.msra.mxu0 %v4951
          %6146 = vmatprep.subr.bf16.mxu0 %v4964
          %6147 = vmatpush1.bf16.msra.mxu0 %v4963
          %6148 = vmatprep.subr.bf16.mxu0 %v4976
          %6149 = vmatpush1.bf16.msra.mxu0 %v4975
          %6150 = vmatprep.subr.bf16.mxu0 %v4988
          %6151 = vmatpush1.bf16.msra.mxu0 %v4987
          %6152 = vmatprep.subr.bf16.mxu0 %v5000
          %6153 = vmatpush1.bf16.msra.mxu0 %v4999
          %6154 = vmatprep.subr.bf16.mxu0 %v5012
          %6155 = vmatpush1.bf16.msra.mxu0 %v5011
          %6156 = vmatprep.subr.bf16.mxu0 %v5024
          %6157 = vmatpush1.bf16.msra.mxu0 %v5023
          %6158 = vmatprep.subr.bf16.mxu0 %v5036
          %6159 = vmatpush1.bf16.msra.mxu0 %v5035
          %6160 = vmatprep.subr.bf16.mxu0 %v5048
          %6161 = vmatpush1.bf16.msra.mxu0 %v5047
          %6162 = vmatprep.subr.bf16.mxu0 %v5060
          %6163 = vmatpush1.bf16.msra.mxu0 %v5059
          %6164 = vmatprep.subr.bf16.mxu0 %v5072
          %6165 = vmatpush1.bf16.msra.mxu0 %v5071
          %6166 = vmatprep.mubr.bf16.mxu0 %v2324
          %6167 = vmatmul.mubr.bf16.gmra.mrb[0].mxu0 %v2323
          %v6168 = vpop.f32.mrb[0].mxu0
          %v6169 = vadd.f32 %v6128, %v6168
          %v6170 = vpop.f32.mrb[0].mxu0
          %v6171 = vadd.f32 %v6130, %v6170
          %v6172 = vpop.f32.mrb[0].mxu0
          %v6173 = vpop.f32.mrb[0].mxu0
          %6174 = vdwg.mxu0
          %6175 = vmatprep.subr.bf16.mxu0 %v5084
          %6176 = vmatpush1.bf16.msra.mxu0 %v5083
          %6177 = vmatprep.subr.bf16.mxu0 %v5096
          %6178 = vmatpush1.bf16.msra.mxu0 %v5095
          %6179 = vmatprep.subr.bf16.mxu0 %v5108
          %6180 = vmatpush1.bf16.msra.mxu0 %v5107
          %6181 = vmatprep.subr.bf16.mxu0 %v5120
          %6182 = vmatpush1.bf16.msra.mxu0 %v5119
          %6183 = vmatprep.subr.bf16.mxu0 %v5132
          %6184 = vmatpush1.bf16.msra.mxu0 %v5131
          %6185 = vmatprep.subr.bf16.mxu0 %v5144
          %6186 = vmatpush1.bf16.msra.mxu0 %v5143
          %6187 = vmatprep.subr.bf16.mxu0 %v5156
          %6188 = vmatpush1.bf16.msra.mxu0 %v5155
          %6189 = vmatprep.subr.bf16.mxu0 %v5168
          %6190 = vmatpush1.bf16.msra.mxu0 %v5167
          %6191 = vmatprep.subr.bf16.mxu0 %v5180
          %6192 = vmatpush1.bf16.msra.mxu0 %v5179
          %6193 = vmatprep.subr.bf16.mxu0 %v5192
          %6194 = vmatpush1.bf16.msra.mxu0 %v5191
          %6195 = vmatprep.subr.bf16.mxu0 %v5204
          %6196 = vmatpush1.bf16.msra.mxu0 %v5203
          %6197 = vmatprep.subr.bf16.mxu0 %v5216
          %6198 = vmatpush1.bf16.msra.mxu0 %v5215
          %6199 = vmatprep.subr.bf16.mxu0 %v5228
          %6200 = vmatpush1.bf16.msra.mxu0 %v5227
          %6201 = vmatprep.subr.bf16.mxu0 %v5240
          %6202 = vmatpush1.bf16.msra.mxu0 %v5239
          %6203 = vmatprep.subr.bf16.mxu0 %v5252
          %6204 = vmatpush1.bf16.msra.mxu0 %v5251
          %6205 = vmatprep.subr.bf16.mxu0 %v5264
          %6206 = vmatpush1.bf16.msra.mxu0 %v5263
          %6207 = vmatprep.mubr.bf16.mxu0 %v2326
          %6208 = vmatmul.mubr.bf16.gmra.mrb[0].mxu0 %v2325
          %v6209 = vpop.f32.mrb[0].mxu0
          %v6210 = vadd.f32 %v6169, %v6209
          %v6211 = vpop.f32.mrb[0].mxu0
          %v6212 = vadd.f32 %v6171, %v6211
          %v6213 = vpop.f32.mrb[0].mxu0
          %v6214 = vpop.f32.mrb[0].mxu0
          %6215 = vdwg.mxu0
          %6216 = vmatprep.subr.bf16.mxu0 %v4702
          %6217 = vmatpush1.bf16.msra.mxu0 %v4701
          %6218 = vmatprep.subr.bf16.mxu0 %v4714
          %6219 = vmatpush1.bf16.msra.mxu0 %v4713
          %6220 = vmatprep.subr.bf16.mxu0 %v4726
          %6221 = vmatpush1.bf16.msra.mxu0 %v4725
          %6222 = vmatprep.subr.bf16.mxu0 %v4738
          %6223 = vmatpush1.bf16.msra.mxu0 %v4737
          %6224 = vmatprep.subr.bf16.mxu0 %v4750
          %6225 = vmatpush1.bf16.msra.mxu0 %v4749
          %6226 = vmatprep.subr.bf16.mxu0 %v4762
          %6227 = vmatpush1.bf16.msra.mxu0 %v4761
          %6228 = vmatprep.subr.bf16.mxu0 %v4774
          %6229 = vmatpush1.bf16.msra.mxu0 %v4773
          %6230 = vmatprep.subr.bf16.mxu0 %v4786
          %6231 = vmatpush1.bf16.msra.mxu0 %v4785
          %6232 = vmatprep.subr.bf16.mxu0 %v4798
          %6233 = vmatpush1.bf16.msra.mxu0 %v4797
          %6234 = vmatprep.subr.bf16.mxu0 %v4810
          %6235 = vmatpush1.bf16.msra.mxu0 %v4809
          %6236 = vmatprep.subr.bf16.mxu0 %v4822
          %6237 = vmatpush1.bf16.msra.mxu0 %v4821
          %6238 = vmatprep.subr.bf16.mxu0 %v4834
          %6239 = vmatpush1.bf16.msra.mxu0 %v4833
          %6240 = vmatprep.subr.bf16.mxu0 %v4846
          %6241 = vmatpush1.bf16.msra.mxu0 %v4845
          %6242 = vmatprep.subr.bf16.mxu0 %v4858
          %6243 = vmatpush1.bf16.msra.mxu0 %v4857
          %6244 = vmatprep.subr.bf16.mxu0 %v4870
          %6245 = vmatpush1.bf16.msra.mxu0 %v4869
          %6246 = vmatprep.subr.bf16.mxu0 %v4882
          %6247 = vmatpush1.bf16.msra.mxu0 %v4881
          %6248 = vmatprep.mubr.bf16.mxu0 %v2322
          %6249 = vmatmul.mubr.bf16.gmra.mrb[0].mxu0 %v2321
          %v6250 = vpop.f32.mrb[0].mxu0
          %v6251 = vadd.f32 %v2934, %v6250
          %v6252 = vpop.f32.mrb[0].mxu0
          %v6253 = vadd.f32 %v2938, %v6252
          %v6254 = vpop.f32.mrb[0].mxu0
          %v6255 = vpop.f32.mrb[0].mxu0
          %6256 = vdwg.mxu0
          %6257 = vmatprep.subr.bf16.mxu0 %v4894
          %6258 = vmatpush1.bf16.msra.mxu0 %v4893
          %6259 = vmatprep.subr.bf16.mxu0 %v4906
          %6260 = vmatpush1.bf16.msra.mxu0 %v4905
          %6261 = vmatprep.subr.bf16.mxu0 %v4918
          %6262 = vmatpush1.bf16.msra.mxu0 %v4917
          %6263 = vmatprep.subr.bf16.mxu0 %v4930
          %6264 = vmatpush1.bf16.msra.mxu0 %v4929
          %6265 = vmatprep.subr.bf16.mxu0 %v4942
          %6266 = vmatpush1.bf16.msra.mxu0 %v4941
          %6267 = vmatprep.subr.bf16.mxu0 %v4954
          %6268 = vmatpush1.bf16.msra.mxu0 %v4953
          %6269 = vmatprep.subr.bf16.mxu0 %v4966
          %6270 = vmatpush1.bf16.msra.mxu0 %v4965
          %6271 = vmatprep.subr.bf16.mxu0 %v4978
          %6272 = vmatpush1.bf16.msra.mxu0 %v4977
          %6273 = vmatprep.subr.bf16.mxu0 %v4990
          %6274 = vmatpush1.bf16.msra.mxu0 %v4989
          %6275 = vmatprep.subr.bf16.mxu0 %v5002
          %6276 = vmatpush1.bf16.msra.mxu0 %v5001
          %6277 = vmatprep.subr.bf16.mxu0 %v5014
          %6278 = vmatpush1.bf16.msra.mxu0 %v5013
          %6279 = vmatprep.subr.bf16.mxu0 %v5026
          %6280 = vmatpush1.bf16.msra.mxu0 %v5025
          %6281 = vmatprep.subr.bf16.mxu0 %v5038
          %6282 = vmatpush1.bf16.msra.mxu0 %v5037
          %6283 = vmatprep.subr.bf16.mxu0 %v5050
          %6284 = vmatpush1.bf16.msra.mxu0 %v5049
          %6285 = vmatprep.subr.bf16.mxu0 %v5062
          %6286 = vmatpush1.bf16.msra.mxu0 %v5061
          %6287 = vmatprep.subr.bf16.mxu0 %v5074
          %6288 = vmatpush1.bf16.msra.mxu0 %v5073
          %6289 = vmatprep.mubr.bf16.mxu0 %v2324
          %6290 = vmatmul.mubr.bf16.gmra.mrb[0].mxu0 %v2323
          %v6291 = vpop.f32.mrb[0].mxu0
          %v6292 = vadd.f32 %v6251, %v6291
          %v6293 = vpop.f32.mrb[0].mxu0
          %v6294 = vadd.f32 %v6253, %v6293
          %v6295 = vpop.f32.mrb[0].mxu0
          %v6296 = vpop.f32.mrb[0].mxu0
          %6297 = vdwg.mxu0
          %6298 = vmatprep.subr.bf16.mxu0 %v5086
          %6299 = vmatpush1.bf16.msra.mxu0 %v5085
          %6300 = vmatprep.subr.bf16.mxu0 %v5098
          %6301 = vmatpush1.bf16.msra.mxu0 %v5097
          %6302 = vmatprep.subr.bf16.mxu0 %v5110
          %6303 = vmatpush1.bf16.msra.mxu0 %v5109
          %6304 = vmatprep.subr.bf16.mxu0 %v5122
          %6305 = vmatpush1.bf16.msra.mxu0 %v5121
          %6306 = vmatprep.subr.bf16.mxu0 %v5134
          %6307 = vmatpush1.bf16.msra.mxu0 %v5133
          %6308 = vmatprep.subr.bf16.mxu0 %v5146
          %6309 = vmatpush1.bf16.msra.mxu0 %v5145
          %6310 = vmatprep.subr.bf16.mxu0 %v5158
          %6311 = vmatpush1.bf16.msra.mxu0 %v5157
          %6312 = vmatprep.subr.bf16.mxu0 %v5170
          %6313 = vmatpush1.bf16.msra.mxu0 %v5169
          %6314 = vmatprep.subr.bf16.mxu0 %v5182
          %6315 = vmatpush1.bf16.msra.mxu0 %v5181
          %6316 = vmatprep.subr.bf16.mxu0 %v5194
          %6317 = vmatpush1.bf16.msra.mxu0 %v5193
          %6318 = vmatprep.subr.bf16.mxu0 %v5206
          %6319 = vmatpush1.bf16.msra.mxu0 %v5205
          %6320 = vmatprep.subr.bf16.mxu0 %v5218
          %6321 = vmatpush1.bf16.msra.mxu0 %v5217
          %6322 = vmatprep.subr.bf16.mxu0 %v5230
          %6323 = vmatpush1.bf16.msra.mxu0 %v5229
          %6324 = vmatprep.subr.bf16.mxu0 %v5242
          %6325 = vmatpush1.bf16.msra.mxu0 %v5241
          %6326 = vmatprep.subr.bf16.mxu0 %v5254
          %6327 = vmatpush1.bf16.msra.mxu0 %v5253
          %6328 = vmatprep.subr.bf16.mxu0 %v5266
          %6329 = vmatpush1.bf16.msra.mxu0 %v5265
          %6330 = vmatprep.mubr.bf16.mxu0 %v2326
          %6331 = vmatmul.mubr.bf16.gmra.mrb[0].mxu0 %v2325
          %v6332 = vpop.f32.mrb[0].mxu0
          %v6333 = vadd.f32 %v6292, %v6332
          %v6334 = vpop.f32.mrb[0].mxu0
          %v6335 = vadd.f32 %v6294, %v6334
          %v6336 = vpop.f32.mrb[0].mxu0
          %v6337 = vpop.f32.mrb[0].mxu0
          %6338 = vdwg.mxu0
          %6339 = vmatprep.subr.bf16.mxu0 %v4704
          %6340 = vmatpush1.bf16.msra.mxu0 %v4703
          %6341 = vmatprep.subr.bf16.mxu0 %v4716
          %6342 = vmatpush1.bf16.msra.mxu0 %v4715
          %6343 = vmatprep.subr.bf16.mxu0 %v4728
          %6344 = vmatpush1.bf16.msra.mxu0 %v4727
          %6345 = vmatprep.subr.bf16.mxu0 %v4740
          %6346 = vmatpush1.bf16.msra.mxu0 %v4739
          %6347 = vmatprep.subr.bf16.mxu0 %v4752
          %6348 = vmatpush1.bf16.msra.mxu0 %v4751
          %6349 = vmatprep.subr.bf16.mxu0 %v4764
          %6350 = vmatpush1.bf16.msra.mxu0 %v4763
          %6351 = vmatprep.subr.bf16.mxu0 %v4776
          %6352 = vmatpush1.bf16.msra.mxu0 %v4775
          %6353 = vmatprep.subr.bf16.mxu0 %v4788
          %6354 = vmatpush1.bf16.msra.mxu0 %v4787
          %6355 = vmatprep.subr.bf16.mxu0 %v4800
          %6356 = vmatpush1.bf16.msra.mxu0 %v4799
          %6357 = vmatprep.subr.bf16.mxu0 %v4812
          %6358 = vmatpush1.bf16.msra.mxu0 %v4811
          %6359 = vmatprep.subr.bf16.mxu0 %v4824
          %6360 = vmatpush1.bf16.msra.mxu0 %v4823
          %6361 = vmatprep.subr.bf16.mxu0 %v4836
          %6362 = vmatpush1.bf16.msra.mxu0 %v4835
          %6363 = vmatprep.subr.bf16.mxu0 %v4848
          %6364 = vmatpush1.bf16.msra.mxu0 %v4847
          %6365 = vmatprep.subr.bf16.mxu0 %v4860
          %6366 = vmatpush1.bf16.msra.mxu0 %v4859
          %6367 = vmatprep.subr.bf16.mxu0 %v4872
          %6368 = vmatpush1.bf16.msra.mxu0 %v4871
          %6369 = vmatprep.subr.bf16.mxu0 %v4884
          %6370 = vmatpush1.bf16.msra.mxu0 %v4883
          %6371 = vmatprep.mubr.bf16.mxu0 %v2322
          %6372 = vmatmul.mubr.bf16.gmra.mrb[0].mxu0 %v2321
          %v6373 = vpop.f32.mrb[0].mxu0
          %v6374 = vadd.f32 %v2942, %v6373
          %v6375 = vpop.f32.mrb[0].mxu0
          %v6376 = vadd.f32 %v2946, %v6375
          %v6377 = vpop.f32.mrb[0].mxu0
          %v6378 = vpop.f32.mrb[0].mxu0
          %6379 = vdwg.mxu0
          %6380 = vmatprep.subr.bf16.mxu0 %v4896
          %6381 = vmatpush1.bf16.msra.mxu0 %v4895
          %6382 = vmatprep.subr.bf16.mxu0 %v4908
          %6383 = vmatpush1.bf16.msra.mxu0 %v4907
          %6384 = vmatprep.subr.bf16.mxu0 %v4920
          %6385 = vmatpush1.bf16.msra.mxu0 %v4919
          %6386 = vmatprep.subr.bf16.mxu0 %v4932
          %6387 = vmatpush1.bf16.msra.mxu0 %v4931
          %6388 = vmatprep.subr.bf16.mxu0 %v4944
          %6389 = vmatpush1.bf16.msra.mxu0 %v4943
          %6390 = vmatprep.subr.bf16.mxu0 %v4956
          %6391 = vmatpush1.bf16.msra.mxu0 %v4955
          %6392 = vmatprep.subr.bf16.mxu0 %v4968
          %6393 = vmatpush1.bf16.msra.mxu0 %v4967
          %6394 = vmatprep.subr.bf16.mxu0 %v4980
          %6395 = vmatpush1.bf16.msra.mxu0 %v4979
          %6396 = vmatprep.subr.bf16.mxu0 %v4992
          %6397 = vmatpush1.bf16.msra.mxu0 %v4991
          %6398 = vmatprep.subr.bf16.mxu0 %v5004
          %6399 = vmatpush1.bf16.msra.mxu0 %v5003
          %6400 = vmatprep.subr.bf16.mxu0 %v5016
          %6401 = vmatpush1.bf16.msra.mxu0 %v5015
          %6402 = vmatprep.subr.bf16.mxu0 %v5028
          %6403 = vmatpush1.bf16.msra.mxu0 %v5027
          %6404 = vmatprep.subr.bf16.mxu0 %v5040
          %6405 = vmatpush1.bf16.msra.mxu0 %v5039
          %6406 = vmatprep.subr.bf16.mxu0 %v5052
          %6407 = vmatpush1.bf16.msra.mxu0 %v5051
          %6408 = vmatprep.subr.bf16.mxu0 %v5064
          %6409 = vmatpush1.bf16.msra.mxu0 %v5063
          %6410 = vmatprep.subr.bf16.mxu0 %v5076
          %6411 = vmatpush1.bf16.msra.mxu0 %v5075
          %6412 = vmatprep.mubr.bf16.mxu0 %v2324
          %6413 = vmatmul.mubr.bf16.gmra.mrb[0].mxu0 %v2323
          %v6414 = vpop.f32.mrb[0].mxu0
          %v6415 = vadd.f32 %v6374, %v6414
          %v6416 = vpop.f32.mrb[0].mxu0
          %v6417 = vadd.f32 %v6376, %v6416
          %v6418 = vpop.f32.mrb[0].mxu0
          %v6419 = vpop.f32.mrb[0].mxu0
          %6420 = vdwg.mxu0
          %6421 = vmatprep.subr.bf16.mxu0 %v5088
          %6422 = vmatpush1.bf16.msra.mxu0 %v5087
          %6423 = vmatprep.subr.bf16.mxu0 %v5100
          %6424 = vmatpush1.bf16.msra.mxu0 %v5099
          %6425 = vmatprep.subr.bf16.mxu0 %v5112
          %6426 = vmatpush1.bf16.msra.mxu0 %v5111
          %6427 = vmatprep.subr.bf16.mxu0 %v5124
          %6428 = vmatpush1.bf16.msra.mxu0 %v5123
          %6429 = vmatprep.subr.bf16.mxu0 %v5136
          %6430 = vmatpush1.bf16.msra.mxu0 %v5135
          %6431 = vmatprep.subr.bf16.mxu0 %v5148
          %6432 = vmatpush1.bf16.msra.mxu0 %v5147
          %6433 = vmatprep.subr.bf16.mxu0 %v5160
          %6434 = vmatpush1.bf16.msra.mxu0 %v5159
          %6435 = vmatprep.subr.bf16.mxu0 %v5172
          %6436 = vmatpush1.bf16.msra.mxu0 %v5171
          %6437 = vmatprep.subr.bf16.mxu0 %v5184
          %6438 = vmatpush1.bf16.msra.mxu0 %v5183
          %6439 = vmatprep.subr.bf16.mxu0 %v5196
          %6440 = vmatpush1.bf16.msra.mxu0 %v5195
          %6441 = vmatprep.subr.bf16.mxu0 %v5208
          %6442 = vmatpush1.bf16.msra.mxu0 %v5207
          %6443 = vmatprep.subr.bf16.mxu0 %v5220
          %6444 = vmatpush1.bf16.msra.mxu0 %v5219
          %6445 = vmatprep.subr.bf16.mxu0 %v5232
          %6446 = vmatpush1.bf16.msra.mxu0 %v5231
          %6447 = vmatprep.subr.bf16.mxu0 %v5244
          %6448 = vmatpush1.bf16.msra.mxu0 %v5243
          %6449 = vmatprep.subr.bf16.mxu0 %v5256
          %6450 = vmatpush1.bf16.msra.mxu0 %v5255
          %6451 = vmatprep.subr.bf16.mxu0 %v5268
          %6452 = vmatpush1.bf16.msra.mxu0 %v5267
          %6453 = vmatprep.mubr.bf16.mxu0 %v2326
          %6454 = vmatmul.mubr.bf16.gmra.mrb[0].mxu0 %v2325
          %v6455 = vpop.f32.mrb[0].mxu0
          %v6456 = vadd.f32 %v6415, %v6455
          %v6457 = vpop.f32.mrb[0].mxu0
          %v6458 = vadd.f32 %v6417, %v6457
          %v6459 = vpop.f32.mrb[0].mxu0
          %v6460 = vpop.f32.mrb[0].mxu0
          %6461 = vdwg.mxu0
          %6462 = vmatprep.subr.bf16.mxu0 %v4706
          %6463 = vmatpush1.bf16.msra.mxu0 %v4705
          %6464 = vmatprep.subr.bf16.mxu0 %v4718
          %6465 = vmatpush1.bf16.msra.mxu0 %v4717
          %6466 = vmatprep.subr.bf16.mxu0 %v4730
          %6467 = vmatpush1.bf16.msra.mxu0 %v4729
          %6468 = vmatprep.subr.bf16.mxu0 %v4742
          %6469 = vmatpush1.bf16.msra.mxu0 %v4741
          %6470 = vmatprep.subr.bf16.mxu0 %v4754
          %6471 = vmatpush1.bf16.msra.mxu0 %v4753
          %6472 = vmatprep.subr.bf16.mxu0 %v4766
          %6473 = vmatpush1.bf16.msra.mxu0 %v4765
          %6474 = vmatprep.subr.bf16.mxu0 %v4778
          %6475 = vmatpush1.bf16.msra.mxu0 %v4777
          %6476 = vmatprep.subr.bf16.mxu0 %v4790
          %6477 = vmatpush1.bf16.msra.mxu0 %v4789
          %6478 = vmatprep.subr.bf16.mxu0 %v4802
          %6479 = vmatpush1.bf16.msra.mxu0 %v4801
          %6480 = vmatprep.subr.bf16.mxu0 %v4814
          %6481 = vmatpush1.bf16.msra.mxu0 %v4813
          %6482 = vmatprep.subr.bf16.mxu0 %v4826
          %6483 = vmatpush1.bf16.msra.mxu0 %v4825
          %6484 = vmatprep.subr.bf16.mxu0 %v4838
          %6485 = vmatpush1.bf16.msra.mxu0 %v4837
          %6486 = vmatprep.subr.bf16.mxu0 %v4850
          %6487 = vmatpush1.bf16.msra.mxu0 %v4849
          %6488 = vmatprep.subr.bf16.mxu0 %v4862
          %6489 = vmatpush1.bf16.msra.mxu0 %v4861
          %6490 = vmatprep.subr.bf16.mxu0 %v4874
          %6491 = vmatpush1.bf16.msra.mxu0 %v4873
          %6492 = vmatprep.subr.bf16.mxu0 %v4886
          %6493 = vmatpush1.bf16.msra.mxu0 %v4885
          %6494 = vmatprep.mubr.bf16.mxu0 %v2322
          %6495 = vmatmul.mubr.bf16.gmra.mrb[0].mxu0 %v2321
          %v6496 = vpop.f32.mrb[0].mxu0
          %v6497 = vadd.f32 %v2950, %v6496
          %v6498 = vpop.f32.mrb[0].mxu0
          %v6499 = vadd.f32 %v2954, %v6498
          %v6500 = vpop.f32.mrb[0].mxu0
          %v6501 = vpop.f32.mrb[0].mxu0
          %6502 = vdwg.mxu0
          %6503 = vmatprep.subr.bf16.mxu0 %v4898
          %6504 = vmatpush1.bf16.msra.mxu0 %v4897
          %6505 = vmatprep.subr.bf16.mxu0 %v4910
          %6506 = vmatpush1.bf16.msra.mxu0 %v4909
          %6507 = vmatprep.subr.bf16.mxu0 %v4922
          %6508 = vmatpush1.bf16.msra.mxu0 %v4921
          %6509 = vmatprep.subr.bf16.mxu0 %v4934
          %6510 = vmatpush1.bf16.msra.mxu0 %v4933
          %6511 = vmatprep.subr.bf16.mxu0 %v4946
          %6512 = vmatpush1.bf16.msra.mxu0 %v4945
          %6513 = vmatprep.subr.bf16.mxu0 %v4958
          %6514 = vmatpush1.bf16.msra.mxu0 %v4957
          %6515 = vmatprep.subr.bf16.mxu0 %v4970
          %6516 = vmatpush1.bf16.msra.mxu0 %v4969
          %6517 = vmatprep.subr.bf16.mxu0 %v4982
          %6518 = vmatpush1.bf16.msra.mxu0 %v4981
          %6519 = vmatprep.subr.bf16.mxu0 %v4994
          %6520 = vmatpush1.bf16.msra.mxu0 %v4993
          %6521 = vmatprep.subr.bf16.mxu0 %v5006
          %6522 = vmatpush1.bf16.msra.mxu0 %v5005
          %6523 = vmatprep.subr.bf16.mxu0 %v5018
          %6524 = vmatpush1.bf16.msra.mxu0 %v5017
          %6525 = vmatprep.subr.bf16.mxu0 %v5030
          %6526 = vmatpush1.bf16.msra.mxu0 %v5029
          %6527 = vmatprep.subr.bf16.mxu0 %v5042
          %6528 = vmatpush1.bf16.msra.mxu0 %v5041
          %6529 = vmatprep.subr.bf16.mxu0 %v5054
          %6530 = vmatpush1.bf16.msra.mxu0 %v5053
          %6531 = vmatprep.subr.bf16.mxu0 %v5066
          %6532 = vmatpush1.bf16.msra.mxu0 %v5065
          %6533 = vmatprep.subr.bf16.mxu0 %v5078
          %6534 = vmatpush1.bf16.msra.mxu0 %v5077
          %6535 = vmatprep.mubr.bf16.mxu0 %v2324
          %6536 = vmatmul.mubr.bf16.gmra.mrb[0].mxu0 %v2323
          %v6537 = vpop.f32.mrb[0].mxu0
          %v6538 = vadd.f32 %v6497, %v6537
          %v6539 = vpop.f32.mrb[0].mxu0
          %v6540 = vadd.f32 %v6499, %v6539
          %v6541 = vpop.f32.mrb[0].mxu0
          %v6542 = vpop.f32.mrb[0].mxu0
          %6543 = vdwg.mxu0
          %6544 = vmatprep.subr.bf16.mxu0 %v5090
          %6545 = vmatpush1.bf16.msra.mxu0 %v5089
          %6546 = vmatprep.subr.bf16.mxu0 %v5102
          %6547 = vmatpush1.bf16.msra.mxu0 %v5101
          %6548 = vmatprep.subr.bf16.mxu0 %v5114
          %6549 = vmatpush1.bf16.msra.mxu0 %v5113
          %6550 = vmatprep.subr.bf16.mxu0 %v5126
          %6551 = vmatpush1.bf16.msra.mxu0 %v5125
          %6552 = vmatprep.subr.bf16.mxu0 %v5138
          %6553 = vmatpush1.bf16.msra.mxu0 %v5137
          %6554 = vmatprep.subr.bf16.mxu0 %v5150
          %6555 = vmatpush1.bf16.msra.mxu0 %v5149
          %6556 = vmatprep.subr.bf16.mxu0 %v5162
          %6557 = vmatpush1.bf16.msra.mxu0 %v5161
          %6558 = vmatprep.subr.bf16.mxu0 %v5174
          %6559 = vmatpush1.bf16.msra.mxu0 %v5173
          %6560 = vmatprep.subr.bf16.mxu0 %v5186
          %6561 = vmatpush1.bf16.msra.mxu0 %v5185
          %6562 = vmatprep.subr.bf16.mxu0 %v5198
          %6563 = vmatpush1.bf16.msra.mxu0 %v5197
          %6564 = vmatprep.subr.bf16.mxu0 %v5210
          %6565 = vmatpush1.bf16.msra.mxu0 %v5209
          %6566 = vmatprep.subr.bf16.mxu0 %v5222
          %6567 = vmatpush1.bf16.msra.mxu0 %v5221
          %6568 = vmatprep.subr.bf16.mxu0 %v5234
          %6569 = vmatpush1.bf16.msra.mxu0 %v5233
          %6570 = vmatprep.subr.bf16.mxu0 %v5246
          %6571 = vmatpush1.bf16.msra.mxu0 %v5245
          %6572 = vmatprep.subr.bf16.mxu0 %v5258
          %6573 = vmatpush1.bf16.msra.mxu0 %v5257
          %6574 = vmatprep.subr.bf16.mxu0 %v5270
          %6575 = vmatpush1.bf16.msra.mxu0 %v5269
          %6576 = vmatprep.mubr.bf16.mxu0 %v2326
          %6577 = vmatmul.mubr.bf16.gmra.mrb[0].mxu0 %v2325
          %v6578 = vpop.f32.mrb[0].mxu0
          %v6579 = vadd.f32 %v6538, %v6578
          %v6580 = vpop.f32.mrb[0].mxu0
          %v6581 = vadd.f32 %v6540, %v6580
          %v6582 = vpop.f32.mrb[0].mxu0
          %v6583 = vpop.f32.mrb[0].mxu0
          %6584 = vdwg.mxu0
          %v6585 = vxor.u32 %v5964, 2147483648
          %v6586 = vxor.u32 %v5966, 2147483648
          %v6587 = vxor.u32 %v6087, 2147483648
          %v6588 = vmul.f32 %v6585, 1.442695
          %v6589 = vpow.pop %v6588
          %v6590 = vmul.f32 %v6586, 1.442695
          %v6591 = vpow.pop %v6590
          %v6592 = vmul.f32 %v6587, 1.442695
          %v6593 = vpow.pop %v6592
          %v6594 = vadd.f32 %v6589, 1.0
          %v6595 = vadd.f32 %v6591, 1.0
          %v6596 = vadd.f32 %v6593, 1.0
          %v6597 = vrcp.pop %v6594
          %v6598 = vmul.f32 1.0, %v6597
          %v6599 = vrcp.pop %v6595
          %v6600 = vmul.f32 1.0, %v6599
          %v6601 = vrcp.pop %v6596
          %v6602 = vmul.f32 1.0, %v6601
          %v6603 = vxor.u32 %v6089, 2147483648
          %v6604 = vxor.u32 %v6210, 2147483648
          %v6605 = vxor.u32 %v6212, 2147483648
          %v6606 = vmul.f32 %v6603, 1.442695
          %v6607 = vpow.pop %v6606
          %v6608 = vmul.f32 %v6604, 1.442695
          %v6609 = vpow.pop %v6608
          %v6610 = vmul.f32 %v6605, 1.442695
          %v6611 = vpow.pop %v6610
          %v6612 = vadd.f32 %v6607, 1.0
          %v6613 = vadd.f32 %v6609, 1.0
          %v6614 = vadd.f32 %v6611, 1.0
          %v6615 = vrcp.pop %v6612
          %v6616 = vmul.f32 1.0, %v6615
          %v6617 = vrcp.pop %v6613
          %v6618 = vmul.f32 1.0, %v6617
          %v6619 = vrcp.pop %v6614
          %v6620 = vmul.f32 1.0, %v6619
          %v6621 = vtanh.pop %v6333
          %v6622 = vtanh.pop %v6335
          %v6623 = vtanh.pop %v6456
          %v6624 = vxor.u32 %v6458, 2147483648
          %v6625 = vxor.u32 %v6579, 2147483648
          %v6626 = vxor.u32 %v6581, 2147483648
          %v6627 = vmul.f32 %v6624, 1.442695
          %v6628 = vpow.pop %v6627
          %v6629 = vmul.f32 %v6625, 1.442695
          %v6630 = vpow.pop %v6629
          %v6631 = vmul.f32 %v6626, 1.442695
          %v6632 = vpow.pop %v6631
          %v6633 = vadd.f32 %v6628, 1.0
          %v6634 = vadd.f32 %v6630, 1.0
          %v6635 = vadd.f32 %v6632, 1.0
          %v6636 = vrcp.pop %v6633
          %v6637 = vmul.f32 1.0, %v6636
          %v6638 = vrcp.pop %v6634
          %v6639 = vmul.f32 1.0, %v6638
          %v6640 = vrcp.pop %v6635
          %v6641 = vmul.f32 1.0, %v6640
          %v6642 = vld [vmem:[#allocation52] sm:$0xff]
          %v6643 = vld [vmem:[#allocation52 + $0x8] sm:$0xff]
          %v6644 = vld [vmem:[#allocation52 + $0x10] sm:$0xff]
          %v6645 = vmul.f32 %v6616, %v6642
          %v6646 = vmul.f32 %v6618, %v6643
          %v6647 = vmul.f32 %v6620, %v6644
          %v6648 = vmul.f32 %v6598, %v6621
          %v6649 = vmul.f32 %v6600, %v6622
          %v6650 = vmul.f32 %v6602, %v6623
          %v6651 = vadd.f32 %v6645, %v6648
          %v6652 = vadd.f32 %v6646, %v6649
          %v6653 = vadd.f32 %v6647, %v6650
          %v6654 = vtanh.pop %v6651
          %v6655 = vtanh.pop %v6652
          %v6656 = vtanh.pop %v6653
          %v6657 = vmul.f32 %v6637, %v6654
          %v6658 = vmul.f32 %v6639, %v6655
          %v6659 = vmul.f32 %v6641, %v6656
          %6660 = vst [vmem:[#allocation50] sm:$0xff] %v6657
          %6661 = vst [vmem:[#allocation50 + $0x8] sm:$0xff] %v6658
          %6662 = vst [vmem:[#allocation50 + $0x10] sm:$0xff] %v6659
          %6663 = vst [vmem:[#allocation52] sm:$0xff] %v6651
          %6664 = vst [vmem:[#allocation52 + $0x8] sm:$0xff] %v6652
          %6665 = vst [vmem:[#allocation52 + $0x10] sm:$0xff] %v6653
          %v6666 = vpack.c.bf16 %v6657, %v6657
          %v6667 = vpack.c.bf16 %v6658, %v6658
          %v6668 = vpack.c.bf16 %v6659, %v6659
          %v6669 = vld [vmem:[#allocation40] sm:$0xff]
          %v6670 = vld [vmem:[#allocation40 + $0x8] sm:$0xff]
          %v6671 = vld [vmem:[#allocation40 + $0x10] sm:$0xff]
          %v6672 = vld [vmem:[#allocation40 + $0x18] sm:$0xff]
          %v6673 = vld [vmem:[#allocation40 + $0x20] sm:$0xff]
          %v6674 = vld [vmem:[#allocation40 + $0x28] sm:$0xff]
          %v6675 = vld [vmem:[#allocation40 + $0x30] sm:$0xff]
          %v6676 = vld [vmem:[#allocation40 + $0x38] sm:$0xff]
          %v6677 = vld [vmem:[#allocation40 + $0x40] sm:$0xff]
          %v6678 = vld [vmem:[#allocation40 + $0x48] sm:$0xff]
          %v6679 = vld [vmem:[#allocation40 + $0x50] sm:$0xff]
          %v6680 = vld [vmem:[#allocation40 + $0x58] sm:$0xff]
          %v6681 = vld [vmem:[#allocation40 + $0x60] sm:$0xff]
          %v6682 = vld [vmem:[#allocation40 + $0x68] sm:$0xff]
          %v6683 = vld [vmem:[#allocation40 + $0x70] sm:$0xff]
          %v6684 = vld [vmem:[#allocation40 + $0x78] sm:$0xff]
          %v6685 = vld [vmem:[#allocation40 + $0x80] sm:$0xff]
          %v6686 = vld [vmem:[#allocation40 + $0x88] sm:$0xff]
          %v6687 = vld [vmem:[#allocation40 + $0x90] sm:$0xff]
          %v6688 = vld [vmem:[#allocation40 + $0x98] sm:$0xff]
          %v6689 = vld [vmem:[#allocation40 + $0xa0] sm:$0xff]
          %v6690 = vld [vmem:[#allocation40 + $0xa8] sm:$0xff]
          %v6691 = vld [vmem:[#allocation40 + $0xb0] sm:$0xff]
          %v6692 = vld [vmem:[#allocation40 + $0xb8] sm:$0xff]
          %v6693 = vld [vmem:[#allocation40 + $0xc0] sm:$0xff]
          %v6694 = vld [vmem:[#allocation40 + $0xc8] sm:$0xff]
          %v6695 = vld [vmem:[#allocation40 + $0xd0] sm:$0xff]
          %v6696 = vld [vmem:[#allocation40 + $0xd8] sm:$0xff]
          %v6697 = vld [vmem:[#allocation40 + $0xe0] sm:$0xff]
          %v6698 = vld [vmem:[#allocation40 + $0xe8] sm:$0xff]
          %v6699 = vld [vmem:[#allocation40 + $0xf0] sm:$0xff]
          %v6700 = vld [vmem:[#allocation40 + $0xf8] sm:$0xff]
          %v6701 = vld [vmem:[#allocation40 + $0x100] sm:$0xff]
          %v6702 = vld [vmem:[#allocation40 + $0x108] sm:$0xff]
          %v6703 = vld [vmem:[#allocation40 + $0x110] sm:$0xff]
          %v6704 = vld [vmem:[#allocation40 + $0x118] sm:$0xff]
          %v6705 = vld [vmem:[#allocation40 + $0x120] sm:$0xff]
          %v6706 = vld [vmem:[#allocation40 + $0x128] sm:$0xff]
          %v6707 = vld [vmem:[#allocation40 + $0x130] sm:$0xff]
          %v6708 = vld [vmem:[#allocation40 + $0x138] sm:$0xff]
          %v6709 = vld [vmem:[#allocation40 + $0x140] sm:$0xff]
          %v6710 = vld [vmem:[#allocation40 + $0x148] sm:$0xff]
          %v6711 = vld [vmem:[#allocation40 + $0x150] sm:$0xff]
          %v6712 = vld [vmem:[#allocation40 + $0x158] sm:$0xff]
          %v6713 = vld [vmem:[#allocation40 + $0x160] sm:$0xff]
          %v6714 = vld [vmem:[#allocation40 + $0x168] sm:$0xff]
          %v6715 = vld [vmem:[#allocation40 + $0x170] sm:$0xff]
          %v6716 = vld [vmem:[#allocation40 + $0x178] sm:$0xff]
          %v6717 = vld [vmem:[#allocation41] sm:$0x3]
          %v6719 = vlaneseq
          %v6720 = vshrl.u32 %v6719, 7
          %v6721 = vsub.s32 0, %v6720
          %v6722 = vrot.slane %v6717, %v6721
          %v6723 = vlaneseq
          %v6724 = vshrl.u32 %v6723, 7
          %v6725 = vsub.s32 1, %v6724
          %v6726 = vrot.slane %v6717, %v6725
          %v6777 = vunpack.c.l.b16 %v6669
          %v6778 = vunpack.c.h.b16 %v6669
          %v6779 = vunpack.c.l.b16 %v6670
          %v6780 = vunpack.c.h.b16 %v6670
          %v6781 = vunpack.c.l.b16 %v6671
          %v6782 = vunpack.c.h.b16 %v6671
          %v6783 = vunpack.c.l.b16 %v6672
          %v6784 = vunpack.c.h.b16 %v6672
          %v6785 = vunpack.c.l.b16 %v6673
          %v6786 = vunpack.c.h.b16 %v6673
          %v6787 = vunpack.c.l.b16 %v6674
          %v6788 = vunpack.c.h.b16 %v6674
          %v6789 = vunpack.c.l.b16 %v6675
          %v6790 = vunpack.c.h.b16 %v6675
          %v6791 = vunpack.c.l.b16 %v6676
          %v6792 = vunpack.c.h.b16 %v6676
          %v6793 = vunpack.c.l.b16 %v6677
          %v6794 = vunpack.c.h.b16 %v6677
          %v6795 = vunpack.c.l.b16 %v6678
          %v6796 = vunpack.c.h.b16 %v6678
          %v6797 = vunpack.c.l.b16 %v6679
          %v6798 = vunpack.c.h.b16 %v6679
          %v6799 = vunpack.c.l.b16 %v6680
          %v6800 = vunpack.c.h.b16 %v6680
          %v6801 = vunpack.c.l.b16 %v6681
          %v6802 = vunpack.c.h.b16 %v6681
          %v6803 = vunpack.c.l.b16 %v6682
          %v6804 = vunpack.c.h.b16 %v6682
          %v6805 = vunpack.c.l.b16 %v6683
          %v6806 = vunpack.c.h.b16 %v6683
          %v6807 = vunpack.c.l.b16 %v6684
          %v6808 = vunpack.c.h.b16 %v6684
          %v6809 = vunpack.c.l.b16 %v6685
          %v6810 = vunpack.c.h.b16 %v6685
          %v6811 = vunpack.c.l.b16 %v6686
          %v6812 = vunpack.c.h.b16 %v6686
          %v6813 = vunpack.c.l.b16 %v6687
          %v6814 = vunpack.c.h.b16 %v6687
          %v6815 = vunpack.c.l.b16 %v6688
          %v6816 = vunpack.c.h.b16 %v6688
          %v6817 = vunpack.c.l.b16 %v6689
          %v6818 = vunpack.c.h.b16 %v6689
          %v6819 = vunpack.c.l.b16 %v6690
          %v6820 = vunpack.c.h.b16 %v6690
          %v6821 = vunpack.c.l.b16 %v6691
          %v6822 = vunpack.c.h.b16 %v6691
          %v6823 = vunpack.c.l.b16 %v6692
          %v6824 = vunpack.c.h.b16 %v6692
          %v6825 = vunpack.c.l.b16 %v6693
          %v6826 = vunpack.c.h.b16 %v6693
          %v6827 = vunpack.c.l.b16 %v6694
          %v6828 = vunpack.c.h.b16 %v6694
          %v6829 = vunpack.c.l.b16 %v6695
          %v6830 = vunpack.c.h.b16 %v6695
          %v6831 = vunpack.c.l.b16 %v6696
          %v6832 = vunpack.c.h.b16 %v6696
          %v6833 = vunpack.c.l.b16 %v6697
          %v6834 = vunpack.c.h.b16 %v6697
          %v6835 = vunpack.c.l.b16 %v6698
          %v6836 = vunpack.c.h.b16 %v6698
          %v6837 = vunpack.c.l.b16 %v6699
          %v6838 = vunpack.c.h.b16 %v6699
          %v6839 = vunpack.c.l.b16 %v6700
          %v6840 = vunpack.c.h.b16 %v6700
          %v6841 = vunpack.c.l.b16 %v6701
          %v6842 = vunpack.c.h.b16 %v6701
          %v6843 = vunpack.c.l.b16 %v6702
          %v6844 = vunpack.c.h.b16 %v6702
          %v6845 = vunpack.c.l.b16 %v6703
          %v6846 = vunpack.c.h.b16 %v6703
          %v6847 = vunpack.c.l.b16 %v6704
          %v6848 = vunpack.c.h.b16 %v6704
          %v6849 = vunpack.c.l.b16 %v6705
          %v6850 = vunpack.c.h.b16 %v6705
          %v6851 = vunpack.c.l.b16 %v6706
          %v6852 = vunpack.c.h.b16 %v6706
          %v6853 = vunpack.c.l.b16 %v6707
          %v6854 = vunpack.c.h.b16 %v6707
          %v6855 = vunpack.c.l.b16 %v6708
          %v6856 = vunpack.c.h.b16 %v6708
          %v6857 = vunpack.c.l.b16 %v6709
          %v6858 = vunpack.c.h.b16 %v6709
          %v6859 = vunpack.c.l.b16 %v6710
          %v6860 = vunpack.c.h.b16 %v6710
          %v6861 = vunpack.c.l.b16 %v6711
          %v6862 = vunpack.c.h.b16 %v6711
          %v6863 = vunpack.c.l.b16 %v6712
          %v6864 = vunpack.c.h.b16 %v6712
          %v6865 = vunpack.c.l.b16 %v6713
          %v6866 = vunpack.c.h.b16 %v6713
          %v6867 = vunpack.c.l.b16 %v6714
          %v6868 = vunpack.c.h.b16 %v6714
          %v6869 = vunpack.c.l.b16 %v6715
          %v6870 = vunpack.c.h.b16 %v6715
          %v6871 = vunpack.c.l.b16 %v6716
          %v6872 = vunpack.c.h.b16 %v6716
          %v6873 = vpack.c.b16 %v6779, %v6777
          %v6874 = vpack.c.b16 %v6780, %v6778
          %v6875 = vpack.c.b16 %v6783, %v6781
          %v6876 = vpack.c.b16 %v6784, %v6782
          %v6877 = vpack.c.b16 %v6787, %v6785
          %v6878 = vpack.c.b16 %v6788, %v6786
          %v6879 = vpack.c.b16 %v6791, %v6789
          %v6880 = vpack.c.b16 %v6792, %v6790
          %v6881 = vpack.c.b16 %v6795, %v6793
          %v6882 = vpack.c.b16 %v6796, %v6794
          %v6883 = vpack.c.b16 %v6799, %v6797
          %v6884 = vpack.c.b16 %v6800, %v6798
          %v6885 = vpack.c.b16 %v6803, %v6801
          %v6886 = vpack.c.b16 %v6804, %v6802
          %v6887 = vpack.c.b16 %v6807, %v6805
          %v6888 = vpack.c.b16 %v6808, %v6806
          %v6889 = vpack.c.b16 %v6811, %v6809
          %v6890 = vpack.c.b16 %v6812, %v6810
          %v6891 = vpack.c.b16 %v6815, %v6813
          %v6892 = vpack.c.b16 %v6816, %v6814
          %v6893 = vpack.c.b16 %v6819, %v6817
          %v6894 = vpack.c.b16 %v6820, %v6818
          %v6895 = vpack.c.b16 %v6823, %v6821
          %v6896 = vpack.c.b16 %v6824, %v6822
          %v6897 = vpack.c.b16 %v6827, %v6825
          %v6898 = vpack.c.b16 %v6828, %v6826
          %v6899 = vpack.c.b16 %v6831, %v6829
          %v6900 = vpack.c.b16 %v6832, %v6830
          %v6901 = vpack.c.b16 %v6835, %v6833
          %v6902 = vpack.c.b16 %v6836, %v6834
          %v6903 = vpack.c.b16 %v6839, %v6837
          %v6904 = vpack.c.b16 %v6840, %v6838
          %v6905 = vpack.c.b16 %v6843, %v6841
          %v6906 = vpack.c.b16 %v6844, %v6842
          %v6907 = vpack.c.b16 %v6847, %v6845
          %v6908 = vpack.c.b16 %v6848, %v6846
          %v6909 = vpack.c.b16 %v6851, %v6849
          %v6910 = vpack.c.b16 %v6852, %v6850
          %v6911 = vpack.c.b16 %v6855, %v6853
          %v6912 = vpack.c.b16 %v6856, %v6854
          %v6913 = vpack.c.b16 %v6859, %v6857
          %v6914 = vpack.c.b16 %v6860, %v6858
          %v6915 = vpack.c.b16 %v6863, %v6861
          %v6916 = vpack.c.b16 %v6864, %v6862
          %v6917 = vpack.c.b16 %v6867, %v6865
          %v6918 = vpack.c.b16 %v6868, %v6866
          %v6919 = vpack.c.b16 %v6871, %v6869
          %v6920 = vpack.c.b16 %v6872, %v6870
          %6969 = vmatprep.subr.bf16.mxu0 %v6874
          %6970 = vmatpush1.bf16.msra.mxu0 %v6873
          %6971 = vmatprep.subr.bf16.mxu0 %v6876
          %6972 = vmatpush1.bf16.msra.mxu0 %v6875
          %6973 = vmatprep.subr.bf16.mxu0 %v6878
          %6974 = vmatpush1.bf16.msra.mxu0 %v6877
          %6975 = vmatprep.subr.bf16.mxu0 %v6880
          %6976 = vmatpush1.bf16.msra.mxu0 %v6879
          %6977 = vmatprep.subr.bf16.mxu0 %v6882
          %6978 = vmatpush1.bf16.msra.mxu0 %v6881
          %6979 = vmatprep.subr.bf16.mxu0 %v6884
          %6980 = vmatpush1.bf16.msra.mxu0 %v6883
          %6981 = vmatprep.subr.bf16.mxu0 %v6886
          %6982 = vmatpush1.bf16.msra.mxu0 %v6885
          %6983 = vmatprep.subr.bf16.mxu0 %v6888
          %6984 = vmatpush1.bf16.msra.mxu0 %v6887
          %6985 = vmatprep.subr.bf16.mxu0 %v6890
          %6986 = vmatpush1.bf16.msra.mxu0 %v6889
          %6987 = vmatprep.subr.bf16.mxu0 %v6892
          %6988 = vmatpush1.bf16.msra.mxu0 %v6891
          %6989 = vmatprep.subr.bf16.mxu0 %v6894
          %6990 = vmatpush1.bf16.msra.mxu0 %v6893
          %6991 = vmatprep.subr.bf16.mxu0 %v6896
          %6992 = vmatpush1.bf16.msra.mxu0 %v6895
          %6993 = vmatprep.subr.bf16.mxu0 %v6898
          %6994 = vmatpush1.bf16.msra.mxu0 %v6897
          %6995 = vmatprep.subr.bf16.mxu0 %v6900
          %6996 = vmatpush1.bf16.msra.mxu0 %v6899
          %6997 = vmatprep.subr.bf16.mxu0 %v6902
          %6998 = vmatpush1.bf16.msra.mxu0 %v6901
          %6999 = vmatprep.subr.bf16.mxu0 %v6904
          %7000 = vmatpush1.bf16.msra.mxu0 %v6903
          %7001 = vmatprep.mubr.bf16.mxu0 %v6667
          %7002 = vmatmul.mubr.bf16.gmra.mrb[0].mxu0 %v6666
          %v7003 = vpop.f32.mrb[0].mxu0
          %v7004 = vadd.f32 %v6722, %v7003
          %v7005 = vpop.f32.mrb[0].mxu0
          %v7006 = vadd.f32 %v6726, %v7005
          %v7007 = vpop.f32.mrb[0].mxu0
          %v7008 = vpop.f32.mrb[0].mxu0
          %7009 = vdwg.mxu0
          %7010 = vmatprep.subr.bf16.mxu0 %v6906
          %7011 = vmatpush1.bf16.msra.mxu0 %v6905
          %7012 = vmatprep.subr.bf16.mxu0 %v6908
          %7013 = vmatpush1.bf16.msra.mxu0 %v6907
          %7014 = vmatprep.subr.bf16.mxu0 %v6910
          %7015 = vmatpush1.bf16.msra.mxu0 %v6909
          %7016 = vmatprep.subr.bf16.mxu0 %v6912
          %7017 = vmatpush1.bf16.msra.mxu0 %v6911
          %7018 = vmatprep.subr.bf16.mxu0 %v6914
          %7019 = vmatpush1.bf16.msra.mxu0 %v6913
          %7020 = vmatprep.subr.bf16.mxu0 %v6916
          %7021 = vmatpush1.bf16.msra.mxu0 %v6915
          %7022 = vmatprep.subr.bf16.mxu0 %v6918
          %7023 = vmatpush1.bf16.msra.mxu0 %v6917
          %7024 = vmatprep.subr.bf16.mxu0 %v6920
          %7025 = vmatpush1.bf16.msra.mxu0 %v6919
          %7026 = vmatprep.subr.bf16.mxu0 0
          %7027 = vmatpush1.bf16.msra.mxu0 0
          %7028 = vmatprep.subr.bf16.mxu0 0
          %7029 = vmatpush1.bf16.msra.mxu0 0
          %7030 = vmatprep.subr.bf16.mxu0 0
          %7031 = vmatpush1.bf16.msra.mxu0 0
          %7032 = vmatprep.subr.bf16.mxu0 0
          %7033 = vmatpush1.bf16.msra.mxu0 0
          %7034 = vmatprep.subr.bf16.mxu0 0
          %7035 = vmatpush1.bf16.msra.mxu0 0
          %7036 = vmatprep.subr.bf16.mxu0 0
          %7037 = vmatpush1.bf16.msra.mxu0 0
          %7038 = vmatprep.subr.bf16.mxu0 0
          %7039 = vmatpush1.bf16.msra.mxu0 0
          %7040 = vmatprep.subr.bf16.mxu0 0
          %7041 = vmatpush1.bf16.msra.mxu0 0
          %7042 = vmatprep.mubr.bf16.mxu0 0
          %7043 = vmatmul.mubr.bf16.gmra.mrb[0].mxu0 %v6668
          %v7044 = vpop.f32.mrb[0].mxu0
          %v7045 = vadd.f32 %v7004, %v7044
          %v7046 = vpop.f32.mrb[0].mxu0
          %v7047 = vadd.f32 %v7006, %v7046
          %v7048 = vpop.f32.mrb[0].mxu0
          %v7049 = vpop.f32.mrb[0].mxu0
          %7050 = vdwg.mxu0
          %v7051 = vadd.f32 %v7045, 1.0
          %v7052 = vadd.f32 %v7047, 1.0
          %v7053 = vmul.f32 %v7051, 0.1
          %v7054 = vmul.f32 %v7052, 0.1
          %v7055 = vsub.f32 %v7053, 1.0
          %v7056 = vsub.f32 %v7054, 1.0
          %v7057 = vsub.f32 %v7045, 1.0
          %v7058 = vsub.f32 %v7047, 1.0
          %v7059 = vmul.f32 %v7057, 0.1
          %v7060 = vmul.f32 %v7058, 0.1
          %v7061 = vadd.f32 %v7059, 1.0
          %v7062 = vadd.f32 %v7060, 1.0
          %v7063 = vsub.f32 %v7045, %v7061
          %v7064 = vsub.f32 %v7047, %v7062
          %v7065 = vmax.f32 %v7063, 0.0
          %v7066 = vmax.f32 %v7064, 0.0
          %v7067 = vsub.f32 %v7045, %v7065
          %v7068 = vsub.f32 %v7047, %v7066
          %v7069 = vsub.f32 %v7055, %v7067
          %v7070 = vsub.f32 %v7056, %v7068
          %v7071 = vmax.f32 %v7069, 0.0
          %v7072 = vmax.f32 %v7070, 0.0
          %v7073 = vadd.f32 %v7071, %v7067
          %v7074 = vadd.f32 %v7072, %v7068
          %v7075 = vpack.c.bf16 %v7073, %v7073
          %v7076 = vpack.c.bf16 %v7074, %v7074
          %v7077 = vld [vmem:[#allocation43] sm:$0xf]
          %v7078 = vld [vmem:[#allocation43 + $0x4] sm:$0xf]
          %v7079 = vld [vmem:[#allocation43 + $0x8] sm:$0xf]
          %v7080 = vld [vmem:[#allocation43 + $0xc] sm:$0xf]
          %v7081 = vld [vmem:[#allocation43 + $0x10] sm:$0xf]
          %v7082 = vld [vmem:[#allocation43 + $0x14] sm:$0xf]
          %v7083 = vld [vmem:[#allocation43 + $0x18] sm:$0xf]
          %v7084 = vld [vmem:[#allocation43 + $0x1c] sm:$0xf]
          %v7085 = vld [vmem:[#allocation43 + $0x20] sm:$0xf]
          %v7086 = vld [vmem:[#allocation43 + $0x24] sm:$0xf]
          %v7087 = vld [vmem:[#allocation43 + $0x28] sm:$0xf]
          %v7088 = vld [vmem:[#allocation43 + $0x2c] sm:$0xf]
          %v7089 = vld [vmem:[#allocation43 + $0x30] sm:$0xf]
          %v7090 = vld [vmem:[#allocation43 + $0x34] sm:$0xf]
          %v7091 = vld [vmem:[#allocation43 + $0x38] sm:$0xf]
          %v7092 = vld [vmem:[#allocation43 + $0x3c] sm:$0xf]
          %v7093 = vld [vmem:[#allocation43 + $0x40] sm:$0xf]
          %v7094 = vld [vmem:[#allocation43 + $0x44] sm:$0xf]
          %v7095 = vld [vmem:[#allocation43 + $0x48] sm:$0xf]
          %v7096 = vld [vmem:[#allocation43 + $0x4c] sm:$0xf]
          %v7097 = vld [vmem:[#allocation43 + $0x50] sm:$0xf]
          %v7098 = vld [vmem:[#allocation43 + $0x54] sm:$0xf]
          %v7099 = vld [vmem:[#allocation43 + $0x58] sm:$0xf]
          %v7100 = vld [vmem:[#allocation43 + $0x5c] sm:$0xf]
          %v7101 = vld [vmem:[#allocation43 + $0x60] sm:$0xf]
          %v7102 = vld [vmem:[#allocation43 + $0x64] sm:$0xf]
          %v7103 = vld [vmem:[#allocation43 + $0x68] sm:$0xf]
          %v7104 = vld [vmem:[#allocation43 + $0x6c] sm:$0xf]
          %v7105 = vld [vmem:[#allocation43 + $0x70] sm:$0xf]
          %v7106 = vld [vmem:[#allocation43 + $0x74] sm:$0xf]
          %v7107 = vld [vmem:[#allocation43 + $0x78] sm:$0xf]
          %v7108 = vld [vmem:[#allocation43 + $0x7c] sm:$0xf]
          %v7109 = vld [vmem:[#allocation44] sm:$0x1]
          %v7111 = vlaneseq
          %v7112 = vshrl.u32 %v7111, 7
          %v7113 = vsub.s32 0, %v7112
          %v7114 = vrot.slane %v7109, %v7113
          %v7148 = vunpack.c.l.b16 %v7077
          %v7149 = vunpack.c.l.b16 %v7078
          %v7150 = vunpack.c.l.b16 %v7079
          %v7151 = vunpack.c.l.b16 %v7080
          %v7152 = vunpack.c.l.b16 %v7081
          %v7153 = vunpack.c.l.b16 %v7082
          %v7154 = vunpack.c.l.b16 %v7083
          %v7155 = vunpack.c.l.b16 %v7084
          %v7156 = vunpack.c.l.b16 %v7085
          %v7157 = vunpack.c.l.b16 %v7086
          %v7158 = vunpack.c.l.b16 %v7087
          %v7159 = vunpack.c.l.b16 %v7088
          %v7160 = vunpack.c.l.b16 %v7089
          %v7161 = vunpack.c.l.b16 %v7090
          %v7162 = vunpack.c.l.b16 %v7091
          %v7163 = vunpack.c.l.b16 %v7092
          %v7164 = vunpack.c.l.b16 %v7093
          %v7165 = vunpack.c.l.b16 %v7094
          %v7166 = vunpack.c.l.b16 %v7095
          %v7167 = vunpack.c.l.b16 %v7096
          %v7168 = vunpack.c.l.b16 %v7097
          %v7169 = vunpack.c.l.b16 %v7098
          %v7170 = vunpack.c.l.b16 %v7099
          %v7171 = vunpack.c.l.b16 %v7100
          %v7172 = vunpack.c.l.b16 %v7101
          %v7173 = vunpack.c.l.b16 %v7102
          %v7174 = vunpack.c.l.b16 %v7103
          %v7175 = vunpack.c.l.b16 %v7104
          %v7176 = vunpack.c.l.b16 %v7105
          %v7177 = vunpack.c.l.b16 %v7106
          %v7178 = vunpack.c.l.b16 %v7107
          %v7179 = vunpack.c.l.b16 %v7108
          %v7180 = vpack.c.b16 %v7149, %v7148
          %v7181 = vpack.c.b16 %v7151, %v7150
          %v7182 = vpack.c.b16 %v7153, %v7152
          %v7183 = vpack.c.b16 %v7155, %v7154
          %v7184 = vpack.c.b16 %v7157, %v7156
          %v7185 = vpack.c.b16 %v7159, %v7158
          %v7186 = vpack.c.b16 %v7161, %v7160
          %v7187 = vpack.c.b16 %v7163, %v7162
          %v7188 = vpack.c.b16 %v7165, %v7164
          %v7189 = vpack.c.b16 %v7167, %v7166
          %v7190 = vpack.c.b16 %v7169, %v7168
          %v7191 = vpack.c.b16 %v7171, %v7170
          %v7192 = vpack.c.b16 %v7173, %v7172
          %v7193 = vpack.c.b16 %v7175, %v7174
          %v7194 = vpack.c.b16 %v7177, %v7176
          %v7195 = vpack.c.b16 %v7179, %v7178
          %7212 = vmatprep.subr.bf16.mxu0 0
          %7213 = vmatpush1.bf16.msra.mxu0 %v7180
          %7214 = vmatprep.subr.bf16.mxu0 0
          %7215 = vmatpush1.bf16.msra.mxu0 %v7181
          %7216 = vmatprep.subr.bf16.mxu0 0
          %7217 = vmatpush1.bf16.msra.mxu0 %v7182
          %7218 = vmatprep.subr.bf16.mxu0 0
          %7219 = vmatpush1.bf16.msra.mxu0 %v7183
          %7220 = vmatprep.subr.bf16.mxu0 0
          %7221 = vmatpush1.bf16.msra.mxu0 %v7184
          %7222 = vmatprep.subr.bf16.mxu0 0
          %7223 = vmatpush1.bf16.msra.mxu0 %v7185
          %7224 = vmatprep.subr.bf16.mxu0 0
          %7225 = vmatpush1.bf16.msra.mxu0 %v7186
          %7226 = vmatprep.subr.bf16.mxu0 0
          %7227 = vmatpush1.bf16.msra.mxu0 %v7187
          %7228 = vmatprep.subr.bf16.mxu0 0
          %7229 = vmatpush1.bf16.msra.mxu0 %v7188
          %7230 = vmatprep.subr.bf16.mxu0 0
          %7231 = vmatpush1.bf16.msra.mxu0 %v7189
          %7232 = vmatprep.subr.bf16.mxu0 0
          %7233 = vmatpush1.bf16.msra.mxu0 %v7190
          %7234 = vmatprep.subr.bf16.mxu0 0
          %7235 = vmatpush1.bf16.msra.mxu0 %v7191
          %7236 = vmatprep.subr.bf16.mxu0 0
          %7237 = vmatpush1.bf16.msra.mxu0 %v7192
          %7238 = vmatprep.subr.bf16.mxu0 0
          %7239 = vmatpush1.bf16.msra.mxu0 %v7193
          %7240 = vmatprep.subr.bf16.mxu0 0
          %7241 = vmatpush1.bf16.msra.mxu0 %v7194
          %7242 = vmatprep.subr.bf16.mxu0 0
          %7243 = vmatpush1.bf16.msra.mxu0 %v7195
          %7244 = vmatprep.mubr.bf16.mxu0 %v7076
          %7245 = vmatmul.mubr.bf16.gmra.mrb[0].mxu0 %v7075
          %v7246 = vpop.f32.mrb[0].mxu0
          %v7247 = vadd.f32 %v7114, %v7246
          %v7248 = vpop.f32.mrb[0].mxu0
          %v7249 = vpop.f32.mrb[0].mxu0
          %v7250 = vpop.f32.mrb[0].mxu0
          %7251 = vdwg.mxu0
          %v7252 = vadd.f32 %v7247, 1.0
          %v7253 = vmul.f32 %v7252, 0.1
          %v7254 = vsub.f32 %v7253, 1.0
          %v7255 = vsub.f32 %v7247, 1.0
          %v7256 = vmul.f32 %v7255, 0.1
          %v7257 = vadd.f32 %v7256, 1.0
          %v7258 = vsub.f32 %v7247, %v7257
          %v7259 = vmax.f32 %v7258, 0.0
          %v7260 = vsub.f32 %v7247, %v7259
          %v7261 = vsub.f32 %v7254, %v7260
          %v7262 = vmax.f32 %v7261, 0.0
          %v7263 = vadd.f32 %v7262, %v7260
          %v7264 = vpack.c.bf16 %v7263, %v7263
          %v7265 = vld [vmem:[#allocation46] sm:$0xf]
          %v7266 = vld [vmem:[#allocation46 + $0x4] sm:$0xf]
          %v7267 = vld [vmem:[#allocation46 + $0x8] sm:$0xf]
          %v7268 = vld [vmem:[#allocation46 + $0xc] sm:$0xf]
          %v7269 = vld [vmem:[#allocation46 + $0x10] sm:$0xf]
          %v7270 = vld [vmem:[#allocation46 + $0x14] sm:$0xf]
          %v7271 = vld [vmem:[#allocation46 + $0x18] sm:$0xf]
          %v7272 = vld [vmem:[#allocation46 + $0x1c] sm:$0xf]
          %v7273 = vld [vmem:[#allocation46 + $0x20] sm:$0xf]
          %v7274 = vld [vmem:[#allocation46 + $0x24] sm:$0xf]
          %v7275 = vld [vmem:[#allocation46 + $0x28] sm:$0xf]
          %v7276 = vld [vmem:[#allocation46 + $0x2c] sm:$0xf]
          %v7277 = vld [vmem:[#allocation46 + $0x30] sm:$0xf]
          %v7278 = vld [vmem:[#allocation46 + $0x34] sm:$0xf]
          %v7279 = vld [vmem:[#allocation46 + $0x38] sm:$0xf]
          %v7280 = vld [vmem:[#allocation46 + $0x3c] sm:$0xf]
          %v7281 = vld [vmem:[#allocation47] sm:$0x1]
          %v7283 = vlaneseq
          %v7284 = vshrl.u32 %v7283, 7
          %v7285 = vsub.s32 0, %v7284
          %v7286 = vrot.slane %v7281, %v7285
          %v7304 = vunpack.c.l.b16 %v7265
          %v7305 = vunpack.c.l.b16 %v7266
          %v7306 = vunpack.c.l.b16 %v7267
          %v7307 = vunpack.c.l.b16 %v7268
          %v7308 = vunpack.c.l.b16 %v7269
          %v7309 = vunpack.c.l.b16 %v7270
          %v7310 = vunpack.c.l.b16 %v7271
          %v7311 = vunpack.c.l.b16 %v7272
          %v7312 = vunpack.c.l.b16 %v7273
          %v7313 = vunpack.c.l.b16 %v7274
          %v7314 = vunpack.c.l.b16 %v7275
          %v7315 = vunpack.c.l.b16 %v7276
          %v7316 = vunpack.c.l.b16 %v7277
          %v7317 = vunpack.c.l.b16 %v7278
          %v7318 = vunpack.c.l.b16 %v7279
          %v7319 = vunpack.c.l.b16 %v7280
          %v7320 = vpack.c.b16 %v7305, %v7304
          %v7321 = vpack.c.b16 %v7307, %v7306
          %v7322 = vpack.c.b16 %v7309, %v7308
          %v7323 = vpack.c.b16 %v7311, %v7310
          %v7324 = vpack.c.b16 %v7313, %v7312
          %v7325 = vpack.c.b16 %v7315, %v7314
          %v7326 = vpack.c.b16 %v7317, %v7316
          %v7327 = vpack.c.b16 %v7319, %v7318
          %7336 = vmatprep.subr.bf16.mxu0 0
          %7337 = vmatpush1.bf16.msra.mxu0 %v7320
          %7338 = vmatprep.subr.bf16.mxu0 0
          %7339 = vmatpush1.bf16.msra.mxu0 %v7321
          %7340 = vmatprep.subr.bf16.mxu0 0
          %7341 = vmatpush1.bf16.msra.mxu0 %v7322
          %7342 = vmatprep.subr.bf16.mxu0 0
          %7343 = vmatpush1.bf16.msra.mxu0 %v7323
          %7344 = vmatprep.subr.bf16.mxu0 0
          %7345 = vmatpush1.bf16.msra.mxu0 %v7324
          %7346 = vmatprep.subr.bf16.mxu0 0
          %7347 = vmatpush1.bf16.msra.mxu0 %v7325
          %7348 = vmatprep.subr.bf16.mxu0 0
          %7349 = vmatpush1.bf16.msra.mxu0 %v7326
          %7350 = vmatprep.subr.bf16.mxu0 0
          %7351 = vmatpush1.bf16.msra.mxu0 %v7327
          %7352 = vmatprep.subr.bf16.mxu0 0
          %7353 = vmatpush1.bf16.msra.mxu0 0
          %7354 = vmatprep.subr.bf16.mxu0 0
          %7355 = vmatpush1.bf16.msra.mxu0 0
          %7356 = vmatprep.subr.bf16.mxu0 0
          %7357 = vmatpush1.bf16.msra.mxu0 0
          %7358 = vmatprep.subr.bf16.mxu0 0
          %7359 = vmatpush1.bf16.msra.mxu0 0
          %7360 = vmatprep.subr.bf16.mxu0 0
          %7361 = vmatpush1.bf16.msra.mxu0 0
          %7362 = vmatprep.subr.bf16.mxu0 0
          %7363 = vmatpush1.bf16.msra.mxu0 0
          %7364 = vmatprep.subr.bf16.mxu0 0
          %7365 = vmatpush1.bf16.msra.mxu0 0
          %7366 = vmatprep.subr.bf16.mxu0 0
          %7367 = vmatpush1.bf16.msra.mxu0 0
          %7368 = vmatprep.mubr.bf16.mxu0 0
          %7369 = vmatmul.mubr.bf16.gmra.mrb[0].mxu0 %v7264
          %v7370 = vpop.f32.mrb[0].mxu0
          %v7371 = vadd.f32 %v7286, %v7370
          %v7372 = vpop.f32.mrb[0].mxu0
          %v7373 = vpop.f32.mrb[0].mxu0
          %v7374 = vpop.f32.mrb[0].mxu0
          %7375 = vdwg.mxu0
          %7376 = vst [vmem:[#allocation5] sm:$0xff] %v7371
        $region256: #{tpu_custom_call.1} parent=131 // pred_fallthru
          _
        %s7377 = sand.u32 %s699, 1
        %s7378 = scalar_lea.sflag [#allocation10], %s7377
        %s7379 = sand.u32 %s699, 1
        %s7380 = smul.addr %s7379, 8
        %s7381 = scalar_lea.vmem [#allocation49], %s7380
        // Predicated region
        $region257: #{tpu_custom_call.1} parent=131 // pred_check
          %p7382 = pneg %p709
        $region258: #{tpu_custom_call.1} parent=131 // pred_check_branch
          %7384 = sbr.rel (%p7382) target = $region260
        $region259: #{tpu_custom_call.1} parent=131 // pred_region
          %s7386 = ssub.s32 128, 128
          %7387 = vsyncadd %s7378, %s7386
          %s7388 = smul.addr %s96, 128
          %s7389 = scalar_lea.hbm %s59, %s7388
          %s7391 = sshll.u32 %s7381, 4
          %s7392 = int_to_ptr.vmem [resolvable:$true] %s7391
          %7394 = dma.vmem_to_hbm [thread:$0]  %s7392, 128, %s7389, %s7378
        $region260: #{tpu_custom_call.1} parent=131 // pred_fallthru
          _
        // Predicated region
        $region261: #{tpu_custom_call.1} parent=131 // pred_check
          %p7395 = pneg %p730
        $region262: #{tpu_custom_call.1} parent=131 // pred_check_branch
          %7397 = sbr.rel (%p7395) target = $region264
        $region263: #{tpu_custom_call.1} parent=131 // pred_region
          %s7399 = ssub.s32 384, 384
          %7400 = vsyncadd [#allocation51], %s7399
          %s7402 = sshll.u32 [#allocation50], 4
          %s7403 = int_to_ptr.vmem [resolvable:$true] %s7402
          %7405 = dma.vmem_to_hbm [thread:$0]  %s7403, 384, %s61, [#allocation51]
        $region264: #{tpu_custom_call.1} parent=131 // pred_fallthru
          _
        // Predicated region
        $region265: #{tpu_custom_call.1} parent=131 // pred_check
          %p7406 = pneg %p751
        $region266: #{tpu_custom_call.1} parent=131 // pred_check_branch
          %7408 = sbr.rel (%p7406) target = $region268
        $region267: #{tpu_custom_call.1} parent=131 // pred_region
          %s7410 = ssub.s32 384, 384
          %7411 = vsyncadd [#allocation51], %s7410
          %s7413 = sshll.u32 [#allocation52], 4
          %s7414 = int_to_ptr.vmem [resolvable:$true] %s7413
          %7416 = dma.vmem_to_hbm [thread:$0]  %s7414, 384, %s63, [#allocation51]
        $region268: #{tpu_custom_call.1} parent=131 // pred_fallthru
          _
        // Predicated region
        $region269: #{tpu_custom_call.1} parent=131 // pred_check
          %p7417 = pneg %p730
        $region270: #{tpu_custom_call.1} parent=131 // pred_check_branch
          %7419 = sbr.rel (%p7417) target = $region272
        $region271: #{tpu_custom_call.1} parent=131 // pred_region
          %7420 = dma.done [#allocation51], 384
        $region272: #{tpu_custom_call.1} parent=131 // pred_fallthru
          _
        // Predicated region
        $region273: #{tpu_custom_call.1} parent=131 // pred_check
          %p7421 = pneg %p751
        $region274: #{tpu_custom_call.1} parent=131 // pred_check_branch
          %7423 = sbr.rel (%p7421) target = $region276
        $region275: #{tpu_custom_call.1} parent=131 // pred_region
          %7424 = dma.done [#allocation51], 384
        $region276: #{tpu_custom_call.1} parent=131 // pred_fallthru
          _
      $region132: #{tpu_custom_call.1} parent=5 // pred_fallthru
        _
      %p7425 = scmp.le.s32.totalorder 2, %s91
      // Predicated region
      $region277: #{tpu_custom_call.1} parent=5 // pred_check
        %p7426 = pneg %p7425
      $region278: #{tpu_custom_call.1} parent=5 // pred_check_branch
        %7428 = sbr.rel (%p7426) target = $region280
      $region279: #{tpu_custom_call.1} parent=5 // pred_region
        %s7429 = ssub.s32 %s91, 2
        // Predicated region
        $region281: #{tpu_custom_call.1} parent=279 // pred_check
          %p7430 = pneg %p715
        $region282: #{tpu_custom_call.1} parent=279 // pred_check_branch
          %7432 = sbr.rel (%p7430) target = $region284
        $region283: #{tpu_custom_call.1} parent=279 // pred_region
          %s7433 = sand.u32 %s700, 1
          %s7434 = scalar_lea.sflag [#allocation10], %s7433
          %s7435 = sand.u32 %s700, 1
          %s7436 = smul.addr %s7435, 8
          %s7437 = scalar_lea.vmem [#allocation49], %s7436
          %7438 = dma.done %s7434, 128
        $region284: #{tpu_custom_call.1} parent=279 // pred_fallthru
          _
      $region280: #{tpu_custom_call.1} parent=5 // pred_fallthru
        _
    $region6: #{tpu_custom_call.1} parent=1 // loop_footer
      %s95 = sadd.s32 1, %s91
    $region7: #{tpu_custom_call.1} parent=1 // loop_footer_branch
      %90 = sbr.rel target = $region3
    $region8: #{tpu_custom_call.1} parent=1 // loop_exit
      _
    %7439 = vsyncpa [#allocation9], 1
    %s7440 = scalar_lea.sflag [#allocation9], 1
    %7441 = vsyncpa %s7440, 1
    %7442 = vsyncpa [#allocation12], 1
    %7443 = vsyncpa [#allocation15], 1
    %7444 = vsyncpa [#allocation18], 1
    %7445 = vsyncpa [#allocation24], 1
    %7446 = vsyncpa [#allocation27], 1
    %7447 = vsyncpa [#allocation30], 1
    %7448 = vsyncpa [#allocation33], 1
    %7449 = vsyncpa [#allocation36], 1
    %7450 = vsyncpa [#allocation39], 1
    %7451 = vsyncpa [#allocation42], 1
    %7452 = vsyncpa [#allocation45], 1
    %7453 = vsyncpa [#allocation48], 1
    %7454 = vsyncpa [#allocation10], 1
    %s7455 = scalar_lea.sflag [#allocation10], 1
    %7456 = vsyncpa %s7455, 1
    %7457 = vsyncpa [#allocation51], 1

</llo_original>
